<compile_context>
chip_gen: v6e
topology: v6e:2x2x1
jax: 0.10.0
libtpu: 0.0.40
codegen_flags: <defaults>
</compile_context>

<pallas_src>
import jax
import jax.numpy as jnp
from jax import lax
from jax.experimental import pallas as pl
from jax.experimental.pallas import tpu as pltpu

OC = 64  # output channels per branch


def inception_kernel(x_ref,                       # (H, W, C)       input image
                     wred_ref, bred_ref,          # (C, 3*OC), (1, 3*OC) fused 1x1s
                     w3b_ref, b3b_ref,            # (9*OC, OC), (1, OC)
                     w5b_ref, b5b_ref,            # (25*OC, OC), (1, OC)
                     wp_ref, bp_ref,              # (C, OC), (1, OC)
                     out_ref,                     # (H, W, 4*OC)
                     tpad3_ref,                   # (H+2, W+2, OC)  zero border
                     tpad5_ref,                   # (H+4, W+4, OC)  zero border
                     xpool_ref,                   # (H+2, W+2, C)   -inf border
                     col3_ref,                    # (H*W, 9*OC)     im2col (3x3)
                     col5_ref):                   # (H*W, 25*OC)    im2col (5x5)
    H, W, _ = out_ref.shape
    C = x_ref.shape[2]

    # ---- per-step border init (cheap thin strips only; megacore-safe) ----
    z1row = jnp.zeros((1, W + 2, OC), jnp.float32)
    z1col = jnp.zeros((H, 1, OC), jnp.float32)
    tpad3_ref[0:1, :, :] = z1row
    tpad3_ref[H + 1:H + 2, :, :] = z1row
    tpad3_ref[1:1 + H, 0:1, :] = z1col
    tpad3_ref[1:1 + H, W + 1:W + 2, :] = z1col

    z2row = jnp.zeros((2, W + 4, OC), jnp.float32)
    z2col = jnp.zeros((H, 2, OC), jnp.float32)
    tpad5_ref[0:2, :, :] = z2row
    tpad5_ref[H + 2:H + 4, :, :] = z2row
    tpad5_ref[2:2 + H, 0:2, :] = z2col
    tpad5_ref[2:2 + H, W + 2:W + 4, :] = z2col

    nrow = jnp.full((1, W + 2, C), -jnp.inf, jnp.float32)
    ncol = jnp.full((H, 1, C), -jnp.inf, jnp.float32)
    xpool_ref[0:1, :, :] = nrow
    xpool_ref[H + 1:H + 2, :, :] = nrow
    xpool_ref[1:1 + H, 0:1, :] = ncol
    xpool_ref[1:1 + H, W + 1:W + 2, :] = ncol

    x = x_ref[...]                                # (H, W, C)
    xf = x.reshape(H * W, C)

    # ---- fused 1x1 reduces: [branch1x1 | 3x3-reduce | 5x5-reduce] ----
    red = jnp.dot(xf, wred_ref[...],
                  preferred_element_type=jnp.float32) + bred_ref[...]
    y1 = red[:, 0:OC]
    tpad3_ref[1:1 + H, 1:1 + W, :] = red[:, OC:2 * OC].reshape(H, W, OC)
    tpad5_ref[2:2 + H, 2:2 + W, :] = red[:, 2 * OC:3 * OC].reshape(H, W, OC)

    # ---- im2col builds (independent buffers -> no WAR serialization, the
    #      5x5 column build can hide under the 3x3 MXU matmul) ----
    for di in range(3):
        for dj in range(3):
            t = di * 3 + dj
            col3_ref[:, t * OC:(t + 1) * OC] = (
                tpad3_ref[di:di + H, dj:dj + W, :].reshape(H * W, OC))
    for di in range(5):
        for dj in range(5):
            t = di * 5 + dj
            col5_ref[:, t * OC:(t + 1) * OC] = (
                tpad5_ref[di:di + H, dj:dj + W, :].reshape(H * W, OC))

    # ---- branch 3x3 / 5x5: single K=9*OC / K=25*OC matmuls ----
    y3 = jnp.dot(col3_ref[...], w3b_ref[...],
                 preferred_element_type=jnp.float32) + b3b_ref[...]
    y5 = jnp.dot(col5_ref[...], w5b_ref[...],
                 preferred_element_type=jnp.float32) + b5b_ref[...]

    # ---- branch pool: 3x3/s1/p1 maxpool (separable, -inf pad) -> 1x1 conv ----
    xpool_ref[1:1 + H, 1:1 + W, :] = x
    xp = xpool_ref[...]                           # (H+2, W+2, C)
    rmax = jnp.maximum(jnp.maximum(xp[0:H, :, :], xp[1:1 + H, :, :]),
                       xp[2:2 + H, :, :])         # (H, W+2, C)
    pooled = jnp.maximum(jnp.maximum(rmax[:, 0:W, :], rmax[:, 1:1 + W, :]),
                         rmax[:, 2:2 + W, :])     # (H, W, C)
    yp = jnp.dot(pooled.reshape(H * W, C), wp_ref[...],
                 preferred_element_type=jnp.float32) + bp_ref[...]

    # ---- single lane-dense (H, W, 256) store ----
    out_ref[...] = jnp.concatenate([y1, y3, y5, yp],
                                   axis=-1).reshape(H, W, 4 * OC)


def init_params(key, in_channels):
    ks = jax.random.split(key, 12)
    w = lambda k, s: (0.05 * jax.random.normal(k, s)).astype(jnp.float32)
    w1 = w(ks[0], (in_channels, OC)); b1 = w(ks[1], (1, OC))
    w3a = w(ks[2], (in_channels, OC)); b3a = w(ks[3], (1, OC))
    w3b = w(ks[4], (3, 3, OC, OC));    b3b = w(ks[5], (1, OC))
    w5a = w(ks[6], (in_channels, OC)); b5a = w(ks[7], (1, OC))
    w5b = w(ks[8], (5, 5, OC, OC));    b5b = w(ks[9], (1, OC))
    wp = w(ks[10], (in_channels, OC)); bp = w(ks[11], (1, OC))
    return (w1, b1, w3a, b3a, w3b, b3b, w5a, b5a, w5b, b5b, wp, bp)


def inception_forward(x_nchw, params):
    x = jnp.transpose(x_nchw, (0, 2, 3, 1)).astype(jnp.float32)  # -> NHWC
    N, H, W, C = x.shape
    (w1, b1, w3a, b3a, w3b, b3b, w5a, b5a, w5b, b5b, wp, bp) = params

    # Fuse the three 1x1 reduce weights; flatten the 3x3 / 5x5 kernels (HWIO)
    # into im2col RHS matrices.
    w_red = jnp.concatenate([w1, w3a, w5a], axis=1)      # (C, 3*OC)
    b_red = jnp.concatenate([b1, b3a, b5a], axis=1)      # (1, 3*OC)
    w3b_f = w3b.reshape(9 * OC, OC)                      # (576, 64)
    w5b_f = w5b.reshape(25 * OC, OC)                     # (1600, 64)

    def full_spec(shape):
        return pl.BlockSpec(shape, lambda b, _n=len(shape): (0,) * _n)

    grid_spec = pltpu.PrefetchScalarGridSpec(
        num_scalar_prefetch=0,
        grid=(N,),
        in_specs=[
            pl.BlockSpec((pl.Squeezed(), H, W, C), lambda b: (b, 0, 0, 0)),
            full_spec(w_red.shape), full_spec(b_red.shape),
            full_spec(w3b_f.shape), full_spec(b3b.shape),
            full_spec(w5b_f.shape), full_spec(b5b.shape),
            full_spec(wp.shape), full_spec(bp.shape),
        ],
        out_specs=pl.BlockSpec((pl.Squeezed(), H, W, 4 * OC),
                               lambda b: (b, 0, 0, 0)),
        scratch_shapes=[
            pltpu.VMEM((H + 2, W + 2, OC), jnp.float32),   # zero-padded t3
            pltpu.VMEM((H + 4, W + 4, OC), jnp.float32),   # zero-padded t5
            pltpu.VMEM((H + 2, W + 2, C), jnp.float32),    # -inf-padded x
            pltpu.VMEM((H * W, 9 * OC), jnp.float32),      # im2col cols (3x3)
            pltpu.VMEM((H * W, 25 * OC), jnp.float32),     # im2col cols (5x5)
        ],
    )

    flops = 2 * N * H * W * (C * 3 * OC + 9 * OC * OC + 25 * OC * OC + C * OC)
    bytes_accessed = 4 * (N * H * W * C + int(w_red.size) + int(w3b_f.size)
                          + int(w5b_f.size) + int(wp.size)
                          + N * H * W * 4 * OC)
    cost = pl.CostEstimate(flops=flops, transcendentals=0,
                           bytes_accessed=bytes_accessed)

    out_nhwc = pl.pallas_call(
        inception_kernel,
        out_shape=jax.ShapeDtypeStruct((N, H, W, 4 * OC), jnp.float32),
        grid_spec=grid_spec,
        compiler_params=pltpu.CompilerParams(
            dimension_semantics=("parallel",)),
        cost_estimate=cost,
    )(x, w_red, b_red, w3b_f, b3b, w5b_f, b5b, wp, bp)

    return jnp.transpose(out_nhwc, (0, 3, 1, 2))  # -> NCHW


def reference_forward(x_nchw, params):
    """Pure-JAX reference matching the PyTorch module semantics."""
    x = jnp.transpose(x_nchw, (0, 2, 3, 1)).astype(jnp.float32)
    (w1, b1, w3a, b3a, w3b, b3b, w5a, b5a, w5b, b5b, wp, bp) = params

    def conv1x1(inp, w, b):
        return jnp.einsum('nhwc,co->nhwo', inp, w) + b.reshape(1, 1, 1, -1)

    def convk(inp, w, b):
        out = lax.conv_general_dilated(
            inp, w, (1, 1), 'SAME',
            dimension_numbers=('NHWC', 'HWIO', 'NHWC'))
        return out + b.reshape(1, 1, 1, -1)

    y1 = conv1x1(x, w1, b1)
    y3 = convk(conv1x1(x, w3a, b3a), w3b, b3b)
    y5 = convk(conv1x1(x, w5a, b5a), w5b, b5b)
    pooled = lax.reduce_window(x, -jnp.inf, lax.max,
                               (1, 3, 3, 1), (1, 1, 1, 1),
                               [(0, 0), (1, 1), (1, 1), (0, 0)])
    yp = conv1x1(pooled, wp, bp)
    out = jnp.concatenate([y1, y3, y5, yp], axis=-1)
    return jnp.transpose(out, (0, 3, 1, 2))


if __name__ == "__main__":
    N, C, H, W = 2, 4, 16, 16
    x = jax.random.normal(jax.random.PRNGKey(0), (N, C, H, W), jnp.float32)
    params = init_params(jax.random.PRNGKey(1), C)

    out = jax.block_until_ready(inception_forward(x, params))
    ref = jax.block_until_ready(reference_forward(x, params))

    assert out.shape == (N, 4 * OC, H, W), out.shape
    assert jnp.allclose(out, ref, atol=1e-3, rtol=1e-3), \
        float(jnp.max(jnp.abs(out - ref)))
    print("KERNEL_OK")
</pallas_src>

<mosaic_0001>
module attributes {stable_mosaic.version = 11 : i64} {
  func.func @inception_kernel(%arg0: i32, %arg1: memref<1x16x16x4xf32, #tpu.memory_space<vmem>>, %arg2: memref<4x192xf32, #tpu.memory_space<vmem>>, %arg3: memref<1x192xf32, #tpu.memory_space<vmem>>, %arg4: memref<576x64xf32, #tpu.memory_space<vmem>>, %arg5: memref<1x64xf32, #tpu.memory_space<vmem>>, %arg6: memref<1600x64xf32, #tpu.memory_space<vmem>>, %arg7: memref<1x64xf32, #tpu.memory_space<vmem>>, %arg8: memref<4x64xf32, #tpu.memory_space<vmem>>, %arg9: memref<1x64xf32, #tpu.memory_space<vmem>>, %arg10: memref<1x16x16x256xf32, #tpu.memory_space<vmem>>, %arg11: memref<18x18x64xf32, #tpu.memory_space<vmem>>, %arg12: memref<20x20x64xf32, #tpu.memory_space<vmem>>, %arg13: memref<18x18x4xf32, #tpu.memory_space<vmem>>, %arg14: memref<256x576xf32, #tpu.memory_space<vmem>>, %arg15: memref<256x1600xf32, #tpu.memory_space<vmem>>) attributes {dimension_semantics = [#tpu.dimension_semantics<parallel>], iteration_bounds = array<i64: 2>, scalar_prefetch = 0 : i64, scratch_operands = 5 : i64, tpu.core_type = #tpu.core_type<tc>, window_params = [{transform_indices = @transform_0, window_bounds = array<i64: 1, 16, 16, 4>}, {pipeline_mode = #tpu.pipeline_mode<synchronous>, transform_indices = @transform_1, window_bounds = array<i64: 4, 192>}, {pipeline_mode = #tpu.pipeline_mode<synchronous>, transform_indices = @transform_2, window_bounds = array<i64: 1, 192>}, {pipeline_mode = #tpu.pipeline_mode<synchronous>, transform_indices = @transform_3, window_bounds = array<i64: 576, 64>}, {pipeline_mode = #tpu.pipeline_mode<synchronous>, transform_indices = @transform_4, window_bounds = array<i64: 1, 64>}, {pipeline_mode = #tpu.pipeline_mode<synchronous>, transform_indices = @transform_5, window_bounds = array<i64: 1600, 64>}, {pipeline_mode = #tpu.pipeline_mode<synchronous>, transform_indices = @transform_6, window_bounds = array<i64: 1, 64>}, {pipeline_mode = #tpu.pipeline_mode<synchronous>, transform_indices = @transform_7, window_bounds = array<i64: 4, 64>}, {pipeline_mode = #tpu.pipeline_mode<synchronous>, transform_indices = @transform_8, window_bounds = array<i64: 1, 64>}, {transform_indices = @transform_9, window_bounds = array<i64: 1, 16, 16, 256>}]} {
    %cst = arith.constant 0.000000e+00 : f32
    %0 = vector.broadcast %cst : f32 to vector<1x18x64xf32>
    %cst_0 = arith.constant 0.000000e+00 : f32
    %1 = vector.broadcast %cst_0 : f32 to vector<16x1x64xf32>
    %c0 = arith.constant 0 : index
    %c0_1 = arith.constant 0 : index
    %c0_2 = arith.constant 0 : index
    %2 = vector.load %arg11[%c0, %c0_1, %c0_2] : memref<18x18x64xf32, #tpu.memory_space<vmem>>, vector<1x18x64xf32>
    tpu.vector_store %arg11[%c0, %c0_1, %c0_2], %0 {strides = array<i32>} : memref<18x18x64xf32, #tpu.memory_space<vmem>>, vector<1x18x64xf32>,
    %c17 = arith.constant 17 : index
    %c0_3 = arith.constant 0 : index
    %c0_4 = arith.constant 0 : index
    %3 = vector.load %arg11[%c17, %c0_3, %c0_4] : memref<18x18x64xf32, #tpu.memory_space<vmem>>, vector<1x18x64xf32>
    tpu.vector_store %arg11[%c17, %c0_3, %c0_4], %0 {strides = array<i32>} : memref<18x18x64xf32, #tpu.memory_space<vmem>>, vector<1x18x64xf32>,
    %c1 = arith.constant 1 : index
    %c0_5 = arith.constant 0 : index
    %c0_6 = arith.constant 0 : index
    %4 = vector.load %arg11[%c1, %c0_5, %c0_6] : memref<18x18x64xf32, #tpu.memory_space<vmem>>, vector<16x1x64xf32>
    tpu.vector_store %arg11[%c1, %c0_5, %c0_6], %1 {strides = array<i32>} : memref<18x18x64xf32, #tpu.memory_space<vmem>>, vector<16x1x64xf32>,
    %c1_7 = arith.constant 1 : index
    %c17_8 = arith.constant 17 : index
    %c0_9 = arith.constant 0 : index
    %5 = vector.load %arg11[%c1_7, %c17_8, %c0_9] : memref<18x18x64xf32, #tpu.memory_space<vmem>>, vector<16x1x64xf32>
    tpu.vector_store %arg11[%c1_7, %c17_8, %c0_9], %1 {strides = array<i32>} : memref<18x18x64xf32, #tpu.memory_space<vmem>>, vector<16x1x64xf32>,
    %cst_10 = arith.constant 0.000000e+00 : f32
    %6 = vector.broadcast %cst_10 : f32 to vector<2x20x64xf32>
    %cst_11 = arith.constant 0.000000e+00 : f32
    %7 = vector.broadcast %cst_11 : f32 to vector<16x2x64xf32>
    %c0_12 = arith.constant 0 : index
    %c0_13 = arith.constant 0 : index
    %c0_14 = arith.constant 0 : index
    %8 = vector.load %arg12[%c0_12, %c0_13, %c0_14] : memref<20x20x64xf32, #tpu.memory_space<vmem>>, vector<2x20x64xf32>
    tpu.vector_store %arg12[%c0_12, %c0_13, %c0_14], %6 {strides = array<i32>} : memref<20x20x64xf32, #tpu.memory_space<vmem>>, vector<2x20x64xf32>,
    %c18 = arith.constant 18 : index
    %c0_15 = arith.constant 0 : index
    %c0_16 = arith.constant 0 : index
    %9 = vector.load %arg12[%c18, %c0_15, %c0_16] : memref<20x20x64xf32, #tpu.memory_space<vmem>>, vector<2x20x64xf32>
    tpu.vector_store %arg12[%c18, %c0_15, %c0_16], %6 {strides = array<i32>} : memref<20x20x64xf32, #tpu.memory_space<vmem>>, vector<2x20x64xf32>,
    %c2 = arith.constant 2 : index
    %c0_17 = arith.constant 0 : index
    %c0_18 = arith.constant 0 : index
    %10 = vector.load %arg12[%c2, %c0_17, %c0_18] : memref<20x20x64xf32, #tpu.memory_space<vmem>>, vector<16x2x64xf32>
    tpu.vector_store %arg12[%c2, %c0_17, %c0_18], %7 {strides = array<i32>} : memref<20x20x64xf32, #tpu.memory_space<vmem>>, vector<16x2x64xf32>,
    %c2_19 = arith.constant 2 : index
    %c18_20 = arith.constant 18 : index
    %c0_21 = arith.constant 0 : index
    %11 = vector.load %arg12[%c2_19, %c18_20, %c0_21] : memref<20x20x64xf32, #tpu.memory_space<vmem>>, vector<16x2x64xf32>
    tpu.vector_store %arg12[%c2_19, %c18_20, %c0_21], %7 {strides = array<i32>} : memref<20x20x64xf32, #tpu.memory_space<vmem>>, vector<16x2x64xf32>,
    %cst_22 = arith.constant 0xFF800000 : f32
    %12 = vector.broadcast %cst_22 : f32 to vector<1x18x4xf32>
    %cst_23 = arith.constant 0xFF800000 : f32
    %13 = vector.broadcast %cst_23 : f32 to vector<16x1x4xf32>
    %c0_24 = arith.constant 0 : index
    %c0_25 = arith.constant 0 : index
    %c0_26 = arith.constant 0 : index
    %14 = vector.load %arg13[%c0_24, %c0_25, %c0_26] : memref<18x18x4xf32, #tpu.memory_space<vmem>>, vector<1x18x4xf32>
    tpu.vector_store %arg13[%c0_24, %c0_25, %c0_26], %12 {strides = array<i32>} : memref<18x18x4xf32, #tpu.memory_space<vmem>>, vector<1x18x4xf32>,
    %c17_27 = arith.constant 17 : index
    %c0_28 = arith.constant 0 : index
    %c0_29 = arith.constant 0 : index
    %15 = vector.load %arg13[%c17_27, %c0_28, %c0_29] : memref<18x18x4xf32, #tpu.memory_space<vmem>>, vector<1x18x4xf32>
    tpu.vector_store %arg13[%c17_27, %c0_28, %c0_29], %12 {strides = array<i32>} : memref<18x18x4xf32, #tpu.memory_space<vmem>>, vector<1x18x4xf32>,
    %c1_30 = arith.constant 1 : index
    %c0_31 = arith.constant 0 : index
    %c0_32 = arith.constant 0 : index
    %16 = vector.load %arg13[%c1_30, %c0_31, %c0_32] : memref<18x18x4xf32, #tpu.memory_space<vmem>>, vector<16x1x4xf32>
    tpu.vector_store %arg13[%c1_30, %c0_31, %c0_32], %13 {strides = array<i32>} : memref<18x18x4xf32, #tpu.memory_space<vmem>>, vector<16x1x4xf32>,
    %c1_33 = arith.constant 1 : index
    %c17_34 = arith.constant 17 : index
    %c0_35 = arith.constant 0 : index
    %17 = vector.load %arg13[%c1_33, %c17_34, %c0_35] : memref<18x18x4xf32, #tpu.memory_space<vmem>>, vector<16x1x4xf32>
    tpu.vector_store %arg13[%c1_33, %c17_34, %c0_35], %13 {strides = array<i32>} : memref<18x18x4xf32, #tpu.memory_space<vmem>>, vector<16x1x4xf32>,
    %c0_36 = arith.constant 0 : index
    %c0_37 = arith.constant 0 : index
    %c0_38 = arith.constant 0 : index
    %c0_39 = arith.constant 0 : index
    %18 = vector.load %arg1[%c0_36, %c0_37, %c0_38, %c0_39] : memref<1x16x16x4xf32, #tpu.memory_space<vmem>>, vector<1x16x16x4xf32>
    %19 = vector.shape_cast %18 : vector<1x16x16x4xf32> to vector<16x16x4xf32>
    %20 = vector.shape_cast %19 : vector<16x16x4xf32> to vector<256x4xf32>
    %c0_40 = arith.constant 0 : index
    %c0_41 = arith.constant 0 : index
    %21 = vector.load %arg2[%c0_40, %c0_41] : memref<4x192xf32, #tpu.memory_space<vmem>>, vector<4x192xf32>
    %cst_42 = arith.constant dense<0.000000e+00> : vector<256x192xf32>
    %22 = tpu.matmul %20, %21, %cst_42 {dimension_numbers = #tpu.dot_dimension_numbers<[1], [0], [0], [1], [0, 0, 1, 1], [], []>} : vector<256x4xf32>, vector<4x192xf32>, vector<256x192xf32> -> vector<256x192xf32>
    %c0_43 = arith.constant 0 : index
    %c0_44 = arith.constant 0 : index
    %23 = vector.load %arg3[%c0_43, %c0_44] : memref<1x192xf32, #tpu.memory_space<vmem>>, vector<1x192xf32>
    %24 = vector.broadcast %23 : vector<1x192xf32> to vector<256x192xf32>
    %25 = arith.addf %22, %24 : vector<256x192xf32>
    %26 = vector.extract_strided_slice %25 {offsets = [0, 0], sizes = [256, 64], strides = [1, 1]} : vector<256x192xf32> to vector<256x64xf32>
    %27 = vector.extract_strided_slice %25 {offsets = [0, 64], sizes = [256, 64], strides = [1, 1]} : vector<256x192xf32> to vector<256x64xf32>
    %28 = vector.shape_cast %27 : vector<256x64xf32> to vector<16x16x64xf32>
    %c1_45 = arith.constant 1 : index
    %c1_46 = arith.constant 1 : index
    %c0_47 = arith.constant 0 : index
    %29 = vector.load %arg11[%c1_45, %c1_46, %c0_47] : memref<18x18x64xf32, #tpu.memory_space<vmem>>, vector<16x16x64xf32>
    tpu.vector_store %arg11[%c1_45, %c1_46, %c0_47], %28 {strides = array<i32>} : memref<18x18x64xf32, #tpu.memory_space<vmem>>, vector<16x16x64xf32>,
    %30 = vector.extract_strided_slice %25 {offsets = [0, 128], sizes = [256, 64], strides = [1, 1]} : vector<256x192xf32> to vector<256x64xf32>
    %31 = vector.shape_cast %30 : vector<256x64xf32> to vector<16x16x64xf32>
    %c2_48 = arith.constant 2 : index
    %c2_49 = arith.constant 2 : index
    %c0_50 = arith.constant 0 : index
    %32 = vector.load %arg12[%c2_48, %c2_49, %c0_50] : memref<20x20x64xf32, #tpu.memory_space<vmem>>, vector<16x16x64xf32>
    tpu.vector_store %arg12[%c2_48, %c2_49, %c0_50], %31 {strides = array<i32>} : memref<20x20x64xf32, #tpu.memory_space<vmem>>, vector<16x16x64xf32>,
    %c0_51 = arith.constant 0 : index
    %c0_52 = arith.constant 0 : index
    %c0_53 = arith.constant 0 : index
    %33 = vector.load %arg11[%c0_51, %c0_52, %c0_53] : memref<18x18x64xf32, #tpu.memory_space<vmem>>, vector<16x16x64xf32>
    %34 = vector.shape_cast %33 : vector<16x16x64xf32> to vector<256x64xf32>
    %c0_54 = arith.constant 0 : index
    %c0_55 = arith.constant 0 : index
    %35 = vector.load %arg14[%c0_54, %c0_55] : memref<256x576xf32, #tpu.memory_space<vmem>>, vector<256x64xf32>
    tpu.vector_store %arg14[%c0_54, %c0_55], %34 {strides = array<i32>} : memref<256x576xf32, #tpu.memory_space<vmem>>, vector<256x64xf32>,
    %c0_56 = arith.constant 0 : index
    %c1_57 = arith.constant 1 : index
    %c0_58 = arith.constant 0 : index
    %36 = vector.load %arg11[%c0_56, %c1_57, %c0_58] : memref<18x18x64xf32, #tpu.memory_space<vmem>>, vector<16x16x64xf32>
    %37 = vector.shape_cast %36 : vector<16x16x64xf32> to vector<256x64xf32>
    %c0_59 = arith.constant 0 : index
    %c64 = arith.constant 64 : index
    %38 = vector.load %arg14[%c0_59, %c64] : memref<256x576xf32, #tpu.memory_space<vmem>>, vector<256x64xf32>
    tpu.vector_store %arg14[%c0_59, %c64], %37 {strides = array<i32>} : memref<256x576xf32, #tpu.memory_space<vmem>>, vector<256x64xf32>,
    %c0_60 = arith.constant 0 : index
    %c2_61 = arith.constant 2 : index
    %c0_62 = arith.constant 0 : index
    %39 = vector.load %arg11[%c0_60, %c2_61, %c0_62] : memref<18x18x64xf32, #tpu.memory_space<vmem>>, vector<16x16x64xf32>
    %40 = vector.shape_cast %39 : vector<16x16x64xf32> to vector<256x64xf32>
    %c0_63 = arith.constant 0 : index
    %c128 = arith.constant 128 : index
    %41 = vector.load %arg14[%c0_63, %c128] : memref<256x576xf32, #tpu.memory_space<vmem>>, vector<256x64xf32>
    tpu.vector_store %arg14[%c0_63, %c128], %40 {strides = array<i32>} : memref<256x576xf32, #tpu.memory_space<vmem>>, vector<256x64xf32>,
    %c1_64 = arith.constant 1 : index
    %c0_65 = arith.constant 0 : index
    %c0_66 = arith.constant 0 : index
    %42 = vector.load %arg11[%c1_64, %c0_65, %c0_66] : memref<18x18x64xf32, #tpu.memory_space<vmem>>, vector<16x16x64xf32>
    %43 = vector.shape_cast %42 : vector<16x16x64xf32> to vector<256x64xf32>
    %c0_67 = arith.constant 0 : index
    %c192 = arith.constant 192 : index
    %44 = vector.load %arg14[%c0_67, %c192] : memref<256x576xf32, #tpu.memory_space<vmem>>, vector<256x64xf32>
    tpu.vector_store %arg14[%c0_67, %c192], %43 {strides = array<i32>} : memref<256x576xf32, #tpu.memory_space<vmem>>, vector<256x64xf32>,
    %c1_68 = arith.constant 1 : index
    %c1_69 = arith.constant 1 : index
    %c0_70 = arith.constant 0 : index
    %45 = vector.load %arg11[%c1_68, %c1_69, %c0_70] : memref<18x18x64xf32, #tpu.memory_space<vmem>>, vector<16x16x64xf32>
    %46 = vector.shape_cast %45 : vector<16x16x64xf32> to vector<256x64xf32>
    %c0_71 = arith.constant 0 : index
    %c256 = arith.constant 256 : index
    %47 = vector.load %arg14[%c0_71, %c256] : memref<256x576xf32, #tpu.memory_space<vmem>>, vector<256x64xf32>
    tpu.vector_store %arg14[%c0_71, %c256], %46 {strides = array<i32>} : memref<256x576xf32, #tpu.memory_space<vmem>>, vector<256x64xf32>,
    %c1_72 = arith.constant 1 : index
    %c2_73 = arith.constant 2 : index
    %c0_74 = arith.constant 0 : index
    %48 = vector.load %arg11[%c1_72, %c2_73, %c0_74] : memref<18x18x64xf32, #tpu.memory_space<vmem>>, vector<16x16x64xf32>
    %49 = vector.shape_cast %48 : vector<16x16x64xf32> to vector<256x64xf32>
    %c0_75 = arith.constant 0 : index
    %c320 = arith.constant 320 : index
    %50 = vector.load %arg14[%c0_75, %c320] : memref<256x576xf32, #tpu.memory_space<vmem>>, vector<256x64xf32>
    tpu.vector_store %arg14[%c0_75, %c320], %49 {strides = array<i32>} : memref<256x576xf32, #tpu.memory_space<vmem>>, vector<256x64xf32>,
    %c2_76 = arith.constant 2 : index
    %c0_77 = arith.constant 0 : index
    %c0_78 = arith.constant 0 : index
    %51 = vector.load %arg11[%c2_76, %c0_77, %c0_78] : memref<18x18x64xf32, #tpu.memory_space<vmem>>, vector<16x16x64xf32>
    %52 = vector.shape_cast %51 : vector<16x16x64xf32> to vector<256x64xf32>
    %c0_79 = arith.constant 0 : index
    %c384 = arith.constant 384 : index
    %53 = vector.load %arg14[%c0_79, %c384] : memref<256x576xf32, #tpu.memory_space<vmem>>, vector<256x64xf32>
    tpu.vector_store %arg14[%c0_79, %c384], %52 {strides = array<i32>} : memref<256x576xf32, #tpu.memory_space<vmem>>, vector<256x64xf32>,
    %c2_80 = arith.constant 2 : index
    %c1_81 = arith.constant 1 : index
    %c0_82 = arith.constant 0 : index
    %54 = vector.load %arg11[%c2_80, %c1_81, %c0_82] : memref<18x18x64xf32, #tpu.memory_space<vmem>>, vector<16x16x64xf32>
    %55 = vector.shape_cast %54 : vector<16x16x64xf32> to vector<256x64xf32>
    %c0_83 = arith.constant 0 : index
    %c448 = arith.constant 448 : index
    %56 = vector.load %arg14[%c0_83, %c448] : memref<256x576xf32, #tpu.memory_space<vmem>>, vector<256x64xf32>
    tpu.vector_store %arg14[%c0_83, %c448], %55 {strides = array<i32>} : memref<256x576xf32, #tpu.memory_space<vmem>>, vector<256x64xf32>,
    %c2_84 = arith.constant 2 : index
    %c2_85 = arith.constant 2 : index
    %c0_86 = arith.constant 0 : index
    %57 = vector.load %arg11[%c2_84, %c2_85, %c0_86] : memref<18x18x64xf32, #tpu.memory_space<vmem>>, vector<16x16x64xf32>
    %58 = vector.shape_cast %57 : vector<16x16x64xf32> to vector<256x64xf32>
    %c0_87 = arith.constant 0 : index
    %c512 = arith.constant 512 : index
    %59 = vector.load %arg14[%c0_87, %c512] : memref<256x576xf32, #tpu.memory_space<vmem>>, vector<256x64xf32>
    tpu.vector_store %arg14[%c0_87, %c512], %58 {strides = array<i32>} : memref<256x576xf32, #tpu.memory_space<vmem>>, vector<256x64xf32>,
    %c0_88 = arith.constant 0 : index
    %c0_89 = arith.constant 0 : index
    %c0_90 = arith.constant 0 : index
    %60 = vector.load %arg12[%c0_88, %c0_89, %c0_90] : memref<20x20x64xf32, #tpu.memory_space<vmem>>, vector<16x16x64xf32>
    %61 = vector.shape_cast %60 : vector<16x16x64xf32> to vector<256x64xf32>
    %c0_91 = arith.constant 0 : index
    %c0_92 = arith.constant 0 : index
    %62 = vector.load %arg15[%c0_91, %c0_92] : memref<256x1600xf32, #tpu.memory_space<vmem>>, vector<256x64xf32>
    tpu.vector_store %arg15[%c0_91, %c0_92], %61 {strides = array<i32>} : memref<256x1600xf32, #tpu.memory_space<vmem>>, vector<256x64xf32>,
    %c0_93 = arith.constant 0 : index
    %c1_94 = arith.constant 1 : index
    %c0_95 = arith.constant 0 : index
    %63 = vector.load %arg12[%c0_93, %c1_94, %c0_95] : memref<20x20x64xf32, #tpu.memory_space<vmem>>, vector<16x16x64xf32>
    %64 = vector.shape_cast %63 : vector<16x16x64xf32> to vector<256x64xf32>
    %c0_96 = arith.constant 0 : index
    %c64_97 = arith.constant 64 : index
    %65 = vector.load %arg15[%c0_96, %c64_97] : memref<256x1600xf32, #tpu.memory_space<vmem>>, vector<256x64xf32>
    tpu.vector_store %arg15[%c0_96, %c64_97], %64 {strides = array<i32>} : memref<256x1600xf32, #tpu.memory_space<vmem>>, vector<256x64xf32>,
    %c0_98 = arith.constant 0 : index
    %c2_99 = arith.constant 2 : index
    %c0_100 = arith.constant 0 : index
    %66 = vector.load %arg12[%c0_98, %c2_99, %c0_100] : memref<20x20x64xf32, #tpu.memory_space<vmem>>, vector<16x16x64xf32>
    %67 = vector.shape_cast %66 : vector<16x16x64xf32> to vector<256x64xf32>
    %c0_101 = arith.constant 0 : index
    %c128_102 = arith.constant 128 : index
    %68 = vector.load %arg15[%c0_101, %c128_102] : memref<256x1600xf32, #tpu.memory_space<vmem>>, vector<256x64xf32>
    tpu.vector_store %arg15[%c0_101, %c128_102], %67 {strides = array<i32>} : memref<256x1600xf32, #tpu.memory_space<vmem>>, vector<256x64xf32>,
    %c0_103 = arith.constant 0 : index
    %c3 = arith.constant 3 : index
    %c0_104 = arith.constant 0 : index
    %69 = vector.load %arg12[%c0_103, %c3, %c0_104] : memref<20x20x64xf32, #tpu.memory_space<vmem>>, vector<16x16x64xf32>
    %70 = vector.shape_cast %69 : vector<16x16x64xf32> to vector<256x64xf32>
    %c0_105 = arith.constant 0 : index
    %c192_106 = arith.constant 192 : index
    %71 = vector.load %arg15[%c0_105, %c192_106] : memref<256x1600xf32, #tpu.memory_space<vmem>>, vector<256x64xf32>
    tpu.vector_store %arg15[%c0_105, %c192_106], %70 {strides = array<i32>} : memref<256x1600xf32, #tpu.memory_space<vmem>>, vector<256x64xf32>,
    %c0_107 = arith.constant 0 : index
    %c4 = arith.constant 4 : index
    %c0_108 = arith.constant 0 : index
    %72 = vector.load %arg12[%c0_107, %c4, %c0_108] : memref<20x20x64xf32, #tpu.memory_space<vmem>>, vector<16x16x64xf32>
    %73 = vector.shape_cast %72 : vector<16x16x64xf32> to vector<256x64xf32>
    %c0_109 = arith.constant 0 : index
    %c256_110 = arith.constant 256 : index
    %74 = vector.load %arg15[%c0_109, %c256_110] : memref<256x1600xf32, #tpu.memory_space<vmem>>, vector<256x64xf32>
    tpu.vector_store %arg15[%c0_109, %c256_110], %73 {strides = array<i32>} : memref<256x1600xf32, #tpu.memory_space<vmem>>, vector<256x64xf32>,
    %c1_111 = arith.constant 1 : index
    %c0_112 = arith.constant 0 : index
    %c0_113 = arith.constant 0 : index
    %75 = vector.load %arg12[%c1_111, %c0_112, %c0_113] : memref<20x20x64xf32, #tpu.memory_space<vmem>>, vector<16x16x64xf32>
    %76 = vector.shape_cast %75 : vector<16x16x64xf32> to vector<256x64xf32>
    %c0_114 = arith.constant 0 : index
    %c320_115 = arith.constant 320 : index
    %77 = vector.load %arg15[%c0_114, %c320_115] : memref<256x1600xf32, #tpu.memory_space<vmem>>, vector<256x64xf32>
    tpu.vector_store %arg15[%c0_114, %c320_115], %76 {strides = array<i32>} : memref<256x1600xf32, #tpu.memory_space<vmem>>, vector<256x64xf32>,
    %c1_116 = arith.constant 1 : index
    %c1_117 = arith.constant 1 : index
    %c0_118 = arith.constant 0 : index
    %78 = vector.load %arg12[%c1_116, %c1_117, %c0_118] : memref<20x20x64xf32, #tpu.memory_space<vmem>>, vector<16x16x64xf32>
    %79 = vector.shape_cast %78 : vector<16x16x64xf32> to vector<256x64xf32>
    %c0_119 = arith.constant 0 : index
    %c384_120 = arith.constant 384 : index
    %80 = vector.load %arg15[%c0_119, %c384_120] : memref<256x1600xf32, #tpu.memory_space<vmem>>, vector<256x64xf32>
    tpu.vector_store %arg15[%c0_119, %c384_120], %79 {strides = array<i32>} : memref<256x1600xf32, #tpu.memory_space<vmem>>, vector<256x64xf32>,
    %c1_121 = arith.constant 1 : index
    %c2_122 = arith.constant 2 : index
    %c0_123 = arith.constant 0 : index
    %81 = vector.load %arg12[%c1_121, %c2_122, %c0_123] : memref<20x20x64xf32, #tpu.memory_space<vmem>>, vector<16x16x64xf32>
    %82 = vector.shape_cast %81 : vector<16x16x64xf32> to vector<256x64xf32>
    %c0_124 = arith.constant 0 : index
    %c448_125 = arith.constant 448 : index
    %83 = vector.load %arg15[%c0_124, %c448_125] : memref<256x1600xf32, #tpu.memory_space<vmem>>, vector<256x64xf32>
    tpu.vector_store %arg15[%c0_124, %c448_125], %82 {strides = array<i32>} : memref<256x1600xf32, #tpu.memory_space<vmem>>, vector<256x64xf32>,
    %c1_126 = arith.constant 1 : index
    %c3_127 = arith.constant 3 : index
    %c0_128 = arith.constant 0 : index
    %84 = vector.load %arg12[%c1_126, %c3_127, %c0_128] : memref<20x20x64xf32, #tpu.memory_space<vmem>>, vector<16x16x64xf32>
    %85 = vector.shape_cast %84 : vector<16x16x64xf32> to vector<256x64xf32>
    %c0_129 = arith.constant 0 : index
    %c512_130 = arith.constant 512 : index
    %86 = vector.load %arg15[%c0_129, %c512_130] : memref<256x1600xf32, #tpu.memory_space<vmem>>, vector<256x64xf32>
    tpu.vector_store %arg15[%c0_129, %c512_130], %85 {strides = array<i32>} : memref<256x1600xf32, #tpu.memory_space<vmem>>, vector<256x64xf32>,
    %c1_131 = arith.constant 1 : index
    %c4_132 = arith.constant 4 : index
    %c0_133 = arith.constant 0 : index
    %87 = vector.load %arg12[%c1_131, %c4_132, %c0_133] : memref<20x20x64xf32, #tpu.memory_space<vmem>>, vector<16x16x64xf32>
    %88 = vector.shape_cast %87 : vector<16x16x64xf32> to vector<256x64xf32>
    %c0_134 = arith.constant 0 : index
    %c576 = arith.constant 576 : index
    %89 = vector.load %arg15[%c0_134, %c576] : memref<256x1600xf32, #tpu.memory_space<vmem>>, vector<256x64xf32>
    tpu.vector_store %arg15[%c0_134, %c576], %88 {strides = array<i32>} : memref<256x1600xf32, #tpu.memory_space<vmem>>, vector<256x64xf32>,
    %c2_135 = arith.constant 2 : index
    %c0_136 = arith.constant 0 : index
    %c0_137 = arith.constant 0 : index
    %90 = vector.load %arg12[%c2_135, %c0_136, %c0_137] : memref<20x20x64xf32, #tpu.memory_space<vmem>>, vector<16x16x64xf32>
    %91 = vector.shape_cast %90 : vector<16x16x64xf32> to vector<256x64xf32>
    %c0_138 = arith.constant 0 : index
    %c640 = arith.constant 640 : index
    %92 = vector.load %arg15[%c0_138, %c640] : memref<256x1600xf32, #tpu.memory_space<vmem>>, vector<256x64xf32>
    tpu.vector_store %arg15[%c0_138, %c640], %91 {strides = array<i32>} : memref<256x1600xf32, #tpu.memory_space<vmem>>, vector<256x64xf32>,
    %c2_139 = arith.constant 2 : index
    %c1_140 = arith.constant 1 : index
    %c0_141 = arith.constant 0 : index
    %93 = vector.load %arg12[%c2_139, %c1_140, %c0_141] : memref<20x20x64xf32, #tpu.memory_space<vmem>>, vector<16x16x64xf32>
    %94 = vector.shape_cast %93 : vector<16x16x64xf32> to vector<256x64xf32>
    %c0_142 = arith.constant 0 : index
    %c704 = arith.constant 704 : index
    %95 = vector.load %arg15[%c0_142, %c704] : memref<256x1600xf32, #tpu.memory_space<vmem>>, vector<256x64xf32>
    tpu.vector_store %arg15[%c0_142, %c704], %94 {strides = array<i32>} : memref<256x1600xf32, #tpu.memory_space<vmem>>, vector<256x64xf32>,
    %c2_143 = arith.constant 2 : index
    %c2_144 = arith.constant 2 : index
    %c0_145 = arith.constant 0 : index
    %96 = vector.load %arg12[%c2_143, %c2_144, %c0_145] : memref<20x20x64xf32, #tpu.memory_space<vmem>>, vector<16x16x64xf32>
    %97 = vector.shape_cast %96 : vector<16x16x64xf32> to vector<256x64xf32>
    %c0_146 = arith.constant 0 : index
    %c768 = arith.constant 768 : index
    %98 = vector.load %arg15[%c0_146, %c768] : memref<256x1600xf32, #tpu.memory_space<vmem>>, vector<256x64xf32>
    tpu.vector_store %arg15[%c0_146, %c768], %97 {strides = array<i32>} : memref<256x1600xf32, #tpu.memory_space<vmem>>, vector<256x64xf32>,
    %c2_147 = arith.constant 2 : index
    %c3_148 = arith.constant 3 : index
    %c0_149 = arith.constant 0 : index
    %99 = vector.load %arg12[%c2_147, %c3_148, %c0_149] : memref<20x20x64xf32, #tpu.memory_space<vmem>>, vector<16x16x64xf32>
    %100 = vector.shape_cast %99 : vector<16x16x64xf32> to vector<256x64xf32>
    %c0_150 = arith.constant 0 : index
    %c832 = arith.constant 832 : index
    %101 = vector.load %arg15[%c0_150, %c832] : memref<256x1600xf32, #tpu.memory_space<vmem>>, vector<256x64xf32>
    tpu.vector_store %arg15[%c0_150, %c832], %100 {strides = array<i32>} : memref<256x1600xf32, #tpu.memory_space<vmem>>, vector<256x64xf32>,
    %c2_151 = arith.constant 2 : index
    %c4_152 = arith.constant 4 : index
    %c0_153 = arith.constant 0 : index
    %102 = vector.load %arg12[%c2_151, %c4_152, %c0_153] : memref<20x20x64xf32, #tpu.memory_space<vmem>>, vector<16x16x64xf32>
    %103 = vector.shape_cast %102 : vector<16x16x64xf32> to vector<256x64xf32>
    %c0_154 = arith.constant 0 : index
    %c896 = arith.constant 896 : index
    %104 = vector.load %arg15[%c0_154, %c896] : memref<256x1600xf32, #tpu.memory_space<vmem>>, vector<256x64xf32>
    tpu.vector_store %arg15[%c0_154, %c896], %103 {strides = array<i32>} : memref<256x1600xf32, #tpu.memory_space<vmem>>, vector<256x64xf32>,
    %c3_155 = arith.constant 3 : index
    %c0_156 = arith.constant 0 : index
    %c0_157 = arith.constant 0 : index
    %105 = vector.load %arg12[%c3_155, %c0_156, %c0_157] : memref<20x20x64xf32, #tpu.memory_space<vmem>>, vector<16x16x64xf32>
    %106 = vector.shape_cast %105 : vector<16x16x64xf32> to vector<256x64xf32>
    %c0_158 = arith.constant 0 : index
    %c960 = arith.constant 960 : index
    %107 = vector.load %arg15[%c0_158, %c960] : memref<256x1600xf32, #tpu.memory_space<vmem>>, vector<256x64xf32>
    tpu.vector_store %arg15[%c0_158, %c960], %106 {strides = array<i32>} : memref<256x1600xf32, #tpu.memory_space<vmem>>, vector<256x64xf32>,
    %c3_159 = arith.constant 3 : index
    %c1_160 = arith.constant 1 : index
    %c0_161 = arith.constant 0 : index
    %108 = vector.load %arg12[%c3_159, %c1_160, %c0_161] : memref<20x20x64xf32, #tpu.memory_space<vmem>>, vector<16x16x64xf32>
    %109 = vector.shape_cast %108 : vector<16x16x64xf32> to vector<256x64xf32>
    %c0_162 = arith.constant 0 : index
    %c1024 = arith.constant 1024 : index
    %110 = vector.load %arg15[%c0_162, %c1024] : memref<256x1600xf32, #tpu.memory_space<vmem>>, vector<256x64xf32>
    tpu.vector_store %arg15[%c0_162, %c1024], %109 {strides = array<i32>} : memref<256x1600xf32, #tpu.memory_space<vmem>>, vector<256x64xf32>,
    %c3_163 = arith.constant 3 : index
    %c2_164 = arith.constant 2 : index
    %c0_165 = arith.constant 0 : index
    %111 = vector.load %arg12[%c3_163, %c2_164, %c0_165] : memref<20x20x64xf32, #tpu.memory_space<vmem>>, vector<16x16x64xf32>
    %112 = vector.shape_cast %111 : vector<16x16x64xf32> to vector<256x64xf32>
    %c0_166 = arith.constant 0 : index
    %c1088 = arith.constant 1088 : index
    %113 = vector.load %arg15[%c0_166, %c1088] : memref<256x1600xf32, #tpu.memory_space<vmem>>, vector<256x64xf32>
    tpu.vector_store %arg15[%c0_166, %c1088], %112 {strides = array<i32>} : memref<256x1600xf32, #tpu.memory_space<vmem>>, vector<256x64xf32>,
    %c3_167 = arith.constant 3 : index
    %c3_168 = arith.constant 3 : index
    %c0_169 = arith.constant 0 : index
    %114 = vector.load %arg12[%c3_167, %c3_168, %c0_169] : memref<20x20x64xf32, #tpu.memory_space<vmem>>, vector<16x16x64xf32>
    %115 = vector.shape_cast %114 : vector<16x16x64xf32> to vector<256x64xf32>
    %c0_170 = arith.constant 0 : index
    %c1152 = arith.constant 1152 : index
    %116 = vector.load %arg15[%c0_170, %c1152] : memref<256x1600xf32, #tpu.memory_space<vmem>>, vector<256x64xf32>
    tpu.vector_store %arg15[%c0_170, %c1152], %115 {strides = array<i32>} : memref<256x1600xf32, #tpu.memory_space<vmem>>, vector<256x64xf32>,
    %c3_171 = arith.constant 3 : index
    %c4_172 = arith.constant 4 : index
    %c0_173 = arith.constant 0 : index
    %117 = vector.load %arg12[%c3_171, %c4_172, %c0_173] : memref<20x20x64xf32, #tpu.memory_space<vmem>>, vector<16x16x64xf32>
    %118 = vector.shape_cast %117 : vector<16x16x64xf32> to vector<256x64xf32>
    %c0_174 = arith.constant 0 : index
    %c1216 = arith.constant 1216 : index
    %119 = vector.load %arg15[%c0_174, %c1216] : memref<256x1600xf32, #tpu.memory_space<vmem>>, vector<256x64xf32>
    tpu.vector_store %arg15[%c0_174, %c1216], %118 {strides = array<i32>} : memref<256x1600xf32, #tpu.memory_space<vmem>>, vector<256x64xf32>,
    %c4_175 = arith.constant 4 : index
    %c0_176 = arith.constant 0 : index
    %c0_177 = arith.constant 0 : index
    %120 = vector.load %arg12[%c4_175, %c0_176, %c0_177] : memref<20x20x64xf32, #tpu.memory_space<vmem>>, vector<16x16x64xf32>
    %121 = vector.shape_cast %120 : vector<16x16x64xf32> to vector<256x64xf32>
    %c0_178 = arith.constant 0 : index
    %c1280 = arith.constant 1280 : index
    %122 = vector.load %arg15[%c0_178, %c1280] : memref<256x1600xf32, #tpu.memory_space<vmem>>, vector<256x64xf32>
    tpu.vector_store %arg15[%c0_178, %c1280], %121 {strides = array<i32>} : memref<256x1600xf32, #tpu.memory_space<vmem>>, vector<256x64xf32>,
    %c4_179 = arith.constant 4 : index
    %c1_180 = arith.constant 1 : index
    %c0_181 = arith.constant 0 : index
    %123 = vector.load %arg12[%c4_179, %c1_180, %c0_181] : memref<20x20x64xf32, #tpu.memory_space<vmem>>, vector<16x16x64xf32>
    %124 = vector.shape_cast %123 : vector<16x16x64xf32> to vector<256x64xf32>
    %c0_182 = arith.constant 0 : index
    %c1344 = arith.constant 1344 : index
    %125 = vector.load %arg15[%c0_182, %c1344] : memref<256x1600xf32, #tpu.memory_space<vmem>>, vector<256x64xf32>
    tpu.vector_store %arg15[%c0_182, %c1344], %124 {strides = array<i32>} : memref<256x1600xf32, #tpu.memory_space<vmem>>, vector<256x64xf32>,
    %c4_183 = arith.constant 4 : index
    %c2_184 = arith.constant 2 : index
    %c0_185 = arith.constant 0 : index
    %126 = vector.load %arg12[%c4_183, %c2_184, %c0_185] : memref<20x20x64xf32, #tpu.memory_space<vmem>>, vector<16x16x64xf32>
    %127 = vector.shape_cast %126 : vector<16x16x64xf32> to vector<256x64xf32>
    %c0_186 = arith.constant 0 : index
    %c1408 = arith.constant 1408 : index
    %128 = vector.load %arg15[%c0_186, %c1408] : memref<256x1600xf32, #tpu.memory_space<vmem>>, vector<256x64xf32>
    tpu.vector_store %arg15[%c0_186, %c1408], %127 {strides = array<i32>} : memref<256x1600xf32, #tpu.memory_space<vmem>>, vector<256x64xf32>,
    %c4_187 = arith.constant 4 : index
    %c3_188 = arith.constant 3 : index
    %c0_189 = arith.constant 0 : index
    %129 = vector.load %arg12[%c4_187, %c3_188, %c0_189] : memref<20x20x64xf32, #tpu.memory_space<vmem>>, vector<16x16x64xf32>
    %130 = vector.shape_cast %129 : vector<16x16x64xf32> to vector<256x64xf32>
    %c0_190 = arith.constant 0 : index
    %c1472 = arith.constant 1472 : index
    %131 = vector.load %arg15[%c0_190, %c1472] : memref<256x1600xf32, #tpu.memory_space<vmem>>, vector<256x64xf32>
    tpu.vector_store %arg15[%c0_190, %c1472], %130 {strides = array<i32>} : memref<256x1600xf32, #tpu.memory_space<vmem>>, vector<256x64xf32>,
    %c4_191 = arith.constant 4 : index
    %c4_192 = arith.constant 4 : index
    %c0_193 = arith.constant 0 : index
    %132 = vector.load %arg12[%c4_191, %c4_192, %c0_193] : memref<20x20x64xf32, #tpu.memory_space<vmem>>, vector<16x16x64xf32>
    %133 = vector.shape_cast %132 : vector<16x16x64xf32> to vector<256x64xf32>
    %c0_194 = arith.constant 0 : index
    %c1536 = arith.constant 1536 : index
    %134 = vector.load %arg15[%c0_194, %c1536] : memref<256x1600xf32, #tpu.memory_space<vmem>>, vector<256x64xf32>
    tpu.vector_store %arg15[%c0_194, %c1536], %133 {strides = array<i32>} : memref<256x1600xf32, #tpu.memory_space<vmem>>, vector<256x64xf32>,
    %c0_195 = arith.constant 0 : index
    %c0_196 = arith.constant 0 : index
    %135 = vector.load %arg14[%c0_195, %c0_196] : memref<256x576xf32, #tpu.memory_space<vmem>>, vector<256x576xf32>
    %c0_197 = arith.constant 0 : index
    %c0_198 = arith.constant 0 : index
    %136 = vector.load %arg4[%c0_197, %c0_198] : memref<576x64xf32, #tpu.memory_space<vmem>>, vector<576x64xf32>
    %cst_199 = arith.constant dense<0.000000e+00> : vector<256x64xf32>
    %137 = tpu.matmul %135, %136, %cst_199 {dimension_numbers = #tpu.dot_dimension_numbers<[1], [0], [0], [1], [0, 0, 1, 1], [], []>} : vector<256x576xf32>, vector<576x64xf32>, vector<256x64xf32> -> vector<256x64xf32>
    %c0_200 = arith.constant 0 : index
    %c0_201 = arith.constant 0 : index
    %138 = vector.load %arg5[%c0_200, %c0_201] : memref<1x64xf32, #tpu.memory_space<vmem>>, vector<1x64xf32>
    %139 = vector.broadcast %138 : vector<1x64xf32> to vector<256x64xf32>
    %140 = arith.addf %137, %139 : vector<256x64xf32>
    %c0_202 = arith.constant 0 : index
    %c0_203 = arith.constant 0 : index
    %141 = vector.load %arg15[%c0_202, %c0_203] : memref<256x1600xf32, #tpu.memory_space<vmem>>, vector<256x1600xf32>
    %c0_204 = arith.constant 0 : index
    %c0_205 = arith.constant 0 : index
    %142 = vector.load %arg6[%c0_204, %c0_205] : memref<1600x64xf32, #tpu.memory_space<vmem>>, vector<1600x64xf32>
    %cst_206 = arith.constant dense<0.000000e+00> : vector<256x64xf32>
    %143 = tpu.matmul %141, %142, %cst_206 {dimension_numbers = #tpu.dot_dimension_numbers<[1], [0], [0], [1], [0, 0, 1, 1], [], []>} : vector<256x1600xf32>, vector<1600x64xf32>, vector<256x64xf32> -> vector<256x64xf32>
    %c0_207 = arith.constant 0 : index
    %c0_208 = arith.constant 0 : index
    %144 = vector.load %arg7[%c0_207, %c0_208] : memref<1x64xf32, #tpu.memory_space<vmem>>, vector<1x64xf32>
    %145 = vector.broadcast %144 : vector<1x64xf32> to vector<256x64xf32>
    %146 = arith.addf %143, %145 : vector<256x64xf32>
    %c1_209 = arith.constant 1 : index
    %c1_210 = arith.constant 1 : index
    %c0_211 = arith.constant 0 : index
    %147 = vector.load %arg13[%c1_209, %c1_210, %c0_211] : memref<18x18x4xf32, #tpu.memory_space<vmem>>, vector<16x16x4xf32>
    tpu.vector_store %arg13[%c1_209, %c1_210, %c0_211], %19 {strides = array<i32>} : memref<18x18x4xf32, #tpu.memory_space<vmem>>, vector<16x16x4xf32>,
    %c0_212 = arith.constant 0 : index
    %c0_213 = arith.constant 0 : index
    %c0_214 = arith.constant 0 : index
    %148 = vector.load %arg13[%c0_212, %c0_213, %c0_214] : memref<18x18x4xf32, #tpu.memory_space<vmem>>, vector<18x18x4xf32>
    %149 = vector.extract_strided_slice %148 {offsets = [0, 0, 0], sizes = [16, 18, 4], strides = [1, 1, 1]} : vector<18x18x4xf32> to vector<16x18x4xf32>
    %150 = vector.extract_strided_slice %148 {offsets = [1, 0, 0], sizes = [16, 18, 4], strides = [1, 1, 1]} : vector<18x18x4xf32> to vector<16x18x4xf32>
    %151 = arith.maximumf %149, %150 : vector<16x18x4xf32>
    %152 = vector.extract_strided_slice %148 {offsets = [2, 0, 0], sizes = [16, 18, 4], strides = [1, 1, 1]} : vector<18x18x4xf32> to vector<16x18x4xf32>
    %153 = arith.maximumf %151, %152 : vector<16x18x4xf32>
    %154 = vector.extract_strided_slice %153 {offsets = [0, 0, 0], sizes = [16, 16, 4], strides = [1, 1, 1]} : vector<16x18x4xf32> to vector<16x16x4xf32>
    %155 = vector.extract_strided_slice %153 {offsets = [0, 1, 0], sizes = [16, 16, 4], strides = [1, 1, 1]} : vector<16x18x4xf32> to vector<16x16x4xf32>
    %156 = arith.maximumf %154, %155 : vector<16x16x4xf32>
    %157 = vector.extract_strided_slice %153 {offsets = [0, 2, 0], sizes = [16, 16, 4], strides = [1, 1, 1]} : vector<16x18x4xf32> to vector<16x16x4xf32>
    %158 = arith.maximumf %156, %157 : vector<16x16x4xf32>
    %159 = vector.shape_cast %158 : vector<16x16x4xf32> to vector<256x4xf32>
    %c0_215 = arith.constant 0 : index
    %c0_216 = arith.constant 0 : index
    %160 = vector.load %arg8[%c0_215, %c0_216] : memref<4x64xf32, #tpu.memory_space<vmem>>, vector<4x64xf32>
    %cst_217 = arith.constant dense<0.000000e+00> : vector<256x64xf32>
    %161 = tpu.matmul %159, %160, %cst_217 {dimension_numbers = #tpu.dot_dimension_numbers<[1], [0], [0], [1], [0, 0, 1, 1], [], []>} : vector<256x4xf32>, vector<4x64xf32>, vector<256x64xf32> -> vector<256x64xf32>
    %c0_218 = arith.constant 0 : index
    %c0_219 = arith.constant 0 : index
    %162 = vector.load %arg9[%c0_218, %c0_219] : memref<1x64xf32, #tpu.memory_space<vmem>>, vector<1x64xf32>
    %163 = vector.broadcast %162 : vector<1x64xf32> to vector<256x64xf32>
    %164 = arith.addf %161, %163 : vector<256x64xf32>
    %165 = tpu.concatenate %26, %140, %146, %164 in 1 : vector<256x64xf32>, vector<256x64xf32>, vector<256x64xf32>, vector<256x64xf32> -> vector<256x256xf32>
    %166 = vector.shape_cast %165 : vector<256x256xf32> to vector<16x16x256xf32>
    %c0_220 = arith.constant 0 : index
    %c0_221 = arith.constant 0 : index
    %c0_222 = arith.constant 0 : index
    %c0_223 = arith.constant 0 : index
    %167 = vector.load %arg10[%c0_220, %c0_221, %c0_222, %c0_223] : memref<1x16x16x256xf32, #tpu.memory_space<vmem>>, vector<1x16x16x256xf32>
    %168 = vector.shape_cast %167 : vector<1x16x16x256xf32> to vector<16x16x256xf32>
    %169 = vector.shape_cast %166 : vector<16x16x256xf32> to vector<1x16x16x256xf32>
    tpu.vector_store %arg10[%c0_220, %c0_221, %c0_222, %c0_223], %169 {strides = array<i32>} : memref<1x16x16x256xf32, #tpu.memory_space<vmem>>, vector<1x16x16x256xf32>,
    return
  }
  func.func @transform_0(%arg0: i32) -> (i32, i32, i32, i32) {
    %c0_i32 = arith.constant 0 : i32
    %c0_i32_0 = arith.constant 0 : i32
    %c0_i32_1 = arith.constant 0 : i32
    %c0_i32_2 = arith.constant 0 : i32
    return %arg0, %c0_i32, %c0_i32_0, %c0_i32_1 : i32, i32, i32, i32
  }
  func.func @transform_1(%arg0: i32) -> (i32, i32) {
    %c0_i32 = arith.constant 0 : i32
    %c0_i32_0 = arith.constant 0 : i32
    %c0_i32_1 = arith.constant 0 : i32
    return %c0_i32, %c0_i32_0 : i32, i32
  }
  func.func @transform_2(%arg0: i32) -> (i32, i32) {
    %c0_i32 = arith.constant 0 : i32
    %c0_i32_0 = arith.constant 0 : i32
    %c0_i32_1 = arith.constant 0 : i32
    return %c0_i32, %c0_i32_0 : i32, i32
  }
  func.func @transform_3(%arg0: i32) -> (i32, i32) {
    %c0_i32 = arith.constant 0 : i32
    %c0_i32_0 = arith.constant 0 : i32
    %c0_i32_1 = arith.constant 0 : i32
    return %c0_i32, %c0_i32_0 : i32, i32
  }
  func.func @transform_4(%arg0: i32) -> (i32, i32) {
    %c0_i32 = arith.constant 0 : i32
    %c0_i32_0 = arith.constant 0 : i32
    %c0_i32_1 = arith.constant 0 : i32
    return %c0_i32, %c0_i32_0 : i32, i32
  }
  func.func @transform_5(%arg0: i32) -> (i32, i32) {
    %c0_i32 = arith.constant 0 : i32
    %c0_i32_0 = arith.constant 0 : i32
    %c0_i32_1 = arith.constant 0 : i32
    return %c0_i32, %c0_i32_0 : i32, i32
  }
  func.func @transform_6(%arg0: i32) -> (i32, i32) {
    %c0_i32 = arith.constant 0 : i32
    %c0_i32_0 = arith.constant 0 : i32
    %c0_i32_1 = arith.constant 0 : i32
    return %c0_i32, %c0_i32_0 : i32, i32
  }
  func.func @transform_7(%arg0: i32) -> (i32, i32) {
    %c0_i32 = arith.constant 0 : i32
    %c0_i32_0 = arith.constant 0 : i32
    %c0_i32_1 = arith.constant 0 : i32
    return %c0_i32, %c0_i32_0 : i32, i32
  }
  func.func @transform_8(%arg0: i32) -> (i32, i32) {
    %c0_i32 = arith.constant 0 : i32
    %c0_i32_0 = arith.constant 0 : i32
    %c0_i32_1 = arith.constant 0 : i32
    return %c0_i32, %c0_i32_0 : i32, i32
  }
  func.func @transform_9(%arg0: i32) -> (i32, i32, i32, i32) {
    %c0_i32 = arith.constant 0 : i32
    %c0_i32_0 = arith.constant 0 : i32
    %c0_i32_1 = arith.constant 0 : i32
    %c0_i32_2 = arith.constant 0 : i32
    return %arg0, %c0_i32, %c0_i32_0, %c0_i32_1 : i32, i32, i32, i32
  }
}

</mosaic_0001>

<llo_original>
// kernel: tpu_custom_call.1
$region0: #{tpu_custom_call.1}
  #allocation0 [shape = 'u32[]', space=smem, size = 0x4, offset = 0x4, fixed_abs, tag = 'smem constant byte address 0x4 - core index']
  #allocation1 [shape = 'u32[144,128]{1,0:T(1,128)}', space=vmem, size = 0x12000, scoped, tag = 'internal scratch']
  #allocation2 [shape = 'f32[18,18,64]{2,1,0:T(8,128)}', space=vmem, size = 0x36000, scoped, tag = 'scratch operand']
  #allocation3 [shape = 'f32[20,20,64]{2,1,0:T(8,128)}', space=vmem, size = 0x3c000, scoped, tag = 'scratch operand']
  #allocation4 [shape = 'f32[18,18,4]{2,1,0:T(8,128)}', space=vmem, size = 0x36000, scoped, tag = 'scratch operand']
  #allocation5 [shape = 'f32[256,576]{1,0:T(8,128)}', space=vmem, size = 0xa0000, scoped, tag = 'scratch operand']
  #allocation6 [shape = 'f32[256,1600]{1,0:T(8,128)}', space=vmem, size = 0x1a0000, scoped, tag = 'scratch operand']
  %s0 = inlined_call_operand.vmem [shape: f32[2,16,16,4], index: 0, kind: input, shape index: {}]
  %s1 = inlined_call_operand.vmem [shape: f32[4,192], index: 1, kind: input, shape index: {}]
  %s2 = inlined_call_operand.vmem [shape: f32[1,192], index: 2, kind: input, shape index: {}]
  %s3 = inlined_call_operand.vmem [shape: f32[576,64], index: 3, kind: input, shape index: {}]
  %s4 = inlined_call_operand.vmem [shape: f32[1,64], index: 4, kind: input, shape index: {}]
  %s5 = inlined_call_operand.vmem [shape: f32[1600,64], index: 5, kind: input, shape index: {}]
  %s6 = inlined_call_operand.vmem [shape: f32[1,64], index: 6, kind: input, shape index: {}]
  %s7 = inlined_call_operand.vmem [shape: f32[4,64], index: 7, kind: input, shape index: {}]
  %s8 = inlined_call_operand.vmem [shape: f32[1,64], index: 8, kind: input, shape index: {}]
  %s9 = inlined_call_operand.hbm [shape: f32[2,16,16,256], index: 9, kind: output, shape index: {}]
  %s10 = sld [smem:[#allocation0]]
  $region69: #{tpu_custom_call.1} parent=0
    _
  %s12 = ssub.s32 1, %s10
  %s13 = scalar_select 0, %s12, %s10
  $region1: #{tpu_custom_call.1} parent=0
    #allocation7 [shape = 'u8[524288]{0}', space=vmem, size = 0x80000, scoped, tag = 'output window, operand 0']
    #allocation8 [shape = 's32[2]{0}', space=sflag, size = 0x8, scoped, tag = 'scoped memory for tpu_custom_call.1']
    %14 = vsyncpa [#allocation8], 0
    %s15 = scalar_lea.sflag [#allocation8], 1
    %16 = vsyncpa %s15, 0
    loop: start=0, step=1, limit=4
    $region2: #{tpu_custom_call.1} parent=1 // loop_pre_header
      _
    $region3: #{tpu_custom_call.1} parent=1 // loop_header
      %s18 = sphi 0, %s22
      %p19 = scmp.ge.s32.totalorder %s18, 4
      %s28 = sphi 0, %s30
      %s31 = sphi 0, %s28
      %s32 = sphi 0, %s31
      %s48 = sphi 0, %s32
      %s52 = sphi 0, %s52
      %s54 = sphi 0, %s52
      %s55 = sphi 0, %s54
      %s69 = sphi 0, %s55
      %s73 = sphi 0, %s73
      %s75 = sphi 0, %s73
      %s76 = sphi 0, %s75
      %s90 = sphi 0, %s76
      %s94 = sphi 0, %s94
      %s96 = sphi 0, %s94
      %s97 = sphi 0, %s96
      %s111 = sphi 0, %s97
      %s115 = sphi 0, %s115
      %s117 = sphi 0, %s115
      %s118 = sphi 0, %s117
      %s132 = sphi 0, %s118
      %s136 = sphi 0, %s136
      %s138 = sphi 0, %s136
      %s139 = sphi 0, %s138
      %s153 = sphi 0, %s139
      %s157 = sphi 0, %s157
      %s159 = sphi 0, %s157
      %s160 = sphi 0, %s159
      %s174 = sphi 0, %s160
      %s178 = sphi 0, %s178
      %s180 = sphi 0, %s178
      %s181 = sphi 0, %s180
      %s195 = sphi 0, %s181
      %s199 = sphi 0, %s199
      %s201 = sphi 0, %s199
      %s202 = sphi 0, %s201
      %s216 = sphi 0, %s202
      %s222 = sphi 0, %s224
      %s225 = sphi 0, %s222
      %s226 = sphi 0, %s225
      %s242 = sphi 0, %s226
    $region4: #{tpu_custom_call.1} parent=1 // loop_header_branch
      %21 = sbr.rel (%p19) target = $region8
    $region5: #{tpu_custom_call.1} parent=1 // loop_body
      %s23 = ssub.s32 %s18, 1
      %s24 = ssub.s32 %s18, 2
      %s25 = sadd.s32 %s18, 1
      %s26 = ssub.s32 %s18, %s25
      %p27 = scmp.eq.s32.totalorder %s26, 0
      %s29 = sadd.s32 %s28, 1
      %s30 = scalar_select %p27, %s28, %s29
      %p33 = pneg %p27
      %p34 = scmp.eq.s32.totalorder %s18, 1
      %p35 = por %p33, %p34
      %p36 = scmp.ne.s32.totalorder %s28, %s31
      %p37 = scmp.eq.s32.totalorder %s18, 0
      %p38 = por %p36, %p37
      %p39 = scmp.ne.s32.totalorder %s28, %s31
      %p40 = scmp.eq.s32.totalorder %s23, 1
      %p41 = por %p39, %p40
      %p42 = scmp.ne.s32.totalorder %s31, %s32
      %p43 = scmp.eq.s32.totalorder %s23, 0
      %p44 = por %p42, %p43
      %p45 = scmp.ne.s32.totalorder %s31, %s32
      %p46 = scmp.eq.s32.totalorder %s24, 1
      %p47 = por %p45, %p46
      %p49 = scmp.ne.s32.totalorder %s32, %s48
      %p50 = scmp.eq.s32.totalorder %s24, 0
      %p51 = por %p49, %p50
      %s53 = sadd.s32 %s52, 1
      %p56 = scmp.eq.s32.totalorder %s18, 1
      %p57 = scmp.ne.s32.totalorder %s52, %s54
      %p58 = scmp.eq.s32.totalorder %s18, 0
      %p59 = por %p57, %p58
      %p60 = scmp.ne.s32.totalorder %s52, %s54
      %p61 = scmp.eq.s32.totalorder %s23, 1
      %p62 = por %p60, %p61
      %p63 = scmp.ne.s32.totalorder %s54, %s55
      %p64 = scmp.eq.s32.totalorder %s23, 0
      %p65 = por %p63, %p64
      %p66 = scmp.ne.s32.totalorder %s54, %s55
      %p67 = scmp.eq.s32.totalorder %s24, 1
      %p68 = por %p66, %p67
      %p70 = scmp.ne.s32.totalorder %s55, %s69
      %p71 = scmp.eq.s32.totalorder %s24, 0
      %p72 = por %p70, %p71
      %s74 = sadd.s32 %s73, 1
      %p77 = scmp.eq.s32.totalorder %s18, 1
      %p78 = scmp.ne.s32.totalorder %s73, %s75
      %p79 = scmp.eq.s32.totalorder %s18, 0
      %p80 = por %p78, %p79
      %p81 = scmp.ne.s32.totalorder %s73, %s75
      %p82 = scmp.eq.s32.totalorder %s23, 1
      %p83 = por %p81, %p82
      %p84 = scmp.ne.s32.totalorder %s75, %s76
      %p85 = scmp.eq.s32.totalorder %s23, 0
      %p86 = por %p84, %p85
      %p87 = scmp.ne.s32.totalorder %s75, %s76
      %p88 = scmp.eq.s32.totalorder %s24, 1
      %p89 = por %p87, %p88
      %p91 = scmp.ne.s32.totalorder %s76, %s90
      %p92 = scmp.eq.s32.totalorder %s24, 0
      %p93 = por %p91, %p92
      %s95 = sadd.s32 %s94, 1
      %p98 = scmp.eq.s32.totalorder %s18, 1
      %p99 = scmp.ne.s32.totalorder %s94, %s96
      %p100 = scmp.eq.s32.totalorder %s18, 0
      %p101 = por %p99, %p100
      %p102 = scmp.ne.s32.totalorder %s94, %s96
      %p103 = scmp.eq.s32.totalorder %s23, 1
      %p104 = por %p102, %p103
      %p105 = scmp.ne.s32.totalorder %s96, %s97
      %p106 = scmp.eq.s32.totalorder %s23, 0
      %p107 = por %p105, %p106
      %p108 = scmp.ne.s32.totalorder %s96, %s97
      %p109 = scmp.eq.s32.totalorder %s24, 1
      %p110 = por %p108, %p109
      %p112 = scmp.ne.s32.totalorder %s97, %s111
      %p113 = scmp.eq.s32.totalorder %s24, 0
      %p114 = por %p112, %p113
      %s116 = sadd.s32 %s115, 1
      %p119 = scmp.eq.s32.totalorder %s18, 1
      %p120 = scmp.ne.s32.totalorder %s115, %s117
      %p121 = scmp.eq.s32.totalorder %s18, 0
      %p122 = por %p120, %p121
      %p123 = scmp.ne.s32.totalorder %s115, %s117
      %p124 = scmp.eq.s32.totalorder %s23, 1
      %p125 = por %p123, %p124
      %p126 = scmp.ne.s32.totalorder %s117, %s118
      %p127 = scmp.eq.s32.totalorder %s23, 0
      %p128 = por %p126, %p127
      %p129 = scmp.ne.s32.totalorder %s117, %s118
      %p130 = scmp.eq.s32.totalorder %s24, 1
      %p131 = por %p129, %p130
      %p133 = scmp.ne.s32.totalorder %s118, %s132
      %p134 = scmp.eq.s32.totalorder %s24, 0
      %p135 = por %p133, %p134
      %s137 = sadd.s32 %s136, 1
      %p140 = scmp.eq.s32.totalorder %s18, 1
      %p141 = scmp.ne.s32.totalorder %s136, %s138
      %p142 = scmp.eq.s32.totalorder %s18, 0
      %p143 = por %p141, %p142
      %p144 = scmp.ne.s32.totalorder %s136, %s138
      %p145 = scmp.eq.s32.totalorder %s23, 1
      %p146 = por %p144, %p145
      %p147 = scmp.ne.s32.totalorder %s138, %s139
      %p148 = scmp.eq.s32.totalorder %s23, 0
      %p149 = por %p147, %p148
      %p150 = scmp.ne.s32.totalorder %s138, %s139
      %p151 = scmp.eq.s32.totalorder %s24, 1
      %p152 = por %p150, %p151
      %p154 = scmp.ne.s32.totalorder %s139, %s153
      %p155 = scmp.eq.s32.totalorder %s24, 0
      %p156 = por %p154, %p155
      %s158 = sadd.s32 %s157, 1
      %p161 = scmp.eq.s32.totalorder %s18, 1
      %p162 = scmp.ne.s32.totalorder %s157, %s159
      %p163 = scmp.eq.s32.totalorder %s18, 0
      %p164 = por %p162, %p163
      %p165 = scmp.ne.s32.totalorder %s157, %s159
      %p166 = scmp.eq.s32.totalorder %s23, 1
      %p167 = por %p165, %p166
      %p168 = scmp.ne.s32.totalorder %s159, %s160
      %p169 = scmp.eq.s32.totalorder %s23, 0
      %p170 = por %p168, %p169
      %p171 = scmp.ne.s32.totalorder %s159, %s160
      %p172 = scmp.eq.s32.totalorder %s24, 1
      %p173 = por %p171, %p172
      %p175 = scmp.ne.s32.totalorder %s160, %s174
      %p176 = scmp.eq.s32.totalorder %s24, 0
      %p177 = por %p175, %p176
      %s179 = sadd.s32 %s178, 1
      %p182 = scmp.eq.s32.totalorder %s18, 1
      %p183 = scmp.ne.s32.totalorder %s178, %s180
      %p184 = scmp.eq.s32.totalorder %s18, 0
      %p185 = por %p183, %p184
      %p186 = scmp.ne.s32.totalorder %s178, %s180
      %p187 = scmp.eq.s32.totalorder %s23, 1
      %p188 = por %p186, %p187
      %p189 = scmp.ne.s32.totalorder %s180, %s181
      %p190 = scmp.eq.s32.totalorder %s23, 0
      %p191 = por %p189, %p190
      %p192 = scmp.ne.s32.totalorder %s180, %s181
      %p193 = scmp.eq.s32.totalorder %s24, 1
      %p194 = por %p192, %p193
      %p196 = scmp.ne.s32.totalorder %s181, %s195
      %p197 = scmp.eq.s32.totalorder %s24, 0
      %p198 = por %p196, %p197
      %s200 = sadd.s32 %s199, 1
      %p203 = scmp.eq.s32.totalorder %s18, 1
      %p204 = scmp.ne.s32.totalorder %s199, %s201
      %p205 = scmp.eq.s32.totalorder %s18, 0
      %p206 = por %p204, %p205
      %p207 = scmp.ne.s32.totalorder %s199, %s201
      %p208 = scmp.eq.s32.totalorder %s23, 1
      %p209 = por %p207, %p208
      %p210 = scmp.ne.s32.totalorder %s201, %s202
      %p211 = scmp.eq.s32.totalorder %s23, 0
      %p212 = por %p210, %p211
      %p213 = scmp.ne.s32.totalorder %s201, %s202
      %p214 = scmp.eq.s32.totalorder %s24, 1
      %p215 = por %p213, %p214
      %p217 = scmp.ne.s32.totalorder %s202, %s216
      %p218 = scmp.eq.s32.totalorder %s24, 0
      %p219 = por %p217, %p218
      %s220 = ssub.s32 %s18, %s25
      %p221 = scmp.eq.s32.totalorder %s220, 0
      %s223 = sadd.s32 %s222, 1
      %s224 = scalar_select %p221, %s222, %s223
      %p227 = pneg %p221
      %p228 = scmp.eq.s32.totalorder %s18, 1
      %p229 = por %p227, %p228
      %p230 = scmp.ne.s32.totalorder %s222, %s225
      %p231 = scmp.eq.s32.totalorder %s18, 0
      %p232 = por %p230, %p231
      %p233 = scmp.ne.s32.totalorder %s222, %s225
      %p234 = scmp.eq.s32.totalorder %s23, 1
      %p235 = por %p233, %p234
      %p236 = scmp.ne.s32.totalorder %s225, %s226
      %p237 = scmp.eq.s32.totalorder %s23, 0
      %p238 = por %p236, %p237
      %p239 = scmp.ne.s32.totalorder %s225, %s226
      %p240 = scmp.eq.s32.totalorder %s24, 1
      %p241 = por %p239, %p240
      %p243 = scmp.ne.s32.totalorder %s226, %s242
      %p244 = scmp.eq.s32.totalorder %s24, 0
      %p245 = por %p243, %p244
      %p246 = scmp.le.s32.totalorder 1, %s18
      %p247 = scmp.lt.s32.totalorder %s18, 3
      %p248 = pnand %p246, %p247
      %p249 = pneg %p248
      // Predicated region
      $region9: #{tpu_custom_call.1} parent=5 // pred_check
        _
      $region10: #{tpu_custom_call.1} parent=5 // pred_check_branch
        %251 = sbr.rel (%p248) target = $region12
      $region11: #{tpu_custom_call.1} parent=5 // pred_region
        %s252 = ssub.s32 %s18, 1
        // Predicated region
        $region13: #{tpu_custom_call.1} parent=11 // pred_check
          %p253 = pneg %p65
        $region14: #{tpu_custom_call.1} parent=11 // pred_check_branch
          %255 = sbr.rel (%p253) target = $region16
        $region15: #{tpu_custom_call.1} parent=11 // pred_region
          _
        $region16: #{tpu_custom_call.1} parent=11 // pred_fallthru
          _
        // Predicated region
        $region17: #{tpu_custom_call.1} parent=11 // pred_check
          %p256 = pneg %p86
        $region18: #{tpu_custom_call.1} parent=11 // pred_check_branch
          %258 = sbr.rel (%p256) target = $region20
        $region19: #{tpu_custom_call.1} parent=11 // pred_region
          _
        $region20: #{tpu_custom_call.1} parent=11 // pred_fallthru
          _
        // Predicated region
        $region21: #{tpu_custom_call.1} parent=11 // pred_check
          %p259 = pneg %p107
        $region22: #{tpu_custom_call.1} parent=11 // pred_check_branch
          %261 = sbr.rel (%p259) target = $region24
        $region23: #{tpu_custom_call.1} parent=11 // pred_region
          _
        $region24: #{tpu_custom_call.1} parent=11 // pred_fallthru
          _
        // Predicated region
        $region25: #{tpu_custom_call.1} parent=11 // pred_check
          %p262 = pneg %p128
        $region26: #{tpu_custom_call.1} parent=11 // pred_check_branch
          %264 = sbr.rel (%p262) target = $region28
        $region27: #{tpu_custom_call.1} parent=11 // pred_region
          _
        $region28: #{tpu_custom_call.1} parent=11 // pred_fallthru
          _
        // Predicated region
        $region29: #{tpu_custom_call.1} parent=11 // pred_check
          %p265 = pneg %p149
        $region30: #{tpu_custom_call.1} parent=11 // pred_check_branch
          %267 = sbr.rel (%p265) target = $region32
        $region31: #{tpu_custom_call.1} parent=11 // pred_region
          _
        $region32: #{tpu_custom_call.1} parent=11 // pred_fallthru
          _
        // Predicated region
        $region33: #{tpu_custom_call.1} parent=11 // pred_check
          %p268 = pneg %p170
        $region34: #{tpu_custom_call.1} parent=11 // pred_check_branch
          %270 = sbr.rel (%p268) target = $region36
        $region35: #{tpu_custom_call.1} parent=11 // pred_region
          _
        $region36: #{tpu_custom_call.1} parent=11 // pred_fallthru
          _
        // Predicated region
        $region37: #{tpu_custom_call.1} parent=11 // pred_check
          %p271 = pneg %p191
        $region38: #{tpu_custom_call.1} parent=11 // pred_check_branch
          %273 = sbr.rel (%p271) target = $region40
        $region39: #{tpu_custom_call.1} parent=11 // pred_region
          _
        $region40: #{tpu_custom_call.1} parent=11 // pred_fallthru
          _
        // Predicated region
        $region41: #{tpu_custom_call.1} parent=11 // pred_check
          %p274 = pneg %p212
        $region42: #{tpu_custom_call.1} parent=11 // pred_check_branch
          %276 = sbr.rel (%p274) target = $region44
        $region43: #{tpu_custom_call.1} parent=11 // pred_region
          _
        $region44: #{tpu_custom_call.1} parent=11 // pred_fallthru
          _
      $region12: #{tpu_custom_call.1} parent=5 // pred_fallthru
        _
      %p277 = scmp.lt.s32.totalorder %s18, 2
      // Predicated region
      $region45: #{tpu_custom_call.1} parent=5 // pred_check
        %p278 = pneg %p277
      $region46: #{tpu_custom_call.1} parent=5 // pred_check_branch
        %280 = sbr.rel (%p278) target = $region48
      $region47: #{tpu_custom_call.1} parent=5 // pred_region
        // Predicated region
        $region49: #{tpu_custom_call.1} parent=47 // pred_check
          %p281 = pneg %p38
        $region50: #{tpu_custom_call.1} parent=47 // pred_check_branch
          %283 = sbr.rel (%p281) target = $region52
        $region51: #{tpu_custom_call.1} parent=47 // pred_region
          %p284 = scmp.lt.s32.totalorder %s18, 1
          %s285 = scalar_select %p284, %s18, 1
          %s286 = smul.addr %s285, 32
          %s287 = smul.addr %s286, 8
          %s288 = scalar_lea.vmem %s0, %s287
        $region52: #{tpu_custom_call.1} parent=47 // pred_fallthru
          _
      $region48: #{tpu_custom_call.1} parent=5 // pred_fallthru
        _
      %p289 = scmp.le.s32.totalorder 1, %s18
      %p290 = scmp.lt.s32.totalorder %s18, 3
      %p291 = pnand %p289, %p290
      %p292 = pneg %p291
      // Predicated region
      $region53: #{tpu_custom_call.1} parent=5 // pred_check
        _
      $region54: #{tpu_custom_call.1} parent=5 // pred_check_branch
        %294 = sbr.rel (%p291) target = $region56
      $region55: #{tpu_custom_call.1} parent=5 // pred_region
        %s295 = ssub.s32 %s18, 1
        %p296 = scmp.lt.s32.totalorder %s23, 1
        %s297 = scalar_select %p296, %s23, 1
        %s298 = smul.addr %s297, 32
        %s299 = smul.addr %s298, 8
        %s300 = scalar_lea.vmem %s0, %s299
        %p301 = pneg %p44
        %p302 = pneg %p41
        %p303 = pneg %p65
        %p304 = pneg %p62
        %p305 = pneg %p86
        %p306 = pneg %p83
        %p307 = pneg %p107
        %p308 = pneg %p104
        %p309 = pneg %p128
        %p310 = pneg %p125
        %p311 = pneg %p149
        %p312 = pneg %p146
        %p313 = pneg %p170
        %p314 = pneg %p167
        %p315 = pneg %p191
        %p316 = pneg %p188
        %p317 = pneg %p212
        %p318 = pneg %p209
        %p319 = pneg %p238
        %p320 = pneg %p235
        %s321 = sand.u32 %s225, 1
        %s322 = scalar_lea.sflag [#allocation8], %s321
        %s323 = sand.u32 %s225, 1
        %s324 = smul.addr %s323, 512
        %s325 = scalar_lea.vmem [#allocation7], %s324
        %p326 = scmp.lt.s32.totalorder %s23, 1
        %s327 = scalar_select %p326, %s23, 1
        %s328 = smul.addr %s327, 32
        %s329 = smul.addr %s328, 8
        %s330 = scalar_lea.vmem %s0, %s329
        %vm331 = vcmask 523264
        %332 = vst.msk [vmem:[#allocation2] sm:$0xff] %vm331, 0.0
        %333 = vst.msk [vmem:[#allocation2 + $0x8] sm:$0xff] %vm331, 0.0
        %vm334 = vcmask 517120
        %335 = vst.msk [vmem:[#allocation2 + $0x10] sm:$0x3] %vm334, 0.0
        %s336 = scalar_lea.vmem [#allocation2], 408
        %337 = vst.msk [vmem:[%s336] sm:$0xff] %vm331, 0.0
        %338 = vst.msk [vmem:[%s336 + $0x8] sm:$0xff] %vm331, 0.0
        %339 = vst.msk [vmem:[%s336 + $0x10] sm:$0x3] %vm334, 0.0
        %s340 = scalar_lea.vmem [#allocation2], 24
        %vm341 = vcmask 516096
        %342 = vst.msk [vmem:[%s340] sm:$0x1] %vm341, 0.0
        %343 = vst.msk [vmem:[%s340 + $0x18] sm:$0x1] %vm341, 0.0
        %344 = vst.msk [vmem:[%s340 + $0x30] sm:$0x1] %vm341, 0.0
        %345 = vst.msk [vmem:[%s340 + $0x48] sm:$0x1] %vm341, 0.0
        %346 = vst.msk [vmem:[%s340 + $0x60] sm:$0x1] %vm341, 0.0
        %347 = vst.msk [vmem:[%s340 + $0x78] sm:$0x1] %vm341, 0.0
        %348 = vst.msk [vmem:[%s340 + $0x90] sm:$0x1] %vm341, 0.0
        %349 = vst.msk [vmem:[%s340 + $0xa8] sm:$0x1] %vm341, 0.0
        %350 = vst.msk [vmem:[%s340 + $0xc0] sm:$0x1] %vm341, 0.0
        %351 = vst.msk [vmem:[%s340 + $0xd8] sm:$0x1] %vm341, 0.0
        %352 = vst.msk [vmem:[%s340 + $0xf0] sm:$0x1] %vm341, 0.0
        %353 = vst.msk [vmem:[%s340 + $0x108] sm:$0x1] %vm341, 0.0
        %354 = vst.msk [vmem:[%s340 + $0x120] sm:$0x1] %vm341, 0.0
        %355 = vst.msk [vmem:[%s340 + $0x138] sm:$0x1] %vm341, 0.0
        %356 = vst.msk [vmem:[%s340 + $0x150] sm:$0x1] %vm341, 0.0
        %357 = vst.msk [vmem:[%s340 + $0x168] sm:$0x1] %vm341, 0.0
        %358 = vst.msk [vmem:[%s340 + $0x11] sm:$0x1] %vm341, 0.0
        %359 = vst.msk [vmem:[%s340 + $0x29] sm:$0x1] %vm341, 0.0
        %360 = vst.msk [vmem:[%s340 + $0x41] sm:$0x1] %vm341, 0.0
        %361 = vst.msk [vmem:[%s340 + $0x59] sm:$0x1] %vm341, 0.0
        %362 = vst.msk [vmem:[%s340 + $0x71] sm:$0x1] %vm341, 0.0
        %363 = vst.msk [vmem:[%s340 + $0x89] sm:$0x1] %vm341, 0.0
        %364 = vst.msk [vmem:[%s340 + $0xa1] sm:$0x1] %vm341, 0.0
        %365 = vst.msk [vmem:[%s340 + $0xb9] sm:$0x1] %vm341, 0.0
        %366 = vst.msk [vmem:[%s340 + $0xd1] sm:$0x1] %vm341, 0.0
        %367 = vst.msk [vmem:[%s340 + $0xe9] sm:$0x1] %vm341, 0.0
        %368 = vst.msk [vmem:[%s340 + $0x101] sm:$0x1] %vm341, 0.0
        %369 = vst.msk [vmem:[%s340 + $0x119] sm:$0x1] %vm341, 0.0
        %370 = vst.msk [vmem:[%s340 + $0x131] sm:$0x1] %vm341, 0.0
        %371 = vst.msk [vmem:[%s340 + $0x149] sm:$0x1] %vm341, 0.0
        %372 = vst.msk [vmem:[%s340 + $0x161] sm:$0x1] %vm341, 0.0
        %373 = vst.msk [vmem:[%s340 + $0x179] sm:$0x1] %vm341, 0.0
        %374 = vst.msk [vmem:[#allocation3] sm:$0xff] %vm331, 0.0
        %375 = vst.msk [vmem:[#allocation3 + $0x8] sm:$0xff] %vm331, 0.0
        %vm376 = vcmask 519168
        %377 = vst.msk [vmem:[#allocation3 + $0x10] sm:$0xf] %vm376, 0.0
        %378 = vst.msk [vmem:[#allocation3 + $0x18] sm:$0xff] %vm331, 0.0
        %379 = vst.msk [vmem:[#allocation3 + $0x20] sm:$0xff] %vm331, 0.0
        %380 = vst.msk [vmem:[#allocation3 + $0x28] sm:$0xf] %vm376, 0.0
        %s381 = scalar_lea.vmem [#allocation3], 432
        %382 = vst.msk [vmem:[%s381] sm:$0xff] %vm331, 0.0
        %383 = vst.msk [vmem:[%s381 + $0x8] sm:$0xff] %vm331, 0.0
        %384 = vst.msk [vmem:[%s381 + $0x10] sm:$0xf] %vm376, 0.0
        %385 = vst.msk [vmem:[%s381 + $0x18] sm:$0xff] %vm331, 0.0
        %386 = vst.msk [vmem:[%s381 + $0x20] sm:$0xff] %vm331, 0.0
        %387 = vst.msk [vmem:[%s381 + $0x28] sm:$0xf] %vm376, 0.0
        %s388 = scalar_lea.vmem [#allocation3], 48
        %389 = vst.msk [vmem:[%s388] sm:$0x3] %vm334, 0.0
        %390 = vst.msk [vmem:[%s388 + $0x18] sm:$0x3] %vm334, 0.0
        %391 = vst.msk [vmem:[%s388 + $0x30] sm:$0x3] %vm334, 0.0
        %392 = vst.msk [vmem:[%s388 + $0x48] sm:$0x3] %vm334, 0.0
        %393 = vst.msk [vmem:[%s388 + $0x60] sm:$0x3] %vm334, 0.0
        %394 = vst.msk [vmem:[%s388 + $0x78] sm:$0x3] %vm334, 0.0
        %395 = vst.msk [vmem:[%s388 + $0x90] sm:$0x3] %vm334, 0.0
        %396 = vst.msk [vmem:[%s388 + $0xa8] sm:$0x3] %vm334, 0.0
        %397 = vst.msk [vmem:[%s388 + $0xc0] sm:$0x3] %vm334, 0.0
        %398 = vst.msk [vmem:[%s388 + $0xd8] sm:$0x3] %vm334, 0.0
        %399 = vst.msk [vmem:[%s388 + $0xf0] sm:$0x3] %vm334, 0.0
        %400 = vst.msk [vmem:[%s388 + $0x108] sm:$0x3] %vm334, 0.0
        %401 = vst.msk [vmem:[%s388 + $0x120] sm:$0x3] %vm334, 0.0
        %402 = vst.msk [vmem:[%s388 + $0x138] sm:$0x3] %vm334, 0.0
        %403 = vst.msk [vmem:[%s388 + $0x150] sm:$0x3] %vm334, 0.0
        %404 = vst.msk [vmem:[%s388 + $0x168] sm:$0x3] %vm334, 0.0
        %405 = vst.msk [vmem:[%s388 + $0x12] sm:$0x3] %vm334, 0.0
        %406 = vst.msk [vmem:[%s388 + $0x2a] sm:$0x3] %vm334, 0.0
        %407 = vst.msk [vmem:[%s388 + $0x42] sm:$0x3] %vm334, 0.0
        %408 = vst.msk [vmem:[%s388 + $0x5a] sm:$0x3] %vm334, 0.0
        %409 = vst.msk [vmem:[%s388 + $0x72] sm:$0x3] %vm334, 0.0
        %410 = vst.msk [vmem:[%s388 + $0x8a] sm:$0x3] %vm334, 0.0
        %411 = vst.msk [vmem:[%s388 + $0xa2] sm:$0x3] %vm334, 0.0
        %412 = vst.msk [vmem:[%s388 + $0xba] sm:$0x3] %vm334, 0.0
        %413 = vst.msk [vmem:[%s388 + $0xd2] sm:$0x3] %vm334, 0.0
        %414 = vst.msk [vmem:[%s388 + $0xea] sm:$0x3] %vm334, 0.0
        %415 = vst.msk [vmem:[%s388 + $0x102] sm:$0x3] %vm334, 0.0
        %416 = vst.msk [vmem:[%s388 + $0x11a] sm:$0x3] %vm334, 0.0
        %417 = vst.msk [vmem:[%s388 + $0x132] sm:$0x3] %vm334, 0.0
        %418 = vst.msk [vmem:[%s388 + $0x14a] sm:$0x3] %vm334, 0.0
        %419 = vst.msk [vmem:[%s388 + $0x162] sm:$0x3] %vm334, 0.0
        %420 = vst.msk [vmem:[%s388 + $0x17a] sm:$0x3] %vm334, 0.0
        %vm421 = vcmask 31744
        %422 = vst.msk [vmem:[#allocation4] sm:$0xff] %vm421, -inf
        %423 = vst.msk [vmem:[#allocation4 + $0x8] sm:$0xff] %vm421, -inf
        %vm424 = vcmask 25600
        %425 = vst.msk [vmem:[#allocation4 + $0x10] sm:$0x3] %vm424, -inf
        %s426 = scalar_lea.vmem [#allocation4], 408
        %427 = vst.msk [vmem:[%s426] sm:$0xff] %vm421, -inf
        %428 = vst.msk [vmem:[%s426 + $0x8] sm:$0xff] %vm421, -inf
        %429 = vst.msk [vmem:[%s426 + $0x10] sm:$0x3] %vm424, -inf
        %s430 = scalar_lea.vmem [#allocation4], 24
        %vm431 = vcmask 24576
        %432 = vst.msk [vmem:[%s430] sm:$0x1] %vm431, -inf
        %433 = vst.msk [vmem:[%s430 + $0x18] sm:$0x1] %vm431, -inf
        %434 = vst.msk [vmem:[%s430 + $0x30] sm:$0x1] %vm431, -inf
        %435 = vst.msk [vmem:[%s430 + $0x48] sm:$0x1] %vm431, -inf
        %436 = vst.msk [vmem:[%s430 + $0x60] sm:$0x1] %vm431, -inf
        %437 = vst.msk [vmem:[%s430 + $0x78] sm:$0x1] %vm431, -inf
        %438 = vst.msk [vmem:[%s430 + $0x90] sm:$0x1] %vm431, -inf
        %439 = vst.msk [vmem:[%s430 + $0xa8] sm:$0x1] %vm431, -inf
        %440 = vst.msk [vmem:[%s430 + $0xc0] sm:$0x1] %vm431, -inf
        %441 = vst.msk [vmem:[%s430 + $0xd8] sm:$0x1] %vm431, -inf
        %442 = vst.msk [vmem:[%s430 + $0xf0] sm:$0x1] %vm431, -inf
        %443 = vst.msk [vmem:[%s430 + $0x108] sm:$0x1] %vm431, -inf
        %444 = vst.msk [vmem:[%s430 + $0x120] sm:$0x1] %vm431, -inf
        %445 = vst.msk [vmem:[%s430 + $0x138] sm:$0x1] %vm431, -inf
        %446 = vst.msk [vmem:[%s430 + $0x150] sm:$0x1] %vm431, -inf
        %447 = vst.msk [vmem:[%s430 + $0x168] sm:$0x1] %vm431, -inf
        %448 = vst.msk [vmem:[%s430 + $0x11] sm:$0x1] %vm431, -inf
        %449 = vst.msk [vmem:[%s430 + $0x29] sm:$0x1] %vm431, -inf
        %450 = vst.msk [vmem:[%s430 + $0x41] sm:$0x1] %vm431, -inf
        %451 = vst.msk [vmem:[%s430 + $0x59] sm:$0x1] %vm431, -inf
        %452 = vst.msk [vmem:[%s430 + $0x71] sm:$0x1] %vm431, -inf
        %453 = vst.msk [vmem:[%s430 + $0x89] sm:$0x1] %vm431, -inf
        %454 = vst.msk [vmem:[%s430 + $0xa1] sm:$0x1] %vm431, -inf
        %455 = vst.msk [vmem:[%s430 + $0xb9] sm:$0x1] %vm431, -inf
        %456 = vst.msk [vmem:[%s430 + $0xd1] sm:$0x1] %vm431, -inf
        %457 = vst.msk [vmem:[%s430 + $0xe9] sm:$0x1] %vm431, -inf
        %458 = vst.msk [vmem:[%s430 + $0x101] sm:$0x1] %vm431, -inf
        %459 = vst.msk [vmem:[%s430 + $0x119] sm:$0x1] %vm431, -inf
        %460 = vst.msk [vmem:[%s430 + $0x131] sm:$0x1] %vm431, -inf
        %461 = vst.msk [vmem:[%s430 + $0x149] sm:$0x1] %vm431, -inf
        %462 = vst.msk [vmem:[%s430 + $0x161] sm:$0x1] %vm431, -inf
        %463 = vst.msk [vmem:[%s430 + $0x179] sm:$0x1] %vm431, -inf
        %v464 = vld [vmem:[%s330] sm:$0xff]
        %v465 = vld [vmem:[%s330 + $0x8] sm:$0xff]
        %v466 = vld [vmem:[%s330 + $0x10] sm:$0xff]
        %v467 = vld [vmem:[%s330 + $0x18] sm:$0xff]
        %v468 = vld [vmem:[%s330 + $0x20] sm:$0xff]
        %v469 = vld [vmem:[%s330 + $0x28] sm:$0xff]
        %v470 = vld [vmem:[%s330 + $0x30] sm:$0xff]
        %v471 = vld [vmem:[%s330 + $0x38] sm:$0xff]
        %v472 = vld [vmem:[%s330 + $0x40] sm:$0xff]
        %v473 = vld [vmem:[%s330 + $0x48] sm:$0xff]
        %v474 = vld [vmem:[%s330 + $0x50] sm:$0xff]
        %v475 = vld [vmem:[%s330 + $0x58] sm:$0xff]
        %v476 = vld [vmem:[%s330 + $0x60] sm:$0xff]
        %v477 = vld [vmem:[%s330 + $0x68] sm:$0xff]
        %v478 = vld [vmem:[%s330 + $0x70] sm:$0xff]
        %v479 = vld [vmem:[%s330 + $0x78] sm:$0xff]
        %v480 = vld [vmem:[%s330 + $0x80] sm:$0xff]
        %v481 = vld [vmem:[%s330 + $0x88] sm:$0xff]
        %v482 = vld [vmem:[%s330 + $0x90] sm:$0xff]
        %v483 = vld [vmem:[%s330 + $0x98] sm:$0xff]
        %v484 = vld [vmem:[%s330 + $0xa0] sm:$0xff]
        %v485 = vld [vmem:[%s330 + $0xa8] sm:$0xff]
        %v486 = vld [vmem:[%s330 + $0xb0] sm:$0xff]
        %v487 = vld [vmem:[%s330 + $0xb8] sm:$0xff]
        %v488 = vld [vmem:[%s330 + $0xc0] sm:$0xff]
        %v489 = vld [vmem:[%s330 + $0xc8] sm:$0xff]
        %v490 = vld [vmem:[%s330 + $0xd0] sm:$0xff]
        %v491 = vld [vmem:[%s330 + $0xd8] sm:$0xff]
        %v492 = vld [vmem:[%s330 + $0xe0] sm:$0xff]
        %v493 = vld [vmem:[%s330 + $0xe8] sm:$0xff]
        %v494 = vld [vmem:[%s330 + $0xf0] sm:$0xff]
        %v495 = vld [vmem:[%s330 + $0xf8] sm:$0xff]
        %v496 = vld [vmem:[%s1] sm:$0xff]
        %v497 = vld [vmem:[%s2] sm:$0x3]
        %v499 = vlaneseq
        %v500 = vshrl.u32 %v499, 7
        %v501 = vsub.s32 0, %v500
        %v502 = vrot.slane %v497, %v501
        %v503 = vlaneseq
        %v504 = vshrl.u32 %v503, 7
        %v505 = vsub.s32 1, %v504
        %v506 = vrot.slane %v497, %v505
        %v510 = vcombine.high %v496, %v496
        %v512 = vsel %vm421, %v464, 0
        %v515 = vsel %vm421, %v465, 0
        %v518 = vsel %vm421, %v466, 0
        %v521 = vsel %vm421, %v467, 0
        %v524 = vsel %vm421, %v468, 0
        %v527 = vsel %vm421, %v469, 0
        %v530 = vsel %vm421, %v470, 0
        %v533 = vsel %vm421, %v471, 0
        %v536 = vsel %vm421, %v472, 0
        %v539 = vsel %vm421, %v473, 0
        %v542 = vsel %vm421, %v474, 0
        %v545 = vsel %vm421, %v475, 0
        %v548 = vsel %vm421, %v476, 0
        %v551 = vsel %vm421, %v477, 0
        %v554 = vsel %vm421, %v478, 0
        %v557 = vsel %vm421, %v479, 0
        %v560 = vsel %vm421, %v480, 0
        %v563 = vsel %vm421, %v481, 0
        %v566 = vsel %vm421, %v482, 0
        %v569 = vsel %vm421, %v483, 0
        %v572 = vsel %vm421, %v484, 0
        %v575 = vsel %vm421, %v485, 0
        %v578 = vsel %vm421, %v486, 0
        %v581 = vsel %vm421, %v487, 0
        %v584 = vsel %vm421, %v488, 0
        %v587 = vsel %vm421, %v489, 0
        %v590 = vsel %vm421, %v490, 0
        %v593 = vsel %vm421, %v491, 0
        %v596 = vsel %vm421, %v492, 0
        %v599 = vsel %vm421, %v493, 0
        %v602 = vsel %vm421, %v494, 0
        %v605 = vsel %vm421, %v495, 0
        %vm607 = vcmask 1043456
        %v608 = vsel %vm607, %v496, 0
        %v610 = vsel %vm607, %v510, 0
        %612 = vmatprep.subr.mxu0 0.0
        %613 = vmatpush1.msra.mxu0 0.0
        %614 = vmatprep.subr.mxu0 0.0
        %615 = vmatpush1.msra.mxu0 0.0
        %616 = vmatprep.subr.mxu0 0.0
        %617 = vmatpush1.msra.mxu0 0.0
        %618 = vmatprep.subr.mxu0 0.0
        %619 = vmatpush1.msra.mxu0 0.0
        %620 = vmatprep.subr.mxu0 0.0
        %621 = vmatpush1.msra.mxu0 0.0
        %622 = vmatprep.subr.mxu0 0.0
        %623 = vmatpush1.msra.mxu0 0.0
        %624 = vmatprep.subr.mxu0 0.0
        %625 = vmatpush1.msra.mxu0 0.0
        %626 = vmatprep.subr.mxu0 0.0
        %627 = vmatpush1.msra.mxu0 0.0
        %628 = vmatprep.subr.mxu0 0.0
        %629 = vmatpush1.msra.mxu0 0.0
        %630 = vmatprep.subr.mxu0 0.0
        %631 = vmatpush1.msra.mxu0 0.0
        %632 = vmatprep.subr.mxu0 0.0
        %633 = vmatpush1.msra.mxu0 0.0
        %634 = vmatprep.subr.mxu0 0.0
        %635 = vmatpush1.msra.mxu0 0.0
        %636 = vmatprep.subr.mxu0 0.0
        %637 = vmatpush1.msra.mxu0 0.0
        %638 = vmatprep.subr.mxu0 0.0
        %639 = vmatpush1.msra.mxu0 0.0
        %640 = vmatprep.subr.mxu0 0.0
        %641 = vmatpush1.msra.mxu0 0.0
        %642 = vmatprep.subr.mxu0 %v610
        %643 = vmatpush1.msra.mxu0 %v608
        %644 = vmatprep.subr.mxu0 0.0
        %645 = vmatpush2.msra.mxu0 0.0
        %646 = vmatprep.subr.mxu0 0.0
        %647 = vmatpush2.msra.mxu0 0.0
        %648 = vmatprep.subr.mxu0 0.0
        %649 = vmatpush2.msra.mxu0 0.0
        %650 = vmatprep.subr.mxu0 0.0
        %651 = vmatpush2.msra.mxu0 0.0
        %652 = vmatprep.subr.mxu0 0.0
        %653 = vmatpush2.msra.mxu0 0.0
        %654 = vmatprep.subr.mxu0 0.0
        %655 = vmatpush2.msra.mxu0 0.0
        %656 = vmatprep.subr.mxu0 0.0
        %657 = vmatpush2.msra.mxu0 0.0
        %658 = vmatprep.subr.mxu0 0.0
        %659 = vmatpush2.msra.mxu0 0.0
        %660 = vmatprep.subr.mxu0 0.0
        %661 = vmatpush2.msra.mxu0 0.0
        %662 = vmatprep.subr.mxu0 0.0
        %663 = vmatpush2.msra.mxu0 0.0
        %664 = vmatprep.subr.mxu0 0.0
        %665 = vmatpush2.msra.mxu0 0.0
        %666 = vmatprep.subr.mxu0 0.0
        %667 = vmatpush2.msra.mxu0 0.0
        %668 = vmatprep.subr.mxu0 0.0
        %669 = vmatpush2.msra.mxu0 0.0
        %670 = vmatprep.subr.mxu0 0.0
        %671 = vmatpush2.msra.mxu0 0.0
        %672 = vmatprep.subr.mxu0 0.0
        %673 = vmatpush2.msra.mxu0 0.0
        %674 = vmatprep.subr.mxu0 0.0
        %675 = vmatpush2.msra.mxu0 0.0
        %676 = vmatprep.mubr.f32.mxu0 0.0
        %677 = vmatmul.mubr.f32.gmra.mxu0 %v512
        %v678 = vpop.f32.mrf.mxu0
        %v679 = vadd.f32 %v502, %v678
        %v680 = vpop.f32.mrf.mxu0
        %v681 = vadd.f32 %v506, %v680
        %682 = vmatprep.mubr.f32.mxu0 0.0
        %683 = vmatmul.mubr.f32.gmra.mxu0 %v515
        %v684 = vpop.f32.mrf.mxu0
        %v685 = vadd.f32 %v502, %v684
        %v686 = vpop.f32.mrf.mxu0
        %v687 = vadd.f32 %v506, %v686
        %688 = vmatprep.mubr.f32.mxu0 0.0
        %689 = vmatmul.mubr.f32.gmra.mxu0 %v518
        %v690 = vpop.f32.mrf.mxu0
        %v691 = vadd.f32 %v502, %v690
        %v692 = vpop.f32.mrf.mxu0
        %v693 = vadd.f32 %v506, %v692
        %694 = vmatprep.mubr.f32.mxu0 0.0
        %695 = vmatmul.mubr.f32.gmra.mxu0 %v521
        %v696 = vpop.f32.mrf.mxu0
        %v697 = vadd.f32 %v502, %v696
        %v698 = vpop.f32.mrf.mxu0
        %v699 = vadd.f32 %v506, %v698
        %700 = vmatprep.mubr.f32.mxu0 0.0
        %701 = vmatmul.mubr.f32.gmra.mxu0 %v524
        %v702 = vpop.f32.mrf.mxu0
        %v703 = vadd.f32 %v502, %v702
        %v704 = vpop.f32.mrf.mxu0
        %v705 = vadd.f32 %v506, %v704
        %706 = vmatprep.mubr.f32.mxu0 0.0
        %707 = vmatmul.mubr.f32.gmra.mxu0 %v527
        %v708 = vpop.f32.mrf.mxu0
        %v709 = vadd.f32 %v502, %v708
        %v710 = vpop.f32.mrf.mxu0
        %v711 = vadd.f32 %v506, %v710
        %712 = vmatprep.mubr.f32.mxu0 0.0
        %713 = vmatmul.mubr.f32.gmra.mxu0 %v530
        %v714 = vpop.f32.mrf.mxu0
        %v715 = vadd.f32 %v502, %v714
        %v716 = vpop.f32.mrf.mxu0
        %v717 = vadd.f32 %v506, %v716
        %718 = vmatprep.mubr.f32.mxu0 0.0
        %719 = vmatmul.mubr.f32.gmra.mxu0 %v533
        %v720 = vpop.f32.mrf.mxu0
        %v721 = vadd.f32 %v502, %v720
        %v722 = vpop.f32.mrf.mxu0
        %v723 = vadd.f32 %v506, %v722
        %724 = vmatprep.mubr.f32.mxu0 0.0
        %725 = vmatmul.mubr.f32.gmra.mxu0 %v536
        %v726 = vpop.f32.mrf.mxu0
        %v727 = vadd.f32 %v502, %v726
        %v728 = vpop.f32.mrf.mxu0
        %v729 = vadd.f32 %v506, %v728
        %730 = vmatprep.mubr.f32.mxu0 0.0
        %731 = vmatmul.mubr.f32.gmra.mxu0 %v539
        %v732 = vpop.f32.mrf.mxu0
        %v733 = vadd.f32 %v502, %v732
        %v734 = vpop.f32.mrf.mxu0
        %v735 = vadd.f32 %v506, %v734
        %736 = vmatprep.mubr.f32.mxu0 0.0
        %737 = vmatmul.mubr.f32.gmra.mxu0 %v542
        %v738 = vpop.f32.mrf.mxu0
        %v739 = vadd.f32 %v502, %v738
        %v740 = vpop.f32.mrf.mxu0
        %v741 = vadd.f32 %v506, %v740
        %742 = vmatprep.mubr.f32.mxu0 0.0
        %743 = vmatmul.mubr.f32.gmra.mxu0 %v545
        %v744 = vpop.f32.mrf.mxu0
        %v745 = vadd.f32 %v502, %v744
        %v746 = vpop.f32.mrf.mxu0
        %v747 = vadd.f32 %v506, %v746
        %748 = vmatprep.mubr.f32.mxu0 0.0
        %749 = vmatmul.mubr.f32.gmra.mxu0 %v548
        %v750 = vpop.f32.mrf.mxu0
        %v751 = vadd.f32 %v502, %v750
        %v752 = vpop.f32.mrf.mxu0
        %v753 = vadd.f32 %v506, %v752
        %754 = vmatprep.mubr.f32.mxu0 0.0
        %755 = vmatmul.mubr.f32.gmra.mxu0 %v551
        %v756 = vpop.f32.mrf.mxu0
        %v757 = vadd.f32 %v502, %v756
        %v758 = vpop.f32.mrf.mxu0
        %v759 = vadd.f32 %v506, %v758
        %760 = vmatprep.mubr.f32.mxu0 0.0
        %761 = vmatmul.mubr.f32.gmra.mxu0 %v554
        %v762 = vpop.f32.mrf.mxu0
        %v763 = vadd.f32 %v502, %v762
        %v764 = vpop.f32.mrf.mxu0
        %v765 = vadd.f32 %v506, %v764
        %766 = vmatprep.mubr.f32.mxu0 0.0
        %767 = vmatmul.mubr.f32.gmra.mxu0 %v557
        %v768 = vpop.f32.mrf.mxu0
        %v769 = vadd.f32 %v502, %v768
        %v770 = vpop.f32.mrf.mxu0
        %v771 = vadd.f32 %v506, %v770
        %772 = vmatprep.mubr.f32.mxu0 0.0
        %773 = vmatmul.mubr.f32.gmra.mxu0 %v560
        %v774 = vpop.f32.mrf.mxu0
        %v775 = vadd.f32 %v502, %v774
        %v776 = vpop.f32.mrf.mxu0
        %v777 = vadd.f32 %v506, %v776
        %778 = vmatprep.mubr.f32.mxu0 0.0
        %779 = vmatmul.mubr.f32.gmra.mxu0 %v563
        %v780 = vpop.f32.mrf.mxu0
        %v781 = vadd.f32 %v502, %v780
        %v782 = vpop.f32.mrf.mxu0
        %v783 = vadd.f32 %v506, %v782
        %784 = vmatprep.mubr.f32.mxu0 0.0
        %785 = vmatmul.mubr.f32.gmra.mxu0 %v566
        %v786 = vpop.f32.mrf.mxu0
        %v787 = vadd.f32 %v502, %v786
        %v788 = vpop.f32.mrf.mxu0
        %v789 = vadd.f32 %v506, %v788
        %790 = vmatprep.mubr.f32.mxu0 0.0
        %791 = vmatmul.mubr.f32.gmra.mxu0 %v569
        %v792 = vpop.f32.mrf.mxu0
        %v793 = vadd.f32 %v502, %v792
        %v794 = vpop.f32.mrf.mxu0
        %v795 = vadd.f32 %v506, %v794
        %796 = vmatprep.mubr.f32.mxu0 0.0
        %797 = vmatmul.mubr.f32.gmra.mxu0 %v572
        %v798 = vpop.f32.mrf.mxu0
        %v799 = vadd.f32 %v502, %v798
        %v800 = vpop.f32.mrf.mxu0
        %v801 = vadd.f32 %v506, %v800
        %802 = vmatprep.mubr.f32.mxu0 0.0
        %803 = vmatmul.mubr.f32.gmra.mxu0 %v575
        %v804 = vpop.f32.mrf.mxu0
        %v805 = vadd.f32 %v502, %v804
        %v806 = vpop.f32.mrf.mxu0
        %v807 = vadd.f32 %v506, %v806
        %808 = vmatprep.mubr.f32.mxu0 0.0
        %809 = vmatmul.mubr.f32.gmra.mxu0 %v578
        %v810 = vpop.f32.mrf.mxu0
        %v811 = vadd.f32 %v502, %v810
        %v812 = vpop.f32.mrf.mxu0
        %v813 = vadd.f32 %v506, %v812
        %814 = vmatprep.mubr.f32.mxu0 0.0
        %815 = vmatmul.mubr.f32.gmra.mxu0 %v581
        %v816 = vpop.f32.mrf.mxu0
        %v817 = vadd.f32 %v502, %v816
        %v818 = vpop.f32.mrf.mxu0
        %v819 = vadd.f32 %v506, %v818
        %820 = vmatprep.mubr.f32.mxu0 0.0
        %821 = vmatmul.mubr.f32.gmra.mxu0 %v584
        %v822 = vpop.f32.mrf.mxu0
        %v823 = vadd.f32 %v502, %v822
        %v824 = vpop.f32.mrf.mxu0
        %v825 = vadd.f32 %v506, %v824
        %826 = vmatprep.mubr.f32.mxu0 0.0
        %827 = vmatmul.mubr.f32.gmra.mxu0 %v587
        %v828 = vpop.f32.mrf.mxu0
        %v829 = vadd.f32 %v502, %v828
        %v830 = vpop.f32.mrf.mxu0
        %v831 = vadd.f32 %v506, %v830
        %832 = vmatprep.mubr.f32.mxu0 0.0
        %833 = vmatmul.mubr.f32.gmra.mxu0 %v590
        %v834 = vpop.f32.mrf.mxu0
        %v835 = vadd.f32 %v502, %v834
        %v836 = vpop.f32.mrf.mxu0
        %v837 = vadd.f32 %v506, %v836
        %838 = vmatprep.mubr.f32.mxu0 0.0
        %839 = vmatmul.mubr.f32.gmra.mxu0 %v593
        %v840 = vpop.f32.mrf.mxu0
        %v841 = vadd.f32 %v502, %v840
        %v842 = vpop.f32.mrf.mxu0
        %v843 = vadd.f32 %v506, %v842
        %844 = vmatprep.mubr.f32.mxu0 0.0
        %845 = vmatmul.mubr.f32.gmra.mxu0 %v596
        %v846 = vpop.f32.mrf.mxu0
        %v847 = vadd.f32 %v502, %v846
        %v848 = vpop.f32.mrf.mxu0
        %v849 = vadd.f32 %v506, %v848
        %850 = vmatprep.mubr.f32.mxu0 0.0
        %851 = vmatmul.mubr.f32.gmra.mxu0 %v599
        %v852 = vpop.f32.mrf.mxu0
        %v853 = vadd.f32 %v502, %v852
        %v854 = vpop.f32.mrf.mxu0
        %v855 = vadd.f32 %v506, %v854
        %856 = vmatprep.mubr.f32.mxu0 0.0
        %857 = vmatmul.mubr.f32.gmra.mxu0 %v602
        %v858 = vpop.f32.mrf.mxu0
        %v859 = vadd.f32 %v502, %v858
        %v860 = vpop.f32.mrf.mxu0
        %v861 = vadd.f32 %v506, %v860
        %862 = vmatprep.mubr.f32.mxu0 0.0
        %863 = vmatmul.mubr.f32.gmra.mxu0 %v605
        %v864 = vpop.f32.mrf.mxu0
        %v865 = vadd.f32 %v502, %v864
        %v866 = vpop.f32.mrf.mxu0
        %v867 = vadd.f32 %v506, %v866
        %868 = vdwg.mxu0
        %901 = vrot.lane.b32.xlu0 %v679, 64
        %v902 = vpop.permute.xlu0 %901
        %903 = vrot.lane.b32.xlu0 %v685, 64
        %v904 = vpop.permute.xlu0 %903
        %905 = vrot.lane.b32.xlu0 %v691, 64
        %v906 = vpop.permute.xlu0 %905
        %907 = vrot.lane.b32.xlu0 %v697, 64
        %v908 = vpop.permute.xlu0 %907
        %909 = vrot.lane.b32.xlu0 %v703, 64
        %v910 = vpop.permute.xlu0 %909
        %911 = vrot.lane.b32.xlu0 %v709, 64
        %v912 = vpop.permute.xlu0 %911
        %913 = vrot.lane.b32.xlu0 %v715, 64
        %v914 = vpop.permute.xlu0 %913
        %915 = vrot.lane.b32.xlu0 %v721, 64
        %v916 = vpop.permute.xlu0 %915
        %917 = vrot.lane.b32.xlu0 %v727, 64
        %v918 = vpop.permute.xlu0 %917
        %919 = vrot.lane.b32.xlu0 %v733, 64
        %v920 = vpop.permute.xlu0 %919
        %921 = vrot.lane.b32.xlu0 %v739, 64
        %v922 = vpop.permute.xlu0 %921
        %923 = vrot.lane.b32.xlu0 %v745, 64
        %v924 = vpop.permute.xlu0 %923
        %925 = vrot.lane.b32.xlu0 %v751, 64
        %v926 = vpop.permute.xlu0 %925
        %927 = vrot.lane.b32.xlu0 %v757, 64
        %v928 = vpop.permute.xlu0 %927
        %929 = vrot.lane.b32.xlu0 %v763, 64
        %v930 = vpop.permute.xlu0 %929
        %931 = vrot.lane.b32.xlu0 %v769, 64
        %v932 = vpop.permute.xlu0 %931
        %933 = vrot.lane.b32.xlu0 %v775, 64
        %v934 = vpop.permute.xlu0 %933
        %935 = vrot.lane.b32.xlu0 %v781, 64
        %v936 = vpop.permute.xlu0 %935
        %937 = vrot.lane.b32.xlu0 %v787, 64
        %v938 = vpop.permute.xlu0 %937
        %939 = vrot.lane.b32.xlu0 %v793, 64
        %v940 = vpop.permute.xlu0 %939
        %941 = vrot.lane.b32.xlu0 %v799, 64
        %v942 = vpop.permute.xlu0 %941
        %943 = vrot.lane.b32.xlu0 %v805, 64
        %v944 = vpop.permute.xlu0 %943
        %945 = vrot.lane.b32.xlu0 %v811, 64
        %v946 = vpop.permute.xlu0 %945
        %947 = vrot.lane.b32.xlu0 %v817, 64
        %v948 = vpop.permute.xlu0 %947
        %949 = vrot.lane.b32.xlu0 %v823, 64
        %v950 = vpop.permute.xlu0 %949
        %951 = vrot.lane.b32.xlu0 %v829, 64
        %v952 = vpop.permute.xlu0 %951
        %953 = vrot.lane.b32.xlu0 %v835, 64
        %v954 = vpop.permute.xlu0 %953
        %955 = vrot.lane.b32.xlu0 %v841, 64
        %v956 = vpop.permute.xlu0 %955
        %957 = vrot.lane.b32.xlu0 %v847, 64
        %v958 = vpop.permute.xlu0 %957
        %959 = vrot.lane.b32.xlu0 %v853, 64
        %v960 = vpop.permute.xlu0 %959
        %961 = vrot.lane.b32.xlu0 %v859, 64
        %v962 = vpop.permute.xlu0 %961
        %963 = vrot.lane.b32.xlu0 %v865, 64
        %v964 = vpop.permute.xlu0 %963
        %997 = vst.msk [vmem:[%s340 + $0x1] sm:$0xff] %vm331, %v902
        %998 = vst.msk [vmem:[%s340 + $0x9] sm:$0xff] %vm331, %v904
        %999 = vst.msk [vmem:[%s340 + $0x19] sm:$0xff] %vm331, %v906
        %1000 = vst.msk [vmem:[%s340 + $0x21] sm:$0xff] %vm331, %v908
        %1001 = vst.msk [vmem:[%s340 + $0x31] sm:$0xff] %vm331, %v910
        %1002 = vst.msk [vmem:[%s340 + $0x39] sm:$0xff] %vm331, %v912
        %1003 = vst.msk [vmem:[%s340 + $0x49] sm:$0xff] %vm331, %v914
        %1004 = vst.msk [vmem:[%s340 + $0x51] sm:$0xff] %vm331, %v916
        %1005 = vst.msk [vmem:[%s340 + $0x61] sm:$0xff] %vm331, %v918
        %1006 = vst.msk [vmem:[%s340 + $0x69] sm:$0xff] %vm331, %v920
        %1007 = vst.msk [vmem:[%s340 + $0x79] sm:$0xff] %vm331, %v922
        %1008 = vst.msk [vmem:[%s340 + $0x81] sm:$0xff] %vm331, %v924
        %1009 = vst.msk [vmem:[%s340 + $0x91] sm:$0xff] %vm331, %v926
        %1010 = vst.msk [vmem:[%s340 + $0x99] sm:$0xff] %vm331, %v928
        %1011 = vst.msk [vmem:[%s340 + $0xa9] sm:$0xff] %vm331, %v930
        %1012 = vst.msk [vmem:[%s340 + $0xb1] sm:$0xff] %vm331, %v932
        %1013 = vst.msk [vmem:[%s340 + $0xc1] sm:$0xff] %vm331, %v934
        %1014 = vst.msk [vmem:[%s340 + $0xc9] sm:$0xff] %vm331, %v936
        %1015 = vst.msk [vmem:[%s340 + $0xd9] sm:$0xff] %vm331, %v938
        %1016 = vst.msk [vmem:[%s340 + $0xe1] sm:$0xff] %vm331, %v940
        %1017 = vst.msk [vmem:[%s340 + $0xf1] sm:$0xff] %vm331, %v942
        %1018 = vst.msk [vmem:[%s340 + $0xf9] sm:$0xff] %vm331, %v944
        %1019 = vst.msk [vmem:[%s340 + $0x109] sm:$0xff] %vm331, %v946
        %1020 = vst.msk [vmem:[%s340 + $0x111] sm:$0xff] %vm331, %v948
        %1021 = vst.msk [vmem:[%s340 + $0x121] sm:$0xff] %vm331, %v950
        %1022 = vst.msk [vmem:[%s340 + $0x129] sm:$0xff] %vm331, %v952
        %1023 = vst.msk [vmem:[%s340 + $0x139] sm:$0xff] %vm331, %v954
        %1024 = vst.msk [vmem:[%s340 + $0x141] sm:$0xff] %vm331, %v956
        %1025 = vst.msk [vmem:[%s340 + $0x151] sm:$0xff] %vm331, %v958
        %1026 = vst.msk [vmem:[%s340 + $0x159] sm:$0xff] %vm331, %v960
        %1027 = vst.msk [vmem:[%s340 + $0x169] sm:$0xff] %vm331, %v962
        %1028 = vst.msk [vmem:[%s340 + $0x171] sm:$0xff] %vm331, %v964
        %1029 = vst.msk [vmem:[%s388 + $0x2] sm:$0xff] %vm331, %v681
        %1030 = vst.msk [vmem:[%s388 + $0xa] sm:$0xff] %vm331, %v687
        %1031 = vst.msk [vmem:[%s388 + $0x1a] sm:$0xff] %vm331, %v693
        %1032 = vst.msk [vmem:[%s388 + $0x22] sm:$0xff] %vm331, %v699
        %1033 = vst.msk [vmem:[%s388 + $0x32] sm:$0xff] %vm331, %v705
        %1034 = vst.msk [vmem:[%s388 + $0x3a] sm:$0xff] %vm331, %v711
        %1035 = vst.msk [vmem:[%s388 + $0x4a] sm:$0xff] %vm331, %v717
        %1036 = vst.msk [vmem:[%s388 + $0x52] sm:$0xff] %vm331, %v723
        %1037 = vst.msk [vmem:[%s388 + $0x62] sm:$0xff] %vm331, %v729
        %1038 = vst.msk [vmem:[%s388 + $0x6a] sm:$0xff] %vm331, %v735
        %1039 = vst.msk [vmem:[%s388 + $0x7a] sm:$0xff] %vm331, %v741
        %1040 = vst.msk [vmem:[%s388 + $0x82] sm:$0xff] %vm331, %v747
        %1041 = vst.msk [vmem:[%s388 + $0x92] sm:$0xff] %vm331, %v753
        %1042 = vst.msk [vmem:[%s388 + $0x9a] sm:$0xff] %vm331, %v759
        %1043 = vst.msk [vmem:[%s388 + $0xaa] sm:$0xff] %vm331, %v765
        %1044 = vst.msk [vmem:[%s388 + $0xb2] sm:$0xff] %vm331, %v771
        %1045 = vst.msk [vmem:[%s388 + $0xc2] sm:$0xff] %vm331, %v777
        %1046 = vst.msk [vmem:[%s388 + $0xca] sm:$0xff] %vm331, %v783
        %1047 = vst.msk [vmem:[%s388 + $0xda] sm:$0xff] %vm331, %v789
        %1048 = vst.msk [vmem:[%s388 + $0xe2] sm:$0xff] %vm331, %v795
        %1049 = vst.msk [vmem:[%s388 + $0xf2] sm:$0xff] %vm331, %v801
        %1050 = vst.msk [vmem:[%s388 + $0xfa] sm:$0xff] %vm331, %v807
        %1051 = vst.msk [vmem:[%s388 + $0x10a] sm:$0xff] %vm331, %v813
        %1052 = vst.msk [vmem:[%s388 + $0x112] sm:$0xff] %vm331, %v819
        %1053 = vst.msk [vmem:[%s388 + $0x122] sm:$0xff] %vm331, %v825
        %1054 = vst.msk [vmem:[%s388 + $0x12a] sm:$0xff] %vm331, %v831
        %1055 = vst.msk [vmem:[%s388 + $0x13a] sm:$0xff] %vm331, %v837
        %1056 = vst.msk [vmem:[%s388 + $0x142] sm:$0xff] %vm331, %v843
        %1057 = vst.msk [vmem:[%s388 + $0x152] sm:$0xff] %vm331, %v849
        %1058 = vst.msk [vmem:[%s388 + $0x15a] sm:$0xff] %vm331, %v855
        %1059 = vst.msk [vmem:[%s388 + $0x16a] sm:$0xff] %vm331, %v861
        %1060 = vst.msk [vmem:[%s388 + $0x172] sm:$0xff] %vm331, %v867
        %v1061 = vld [vmem:[#allocation2] sm:$0xff]
        %v1062 = vld [vmem:[#allocation2 + $0x8] sm:$0xff]
        %v1063 = vld [vmem:[#allocation2 + $0x18] sm:$0xff]
        %v1064 = vld [vmem:[#allocation2 + $0x20] sm:$0xff]
        %v1065 = vld [vmem:[#allocation2 + $0x30] sm:$0xff]
        %v1066 = vld [vmem:[#allocation2 + $0x38] sm:$0xff]
        %v1067 = vld [vmem:[#allocation2 + $0x48] sm:$0xff]
        %v1068 = vld [vmem:[#allocation2 + $0x50] sm:$0xff]
        %v1069 = vld [vmem:[#allocation2 + $0x60] sm:$0xff]
        %v1070 = vld [vmem:[#allocation2 + $0x68] sm:$0xff]
        %v1071 = vld [vmem:[#allocation2 + $0x78] sm:$0xff]
        %v1072 = vld [vmem:[#allocation2 + $0x80] sm:$0xff]
        %v1073 = vld [vmem:[#allocation2 + $0x90] sm:$0xff]
        %v1074 = vld [vmem:[#allocation2 + $0x98] sm:$0xff]
        %v1075 = vld [vmem:[#allocation2 + $0xa8] sm:$0xff]
        %v1076 = vld [vmem:[#allocation2 + $0xb0] sm:$0xff]
        %v1077 = vld [vmem:[#allocation2 + $0xc0] sm:$0xff]
        %v1078 = vld [vmem:[#allocation2 + $0xc8] sm:$0xff]
        %v1079 = vld [vmem:[#allocation2 + $0xd8] sm:$0xff]
        %v1080 = vld [vmem:[#allocation2 + $0xe0] sm:$0xff]
        %v1081 = vld [vmem:[#allocation2 + $0xf0] sm:$0xff]
        %v1082 = vld [vmem:[#allocation2 + $0xf8] sm:$0xff]
        %v1083 = vld [vmem:[#allocation2 + $0x108] sm:$0xff]
        %v1084 = vld [vmem:[#allocation2 + $0x110] sm:$0xff]
        %v1085 = vld [vmem:[#allocation2 + $0x120] sm:$0xff]
        %v1086 = vld [vmem:[#allocation2 + $0x128] sm:$0xff]
        %v1087 = vld [vmem:[#allocation2 + $0x138] sm:$0xff]
        %v1088 = vld [vmem:[#allocation2 + $0x140] sm:$0xff]
        %v1089 = vld [vmem:[#allocation2 + $0x150] sm:$0xff]
        %v1090 = vld [vmem:[#allocation2 + $0x158] sm:$0xff]
        %v1091 = vld [vmem:[#allocation2 + $0x168] sm:$0xff]
        %v1092 = vld [vmem:[#allocation2 + $0x170] sm:$0xff]
        %1093 = vst.msk [vmem:[#allocation5] sm:$0xff] %vm331, %v1061
        %1094 = vst.msk [vmem:[#allocation5 + $0x28] sm:$0xff] %vm331, %v1062
        %1095 = vst.msk [vmem:[#allocation5 + $0x50] sm:$0xff] %vm331, %v1063
        %1096 = vst.msk [vmem:[#allocation5 + $0x78] sm:$0xff] %vm331, %v1064
        %1097 = vst.msk [vmem:[#allocation5 + $0xa0] sm:$0xff] %vm331, %v1065
        %1098 = vst.msk [vmem:[#allocation5 + $0xc8] sm:$0xff] %vm331, %v1066
        %1099 = vst.msk [vmem:[#allocation5 + $0xf0] sm:$0xff] %vm331, %v1067
        %1100 = vst.msk [vmem:[#allocation5 + $0x118] sm:$0xff] %vm331, %v1068
        %1101 = vst.msk [vmem:[#allocation5 + $0x140] sm:$0xff] %vm331, %v1069
        %1102 = vst.msk [vmem:[#allocation5 + $0x168] sm:$0xff] %vm331, %v1070
        %1103 = vst.msk [vmem:[#allocation5 + $0x190] sm:$0xff] %vm331, %v1071
        %1104 = vst.msk [vmem:[#allocation5 + $0x1b8] sm:$0xff] %vm331, %v1072
        %1105 = vst.msk [vmem:[#allocation5 + $0x1e0] sm:$0xff] %vm331, %v1073
        %1106 = vst.msk [vmem:[#allocation5 + $0x208] sm:$0xff] %vm331, %v1074
        %1107 = vst.msk [vmem:[#allocation5 + $0x230] sm:$0xff] %vm331, %v1075
        %1108 = vst.msk [vmem:[#allocation5 + $0x258] sm:$0xff] %vm331, %v1076
        %1109 = vst.msk [vmem:[#allocation5 + $0x280] sm:$0xff] %vm331, %v1077
        %1110 = vst.msk [vmem:[#allocation5 + $0x2a8] sm:$0xff] %vm331, %v1078
        %1111 = vst.msk [vmem:[#allocation5 + $0x2d0] sm:$0xff] %vm331, %v1079
        %1112 = vst.msk [vmem:[#allocation5 + $0x2f8] sm:$0xff] %vm331, %v1080
        %1113 = vst.msk [vmem:[#allocation5 + $0x320] sm:$0xff] %vm331, %v1081
        %1114 = vst.msk [vmem:[#allocation5 + $0x348] sm:$0xff] %vm331, %v1082
        %1115 = vst.msk [vmem:[#allocation5 + $0x370] sm:$0xff] %vm331, %v1083
        %1116 = vst.msk [vmem:[#allocation5 + $0x398] sm:$0xff] %vm331, %v1084
        %1117 = vst.msk [vmem:[#allocation5 + $0x3c0] sm:$0xff] %vm331, %v1085
        %1118 = vst.msk [vmem:[#allocation5 + $0x3e8] sm:$0xff] %vm331, %v1086
        %1119 = vst.msk [vmem:[#allocation5 + $0x410] sm:$0xff] %vm331, %v1087
        %1120 = vst.msk [vmem:[#allocation5 + $0x438] sm:$0xff] %vm331, %v1088
        %1121 = vst.msk [vmem:[#allocation5 + $0x460] sm:$0xff] %vm331, %v1089
        %1122 = vst.msk [vmem:[#allocation5 + $0x488] sm:$0xff] %vm331, %v1090
        %1123 = vst.msk [vmem:[#allocation5 + $0x4b0] sm:$0xff] %vm331, %v1091
        %1124 = vst.msk [vmem:[#allocation5 + $0x4d8] sm:$0xff] %vm331, %v1092
        %v1125 = vld [vmem:[#allocation2 + $0x1] sm:$0xff]
        %v1126 = vld [vmem:[#allocation2 + $0x9] sm:$0xff]
        %v1127 = vld [vmem:[#allocation2 + $0x19] sm:$0xff]
        %v1128 = vld [vmem:[#allocation2 + $0x21] sm:$0xff]
        %v1129 = vld [vmem:[#allocation2 + $0x31] sm:$0xff]
        %v1130 = vld [vmem:[#allocation2 + $0x39] sm:$0xff]
        %v1131 = vld [vmem:[#allocation2 + $0x49] sm:$0xff]
        %v1132 = vld [vmem:[#allocation2 + $0x51] sm:$0xff]
        %v1133 = vld [vmem:[#allocation2 + $0x61] sm:$0xff]
        %v1134 = vld [vmem:[#allocation2 + $0x69] sm:$0xff]
        %v1135 = vld [vmem:[#allocation2 + $0x79] sm:$0xff]
        %v1136 = vld [vmem:[#allocation2 + $0x81] sm:$0xff]
        %v1137 = vld [vmem:[#allocation2 + $0x91] sm:$0xff]
        %v1138 = vld [vmem:[#allocation2 + $0x99] sm:$0xff]
        %v1139 = vld [vmem:[#allocation2 + $0xa9] sm:$0xff]
        %v1140 = vld [vmem:[#allocation2 + $0xb1] sm:$0xff]
        %v1141 = vld [vmem:[#allocation2 + $0xc1] sm:$0xff]
        %v1142 = vld [vmem:[#allocation2 + $0xc9] sm:$0xff]
        %v1143 = vld [vmem:[#allocation2 + $0xd9] sm:$0xff]
        %v1144 = vld [vmem:[#allocation2 + $0xe1] sm:$0xff]
        %v1145 = vld [vmem:[#allocation2 + $0xf1] sm:$0xff]
        %v1146 = vld [vmem:[#allocation2 + $0xf9] sm:$0xff]
        %v1147 = vld [vmem:[#allocation2 + $0x109] sm:$0xff]
        %v1148 = vld [vmem:[#allocation2 + $0x111] sm:$0xff]
        %v1149 = vld [vmem:[#allocation2 + $0x121] sm:$0xff]
        %v1150 = vld [vmem:[#allocation2 + $0x129] sm:$0xff]
        %v1151 = vld [vmem:[#allocation2 + $0x139] sm:$0xff]
        %v1152 = vld [vmem:[#allocation2 + $0x141] sm:$0xff]
        %v1153 = vld [vmem:[#allocation2 + $0x151] sm:$0xff]
        %v1154 = vld [vmem:[#allocation2 + $0x159] sm:$0xff]
        %v1155 = vld [vmem:[#allocation2 + $0x169] sm:$0xff]
        %v1156 = vld [vmem:[#allocation2 + $0x171] sm:$0xff]
        %1189 = vrot.lane.b32.xlu0 %v1125, 64
        %v1190 = vpop.permute.xlu0 %1189
        %1191 = vrot.lane.b32.xlu0 %v1126, 64
        %v1192 = vpop.permute.xlu0 %1191
        %1193 = vrot.lane.b32.xlu0 %v1127, 64
        %v1194 = vpop.permute.xlu0 %1193
        %1195 = vrot.lane.b32.xlu0 %v1128, 64
        %v1196 = vpop.permute.xlu0 %1195
        %1197 = vrot.lane.b32.xlu0 %v1129, 64
        %v1198 = vpop.permute.xlu0 %1197
        %1199 = vrot.lane.b32.xlu0 %v1130, 64
        %v1200 = vpop.permute.xlu0 %1199
        %1201 = vrot.lane.b32.xlu0 %v1131, 64
        %v1202 = vpop.permute.xlu0 %1201
        %1203 = vrot.lane.b32.xlu0 %v1132, 64
        %v1204 = vpop.permute.xlu0 %1203
        %1205 = vrot.lane.b32.xlu0 %v1133, 64
        %v1206 = vpop.permute.xlu0 %1205
        %1207 = vrot.lane.b32.xlu0 %v1134, 64
        %v1208 = vpop.permute.xlu0 %1207
        %1209 = vrot.lane.b32.xlu0 %v1135, 64
        %v1210 = vpop.permute.xlu0 %1209
        %1211 = vrot.lane.b32.xlu0 %v1136, 64
        %v1212 = vpop.permute.xlu0 %1211
        %1213 = vrot.lane.b32.xlu0 %v1137, 64
        %v1214 = vpop.permute.xlu0 %1213
        %1215 = vrot.lane.b32.xlu0 %v1138, 64
        %v1216 = vpop.permute.xlu0 %1215
        %1217 = vrot.lane.b32.xlu0 %v1139, 64
        %v1218 = vpop.permute.xlu0 %1217
        %1219 = vrot.lane.b32.xlu0 %v1140, 64
        %v1220 = vpop.permute.xlu0 %1219
        %1221 = vrot.lane.b32.xlu0 %v1141, 64
        %v1222 = vpop.permute.xlu0 %1221
        %1223 = vrot.lane.b32.xlu0 %v1142, 64
        %v1224 = vpop.permute.xlu0 %1223
        %1225 = vrot.lane.b32.xlu0 %v1143, 64
        %v1226 = vpop.permute.xlu0 %1225
        %1227 = vrot.lane.b32.xlu0 %v1144, 64
        %v1228 = vpop.permute.xlu0 %1227
        %1229 = vrot.lane.b32.xlu0 %v1145, 64
        %v1230 = vpop.permute.xlu0 %1229
        %1231 = vrot.lane.b32.xlu0 %v1146, 64
        %v1232 = vpop.permute.xlu0 %1231
        %1233 = vrot.lane.b32.xlu0 %v1147, 64
        %v1234 = vpop.permute.xlu0 %1233
        %1235 = vrot.lane.b32.xlu0 %v1148, 64
        %v1236 = vpop.permute.xlu0 %1235
        %1237 = vrot.lane.b32.xlu0 %v1149, 64
        %v1238 = vpop.permute.xlu0 %1237
        %1239 = vrot.lane.b32.xlu0 %v1150, 64
        %v1240 = vpop.permute.xlu0 %1239
        %1241 = vrot.lane.b32.xlu0 %v1151, 64
        %v1242 = vpop.permute.xlu0 %1241
        %1243 = vrot.lane.b32.xlu0 %v1152, 64
        %v1244 = vpop.permute.xlu0 %1243
        %1245 = vrot.lane.b32.xlu0 %v1153, 64
        %v1246 = vpop.permute.xlu0 %1245
        %1247 = vrot.lane.b32.xlu0 %v1154, 64
        %v1248 = vpop.permute.xlu0 %1247
        %1249 = vrot.lane.b32.xlu0 %v1155, 64
        %v1250 = vpop.permute.xlu0 %1249
        %1251 = vrot.lane.b32.xlu0 %v1156, 64
        %v1252 = vpop.permute.xlu0 %1251
        %vm1285 = vcmask 1048064
        %1286 = vst.msk [vmem:[#allocation5] sm:$0xff] %vm1285, %v1190
        %1287 = vst.msk [vmem:[#allocation5 + $0x28] sm:$0xff] %vm1285, %v1192
        %1288 = vst.msk [vmem:[#allocation5 + $0x50] sm:$0xff] %vm1285, %v1194
        %1289 = vst.msk [vmem:[#allocation5 + $0x78] sm:$0xff] %vm1285, %v1196
        %1290 = vst.msk [vmem:[#allocation5 + $0xa0] sm:$0xff] %vm1285, %v1198
        %1291 = vst.msk [vmem:[#allocation5 + $0xc8] sm:$0xff] %vm1285, %v1200
        %1292 = vst.msk [vmem:[#allocation5 + $0xf0] sm:$0xff] %vm1285, %v1202
        %1293 = vst.msk [vmem:[#allocation5 + $0x118] sm:$0xff] %vm1285, %v1204
        %1294 = vst.msk [vmem:[#allocation5 + $0x140] sm:$0xff] %vm1285, %v1206
        %1295 = vst.msk [vmem:[#allocation5 + $0x168] sm:$0xff] %vm1285, %v1208
        %1296 = vst.msk [vmem:[#allocation5 + $0x190] sm:$0xff] %vm1285, %v1210
        %1297 = vst.msk [vmem:[#allocation5 + $0x1b8] sm:$0xff] %vm1285, %v1212
        %1298 = vst.msk [vmem:[#allocation5 + $0x1e0] sm:$0xff] %vm1285, %v1214
        %1299 = vst.msk [vmem:[#allocation5 + $0x208] sm:$0xff] %vm1285, %v1216
        %1300 = vst.msk [vmem:[#allocation5 + $0x230] sm:$0xff] %vm1285, %v1218
        %1301 = vst.msk [vmem:[#allocation5 + $0x258] sm:$0xff] %vm1285, %v1220
        %1302 = vst.msk [vmem:[#allocation5 + $0x280] sm:$0xff] %vm1285, %v1222
        %1303 = vst.msk [vmem:[#allocation5 + $0x2a8] sm:$0xff] %vm1285, %v1224
        %1304 = vst.msk [vmem:[#allocation5 + $0x2d0] sm:$0xff] %vm1285, %v1226
        %1305 = vst.msk [vmem:[#allocation5 + $0x2f8] sm:$0xff] %vm1285, %v1228
        %1306 = vst.msk [vmem:[#allocation5 + $0x320] sm:$0xff] %vm1285, %v1230
        %1307 = vst.msk [vmem:[#allocation5 + $0x348] sm:$0xff] %vm1285, %v1232
        %1308 = vst.msk [vmem:[#allocation5 + $0x370] sm:$0xff] %vm1285, %v1234
        %1309 = vst.msk [vmem:[#allocation5 + $0x398] sm:$0xff] %vm1285, %v1236
        %1310 = vst.msk [vmem:[#allocation5 + $0x3c0] sm:$0xff] %vm1285, %v1238
        %1311 = vst.msk [vmem:[#allocation5 + $0x3e8] sm:$0xff] %vm1285, %v1240
        %1312 = vst.msk [vmem:[#allocation5 + $0x410] sm:$0xff] %vm1285, %v1242
        %1313 = vst.msk [vmem:[#allocation5 + $0x438] sm:$0xff] %vm1285, %v1244
        %1314 = vst.msk [vmem:[#allocation5 + $0x460] sm:$0xff] %vm1285, %v1246
        %1315 = vst.msk [vmem:[#allocation5 + $0x488] sm:$0xff] %vm1285, %v1248
        %1316 = vst.msk [vmem:[#allocation5 + $0x4b0] sm:$0xff] %vm1285, %v1250
        %1317 = vst.msk [vmem:[#allocation5 + $0x4d8] sm:$0xff] %vm1285, %v1252
        %v1318 = vld [vmem:[#allocation2 + $0x2] sm:$0xff]
        %v1319 = vld [vmem:[#allocation2 + $0xa] sm:$0xff]
        %v1320 = vld [vmem:[#allocation2 + $0x1a] sm:$0xff]
        %v1321 = vld [vmem:[#allocation2 + $0x22] sm:$0xff]
        %v1322 = vld [vmem:[#allocation2 + $0x32] sm:$0xff]
        %v1323 = vld [vmem:[#allocation2 + $0x3a] sm:$0xff]
        %v1324 = vld [vmem:[#allocation2 + $0x4a] sm:$0xff]
        %v1325 = vld [vmem:[#allocation2 + $0x52] sm:$0xff]
        %v1326 = vld [vmem:[#allocation2 + $0x62] sm:$0xff]
        %v1327 = vld [vmem:[#allocation2 + $0x6a] sm:$0xff]
        %v1328 = vld [vmem:[#allocation2 + $0x7a] sm:$0xff]
        %v1329 = vld [vmem:[#allocation2 + $0x82] sm:$0xff]
        %v1330 = vld [vmem:[#allocation2 + $0x92] sm:$0xff]
        %v1331 = vld [vmem:[#allocation2 + $0x9a] sm:$0xff]
        %v1332 = vld [vmem:[#allocation2 + $0xaa] sm:$0xff]
        %v1333 = vld [vmem:[#allocation2 + $0xb2] sm:$0xff]
        %v1334 = vld [vmem:[#allocation2 + $0xc2] sm:$0xff]
        %v1335 = vld [vmem:[#allocation2 + $0xca] sm:$0xff]
        %v1336 = vld [vmem:[#allocation2 + $0xda] sm:$0xff]
        %v1337 = vld [vmem:[#allocation2 + $0xe2] sm:$0xff]
        %v1338 = vld [vmem:[#allocation2 + $0xf2] sm:$0xff]
        %v1339 = vld [vmem:[#allocation2 + $0xfa] sm:$0xff]
        %v1340 = vld [vmem:[#allocation2 + $0x10a] sm:$0xff]
        %v1341 = vld [vmem:[#allocation2 + $0x112] sm:$0xff]
        %v1342 = vld [vmem:[#allocation2 + $0x122] sm:$0xff]
        %v1343 = vld [vmem:[#allocation2 + $0x12a] sm:$0xff]
        %v1344 = vld [vmem:[#allocation2 + $0x13a] sm:$0xff]
        %v1345 = vld [vmem:[#allocation2 + $0x142] sm:$0xff]
        %v1346 = vld [vmem:[#allocation2 + $0x152] sm:$0xff]
        %v1347 = vld [vmem:[#allocation2 + $0x15a] sm:$0xff]
        %v1348 = vld [vmem:[#allocation2 + $0x16a] sm:$0xff]
        %v1349 = vld [vmem:[#allocation2 + $0x172] sm:$0xff]
        %1350 = vst.msk [vmem:[#allocation5 + $0x8] sm:$0xff] %vm331, %v1318
        %1351 = vst.msk [vmem:[#allocation5 + $0x30] sm:$0xff] %vm331, %v1319
        %1352 = vst.msk [vmem:[#allocation5 + $0x58] sm:$0xff] %vm331, %v1320
        %1353 = vst.msk [vmem:[#allocation5 + $0x80] sm:$0xff] %vm331, %v1321
        %1354 = vst.msk [vmem:[#allocation5 + $0xa8] sm:$0xff] %vm331, %v1322
        %1355 = vst.msk [vmem:[#allocation5 + $0xd0] sm:$0xff] %vm331, %v1323
        %1356 = vst.msk [vmem:[#allocation5 + $0xf8] sm:$0xff] %vm331, %v1324
        %1357 = vst.msk [vmem:[#allocation5 + $0x120] sm:$0xff] %vm331, %v1325
        %1358 = vst.msk [vmem:[#allocation5 + $0x148] sm:$0xff] %vm331, %v1326
        %1359 = vst.msk [vmem:[#allocation5 + $0x170] sm:$0xff] %vm331, %v1327
        %1360 = vst.msk [vmem:[#allocation5 + $0x198] sm:$0xff] %vm331, %v1328
        %1361 = vst.msk [vmem:[#allocation5 + $0x1c0] sm:$0xff] %vm331, %v1329
        %1362 = vst.msk [vmem:[#allocation5 + $0x1e8] sm:$0xff] %vm331, %v1330
        %1363 = vst.msk [vmem:[#allocation5 + $0x210] sm:$0xff] %vm331, %v1331
        %1364 = vst.msk [vmem:[#allocation5 + $0x238] sm:$0xff] %vm331, %v1332
        %1365 = vst.msk [vmem:[#allocation5 + $0x260] sm:$0xff] %vm331, %v1333
        %1366 = vst.msk [vmem:[#allocation5 + $0x288] sm:$0xff] %vm331, %v1334
        %1367 = vst.msk [vmem:[#allocation5 + $0x2b0] sm:$0xff] %vm331, %v1335
        %1368 = vst.msk [vmem:[#allocation5 + $0x2d8] sm:$0xff] %vm331, %v1336
        %1369 = vst.msk [vmem:[#allocation5 + $0x300] sm:$0xff] %vm331, %v1337
        %1370 = vst.msk [vmem:[#allocation5 + $0x328] sm:$0xff] %vm331, %v1338
        %1371 = vst.msk [vmem:[#allocation5 + $0x350] sm:$0xff] %vm331, %v1339
        %1372 = vst.msk [vmem:[#allocation5 + $0x378] sm:$0xff] %vm331, %v1340
        %1373 = vst.msk [vmem:[#allocation5 + $0x3a0] sm:$0xff] %vm331, %v1341
        %1374 = vst.msk [vmem:[#allocation5 + $0x3c8] sm:$0xff] %vm331, %v1342
        %1375 = vst.msk [vmem:[#allocation5 + $0x3f0] sm:$0xff] %vm331, %v1343
        %1376 = vst.msk [vmem:[#allocation5 + $0x418] sm:$0xff] %vm331, %v1344
        %1377 = vst.msk [vmem:[#allocation5 + $0x440] sm:$0xff] %vm331, %v1345
        %1378 = vst.msk [vmem:[#allocation5 + $0x468] sm:$0xff] %vm331, %v1346
        %1379 = vst.msk [vmem:[#allocation5 + $0x490] sm:$0xff] %vm331, %v1347
        %1380 = vst.msk [vmem:[#allocation5 + $0x4b8] sm:$0xff] %vm331, %v1348
        %1381 = vst.msk [vmem:[#allocation5 + $0x4e0] sm:$0xff] %vm331, %v1349
        %v1382 = vld [vmem:[%s340] sm:$0xff]
        %v1383 = vld [vmem:[%s340 + $0x8] sm:$0xff]
        %v1384 = vld [vmem:[%s340 + $0x18] sm:$0xff]
        %v1385 = vld [vmem:[%s340 + $0x20] sm:$0xff]
        %v1386 = vld [vmem:[%s340 + $0x30] sm:$0xff]
        %v1387 = vld [vmem:[%s340 + $0x38] sm:$0xff]
        %v1388 = vld [vmem:[%s340 + $0x48] sm:$0xff]
        %v1389 = vld [vmem:[%s340 + $0x50] sm:$0xff]
        %v1390 = vld [vmem:[%s340 + $0x60] sm:$0xff]
        %v1391 = vld [vmem:[%s340 + $0x68] sm:$0xff]
        %v1392 = vld [vmem:[%s340 + $0x78] sm:$0xff]
        %v1393 = vld [vmem:[%s340 + $0x80] sm:$0xff]
        %v1394 = vld [vmem:[%s340 + $0x90] sm:$0xff]
        %v1395 = vld [vmem:[%s340 + $0x98] sm:$0xff]
        %v1396 = vld [vmem:[%s340 + $0xa8] sm:$0xff]
        %v1397 = vld [vmem:[%s340 + $0xb0] sm:$0xff]
        %v1398 = vld [vmem:[%s340 + $0xc0] sm:$0xff]
        %v1399 = vld [vmem:[%s340 + $0xc8] sm:$0xff]
        %v1400 = vld [vmem:[%s340 + $0xd8] sm:$0xff]
        %v1401 = vld [vmem:[%s340 + $0xe0] sm:$0xff]
        %v1402 = vld [vmem:[%s340 + $0xf0] sm:$0xff]
        %v1403 = vld [vmem:[%s340 + $0xf8] sm:$0xff]
        %v1404 = vld [vmem:[%s340 + $0x108] sm:$0xff]
        %v1405 = vld [vmem:[%s340 + $0x110] sm:$0xff]
        %v1406 = vld [vmem:[%s340 + $0x120] sm:$0xff]
        %v1407 = vld [vmem:[%s340 + $0x128] sm:$0xff]
        %v1408 = vld [vmem:[%s340 + $0x138] sm:$0xff]
        %v1409 = vld [vmem:[%s340 + $0x140] sm:$0xff]
        %v1410 = vld [vmem:[%s340 + $0x150] sm:$0xff]
        %v1411 = vld [vmem:[%s340 + $0x158] sm:$0xff]
        %v1412 = vld [vmem:[%s340 + $0x168] sm:$0xff]
        %v1413 = vld [vmem:[%s340 + $0x170] sm:$0xff]
        %1446 = vrot.lane.b32.xlu0 %v1382, 64
        %v1447 = vpop.permute.xlu0 %1446
        %1448 = vrot.lane.b32.xlu0 %v1383, 64
        %v1449 = vpop.permute.xlu0 %1448
        %1450 = vrot.lane.b32.xlu0 %v1384, 64
        %v1451 = vpop.permute.xlu0 %1450
        %1452 = vrot.lane.b32.xlu0 %v1385, 64
        %v1453 = vpop.permute.xlu0 %1452
        %1454 = vrot.lane.b32.xlu0 %v1386, 64
        %v1455 = vpop.permute.xlu0 %1454
        %1456 = vrot.lane.b32.xlu0 %v1387, 64
        %v1457 = vpop.permute.xlu0 %1456
        %1458 = vrot.lane.b32.xlu0 %v1388, 64
        %v1459 = vpop.permute.xlu0 %1458
        %1460 = vrot.lane.b32.xlu0 %v1389, 64
        %v1461 = vpop.permute.xlu0 %1460
        %1462 = vrot.lane.b32.xlu0 %v1390, 64
        %v1463 = vpop.permute.xlu0 %1462
        %1464 = vrot.lane.b32.xlu0 %v1391, 64
        %v1465 = vpop.permute.xlu0 %1464
        %1466 = vrot.lane.b32.xlu0 %v1392, 64
        %v1467 = vpop.permute.xlu0 %1466
        %1468 = vrot.lane.b32.xlu0 %v1393, 64
        %v1469 = vpop.permute.xlu0 %1468
        %1470 = vrot.lane.b32.xlu0 %v1394, 64
        %v1471 = vpop.permute.xlu0 %1470
        %1472 = vrot.lane.b32.xlu0 %v1395, 64
        %v1473 = vpop.permute.xlu0 %1472
        %1474 = vrot.lane.b32.xlu0 %v1396, 64
        %v1475 = vpop.permute.xlu0 %1474
        %1476 = vrot.lane.b32.xlu0 %v1397, 64
        %v1477 = vpop.permute.xlu0 %1476
        %1478 = vrot.lane.b32.xlu0 %v1398, 64
        %v1479 = vpop.permute.xlu0 %1478
        %1480 = vrot.lane.b32.xlu0 %v1399, 64
        %v1481 = vpop.permute.xlu0 %1480
        %1482 = vrot.lane.b32.xlu0 %v1400, 64
        %v1483 = vpop.permute.xlu0 %1482
        %1484 = vrot.lane.b32.xlu0 %v1401, 64
        %v1485 = vpop.permute.xlu0 %1484
        %1486 = vrot.lane.b32.xlu0 %v1402, 64
        %v1487 = vpop.permute.xlu0 %1486
        %1488 = vrot.lane.b32.xlu0 %v1403, 64
        %v1489 = vpop.permute.xlu0 %1488
        %1490 = vrot.lane.b32.xlu0 %v1404, 64
        %v1491 = vpop.permute.xlu0 %1490
        %1492 = vrot.lane.b32.xlu0 %v1405, 64
        %v1493 = vpop.permute.xlu0 %1492
        %1494 = vrot.lane.b32.xlu0 %v1406, 64
        %v1495 = vpop.permute.xlu0 %1494
        %1496 = vrot.lane.b32.xlu0 %v1407, 64
        %v1497 = vpop.permute.xlu0 %1496
        %1498 = vrot.lane.b32.xlu0 %v1408, 64
        %v1499 = vpop.permute.xlu0 %1498
        %1500 = vrot.lane.b32.xlu0 %v1409, 64
        %v1501 = vpop.permute.xlu0 %1500
        %1502 = vrot.lane.b32.xlu0 %v1410, 64
        %v1503 = vpop.permute.xlu0 %1502
        %1504 = vrot.lane.b32.xlu0 %v1411, 64
        %v1505 = vpop.permute.xlu0 %1504
        %1506 = vrot.lane.b32.xlu0 %v1412, 64
        %v1507 = vpop.permute.xlu0 %1506
        %1508 = vrot.lane.b32.xlu0 %v1413, 64
        %v1509 = vpop.permute.xlu0 %1508
        %1542 = vst.msk [vmem:[#allocation5 + $0x8] sm:$0xff] %vm1285, %v1447
        %1543 = vst.msk [vmem:[#allocation5 + $0x30] sm:$0xff] %vm1285, %v1449
        %1544 = vst.msk [vmem:[#allocation5 + $0x58] sm:$0xff] %vm1285, %v1451
        %1545 = vst.msk [vmem:[#allocation5 + $0x80] sm:$0xff] %vm1285, %v1453
        %1546 = vst.msk [vmem:[#allocation5 + $0xa8] sm:$0xff] %vm1285, %v1455
        %1547 = vst.msk [vmem:[#allocation5 + $0xd0] sm:$0xff] %vm1285, %v1457
        %1548 = vst.msk [vmem:[#allocation5 + $0xf8] sm:$0xff] %vm1285, %v1459
        %1549 = vst.msk [vmem:[#allocation5 + $0x120] sm:$0xff] %vm1285, %v1461
        %1550 = vst.msk [vmem:[#allocation5 + $0x148] sm:$0xff] %vm1285, %v1463
        %1551 = vst.msk [vmem:[#allocation5 + $0x170] sm:$0xff] %vm1285, %v1465
        %1552 = vst.msk [vmem:[#allocation5 + $0x198] sm:$0xff] %vm1285, %v1467
        %1553 = vst.msk [vmem:[#allocation5 + $0x1c0] sm:$0xff] %vm1285, %v1469
        %1554 = vst.msk [vmem:[#allocation5 + $0x1e8] sm:$0xff] %vm1285, %v1471
        %1555 = vst.msk [vmem:[#allocation5 + $0x210] sm:$0xff] %vm1285, %v1473
        %1556 = vst.msk [vmem:[#allocation5 + $0x238] sm:$0xff] %vm1285, %v1475
        %1557 = vst.msk [vmem:[#allocation5 + $0x260] sm:$0xff] %vm1285, %v1477
        %1558 = vst.msk [vmem:[#allocation5 + $0x288] sm:$0xff] %vm1285, %v1479
        %1559 = vst.msk [vmem:[#allocation5 + $0x2b0] sm:$0xff] %vm1285, %v1481
        %1560 = vst.msk [vmem:[#allocation5 + $0x2d8] sm:$0xff] %vm1285, %v1483
        %1561 = vst.msk [vmem:[#allocation5 + $0x300] sm:$0xff] %vm1285, %v1485
        %1562 = vst.msk [vmem:[#allocation5 + $0x328] sm:$0xff] %vm1285, %v1487
        %1563 = vst.msk [vmem:[#allocation5 + $0x350] sm:$0xff] %vm1285, %v1489
        %1564 = vst.msk [vmem:[#allocation5 + $0x378] sm:$0xff] %vm1285, %v1491
        %1565 = vst.msk [vmem:[#allocation5 + $0x3a0] sm:$0xff] %vm1285, %v1493
        %1566 = vst.msk [vmem:[#allocation5 + $0x3c8] sm:$0xff] %vm1285, %v1495
        %1567 = vst.msk [vmem:[#allocation5 + $0x3f0] sm:$0xff] %vm1285, %v1497
        %1568 = vst.msk [vmem:[#allocation5 + $0x418] sm:$0xff] %vm1285, %v1499
        %1569 = vst.msk [vmem:[#allocation5 + $0x440] sm:$0xff] %vm1285, %v1501
        %1570 = vst.msk [vmem:[#allocation5 + $0x468] sm:$0xff] %vm1285, %v1503
        %1571 = vst.msk [vmem:[#allocation5 + $0x490] sm:$0xff] %vm1285, %v1505
        %1572 = vst.msk [vmem:[#allocation5 + $0x4b8] sm:$0xff] %vm1285, %v1507
        %1573 = vst.msk [vmem:[#allocation5 + $0x4e0] sm:$0xff] %vm1285, %v1509
        %v1574 = vld [vmem:[%s340 + $0x1] sm:$0xff]
        %v1575 = vld [vmem:[%s340 + $0x9] sm:$0xff]
        %v1576 = vld [vmem:[%s340 + $0x19] sm:$0xff]
        %v1577 = vld [vmem:[%s340 + $0x21] sm:$0xff]
        %v1578 = vld [vmem:[%s340 + $0x31] sm:$0xff]
        %v1579 = vld [vmem:[%s340 + $0x39] sm:$0xff]
        %v1580 = vld [vmem:[%s340 + $0x49] sm:$0xff]
        %v1581 = vld [vmem:[%s340 + $0x51] sm:$0xff]
        %v1582 = vld [vmem:[%s340 + $0x61] sm:$0xff]
        %v1583 = vld [vmem:[%s340 + $0x69] sm:$0xff]
        %v1584 = vld [vmem:[%s340 + $0x79] sm:$0xff]
        %v1585 = vld [vmem:[%s340 + $0x81] sm:$0xff]
        %v1586 = vld [vmem:[%s340 + $0x91] sm:$0xff]
        %v1587 = vld [vmem:[%s340 + $0x99] sm:$0xff]
        %v1588 = vld [vmem:[%s340 + $0xa9] sm:$0xff]
        %v1589 = vld [vmem:[%s340 + $0xb1] sm:$0xff]
        %v1590 = vld [vmem:[%s340 + $0xc1] sm:$0xff]
        %v1591 = vld [vmem:[%s340 + $0xc9] sm:$0xff]
        %v1592 = vld [vmem:[%s340 + $0xd9] sm:$0xff]
        %v1593 = vld [vmem:[%s340 + $0xe1] sm:$0xff]
        %v1594 = vld [vmem:[%s340 + $0xf1] sm:$0xff]
        %v1595 = vld [vmem:[%s340 + $0xf9] sm:$0xff]
        %v1596 = vld [vmem:[%s340 + $0x109] sm:$0xff]
        %v1597 = vld [vmem:[%s340 + $0x111] sm:$0xff]
        %v1598 = vld [vmem:[%s340 + $0x121] sm:$0xff]
        %v1599 = vld [vmem:[%s340 + $0x129] sm:$0xff]
        %v1600 = vld [vmem:[%s340 + $0x139] sm:$0xff]
        %v1601 = vld [vmem:[%s340 + $0x141] sm:$0xff]
        %v1602 = vld [vmem:[%s340 + $0x151] sm:$0xff]
        %v1603 = vld [vmem:[%s340 + $0x159] sm:$0xff]
        %v1604 = vld [vmem:[%s340 + $0x169] sm:$0xff]
        %v1605 = vld [vmem:[%s340 + $0x171] sm:$0xff]
        %1606 = vst.msk [vmem:[#allocation5 + $0x10] sm:$0xff] %vm331, %v1574
        %1607 = vst.msk [vmem:[#allocation5 + $0x38] sm:$0xff] %vm331, %v1575
        %1608 = vst.msk [vmem:[#allocation5 + $0x60] sm:$0xff] %vm331, %v1576
        %1609 = vst.msk [vmem:[#allocation5 + $0x88] sm:$0xff] %vm331, %v1577
        %1610 = vst.msk [vmem:[#allocation5 + $0xb0] sm:$0xff] %vm331, %v1578
        %1611 = vst.msk [vmem:[#allocation5 + $0xd8] sm:$0xff] %vm331, %v1579
        %1612 = vst.msk [vmem:[#allocation5 + $0x100] sm:$0xff] %vm331, %v1580
        %1613 = vst.msk [vmem:[#allocation5 + $0x128] sm:$0xff] %vm331, %v1581
        %1614 = vst.msk [vmem:[#allocation5 + $0x150] sm:$0xff] %vm331, %v1582
        %1615 = vst.msk [vmem:[#allocation5 + $0x178] sm:$0xff] %vm331, %v1583
        %1616 = vst.msk [vmem:[#allocation5 + $0x1a0] sm:$0xff] %vm331, %v1584
        %1617 = vst.msk [vmem:[#allocation5 + $0x1c8] sm:$0xff] %vm331, %v1585
        %1618 = vst.msk [vmem:[#allocation5 + $0x1f0] sm:$0xff] %vm331, %v1586
        %1619 = vst.msk [vmem:[#allocation5 + $0x218] sm:$0xff] %vm331, %v1587
        %1620 = vst.msk [vmem:[#allocation5 + $0x240] sm:$0xff] %vm331, %v1588
        %1621 = vst.msk [vmem:[#allocation5 + $0x268] sm:$0xff] %vm331, %v1589
        %1622 = vst.msk [vmem:[#allocation5 + $0x290] sm:$0xff] %vm331, %v1590
        %1623 = vst.msk [vmem:[#allocation5 + $0x2b8] sm:$0xff] %vm331, %v1591
        %1624 = vst.msk [vmem:[#allocation5 + $0x2e0] sm:$0xff] %vm331, %v1592
        %1625 = vst.msk [vmem:[#allocation5 + $0x308] sm:$0xff] %vm331, %v1593
        %1626 = vst.msk [vmem:[#allocation5 + $0x330] sm:$0xff] %vm331, %v1594
        %1627 = vst.msk [vmem:[#allocation5 + $0x358] sm:$0xff] %vm331, %v1595
        %1628 = vst.msk [vmem:[#allocation5 + $0x380] sm:$0xff] %vm331, %v1596
        %1629 = vst.msk [vmem:[#allocation5 + $0x3a8] sm:$0xff] %vm331, %v1597
        %1630 = vst.msk [vmem:[#allocation5 + $0x3d0] sm:$0xff] %vm331, %v1598
        %1631 = vst.msk [vmem:[#allocation5 + $0x3f8] sm:$0xff] %vm331, %v1599
        %1632 = vst.msk [vmem:[#allocation5 + $0x420] sm:$0xff] %vm331, %v1600
        %1633 = vst.msk [vmem:[#allocation5 + $0x448] sm:$0xff] %vm331, %v1601
        %1634 = vst.msk [vmem:[#allocation5 + $0x470] sm:$0xff] %vm331, %v1602
        %1635 = vst.msk [vmem:[#allocation5 + $0x498] sm:$0xff] %vm331, %v1603
        %1636 = vst.msk [vmem:[#allocation5 + $0x4c0] sm:$0xff] %vm331, %v1604
        %1637 = vst.msk [vmem:[#allocation5 + $0x4e8] sm:$0xff] %vm331, %v1605
        %v1638 = vld [vmem:[%s340 + $0x2] sm:$0xff]
        %v1639 = vld [vmem:[%s340 + $0xa] sm:$0xff]
        %v1640 = vld [vmem:[%s340 + $0x1a] sm:$0xff]
        %v1641 = vld [vmem:[%s340 + $0x22] sm:$0xff]
        %v1642 = vld [vmem:[%s340 + $0x32] sm:$0xff]
        %v1643 = vld [vmem:[%s340 + $0x3a] sm:$0xff]
        %v1644 = vld [vmem:[%s340 + $0x4a] sm:$0xff]
        %v1645 = vld [vmem:[%s340 + $0x52] sm:$0xff]
        %v1646 = vld [vmem:[%s340 + $0x62] sm:$0xff]
        %v1647 = vld [vmem:[%s340 + $0x6a] sm:$0xff]
        %v1648 = vld [vmem:[%s340 + $0x7a] sm:$0xff]
        %v1649 = vld [vmem:[%s340 + $0x82] sm:$0xff]
        %v1650 = vld [vmem:[%s340 + $0x92] sm:$0xff]
        %v1651 = vld [vmem:[%s340 + $0x9a] sm:$0xff]
        %v1652 = vld [vmem:[%s340 + $0xaa] sm:$0xff]
        %v1653 = vld [vmem:[%s340 + $0xb2] sm:$0xff]
        %v1654 = vld [vmem:[%s340 + $0xc2] sm:$0xff]
        %v1655 = vld [vmem:[%s340 + $0xca] sm:$0xff]
        %v1656 = vld [vmem:[%s340 + $0xda] sm:$0xff]
        %v1657 = vld [vmem:[%s340 + $0xe2] sm:$0xff]
        %v1658 = vld [vmem:[%s340 + $0xf2] sm:$0xff]
        %v1659 = vld [vmem:[%s340 + $0xfa] sm:$0xff]
        %v1660 = vld [vmem:[%s340 + $0x10a] sm:$0xff]
        %v1661 = vld [vmem:[%s340 + $0x112] sm:$0xff]
        %v1662 = vld [vmem:[%s340 + $0x122] sm:$0xff]
        %v1663 = vld [vmem:[%s340 + $0x12a] sm:$0xff]
        %v1664 = vld [vmem:[%s340 + $0x13a] sm:$0xff]
        %v1665 = vld [vmem:[%s340 + $0x142] sm:$0xff]
        %v1666 = vld [vmem:[%s340 + $0x152] sm:$0xff]
        %v1667 = vld [vmem:[%s340 + $0x15a] sm:$0xff]
        %v1668 = vld [vmem:[%s340 + $0x16a] sm:$0xff]
        %v1669 = vld [vmem:[%s340 + $0x172] sm:$0xff]
        %1702 = vrot.lane.b32.xlu0 %v1638, 64
        %v1703 = vpop.permute.xlu0 %1702
        %1704 = vrot.lane.b32.xlu0 %v1639, 64
        %v1705 = vpop.permute.xlu0 %1704
        %1706 = vrot.lane.b32.xlu0 %v1640, 64
        %v1707 = vpop.permute.xlu0 %1706
        %1708 = vrot.lane.b32.xlu0 %v1641, 64
        %v1709 = vpop.permute.xlu0 %1708
        %1710 = vrot.lane.b32.xlu0 %v1642, 64
        %v1711 = vpop.permute.xlu0 %1710
        %1712 = vrot.lane.b32.xlu0 %v1643, 64
        %v1713 = vpop.permute.xlu0 %1712
        %1714 = vrot.lane.b32.xlu0 %v1644, 64
        %v1715 = vpop.permute.xlu0 %1714
        %1716 = vrot.lane.b32.xlu0 %v1645, 64
        %v1717 = vpop.permute.xlu0 %1716
        %1718 = vrot.lane.b32.xlu0 %v1646, 64
        %v1719 = vpop.permute.xlu0 %1718
        %1720 = vrot.lane.b32.xlu0 %v1647, 64
        %v1721 = vpop.permute.xlu0 %1720
        %1722 = vrot.lane.b32.xlu0 %v1648, 64
        %v1723 = vpop.permute.xlu0 %1722
        %1724 = vrot.lane.b32.xlu0 %v1649, 64
        %v1725 = vpop.permute.xlu0 %1724
        %1726 = vrot.lane.b32.xlu0 %v1650, 64
        %v1727 = vpop.permute.xlu0 %1726
        %1728 = vrot.lane.b32.xlu0 %v1651, 64
        %v1729 = vpop.permute.xlu0 %1728
        %1730 = vrot.lane.b32.xlu0 %v1652, 64
        %v1731 = vpop.permute.xlu0 %1730
        %1732 = vrot.lane.b32.xlu0 %v1653, 64
        %v1733 = vpop.permute.xlu0 %1732
        %1734 = vrot.lane.b32.xlu0 %v1654, 64
        %v1735 = vpop.permute.xlu0 %1734
        %1736 = vrot.lane.b32.xlu0 %v1655, 64
        %v1737 = vpop.permute.xlu0 %1736
        %1738 = vrot.lane.b32.xlu0 %v1656, 64
        %v1739 = vpop.permute.xlu0 %1738
        %1740 = vrot.lane.b32.xlu0 %v1657, 64
        %v1741 = vpop.permute.xlu0 %1740
        %1742 = vrot.lane.b32.xlu0 %v1658, 64
        %v1743 = vpop.permute.xlu0 %1742
        %1744 = vrot.lane.b32.xlu0 %v1659, 64
        %v1745 = vpop.permute.xlu0 %1744
        %1746 = vrot.lane.b32.xlu0 %v1660, 64
        %v1747 = vpop.permute.xlu0 %1746
        %1748 = vrot.lane.b32.xlu0 %v1661, 64
        %v1749 = vpop.permute.xlu0 %1748
        %1750 = vrot.lane.b32.xlu0 %v1662, 64
        %v1751 = vpop.permute.xlu0 %1750
        %1752 = vrot.lane.b32.xlu0 %v1663, 64
        %v1753 = vpop.permute.xlu0 %1752
        %1754 = vrot.lane.b32.xlu0 %v1664, 64
        %v1755 = vpop.permute.xlu0 %1754
        %1756 = vrot.lane.b32.xlu0 %v1665, 64
        %v1757 = vpop.permute.xlu0 %1756
        %1758 = vrot.lane.b32.xlu0 %v1666, 64
        %v1759 = vpop.permute.xlu0 %1758
        %1760 = vrot.lane.b32.xlu0 %v1667, 64
        %v1761 = vpop.permute.xlu0 %1760
        %1762 = vrot.lane.b32.xlu0 %v1668, 64
        %v1763 = vpop.permute.xlu0 %1762
        %1764 = vrot.lane.b32.xlu0 %v1669, 64
        %v1765 = vpop.permute.xlu0 %1764
        %1798 = vst.msk [vmem:[#allocation5 + $0x10] sm:$0xff] %vm1285, %v1703
        %1799 = vst.msk [vmem:[#allocation5 + $0x38] sm:$0xff] %vm1285, %v1705
        %1800 = vst.msk [vmem:[#allocation5 + $0x60] sm:$0xff] %vm1285, %v1707
        %1801 = vst.msk [vmem:[#allocation5 + $0x88] sm:$0xff] %vm1285, %v1709
        %1802 = vst.msk [vmem:[#allocation5 + $0xb0] sm:$0xff] %vm1285, %v1711
        %1803 = vst.msk [vmem:[#allocation5 + $0xd8] sm:$0xff] %vm1285, %v1713
        %1804 = vst.msk [vmem:[#allocation5 + $0x100] sm:$0xff] %vm1285, %v1715
        %1805 = vst.msk [vmem:[#allocation5 + $0x128] sm:$0xff] %vm1285, %v1717
        %1806 = vst.msk [vmem:[#allocation5 + $0x150] sm:$0xff] %vm1285, %v1719
        %1807 = vst.msk [vmem:[#allocation5 + $0x178] sm:$0xff] %vm1285, %v1721
        %1808 = vst.msk [vmem:[#allocation5 + $0x1a0] sm:$0xff] %vm1285, %v1723
        %1809 = vst.msk [vmem:[#allocation5 + $0x1c8] sm:$0xff] %vm1285, %v1725
        %1810 = vst.msk [vmem:[#allocation5 + $0x1f0] sm:$0xff] %vm1285, %v1727
        %1811 = vst.msk [vmem:[#allocation5 + $0x218] sm:$0xff] %vm1285, %v1729
        %1812 = vst.msk [vmem:[#allocation5 + $0x240] sm:$0xff] %vm1285, %v1731
        %1813 = vst.msk [vmem:[#allocation5 + $0x268] sm:$0xff] %vm1285, %v1733
        %1814 = vst.msk [vmem:[#allocation5 + $0x290] sm:$0xff] %vm1285, %v1735
        %1815 = vst.msk [vmem:[#allocation5 + $0x2b8] sm:$0xff] %vm1285, %v1737
        %1816 = vst.msk [vmem:[#allocation5 + $0x2e0] sm:$0xff] %vm1285, %v1739
        %1817 = vst.msk [vmem:[#allocation5 + $0x308] sm:$0xff] %vm1285, %v1741
        %1818 = vst.msk [vmem:[#allocation5 + $0x330] sm:$0xff] %vm1285, %v1743
        %1819 = vst.msk [vmem:[#allocation5 + $0x358] sm:$0xff] %vm1285, %v1745
        %1820 = vst.msk [vmem:[#allocation5 + $0x380] sm:$0xff] %vm1285, %v1747
        %1821 = vst.msk [vmem:[#allocation5 + $0x3a8] sm:$0xff] %vm1285, %v1749
        %1822 = vst.msk [vmem:[#allocation5 + $0x3d0] sm:$0xff] %vm1285, %v1751
        %1823 = vst.msk [vmem:[#allocation5 + $0x3f8] sm:$0xff] %vm1285, %v1753
        %1824 = vst.msk [vmem:[#allocation5 + $0x420] sm:$0xff] %vm1285, %v1755
        %1825 = vst.msk [vmem:[#allocation5 + $0x448] sm:$0xff] %vm1285, %v1757
        %1826 = vst.msk [vmem:[#allocation5 + $0x470] sm:$0xff] %vm1285, %v1759
        %1827 = vst.msk [vmem:[#allocation5 + $0x498] sm:$0xff] %vm1285, %v1761
        %1828 = vst.msk [vmem:[#allocation5 + $0x4c0] sm:$0xff] %vm1285, %v1763
        %1829 = vst.msk [vmem:[#allocation5 + $0x4e8] sm:$0xff] %vm1285, %v1765
        %s1830 = scalar_lea.vmem [#allocation2], 48
        %v1831 = vld [vmem:[%s1830] sm:$0xff]
        %v1832 = vld [vmem:[%s1830 + $0x8] sm:$0xff]
        %v1833 = vld [vmem:[%s1830 + $0x18] sm:$0xff]
        %v1834 = vld [vmem:[%s1830 + $0x20] sm:$0xff]
        %v1835 = vld [vmem:[%s1830 + $0x30] sm:$0xff]
        %v1836 = vld [vmem:[%s1830 + $0x38] sm:$0xff]
        %v1837 = vld [vmem:[%s1830 + $0x48] sm:$0xff]
        %v1838 = vld [vmem:[%s1830 + $0x50] sm:$0xff]
        %v1839 = vld [vmem:[%s1830 + $0x60] sm:$0xff]
        %v1840 = vld [vmem:[%s1830 + $0x68] sm:$0xff]
        %v1841 = vld [vmem:[%s1830 + $0x78] sm:$0xff]
        %v1842 = vld [vmem:[%s1830 + $0x80] sm:$0xff]
        %v1843 = vld [vmem:[%s1830 + $0x90] sm:$0xff]
        %v1844 = vld [vmem:[%s1830 + $0x98] sm:$0xff]
        %v1845 = vld [vmem:[%s1830 + $0xa8] sm:$0xff]
        %v1846 = vld [vmem:[%s1830 + $0xb0] sm:$0xff]
        %v1847 = vld [vmem:[%s1830 + $0xc0] sm:$0xff]
        %v1848 = vld [vmem:[%s1830 + $0xc8] sm:$0xff]
        %v1849 = vld [vmem:[%s1830 + $0xd8] sm:$0xff]
        %v1850 = vld [vmem:[%s1830 + $0xe0] sm:$0xff]
        %v1851 = vld [vmem:[%s1830 + $0xf0] sm:$0xff]
        %v1852 = vld [vmem:[%s1830 + $0xf8] sm:$0xff]
        %v1853 = vld [vmem:[%s1830 + $0x108] sm:$0xff]
        %v1854 = vld [vmem:[%s1830 + $0x110] sm:$0xff]
        %v1855 = vld [vmem:[%s1830 + $0x120] sm:$0xff]
        %v1856 = vld [vmem:[%s1830 + $0x128] sm:$0xff]
        %v1857 = vld [vmem:[%s1830 + $0x138] sm:$0xff]
        %v1858 = vld [vmem:[%s1830 + $0x140] sm:$0xff]
        %v1859 = vld [vmem:[%s1830 + $0x150] sm:$0xff]
        %v1860 = vld [vmem:[%s1830 + $0x158] sm:$0xff]
        %v1861 = vld [vmem:[%s1830 + $0x168] sm:$0xff]
        %v1862 = vld [vmem:[%s1830 + $0x170] sm:$0xff]
        %1863 = vst.msk [vmem:[#allocation5 + $0x18] sm:$0xff] %vm331, %v1831
        %1864 = vst.msk [vmem:[#allocation5 + $0x40] sm:$0xff] %vm331, %v1832
        %1865 = vst.msk [vmem:[#allocation5 + $0x68] sm:$0xff] %vm331, %v1833
        %1866 = vst.msk [vmem:[#allocation5 + $0x90] sm:$0xff] %vm331, %v1834
        %1867 = vst.msk [vmem:[#allocation5 + $0xb8] sm:$0xff] %vm331, %v1835
        %1868 = vst.msk [vmem:[#allocation5 + $0xe0] sm:$0xff] %vm331, %v1836
        %1869 = vst.msk [vmem:[#allocation5 + $0x108] sm:$0xff] %vm331, %v1837
        %1870 = vst.msk [vmem:[#allocation5 + $0x130] sm:$0xff] %vm331, %v1838
        %1871 = vst.msk [vmem:[#allocation5 + $0x158] sm:$0xff] %vm331, %v1839
        %1872 = vst.msk [vmem:[#allocation5 + $0x180] sm:$0xff] %vm331, %v1840
        %1873 = vst.msk [vmem:[#allocation5 + $0x1a8] sm:$0xff] %vm331, %v1841
        %1874 = vst.msk [vmem:[#allocation5 + $0x1d0] sm:$0xff] %vm331, %v1842
        %1875 = vst.msk [vmem:[#allocation5 + $0x1f8] sm:$0xff] %vm331, %v1843
        %1876 = vst.msk [vmem:[#allocation5 + $0x220] sm:$0xff] %vm331, %v1844
        %1877 = vst.msk [vmem:[#allocation5 + $0x248] sm:$0xff] %vm331, %v1845
        %1878 = vst.msk [vmem:[#allocation5 + $0x270] sm:$0xff] %vm331, %v1846
        %1879 = vst.msk [vmem:[#allocation5 + $0x298] sm:$0xff] %vm331, %v1847
        %1880 = vst.msk [vmem:[#allocation5 + $0x2c0] sm:$0xff] %vm331, %v1848
        %1881 = vst.msk [vmem:[#allocation5 + $0x2e8] sm:$0xff] %vm331, %v1849
        %1882 = vst.msk [vmem:[#allocation5 + $0x310] sm:$0xff] %vm331, %v1850
        %1883 = vst.msk [vmem:[#allocation5 + $0x338] sm:$0xff] %vm331, %v1851
        %1884 = vst.msk [vmem:[#allocation5 + $0x360] sm:$0xff] %vm331, %v1852
        %1885 = vst.msk [vmem:[#allocation5 + $0x388] sm:$0xff] %vm331, %v1853
        %1886 = vst.msk [vmem:[#allocation5 + $0x3b0] sm:$0xff] %vm331, %v1854
        %1887 = vst.msk [vmem:[#allocation5 + $0x3d8] sm:$0xff] %vm331, %v1855
        %1888 = vst.msk [vmem:[#allocation5 + $0x400] sm:$0xff] %vm331, %v1856
        %1889 = vst.msk [vmem:[#allocation5 + $0x428] sm:$0xff] %vm331, %v1857
        %1890 = vst.msk [vmem:[#allocation5 + $0x450] sm:$0xff] %vm331, %v1858
        %1891 = vst.msk [vmem:[#allocation5 + $0x478] sm:$0xff] %vm331, %v1859
        %1892 = vst.msk [vmem:[#allocation5 + $0x4a0] sm:$0xff] %vm331, %v1860
        %1893 = vst.msk [vmem:[#allocation5 + $0x4c8] sm:$0xff] %vm331, %v1861
        %1894 = vst.msk [vmem:[#allocation5 + $0x4f0] sm:$0xff] %vm331, %v1862
        %v1895 = vld [vmem:[%s1830 + $0x1] sm:$0xff]
        %v1896 = vld [vmem:[%s1830 + $0x9] sm:$0xff]
        %v1897 = vld [vmem:[%s1830 + $0x19] sm:$0xff]
        %v1898 = vld [vmem:[%s1830 + $0x21] sm:$0xff]
        %v1899 = vld [vmem:[%s1830 + $0x31] sm:$0xff]
        %v1900 = vld [vmem:[%s1830 + $0x39] sm:$0xff]
        %v1901 = vld [vmem:[%s1830 + $0x49] sm:$0xff]
        %v1902 = vld [vmem:[%s1830 + $0x51] sm:$0xff]
        %v1903 = vld [vmem:[%s1830 + $0x61] sm:$0xff]
        %v1904 = vld [vmem:[%s1830 + $0x69] sm:$0xff]
        %v1905 = vld [vmem:[%s1830 + $0x79] sm:$0xff]
        %v1906 = vld [vmem:[%s1830 + $0x81] sm:$0xff]
        %v1907 = vld [vmem:[%s1830 + $0x91] sm:$0xff]
        %v1908 = vld [vmem:[%s1830 + $0x99] sm:$0xff]
        %v1909 = vld [vmem:[%s1830 + $0xa9] sm:$0xff]
        %v1910 = vld [vmem:[%s1830 + $0xb1] sm:$0xff]
        %v1911 = vld [vmem:[%s1830 + $0xc1] sm:$0xff]
        %v1912 = vld [vmem:[%s1830 + $0xc9] sm:$0xff]
        %v1913 = vld [vmem:[%s1830 + $0xd9] sm:$0xff]
        %v1914 = vld [vmem:[%s1830 + $0xe1] sm:$0xff]
        %v1915 = vld [vmem:[%s1830 + $0xf1] sm:$0xff]
        %v1916 = vld [vmem:[%s1830 + $0xf9] sm:$0xff]
        %v1917 = vld [vmem:[%s1830 + $0x109] sm:$0xff]
        %v1918 = vld [vmem:[%s1830 + $0x111] sm:$0xff]
        %v1919 = vld [vmem:[%s1830 + $0x121] sm:$0xff]
        %v1920 = vld [vmem:[%s1830 + $0x129] sm:$0xff]
        %v1921 = vld [vmem:[%s1830 + $0x139] sm:$0xff]
        %v1922 = vld [vmem:[%s1830 + $0x141] sm:$0xff]
        %v1923 = vld [vmem:[%s1830 + $0x151] sm:$0xff]
        %v1924 = vld [vmem:[%s1830 + $0x159] sm:$0xff]
        %v1925 = vld [vmem:[%s1830 + $0x169] sm:$0xff]
        %v1926 = vld [vmem:[%s1830 + $0x171] sm:$0xff]
        %1959 = vrot.lane.b32.xlu0 %v1895, 64
        %v1960 = vpop.permute.xlu0 %1959
        %1961 = vrot.lane.b32.xlu0 %v1896, 64
        %v1962 = vpop.permute.xlu0 %1961
        %1963 = vrot.lane.b32.xlu0 %v1897, 64
        %v1964 = vpop.permute.xlu0 %1963
        %1965 = vrot.lane.b32.xlu0 %v1898, 64
        %v1966 = vpop.permute.xlu0 %1965
        %1967 = vrot.lane.b32.xlu0 %v1899, 64
        %v1968 = vpop.permute.xlu0 %1967
        %1969 = vrot.lane.b32.xlu0 %v1900, 64
        %v1970 = vpop.permute.xlu0 %1969
        %1971 = vrot.lane.b32.xlu0 %v1901, 64
        %v1972 = vpop.permute.xlu0 %1971
        %1973 = vrot.lane.b32.xlu0 %v1902, 64
        %v1974 = vpop.permute.xlu0 %1973
        %1975 = vrot.lane.b32.xlu0 %v1903, 64
        %v1976 = vpop.permute.xlu0 %1975
        %1977 = vrot.lane.b32.xlu0 %v1904, 64
        %v1978 = vpop.permute.xlu0 %1977
        %1979 = vrot.lane.b32.xlu0 %v1905, 64
        %v1980 = vpop.permute.xlu0 %1979
        %1981 = vrot.lane.b32.xlu0 %v1906, 64
        %v1982 = vpop.permute.xlu0 %1981
        %1983 = vrot.lane.b32.xlu0 %v1907, 64
        %v1984 = vpop.permute.xlu0 %1983
        %1985 = vrot.lane.b32.xlu0 %v1908, 64
        %v1986 = vpop.permute.xlu0 %1985
        %1987 = vrot.lane.b32.xlu0 %v1909, 64
        %v1988 = vpop.permute.xlu0 %1987
        %1989 = vrot.lane.b32.xlu0 %v1910, 64
        %v1990 = vpop.permute.xlu0 %1989
        %1991 = vrot.lane.b32.xlu0 %v1911, 64
        %v1992 = vpop.permute.xlu0 %1991
        %1993 = vrot.lane.b32.xlu0 %v1912, 64
        %v1994 = vpop.permute.xlu0 %1993
        %1995 = vrot.lane.b32.xlu0 %v1913, 64
        %v1996 = vpop.permute.xlu0 %1995
        %1997 = vrot.lane.b32.xlu0 %v1914, 64
        %v1998 = vpop.permute.xlu0 %1997
        %1999 = vrot.lane.b32.xlu0 %v1915, 64
        %v2000 = vpop.permute.xlu0 %1999
        %2001 = vrot.lane.b32.xlu0 %v1916, 64
        %v2002 = vpop.permute.xlu0 %2001
        %2003 = vrot.lane.b32.xlu0 %v1917, 64
        %v2004 = vpop.permute.xlu0 %2003
        %2005 = vrot.lane.b32.xlu0 %v1918, 64
        %v2006 = vpop.permute.xlu0 %2005
        %2007 = vrot.lane.b32.xlu0 %v1919, 64
        %v2008 = vpop.permute.xlu0 %2007
        %2009 = vrot.lane.b32.xlu0 %v1920, 64
        %v2010 = vpop.permute.xlu0 %2009
        %2011 = vrot.lane.b32.xlu0 %v1921, 64
        %v2012 = vpop.permute.xlu0 %2011
        %2013 = vrot.lane.b32.xlu0 %v1922, 64
        %v2014 = vpop.permute.xlu0 %2013
        %2015 = vrot.lane.b32.xlu0 %v1923, 64
        %v2016 = vpop.permute.xlu0 %2015
        %2017 = vrot.lane.b32.xlu0 %v1924, 64
        %v2018 = vpop.permute.xlu0 %2017
        %2019 = vrot.lane.b32.xlu0 %v1925, 64
        %v2020 = vpop.permute.xlu0 %2019
        %2021 = vrot.lane.b32.xlu0 %v1926, 64
        %v2022 = vpop.permute.xlu0 %2021
        %2055 = vst.msk [vmem:[#allocation5 + $0x18] sm:$0xff] %vm1285, %v1960
        %2056 = vst.msk [vmem:[#allocation5 + $0x40] sm:$0xff] %vm1285, %v1962
        %2057 = vst.msk [vmem:[#allocation5 + $0x68] sm:$0xff] %vm1285, %v1964
        %2058 = vst.msk [vmem:[#allocation5 + $0x90] sm:$0xff] %vm1285, %v1966
        %2059 = vst.msk [vmem:[#allocation5 + $0xb8] sm:$0xff] %vm1285, %v1968
        %2060 = vst.msk [vmem:[#allocation5 + $0xe0] sm:$0xff] %vm1285, %v1970
        %2061 = vst.msk [vmem:[#allocation5 + $0x108] sm:$0xff] %vm1285, %v1972
        %2062 = vst.msk [vmem:[#allocation5 + $0x130] sm:$0xff] %vm1285, %v1974
        %2063 = vst.msk [vmem:[#allocation5 + $0x158] sm:$0xff] %vm1285, %v1976
        %2064 = vst.msk [vmem:[#allocation5 + $0x180] sm:$0xff] %vm1285, %v1978
        %2065 = vst.msk [vmem:[#allocation5 + $0x1a8] sm:$0xff] %vm1285, %v1980
        %2066 = vst.msk [vmem:[#allocation5 + $0x1d0] sm:$0xff] %vm1285, %v1982
        %2067 = vst.msk [vmem:[#allocation5 + $0x1f8] sm:$0xff] %vm1285, %v1984
        %2068 = vst.msk [vmem:[#allocation5 + $0x220] sm:$0xff] %vm1285, %v1986
        %2069 = vst.msk [vmem:[#allocation5 + $0x248] sm:$0xff] %vm1285, %v1988
        %2070 = vst.msk [vmem:[#allocation5 + $0x270] sm:$0xff] %vm1285, %v1990
        %2071 = vst.msk [vmem:[#allocation5 + $0x298] sm:$0xff] %vm1285, %v1992
        %2072 = vst.msk [vmem:[#allocation5 + $0x2c0] sm:$0xff] %vm1285, %v1994
        %2073 = vst.msk [vmem:[#allocation5 + $0x2e8] sm:$0xff] %vm1285, %v1996
        %2074 = vst.msk [vmem:[#allocation5 + $0x310] sm:$0xff] %vm1285, %v1998
        %2075 = vst.msk [vmem:[#allocation5 + $0x338] sm:$0xff] %vm1285, %v2000
        %2076 = vst.msk [vmem:[#allocation5 + $0x360] sm:$0xff] %vm1285, %v2002
        %2077 = vst.msk [vmem:[#allocation5 + $0x388] sm:$0xff] %vm1285, %v2004
        %2078 = vst.msk [vmem:[#allocation5 + $0x3b0] sm:$0xff] %vm1285, %v2006
        %2079 = vst.msk [vmem:[#allocation5 + $0x3d8] sm:$0xff] %vm1285, %v2008
        %2080 = vst.msk [vmem:[#allocation5 + $0x400] sm:$0xff] %vm1285, %v2010
        %2081 = vst.msk [vmem:[#allocation5 + $0x428] sm:$0xff] %vm1285, %v2012
        %2082 = vst.msk [vmem:[#allocation5 + $0x450] sm:$0xff] %vm1285, %v2014
        %2083 = vst.msk [vmem:[#allocation5 + $0x478] sm:$0xff] %vm1285, %v2016
        %2084 = vst.msk [vmem:[#allocation5 + $0x4a0] sm:$0xff] %vm1285, %v2018
        %2085 = vst.msk [vmem:[#allocation5 + $0x4c8] sm:$0xff] %vm1285, %v2020
        %2086 = vst.msk [vmem:[#allocation5 + $0x4f0] sm:$0xff] %vm1285, %v2022
        %v2087 = vld [vmem:[%s1830 + $0x2] sm:$0xff]
        %v2088 = vld [vmem:[%s1830 + $0xa] sm:$0xff]
        %v2089 = vld [vmem:[%s1830 + $0x1a] sm:$0xff]
        %v2090 = vld [vmem:[%s1830 + $0x22] sm:$0xff]
        %v2091 = vld [vmem:[%s1830 + $0x32] sm:$0xff]
        %v2092 = vld [vmem:[%s1830 + $0x3a] sm:$0xff]
        %v2093 = vld [vmem:[%s1830 + $0x4a] sm:$0xff]
        %v2094 = vld [vmem:[%s1830 + $0x52] sm:$0xff]
        %v2095 = vld [vmem:[%s1830 + $0x62] sm:$0xff]
        %v2096 = vld [vmem:[%s1830 + $0x6a] sm:$0xff]
        %v2097 = vld [vmem:[%s1830 + $0x7a] sm:$0xff]
        %v2098 = vld [vmem:[%s1830 + $0x82] sm:$0xff]
        %v2099 = vld [vmem:[%s1830 + $0x92] sm:$0xff]
        %v2100 = vld [vmem:[%s1830 + $0x9a] sm:$0xff]
        %v2101 = vld [vmem:[%s1830 + $0xaa] sm:$0xff]
        %v2102 = vld [vmem:[%s1830 + $0xb2] sm:$0xff]
        %v2103 = vld [vmem:[%s1830 + $0xc2] sm:$0xff]
        %v2104 = vld [vmem:[%s1830 + $0xca] sm:$0xff]
        %v2105 = vld [vmem:[%s1830 + $0xda] sm:$0xff]
        %v2106 = vld [vmem:[%s1830 + $0xe2] sm:$0xff]
        %v2107 = vld [vmem:[%s1830 + $0xf2] sm:$0xff]
        %v2108 = vld [vmem:[%s1830 + $0xfa] sm:$0xff]
        %v2109 = vld [vmem:[%s1830 + $0x10a] sm:$0xff]
        %v2110 = vld [vmem:[%s1830 + $0x112] sm:$0xff]
        %v2111 = vld [vmem:[%s1830 + $0x122] sm:$0xff]
        %v2112 = vld [vmem:[%s1830 + $0x12a] sm:$0xff]
        %v2113 = vld [vmem:[%s1830 + $0x13a] sm:$0xff]
        %v2114 = vld [vmem:[%s1830 + $0x142] sm:$0xff]
        %v2115 = vld [vmem:[%s1830 + $0x152] sm:$0xff]
        %v2116 = vld [vmem:[%s1830 + $0x15a] sm:$0xff]
        %v2117 = vld [vmem:[%s1830 + $0x16a] sm:$0xff]
        %v2118 = vld [vmem:[%s1830 + $0x172] sm:$0xff]
        %2119 = vst.msk [vmem:[#allocation5 + $0x20] sm:$0xff] %vm331, %v2087
        %2120 = vst.msk [vmem:[#allocation5 + $0x48] sm:$0xff] %vm331, %v2088
        %2121 = vst.msk [vmem:[#allocation5 + $0x70] sm:$0xff] %vm331, %v2089
        %2122 = vst.msk [vmem:[#allocation5 + $0x98] sm:$0xff] %vm331, %v2090
        %2123 = vst.msk [vmem:[#allocation5 + $0xc0] sm:$0xff] %vm331, %v2091
        %2124 = vst.msk [vmem:[#allocation5 + $0xe8] sm:$0xff] %vm331, %v2092
        %2125 = vst.msk [vmem:[#allocation5 + $0x110] sm:$0xff] %vm331, %v2093
        %2126 = vst.msk [vmem:[#allocation5 + $0x138] sm:$0xff] %vm331, %v2094
        %2127 = vst.msk [vmem:[#allocation5 + $0x160] sm:$0xff] %vm331, %v2095
        %2128 = vst.msk [vmem:[#allocation5 + $0x188] sm:$0xff] %vm331, %v2096
        %2129 = vst.msk [vmem:[#allocation5 + $0x1b0] sm:$0xff] %vm331, %v2097
        %2130 = vst.msk [vmem:[#allocation5 + $0x1d8] sm:$0xff] %vm331, %v2098
        %2131 = vst.msk [vmem:[#allocation5 + $0x200] sm:$0xff] %vm331, %v2099
        %2132 = vst.msk [vmem:[#allocation5 + $0x228] sm:$0xff] %vm331, %v2100
        %2133 = vst.msk [vmem:[#allocation5 + $0x250] sm:$0xff] %vm331, %v2101
        %2134 = vst.msk [vmem:[#allocation5 + $0x278] sm:$0xff] %vm331, %v2102
        %2135 = vst.msk [vmem:[#allocation5 + $0x2a0] sm:$0xff] %vm331, %v2103
        %2136 = vst.msk [vmem:[#allocation5 + $0x2c8] sm:$0xff] %vm331, %v2104
        %2137 = vst.msk [vmem:[#allocation5 + $0x2f0] sm:$0xff] %vm331, %v2105
        %2138 = vst.msk [vmem:[#allocation5 + $0x318] sm:$0xff] %vm331, %v2106
        %2139 = vst.msk [vmem:[#allocation5 + $0x340] sm:$0xff] %vm331, %v2107
        %2140 = vst.msk [vmem:[#allocation5 + $0x368] sm:$0xff] %vm331, %v2108
        %2141 = vst.msk [vmem:[#allocation5 + $0x390] sm:$0xff] %vm331, %v2109
        %2142 = vst.msk [vmem:[#allocation5 + $0x3b8] sm:$0xff] %vm331, %v2110
        %2143 = vst.msk [vmem:[#allocation5 + $0x3e0] sm:$0xff] %vm331, %v2111
        %2144 = vst.msk [vmem:[#allocation5 + $0x408] sm:$0xff] %vm331, %v2112
        %2145 = vst.msk [vmem:[#allocation5 + $0x430] sm:$0xff] %vm331, %v2113
        %2146 = vst.msk [vmem:[#allocation5 + $0x458] sm:$0xff] %vm331, %v2114
        %2147 = vst.msk [vmem:[#allocation5 + $0x480] sm:$0xff] %vm331, %v2115
        %2148 = vst.msk [vmem:[#allocation5 + $0x4a8] sm:$0xff] %vm331, %v2116
        %2149 = vst.msk [vmem:[#allocation5 + $0x4d0] sm:$0xff] %vm331, %v2117
        %2150 = vst.msk [vmem:[#allocation5 + $0x4f8] sm:$0xff] %vm331, %v2118
        %v2151 = vld [vmem:[#allocation3] sm:$0xff]
        %v2152 = vld [vmem:[#allocation3 + $0x8] sm:$0xff]
        %v2153 = vld [vmem:[#allocation3 + $0x18] sm:$0xff]
        %v2154 = vld [vmem:[#allocation3 + $0x20] sm:$0xff]
        %v2155 = vld [vmem:[#allocation3 + $0x30] sm:$0xff]
        %v2156 = vld [vmem:[#allocation3 + $0x38] sm:$0xff]
        %v2157 = vld [vmem:[#allocation3 + $0x48] sm:$0xff]
        %v2158 = vld [vmem:[#allocation3 + $0x50] sm:$0xff]
        %v2159 = vld [vmem:[#allocation3 + $0x60] sm:$0xff]
        %v2160 = vld [vmem:[#allocation3 + $0x68] sm:$0xff]
        %v2161 = vld [vmem:[#allocation3 + $0x78] sm:$0xff]
        %v2162 = vld [vmem:[#allocation3 + $0x80] sm:$0xff]
        %v2163 = vld [vmem:[#allocation3 + $0x90] sm:$0xff]
        %v2164 = vld [vmem:[#allocation3 + $0x98] sm:$0xff]
        %v2165 = vld [vmem:[#allocation3 + $0xa8] sm:$0xff]
        %v2166 = vld [vmem:[#allocation3 + $0xb0] sm:$0xff]
        %v2167 = vld [vmem:[#allocation3 + $0xc0] sm:$0xff]
        %v2168 = vld [vmem:[#allocation3 + $0xc8] sm:$0xff]
        %v2169 = vld [vmem:[#allocation3 + $0xd8] sm:$0xff]
        %v2170 = vld [vmem:[#allocation3 + $0xe0] sm:$0xff]
        %v2171 = vld [vmem:[#allocation3 + $0xf0] sm:$0xff]
        %v2172 = vld [vmem:[#allocation3 + $0xf8] sm:$0xff]
        %v2173 = vld [vmem:[#allocation3 + $0x108] sm:$0xff]
        %v2174 = vld [vmem:[#allocation3 + $0x110] sm:$0xff]
        %v2175 = vld [vmem:[#allocation3 + $0x120] sm:$0xff]
        %v2176 = vld [vmem:[#allocation3 + $0x128] sm:$0xff]
        %v2177 = vld [vmem:[#allocation3 + $0x138] sm:$0xff]
        %v2178 = vld [vmem:[#allocation3 + $0x140] sm:$0xff]
        %v2179 = vld [vmem:[#allocation3 + $0x150] sm:$0xff]
        %v2180 = vld [vmem:[#allocation3 + $0x158] sm:$0xff]
        %v2181 = vld [vmem:[#allocation3 + $0x168] sm:$0xff]
        %v2182 = vld [vmem:[#allocation3 + $0x170] sm:$0xff]
        %2183 = vst.msk [vmem:[#allocation6] sm:$0xff] %vm331, %v2151
        %2184 = vst.msk [vmem:[#allocation6 + $0x68] sm:$0xff] %vm331, %v2152
        %2185 = vst.msk [vmem:[#allocation6 + $0xd0] sm:$0xff] %vm331, %v2153
        %2186 = vst.msk [vmem:[#allocation6 + $0x138] sm:$0xff] %vm331, %v2154
        %2187 = vst.msk [vmem:[#allocation6 + $0x1a0] sm:$0xff] %vm331, %v2155
        %2188 = vst.msk [vmem:[#allocation6 + $0x208] sm:$0xff] %vm331, %v2156
        %2189 = vst.msk [vmem:[#allocation6 + $0x270] sm:$0xff] %vm331, %v2157
        %2190 = vst.msk [vmem:[#allocation6 + $0x2d8] sm:$0xff] %vm331, %v2158
        %2191 = vst.msk [vmem:[#allocation6 + $0x340] sm:$0xff] %vm331, %v2159
        %2192 = vst.msk [vmem:[#allocation6 + $0x3a8] sm:$0xff] %vm331, %v2160
        %2193 = vst.msk [vmem:[#allocation6 + $0x410] sm:$0xff] %vm331, %v2161
        %2194 = vst.msk [vmem:[#allocation6 + $0x478] sm:$0xff] %vm331, %v2162
        %2195 = vst.msk [vmem:[#allocation6 + $0x4e0] sm:$0xff] %vm331, %v2163
        %2196 = vst.msk [vmem:[#allocation6 + $0x548] sm:$0xff] %vm331, %v2164
        %2197 = vst.msk [vmem:[#allocation6 + $0x5b0] sm:$0xff] %vm331, %v2165
        %2198 = vst.msk [vmem:[#allocation6 + $0x618] sm:$0xff] %vm331, %v2166
        %2199 = vst.msk [vmem:[#allocation6 + $0x680] sm:$0xff] %vm331, %v2167
        %2200 = vst.msk [vmem:[#allocation6 + $0x6e8] sm:$0xff] %vm331, %v2168
        %2201 = vst.msk [vmem:[#allocation6 + $0x750] sm:$0xff] %vm331, %v2169
        %2202 = vst.msk [vmem:[#allocation6 + $0x7b8] sm:$0xff] %vm331, %v2170
        %2203 = vst.msk [vmem:[#allocation6 + $0x820] sm:$0xff] %vm331, %v2171
        %2204 = vst.msk [vmem:[#allocation6 + $0x888] sm:$0xff] %vm331, %v2172
        %2205 = vst.msk [vmem:[#allocation6 + $0x8f0] sm:$0xff] %vm331, %v2173
        %2206 = vst.msk [vmem:[#allocation6 + $0x958] sm:$0xff] %vm331, %v2174
        %2207 = vst.msk [vmem:[#allocation6 + $0x9c0] sm:$0xff] %vm331, %v2175
        %2208 = vst.msk [vmem:[#allocation6 + $0xa28] sm:$0xff] %vm331, %v2176
        %2209 = vst.msk [vmem:[#allocation6 + $0xa90] sm:$0xff] %vm331, %v2177
        %2210 = vst.msk [vmem:[#allocation6 + $0xaf8] sm:$0xff] %vm331, %v2178
        %2211 = vst.msk [vmem:[#allocation6 + $0xb60] sm:$0xff] %vm331, %v2179
        %2212 = vst.msk [vmem:[#allocation6 + $0xbc8] sm:$0xff] %vm331, %v2180
        %2213 = vst.msk [vmem:[#allocation6 + $0xc30] sm:$0xff] %vm331, %v2181
        %2214 = vst.msk [vmem:[#allocation6 + $0xc98] sm:$0xff] %vm331, %v2182
        %v2215 = vld [vmem:[#allocation3 + $0x1] sm:$0xff]
        %v2216 = vld [vmem:[#allocation3 + $0x9] sm:$0xff]
        %v2217 = vld [vmem:[#allocation3 + $0x19] sm:$0xff]
        %v2218 = vld [vmem:[#allocation3 + $0x21] sm:$0xff]
        %v2219 = vld [vmem:[#allocation3 + $0x31] sm:$0xff]
        %v2220 = vld [vmem:[#allocation3 + $0x39] sm:$0xff]
        %v2221 = vld [vmem:[#allocation3 + $0x49] sm:$0xff]
        %v2222 = vld [vmem:[#allocation3 + $0x51] sm:$0xff]
        %v2223 = vld [vmem:[#allocation3 + $0x61] sm:$0xff]
        %v2224 = vld [vmem:[#allocation3 + $0x69] sm:$0xff]
        %v2225 = vld [vmem:[#allocation3 + $0x79] sm:$0xff]
        %v2226 = vld [vmem:[#allocation3 + $0x81] sm:$0xff]
        %v2227 = vld [vmem:[#allocation3 + $0x91] sm:$0xff]
        %v2228 = vld [vmem:[#allocation3 + $0x99] sm:$0xff]
        %v2229 = vld [vmem:[#allocation3 + $0xa9] sm:$0xff]
        %v2230 = vld [vmem:[#allocation3 + $0xb1] sm:$0xff]
        %v2231 = vld [vmem:[#allocation3 + $0xc1] sm:$0xff]
        %v2232 = vld [vmem:[#allocation3 + $0xc9] sm:$0xff]
        %v2233 = vld [vmem:[#allocation3 + $0xd9] sm:$0xff]
        %v2234 = vld [vmem:[#allocation3 + $0xe1] sm:$0xff]
        %v2235 = vld [vmem:[#allocation3 + $0xf1] sm:$0xff]
        %v2236 = vld [vmem:[#allocation3 + $0xf9] sm:$0xff]
        %v2237 = vld [vmem:[#allocation3 + $0x109] sm:$0xff]
        %v2238 = vld [vmem:[#allocation3 + $0x111] sm:$0xff]
        %v2239 = vld [vmem:[#allocation3 + $0x121] sm:$0xff]
        %v2240 = vld [vmem:[#allocation3 + $0x129] sm:$0xff]
        %v2241 = vld [vmem:[#allocation3 + $0x139] sm:$0xff]
        %v2242 = vld [vmem:[#allocation3 + $0x141] sm:$0xff]
        %v2243 = vld [vmem:[#allocation3 + $0x151] sm:$0xff]
        %v2244 = vld [vmem:[#allocation3 + $0x159] sm:$0xff]
        %v2245 = vld [vmem:[#allocation3 + $0x169] sm:$0xff]
        %v2246 = vld [vmem:[#allocation3 + $0x171] sm:$0xff]
        %2279 = vrot.lane.b32.xlu0 %v2215, 64
        %v2280 = vpop.permute.xlu0 %2279
        %2281 = vrot.lane.b32.xlu0 %v2216, 64
        %v2282 = vpop.permute.xlu0 %2281
        %2283 = vrot.lane.b32.xlu0 %v2217, 64
        %v2284 = vpop.permute.xlu0 %2283
        %2285 = vrot.lane.b32.xlu0 %v2218, 64
        %v2286 = vpop.permute.xlu0 %2285
        %2287 = vrot.lane.b32.xlu0 %v2219, 64
        %v2288 = vpop.permute.xlu0 %2287
        %2289 = vrot.lane.b32.xlu0 %v2220, 64
        %v2290 = vpop.permute.xlu0 %2289
        %2291 = vrot.lane.b32.xlu0 %v2221, 64
        %v2292 = vpop.permute.xlu0 %2291
        %2293 = vrot.lane.b32.xlu0 %v2222, 64
        %v2294 = vpop.permute.xlu0 %2293
        %2295 = vrot.lane.b32.xlu0 %v2223, 64
        %v2296 = vpop.permute.xlu0 %2295
        %2297 = vrot.lane.b32.xlu0 %v2224, 64
        %v2298 = vpop.permute.xlu0 %2297
        %2299 = vrot.lane.b32.xlu0 %v2225, 64
        %v2300 = vpop.permute.xlu0 %2299
        %2301 = vrot.lane.b32.xlu0 %v2226, 64
        %v2302 = vpop.permute.xlu0 %2301
        %2303 = vrot.lane.b32.xlu0 %v2227, 64
        %v2304 = vpop.permute.xlu0 %2303
        %2305 = vrot.lane.b32.xlu0 %v2228, 64
        %v2306 = vpop.permute.xlu0 %2305
        %2307 = vrot.lane.b32.xlu0 %v2229, 64
        %v2308 = vpop.permute.xlu0 %2307
        %2309 = vrot.lane.b32.xlu0 %v2230, 64
        %v2310 = vpop.permute.xlu0 %2309
        %2311 = vrot.lane.b32.xlu0 %v2231, 64
        %v2312 = vpop.permute.xlu0 %2311
        %2313 = vrot.lane.b32.xlu0 %v2232, 64
        %v2314 = vpop.permute.xlu0 %2313
        %2315 = vrot.lane.b32.xlu0 %v2233, 64
        %v2316 = vpop.permute.xlu0 %2315
        %2317 = vrot.lane.b32.xlu0 %v2234, 64
        %v2318 = vpop.permute.xlu0 %2317
        %2319 = vrot.lane.b32.xlu0 %v2235, 64
        %v2320 = vpop.permute.xlu0 %2319
        %2321 = vrot.lane.b32.xlu0 %v2236, 64
        %v2322 = vpop.permute.xlu0 %2321
        %2323 = vrot.lane.b32.xlu0 %v2237, 64
        %v2324 = vpop.permute.xlu0 %2323
        %2325 = vrot.lane.b32.xlu0 %v2238, 64
        %v2326 = vpop.permute.xlu0 %2325
        %2327 = vrot.lane.b32.xlu0 %v2239, 64
        %v2328 = vpop.permute.xlu0 %2327
        %2329 = vrot.lane.b32.xlu0 %v2240, 64
        %v2330 = vpop.permute.xlu0 %2329
        %2331 = vrot.lane.b32.xlu0 %v2241, 64
        %v2332 = vpop.permute.xlu0 %2331
        %2333 = vrot.lane.b32.xlu0 %v2242, 64
        %v2334 = vpop.permute.xlu0 %2333
        %2335 = vrot.lane.b32.xlu0 %v2243, 64
        %v2336 = vpop.permute.xlu0 %2335
        %2337 = vrot.lane.b32.xlu0 %v2244, 64
        %v2338 = vpop.permute.xlu0 %2337
        %2339 = vrot.lane.b32.xlu0 %v2245, 64
        %v2340 = vpop.permute.xlu0 %2339
        %2341 = vrot.lane.b32.xlu0 %v2246, 64
        %v2342 = vpop.permute.xlu0 %2341
        %2375 = vst.msk [vmem:[#allocation6] sm:$0xff] %vm1285, %v2280
        %2376 = vst.msk [vmem:[#allocation6 + $0x68] sm:$0xff] %vm1285, %v2282
        %2377 = vst.msk [vmem:[#allocation6 + $0xd0] sm:$0xff] %vm1285, %v2284
        %2378 = vst.msk [vmem:[#allocation6 + $0x138] sm:$0xff] %vm1285, %v2286
        %2379 = vst.msk [vmem:[#allocation6 + $0x1a0] sm:$0xff] %vm1285, %v2288
        %2380 = vst.msk [vmem:[#allocation6 + $0x208] sm:$0xff] %vm1285, %v2290
        %2381 = vst.msk [vmem:[#allocation6 + $0x270] sm:$0xff] %vm1285, %v2292
        %2382 = vst.msk [vmem:[#allocation6 + $0x2d8] sm:$0xff] %vm1285, %v2294
        %2383 = vst.msk [vmem:[#allocation6 + $0x340] sm:$0xff] %vm1285, %v2296
        %2384 = vst.msk [vmem:[#allocation6 + $0x3a8] sm:$0xff] %vm1285, %v2298
        %2385 = vst.msk [vmem:[#allocation6 + $0x410] sm:$0xff] %vm1285, %v2300
        %2386 = vst.msk [vmem:[#allocation6 + $0x478] sm:$0xff] %vm1285, %v2302
        %2387 = vst.msk [vmem:[#allocation6 + $0x4e0] sm:$0xff] %vm1285, %v2304
        %2388 = vst.msk [vmem:[#allocation6 + $0x548] sm:$0xff] %vm1285, %v2306
        %2389 = vst.msk [vmem:[#allocation6 + $0x5b0] sm:$0xff] %vm1285, %v2308
        %2390 = vst.msk [vmem:[#allocation6 + $0x618] sm:$0xff] %vm1285, %v2310
        %2391 = vst.msk [vmem:[#allocation6 + $0x680] sm:$0xff] %vm1285, %v2312
        %2392 = vst.msk [vmem:[#allocation6 + $0x6e8] sm:$0xff] %vm1285, %v2314
        %2393 = vst.msk [vmem:[#allocation6 + $0x750] sm:$0xff] %vm1285, %v2316
        %2394 = vst.msk [vmem:[#allocation6 + $0x7b8] sm:$0xff] %vm1285, %v2318
        %2395 = vst.msk [vmem:[#allocation6 + $0x820] sm:$0xff] %vm1285, %v2320
        %2396 = vst.msk [vmem:[#allocation6 + $0x888] sm:$0xff] %vm1285, %v2322
        %2397 = vst.msk [vmem:[#allocation6 + $0x8f0] sm:$0xff] %vm1285, %v2324
        %2398 = vst.msk [vmem:[#allocation6 + $0x958] sm:$0xff] %vm1285, %v2326
        %2399 = vst.msk [vmem:[#allocation6 + $0x9c0] sm:$0xff] %vm1285, %v2328
        %2400 = vst.msk [vmem:[#allocation6 + $0xa28] sm:$0xff] %vm1285, %v2330
        %2401 = vst.msk [vmem:[#allocation6 + $0xa90] sm:$0xff] %vm1285, %v2332
        %2402 = vst.msk [vmem:[#allocation6 + $0xaf8] sm:$0xff] %vm1285, %v2334
        %2403 = vst.msk [vmem:[#allocation6 + $0xb60] sm:$0xff] %vm1285, %v2336
        %2404 = vst.msk [vmem:[#allocation6 + $0xbc8] sm:$0xff] %vm1285, %v2338
        %2405 = vst.msk [vmem:[#allocation6 + $0xc30] sm:$0xff] %vm1285, %v2340
        %2406 = vst.msk [vmem:[#allocation6 + $0xc98] sm:$0xff] %vm1285, %v2342
        %v2407 = vld [vmem:[#allocation3 + $0x2] sm:$0xff]
        %v2408 = vld [vmem:[#allocation3 + $0xa] sm:$0xff]
        %v2409 = vld [vmem:[#allocation3 + $0x1a] sm:$0xff]
        %v2410 = vld [vmem:[#allocation3 + $0x22] sm:$0xff]
        %v2411 = vld [vmem:[#allocation3 + $0x32] sm:$0xff]
        %v2412 = vld [vmem:[#allocation3 + $0x3a] sm:$0xff]
        %v2413 = vld [vmem:[#allocation3 + $0x4a] sm:$0xff]
        %v2414 = vld [vmem:[#allocation3 + $0x52] sm:$0xff]
        %v2415 = vld [vmem:[#allocation3 + $0x62] sm:$0xff]
        %v2416 = vld [vmem:[#allocation3 + $0x6a] sm:$0xff]
        %v2417 = vld [vmem:[#allocation3 + $0x7a] sm:$0xff]
        %v2418 = vld [vmem:[#allocation3 + $0x82] sm:$0xff]
        %v2419 = vld [vmem:[#allocation3 + $0x92] sm:$0xff]
        %v2420 = vld [vmem:[#allocation3 + $0x9a] sm:$0xff]
        %v2421 = vld [vmem:[#allocation3 + $0xaa] sm:$0xff]
        %v2422 = vld [vmem:[#allocation3 + $0xb2] sm:$0xff]
        %v2423 = vld [vmem:[#allocation3 + $0xc2] sm:$0xff]
        %v2424 = vld [vmem:[#allocation3 + $0xca] sm:$0xff]
        %v2425 = vld [vmem:[#allocation3 + $0xda] sm:$0xff]
        %v2426 = vld [vmem:[#allocation3 + $0xe2] sm:$0xff]
        %v2427 = vld [vmem:[#allocation3 + $0xf2] sm:$0xff]
        %v2428 = vld [vmem:[#allocation3 + $0xfa] sm:$0xff]
        %v2429 = vld [vmem:[#allocation3 + $0x10a] sm:$0xff]
        %v2430 = vld [vmem:[#allocation3 + $0x112] sm:$0xff]
        %v2431 = vld [vmem:[#allocation3 + $0x122] sm:$0xff]
        %v2432 = vld [vmem:[#allocation3 + $0x12a] sm:$0xff]
        %v2433 = vld [vmem:[#allocation3 + $0x13a] sm:$0xff]
        %v2434 = vld [vmem:[#allocation3 + $0x142] sm:$0xff]
        %v2435 = vld [vmem:[#allocation3 + $0x152] sm:$0xff]
        %v2436 = vld [vmem:[#allocation3 + $0x15a] sm:$0xff]
        %v2437 = vld [vmem:[#allocation3 + $0x16a] sm:$0xff]
        %v2438 = vld [vmem:[#allocation3 + $0x172] sm:$0xff]
        %2439 = vst.msk [vmem:[#allocation6 + $0x8] sm:$0xff] %vm331, %v2407
        %2440 = vst.msk [vmem:[#allocation6 + $0x70] sm:$0xff] %vm331, %v2408
        %2441 = vst.msk [vmem:[#allocation6 + $0xd8] sm:$0xff] %vm331, %v2409
        %2442 = vst.msk [vmem:[#allocation6 + $0x140] sm:$0xff] %vm331, %v2410
        %2443 = vst.msk [vmem:[#allocation6 + $0x1a8] sm:$0xff] %vm331, %v2411
        %2444 = vst.msk [vmem:[#allocation6 + $0x210] sm:$0xff] %vm331, %v2412
        %2445 = vst.msk [vmem:[#allocation6 + $0x278] sm:$0xff] %vm331, %v2413
        %2446 = vst.msk [vmem:[#allocation6 + $0x2e0] sm:$0xff] %vm331, %v2414
        %2447 = vst.msk [vmem:[#allocation6 + $0x348] sm:$0xff] %vm331, %v2415
        %2448 = vst.msk [vmem:[#allocation6 + $0x3b0] sm:$0xff] %vm331, %v2416
        %2449 = vst.msk [vmem:[#allocation6 + $0x418] sm:$0xff] %vm331, %v2417
        %2450 = vst.msk [vmem:[#allocation6 + $0x480] sm:$0xff] %vm331, %v2418
        %2451 = vst.msk [vmem:[#allocation6 + $0x4e8] sm:$0xff] %vm331, %v2419
        %2452 = vst.msk [vmem:[#allocation6 + $0x550] sm:$0xff] %vm331, %v2420
        %2453 = vst.msk [vmem:[#allocation6 + $0x5b8] sm:$0xff] %vm331, %v2421
        %2454 = vst.msk [vmem:[#allocation6 + $0x620] sm:$0xff] %vm331, %v2422
        %2455 = vst.msk [vmem:[#allocation6 + $0x688] sm:$0xff] %vm331, %v2423
        %2456 = vst.msk [vmem:[#allocation6 + $0x6f0] sm:$0xff] %vm331, %v2424
        %2457 = vst.msk [vmem:[#allocation6 + $0x758] sm:$0xff] %vm331, %v2425
        %2458 = vst.msk [vmem:[#allocation6 + $0x7c0] sm:$0xff] %vm331, %v2426
        %2459 = vst.msk [vmem:[#allocation6 + $0x828] sm:$0xff] %vm331, %v2427
        %2460 = vst.msk [vmem:[#allocation6 + $0x890] sm:$0xff] %vm331, %v2428
        %2461 = vst.msk [vmem:[#allocation6 + $0x8f8] sm:$0xff] %vm331, %v2429
        %2462 = vst.msk [vmem:[#allocation6 + $0x960] sm:$0xff] %vm331, %v2430
        %2463 = vst.msk [vmem:[#allocation6 + $0x9c8] sm:$0xff] %vm331, %v2431
        %2464 = vst.msk [vmem:[#allocation6 + $0xa30] sm:$0xff] %vm331, %v2432
        %2465 = vst.msk [vmem:[#allocation6 + $0xa98] sm:$0xff] %vm331, %v2433
        %2466 = vst.msk [vmem:[#allocation6 + $0xb00] sm:$0xff] %vm331, %v2434
        %2467 = vst.msk [vmem:[#allocation6 + $0xb68] sm:$0xff] %vm331, %v2435
        %2468 = vst.msk [vmem:[#allocation6 + $0xbd0] sm:$0xff] %vm331, %v2436
        %2469 = vst.msk [vmem:[#allocation6 + $0xc38] sm:$0xff] %vm331, %v2437
        %2470 = vst.msk [vmem:[#allocation6 + $0xca0] sm:$0xff] %vm331, %v2438
        %v2471 = vld [vmem:[#allocation3 + $0x3] sm:$0xff]
        %v2472 = vld [vmem:[#allocation3 + $0xb] sm:$0xff]
        %v2473 = vld [vmem:[#allocation3 + $0x1b] sm:$0xff]
        %v2474 = vld [vmem:[#allocation3 + $0x23] sm:$0xff]
        %v2475 = vld [vmem:[#allocation3 + $0x33] sm:$0xff]
        %v2476 = vld [vmem:[#allocation3 + $0x3b] sm:$0xff]
        %v2477 = vld [vmem:[#allocation3 + $0x4b] sm:$0xff]
        %v2478 = vld [vmem:[#allocation3 + $0x53] sm:$0xff]
        %v2479 = vld [vmem:[#allocation3 + $0x63] sm:$0xff]
        %v2480 = vld [vmem:[#allocation3 + $0x6b] sm:$0xff]
        %v2481 = vld [vmem:[#allocation3 + $0x7b] sm:$0xff]
        %v2482 = vld [vmem:[#allocation3 + $0x83] sm:$0xff]
        %v2483 = vld [vmem:[#allocation3 + $0x93] sm:$0xff]
        %v2484 = vld [vmem:[#allocation3 + $0x9b] sm:$0xff]
        %v2485 = vld [vmem:[#allocation3 + $0xab] sm:$0xff]
        %v2486 = vld [vmem:[#allocation3 + $0xb3] sm:$0xff]
        %v2487 = vld [vmem:[#allocation3 + $0xc3] sm:$0xff]
        %v2488 = vld [vmem:[#allocation3 + $0xcb] sm:$0xff]
        %v2489 = vld [vmem:[#allocation3 + $0xdb] sm:$0xff]
        %v2490 = vld [vmem:[#allocation3 + $0xe3] sm:$0xff]
        %v2491 = vld [vmem:[#allocation3 + $0xf3] sm:$0xff]
        %v2492 = vld [vmem:[#allocation3 + $0xfb] sm:$0xff]
        %v2493 = vld [vmem:[#allocation3 + $0x10b] sm:$0xff]
        %v2494 = vld [vmem:[#allocation3 + $0x113] sm:$0xff]
        %v2495 = vld [vmem:[#allocation3 + $0x123] sm:$0xff]
        %v2496 = vld [vmem:[#allocation3 + $0x12b] sm:$0xff]
        %v2497 = vld [vmem:[#allocation3 + $0x13b] sm:$0xff]
        %v2498 = vld [vmem:[#allocation3 + $0x143] sm:$0xff]
        %v2499 = vld [vmem:[#allocation3 + $0x153] sm:$0xff]
        %v2500 = vld [vmem:[#allocation3 + $0x15b] sm:$0xff]
        %v2501 = vld [vmem:[#allocation3 + $0x16b] sm:$0xff]
        %v2502 = vld [vmem:[#allocation3 + $0x173] sm:$0xff]
        %2535 = vrot.lane.b32.xlu0 %v2471, 64
        %v2536 = vpop.permute.xlu0 %2535
        %2537 = vrot.lane.b32.xlu0 %v2472, 64
        %v2538 = vpop.permute.xlu0 %2537
        %2539 = vrot.lane.b32.xlu0 %v2473, 64
        %v2540 = vpop.permute.xlu0 %2539
        %2541 = vrot.lane.b32.xlu0 %v2474, 64
        %v2542 = vpop.permute.xlu0 %2541
        %2543 = vrot.lane.b32.xlu0 %v2475, 64
        %v2544 = vpop.permute.xlu0 %2543
        %2545 = vrot.lane.b32.xlu0 %v2476, 64
        %v2546 = vpop.permute.xlu0 %2545
        %2547 = vrot.lane.b32.xlu0 %v2477, 64
        %v2548 = vpop.permute.xlu0 %2547
        %2549 = vrot.lane.b32.xlu0 %v2478, 64
        %v2550 = vpop.permute.xlu0 %2549
        %2551 = vrot.lane.b32.xlu0 %v2479, 64
        %v2552 = vpop.permute.xlu0 %2551
        %2553 = vrot.lane.b32.xlu0 %v2480, 64
        %v2554 = vpop.permute.xlu0 %2553
        %2555 = vrot.lane.b32.xlu0 %v2481, 64
        %v2556 = vpop.permute.xlu0 %2555
        %2557 = vrot.lane.b32.xlu0 %v2482, 64
        %v2558 = vpop.permute.xlu0 %2557
        %2559 = vrot.lane.b32.xlu0 %v2483, 64
        %v2560 = vpop.permute.xlu0 %2559
        %2561 = vrot.lane.b32.xlu0 %v2484, 64
        %v2562 = vpop.permute.xlu0 %2561
        %2563 = vrot.lane.b32.xlu0 %v2485, 64
        %v2564 = vpop.permute.xlu0 %2563
        %2565 = vrot.lane.b32.xlu0 %v2486, 64
        %v2566 = vpop.permute.xlu0 %2565
        %2567 = vrot.lane.b32.xlu0 %v2487, 64
        %v2568 = vpop.permute.xlu0 %2567
        %2569 = vrot.lane.b32.xlu0 %v2488, 64
        %v2570 = vpop.permute.xlu0 %2569
        %2571 = vrot.lane.b32.xlu0 %v2489, 64
        %v2572 = vpop.permute.xlu0 %2571
        %2573 = vrot.lane.b32.xlu0 %v2490, 64
        %v2574 = vpop.permute.xlu0 %2573
        %2575 = vrot.lane.b32.xlu0 %v2491, 64
        %v2576 = vpop.permute.xlu0 %2575
        %2577 = vrot.lane.b32.xlu0 %v2492, 64
        %v2578 = vpop.permute.xlu0 %2577
        %2579 = vrot.lane.b32.xlu0 %v2493, 64
        %v2580 = vpop.permute.xlu0 %2579
        %2581 = vrot.lane.b32.xlu0 %v2494, 64
        %v2582 = vpop.permute.xlu0 %2581
        %2583 = vrot.lane.b32.xlu0 %v2495, 64
        %v2584 = vpop.permute.xlu0 %2583
        %2585 = vrot.lane.b32.xlu0 %v2496, 64
        %v2586 = vpop.permute.xlu0 %2585
        %2587 = vrot.lane.b32.xlu0 %v2497, 64
        %v2588 = vpop.permute.xlu0 %2587
        %2589 = vrot.lane.b32.xlu0 %v2498, 64
        %v2590 = vpop.permute.xlu0 %2589
        %2591 = vrot.lane.b32.xlu0 %v2499, 64
        %v2592 = vpop.permute.xlu0 %2591
        %2593 = vrot.lane.b32.xlu0 %v2500, 64
        %v2594 = vpop.permute.xlu0 %2593
        %2595 = vrot.lane.b32.xlu0 %v2501, 64
        %v2596 = vpop.permute.xlu0 %2595
        %2597 = vrot.lane.b32.xlu0 %v2502, 64
        %v2598 = vpop.permute.xlu0 %2597
        %2631 = vst.msk [vmem:[#allocation6 + $0x8] sm:$0xff] %vm1285, %v2536
        %2632 = vst.msk [vmem:[#allocation6 + $0x70] sm:$0xff] %vm1285, %v2538
        %2633 = vst.msk [vmem:[#allocation6 + $0xd8] sm:$0xff] %vm1285, %v2540
        %2634 = vst.msk [vmem:[#allocation6 + $0x140] sm:$0xff] %vm1285, %v2542
        %2635 = vst.msk [vmem:[#allocation6 + $0x1a8] sm:$0xff] %vm1285, %v2544
        %2636 = vst.msk [vmem:[#allocation6 + $0x210] sm:$0xff] %vm1285, %v2546
        %2637 = vst.msk [vmem:[#allocation6 + $0x278] sm:$0xff] %vm1285, %v2548
        %2638 = vst.msk [vmem:[#allocation6 + $0x2e0] sm:$0xff] %vm1285, %v2550
        %2639 = vst.msk [vmem:[#allocation6 + $0x348] sm:$0xff] %vm1285, %v2552
        %2640 = vst.msk [vmem:[#allocation6 + $0x3b0] sm:$0xff] %vm1285, %v2554
        %2641 = vst.msk [vmem:[#allocation6 + $0x418] sm:$0xff] %vm1285, %v2556
        %2642 = vst.msk [vmem:[#allocation6 + $0x480] sm:$0xff] %vm1285, %v2558
        %2643 = vst.msk [vmem:[#allocation6 + $0x4e8] sm:$0xff] %vm1285, %v2560
        %2644 = vst.msk [vmem:[#allocation6 + $0x550] sm:$0xff] %vm1285, %v2562
        %2645 = vst.msk [vmem:[#allocation6 + $0x5b8] sm:$0xff] %vm1285, %v2564
        %2646 = vst.msk [vmem:[#allocation6 + $0x620] sm:$0xff] %vm1285, %v2566
        %2647 = vst.msk [vmem:[#allocation6 + $0x688] sm:$0xff] %vm1285, %v2568
        %2648 = vst.msk [vmem:[#allocation6 + $0x6f0] sm:$0xff] %vm1285, %v2570
        %2649 = vst.msk [vmem:[#allocation6 + $0x758] sm:$0xff] %vm1285, %v2572
        %2650 = vst.msk [vmem:[#allocation6 + $0x7c0] sm:$0xff] %vm1285, %v2574
        %2651 = vst.msk [vmem:[#allocation6 + $0x828] sm:$0xff] %vm1285, %v2576
        %2652 = vst.msk [vmem:[#allocation6 + $0x890] sm:$0xff] %vm1285, %v2578
        %2653 = vst.msk [vmem:[#allocation6 + $0x8f8] sm:$0xff] %vm1285, %v2580
        %2654 = vst.msk [vmem:[#allocation6 + $0x960] sm:$0xff] %vm1285, %v2582
        %2655 = vst.msk [vmem:[#allocation6 + $0x9c8] sm:$0xff] %vm1285, %v2584
        %2656 = vst.msk [vmem:[#allocation6 + $0xa30] sm:$0xff] %vm1285, %v2586
        %2657 = vst.msk [vmem:[#allocation6 + $0xa98] sm:$0xff] %vm1285, %v2588
        %2658 = vst.msk [vmem:[#allocation6 + $0xb00] sm:$0xff] %vm1285, %v2590
        %2659 = vst.msk [vmem:[#allocation6 + $0xb68] sm:$0xff] %vm1285, %v2592
        %2660 = vst.msk [vmem:[#allocation6 + $0xbd0] sm:$0xff] %vm1285, %v2594
        %2661 = vst.msk [vmem:[#allocation6 + $0xc38] sm:$0xff] %vm1285, %v2596
        %2662 = vst.msk [vmem:[#allocation6 + $0xca0] sm:$0xff] %vm1285, %v2598
        %v2663 = vld [vmem:[#allocation3 + $0x4] sm:$0xff]
        %v2664 = vld [vmem:[#allocation3 + $0xc] sm:$0xff]
        %v2665 = vld [vmem:[#allocation3 + $0x1c] sm:$0xff]
        %v2666 = vld [vmem:[#allocation3 + $0x24] sm:$0xff]
        %v2667 = vld [vmem:[#allocation3 + $0x34] sm:$0xff]
        %v2668 = vld [vmem:[#allocation3 + $0x3c] sm:$0xff]
        %v2669 = vld [vmem:[#allocation3 + $0x4c] sm:$0xff]
        %v2670 = vld [vmem:[#allocation3 + $0x54] sm:$0xff]
        %v2671 = vld [vmem:[#allocation3 + $0x64] sm:$0xff]
        %v2672 = vld [vmem:[#allocation3 + $0x6c] sm:$0xff]
        %v2673 = vld [vmem:[#allocation3 + $0x7c] sm:$0xff]
        %v2674 = vld [vmem:[#allocation3 + $0x84] sm:$0xff]
        %v2675 = vld [vmem:[#allocation3 + $0x94] sm:$0xff]
        %v2676 = vld [vmem:[#allocation3 + $0x9c] sm:$0xff]
        %v2677 = vld [vmem:[#allocation3 + $0xac] sm:$0xff]
        %v2678 = vld [vmem:[#allocation3 + $0xb4] sm:$0xff]
        %v2679 = vld [vmem:[#allocation3 + $0xc4] sm:$0xff]
        %v2680 = vld [vmem:[#allocation3 + $0xcc] sm:$0xff]
        %v2681 = vld [vmem:[#allocation3 + $0xdc] sm:$0xff]
        %v2682 = vld [vmem:[#allocation3 + $0xe4] sm:$0xff]
        %v2683 = vld [vmem:[#allocation3 + $0xf4] sm:$0xff]
        %v2684 = vld [vmem:[#allocation3 + $0xfc] sm:$0xff]
        %v2685 = vld [vmem:[#allocation3 + $0x10c] sm:$0xff]
        %v2686 = vld [vmem:[#allocation3 + $0x114] sm:$0xff]
        %v2687 = vld [vmem:[#allocation3 + $0x124] sm:$0xff]
        %v2688 = vld [vmem:[#allocation3 + $0x12c] sm:$0xff]
        %v2689 = vld [vmem:[#allocation3 + $0x13c] sm:$0xff]
        %v2690 = vld [vmem:[#allocation3 + $0x144] sm:$0xff]
        %v2691 = vld [vmem:[#allocation3 + $0x154] sm:$0xff]
        %v2692 = vld [vmem:[#allocation3 + $0x15c] sm:$0xff]
        %v2693 = vld [vmem:[#allocation3 + $0x16c] sm:$0xff]
        %v2694 = vld [vmem:[#allocation3 + $0x174] sm:$0xff]
        %2695 = vst.msk [vmem:[#allocation6 + $0x10] sm:$0xff] %vm331, %v2663
        %2696 = vst.msk [vmem:[#allocation6 + $0x78] sm:$0xff] %vm331, %v2664
        %2697 = vst.msk [vmem:[#allocation6 + $0xe0] sm:$0xff] %vm331, %v2665
        %2698 = vst.msk [vmem:[#allocation6 + $0x148] sm:$0xff] %vm331, %v2666
        %2699 = vst.msk [vmem:[#allocation6 + $0x1b0] sm:$0xff] %vm331, %v2667
        %2700 = vst.msk [vmem:[#allocation6 + $0x218] sm:$0xff] %vm331, %v2668
        %2701 = vst.msk [vmem:[#allocation6 + $0x280] sm:$0xff] %vm331, %v2669
        %2702 = vst.msk [vmem:[#allocation6 + $0x2e8] sm:$0xff] %vm331, %v2670
        %2703 = vst.msk [vmem:[#allocation6 + $0x350] sm:$0xff] %vm331, %v2671
        %2704 = vst.msk [vmem:[#allocation6 + $0x3b8] sm:$0xff] %vm331, %v2672
        %2705 = vst.msk [vmem:[#allocation6 + $0x420] sm:$0xff] %vm331, %v2673
        %2706 = vst.msk [vmem:[#allocation6 + $0x488] sm:$0xff] %vm331, %v2674
        %2707 = vst.msk [vmem:[#allocation6 + $0x4f0] sm:$0xff] %vm331, %v2675
        %2708 = vst.msk [vmem:[#allocation6 + $0x558] sm:$0xff] %vm331, %v2676
        %2709 = vst.msk [vmem:[#allocation6 + $0x5c0] sm:$0xff] %vm331, %v2677
        %2710 = vst.msk [vmem:[#allocation6 + $0x628] sm:$0xff] %vm331, %v2678
        %2711 = vst.msk [vmem:[#allocation6 + $0x690] sm:$0xff] %vm331, %v2679
        %2712 = vst.msk [vmem:[#allocation6 + $0x6f8] sm:$0xff] %vm331, %v2680
        %2713 = vst.msk [vmem:[#allocation6 + $0x760] sm:$0xff] %vm331, %v2681
        %2714 = vst.msk [vmem:[#allocation6 + $0x7c8] sm:$0xff] %vm331, %v2682
        %2715 = vst.msk [vmem:[#allocation6 + $0x830] sm:$0xff] %vm331, %v2683
        %2716 = vst.msk [vmem:[#allocation6 + $0x898] sm:$0xff] %vm331, %v2684
        %2717 = vst.msk [vmem:[#allocation6 + $0x900] sm:$0xff] %vm331, %v2685
        %2718 = vst.msk [vmem:[#allocation6 + $0x968] sm:$0xff] %vm331, %v2686
        %2719 = vst.msk [vmem:[#allocation6 + $0x9d0] sm:$0xff] %vm331, %v2687
        %2720 = vst.msk [vmem:[#allocation6 + $0xa38] sm:$0xff] %vm331, %v2688
        %2721 = vst.msk [vmem:[#allocation6 + $0xaa0] sm:$0xff] %vm331, %v2689
        %2722 = vst.msk [vmem:[#allocation6 + $0xb08] sm:$0xff] %vm331, %v2690
        %2723 = vst.msk [vmem:[#allocation6 + $0xb70] sm:$0xff] %vm331, %v2691
        %2724 = vst.msk [vmem:[#allocation6 + $0xbd8] sm:$0xff] %vm331, %v2692
        %2725 = vst.msk [vmem:[#allocation6 + $0xc40] sm:$0xff] %vm331, %v2693
        %2726 = vst.msk [vmem:[#allocation6 + $0xca8] sm:$0xff] %vm331, %v2694
        %s2727 = scalar_lea.vmem [#allocation3], 24
        %v2728 = vld [vmem:[%s2727] sm:$0xff]
        %v2729 = vld [vmem:[%s2727 + $0x8] sm:$0xff]
        %v2730 = vld [vmem:[%s2727 + $0x18] sm:$0xff]
        %v2731 = vld [vmem:[%s2727 + $0x20] sm:$0xff]
        %v2732 = vld [vmem:[%s2727 + $0x30] sm:$0xff]
        %v2733 = vld [vmem:[%s2727 + $0x38] sm:$0xff]
        %v2734 = vld [vmem:[%s2727 + $0x48] sm:$0xff]
        %v2735 = vld [vmem:[%s2727 + $0x50] sm:$0xff]
        %v2736 = vld [vmem:[%s2727 + $0x60] sm:$0xff]
        %v2737 = vld [vmem:[%s2727 + $0x68] sm:$0xff]
        %v2738 = vld [vmem:[%s2727 + $0x78] sm:$0xff]
        %v2739 = vld [vmem:[%s2727 + $0x80] sm:$0xff]
        %v2740 = vld [vmem:[%s2727 + $0x90] sm:$0xff]
        %v2741 = vld [vmem:[%s2727 + $0x98] sm:$0xff]
        %v2742 = vld [vmem:[%s2727 + $0xa8] sm:$0xff]
        %v2743 = vld [vmem:[%s2727 + $0xb0] sm:$0xff]
        %v2744 = vld [vmem:[%s2727 + $0xc0] sm:$0xff]
        %v2745 = vld [vmem:[%s2727 + $0xc8] sm:$0xff]
        %v2746 = vld [vmem:[%s2727 + $0xd8] sm:$0xff]
        %v2747 = vld [vmem:[%s2727 + $0xe0] sm:$0xff]
        %v2748 = vld [vmem:[%s2727 + $0xf0] sm:$0xff]
        %v2749 = vld [vmem:[%s2727 + $0xf8] sm:$0xff]
        %v2750 = vld [vmem:[%s2727 + $0x108] sm:$0xff]
        %v2751 = vld [vmem:[%s2727 + $0x110] sm:$0xff]
        %v2752 = vld [vmem:[%s2727 + $0x120] sm:$0xff]
        %v2753 = vld [vmem:[%s2727 + $0x128] sm:$0xff]
        %v2754 = vld [vmem:[%s2727 + $0x138] sm:$0xff]
        %v2755 = vld [vmem:[%s2727 + $0x140] sm:$0xff]
        %v2756 = vld [vmem:[%s2727 + $0x150] sm:$0xff]
        %v2757 = vld [vmem:[%s2727 + $0x158] sm:$0xff]
        %v2758 = vld [vmem:[%s2727 + $0x168] sm:$0xff]
        %v2759 = vld [vmem:[%s2727 + $0x170] sm:$0xff]
        %2792 = vrot.lane.b32.xlu0 %v2728, 64
        %v2793 = vpop.permute.xlu0 %2792
        %2794 = vrot.lane.b32.xlu0 %v2729, 64
        %v2795 = vpop.permute.xlu0 %2794
        %2796 = vrot.lane.b32.xlu0 %v2730, 64
        %v2797 = vpop.permute.xlu0 %2796
        %2798 = vrot.lane.b32.xlu0 %v2731, 64
        %v2799 = vpop.permute.xlu0 %2798
        %2800 = vrot.lane.b32.xlu0 %v2732, 64
        %v2801 = vpop.permute.xlu0 %2800
        %2802 = vrot.lane.b32.xlu0 %v2733, 64
        %v2803 = vpop.permute.xlu0 %2802
        %2804 = vrot.lane.b32.xlu0 %v2734, 64
        %v2805 = vpop.permute.xlu0 %2804
        %2806 = vrot.lane.b32.xlu0 %v2735, 64
        %v2807 = vpop.permute.xlu0 %2806
        %2808 = vrot.lane.b32.xlu0 %v2736, 64
        %v2809 = vpop.permute.xlu0 %2808
        %2810 = vrot.lane.b32.xlu0 %v2737, 64
        %v2811 = vpop.permute.xlu0 %2810
        %2812 = vrot.lane.b32.xlu0 %v2738, 64
        %v2813 = vpop.permute.xlu0 %2812
        %2814 = vrot.lane.b32.xlu0 %v2739, 64
        %v2815 = vpop.permute.xlu0 %2814
        %2816 = vrot.lane.b32.xlu0 %v2740, 64
        %v2817 = vpop.permute.xlu0 %2816
        %2818 = vrot.lane.b32.xlu0 %v2741, 64
        %v2819 = vpop.permute.xlu0 %2818
        %2820 = vrot.lane.b32.xlu0 %v2742, 64
        %v2821 = vpop.permute.xlu0 %2820
        %2822 = vrot.lane.b32.xlu0 %v2743, 64
        %v2823 = vpop.permute.xlu0 %2822
        %2824 = vrot.lane.b32.xlu0 %v2744, 64
        %v2825 = vpop.permute.xlu0 %2824
        %2826 = vrot.lane.b32.xlu0 %v2745, 64
        %v2827 = vpop.permute.xlu0 %2826
        %2828 = vrot.lane.b32.xlu0 %v2746, 64
        %v2829 = vpop.permute.xlu0 %2828
        %2830 = vrot.lane.b32.xlu0 %v2747, 64
        %v2831 = vpop.permute.xlu0 %2830
        %2832 = vrot.lane.b32.xlu0 %v2748, 64
        %v2833 = vpop.permute.xlu0 %2832
        %2834 = vrot.lane.b32.xlu0 %v2749, 64
        %v2835 = vpop.permute.xlu0 %2834
        %2836 = vrot.lane.b32.xlu0 %v2750, 64
        %v2837 = vpop.permute.xlu0 %2836
        %2838 = vrot.lane.b32.xlu0 %v2751, 64
        %v2839 = vpop.permute.xlu0 %2838
        %2840 = vrot.lane.b32.xlu0 %v2752, 64
        %v2841 = vpop.permute.xlu0 %2840
        %2842 = vrot.lane.b32.xlu0 %v2753, 64
        %v2843 = vpop.permute.xlu0 %2842
        %2844 = vrot.lane.b32.xlu0 %v2754, 64
        %v2845 = vpop.permute.xlu0 %2844
        %2846 = vrot.lane.b32.xlu0 %v2755, 64
        %v2847 = vpop.permute.xlu0 %2846
        %2848 = vrot.lane.b32.xlu0 %v2756, 64
        %v2849 = vpop.permute.xlu0 %2848
        %2850 = vrot.lane.b32.xlu0 %v2757, 64
        %v2851 = vpop.permute.xlu0 %2850
        %2852 = vrot.lane.b32.xlu0 %v2758, 64
        %v2853 = vpop.permute.xlu0 %2852
        %2854 = vrot.lane.b32.xlu0 %v2759, 64
        %v2855 = vpop.permute.xlu0 %2854
        %2888 = vst.msk [vmem:[#allocation6 + $0x10] sm:$0xff] %vm1285, %v2793
        %2889 = vst.msk [vmem:[#allocation6 + $0x78] sm:$0xff] %vm1285, %v2795
        %2890 = vst.msk [vmem:[#allocation6 + $0xe0] sm:$0xff] %vm1285, %v2797
        %2891 = vst.msk [vmem:[#allocation6 + $0x148] sm:$0xff] %vm1285, %v2799
        %2892 = vst.msk [vmem:[#allocation6 + $0x1b0] sm:$0xff] %vm1285, %v2801
        %2893 = vst.msk [vmem:[#allocation6 + $0x218] sm:$0xff] %vm1285, %v2803
        %2894 = vst.msk [vmem:[#allocation6 + $0x280] sm:$0xff] %vm1285, %v2805
        %2895 = vst.msk [vmem:[#allocation6 + $0x2e8] sm:$0xff] %vm1285, %v2807
        %2896 = vst.msk [vmem:[#allocation6 + $0x350] sm:$0xff] %vm1285, %v2809
        %2897 = vst.msk [vmem:[#allocation6 + $0x3b8] sm:$0xff] %vm1285, %v2811
        %2898 = vst.msk [vmem:[#allocation6 + $0x420] sm:$0xff] %vm1285, %v2813
        %2899 = vst.msk [vmem:[#allocation6 + $0x488] sm:$0xff] %vm1285, %v2815
        %2900 = vst.msk [vmem:[#allocation6 + $0x4f0] sm:$0xff] %vm1285, %v2817
        %2901 = vst.msk [vmem:[#allocation6 + $0x558] sm:$0xff] %vm1285, %v2819
        %2902 = vst.msk [vmem:[#allocation6 + $0x5c0] sm:$0xff] %vm1285, %v2821
        %2903 = vst.msk [vmem:[#allocation6 + $0x628] sm:$0xff] %vm1285, %v2823
        %2904 = vst.msk [vmem:[#allocation6 + $0x690] sm:$0xff] %vm1285, %v2825
        %2905 = vst.msk [vmem:[#allocation6 + $0x6f8] sm:$0xff] %vm1285, %v2827
        %2906 = vst.msk [vmem:[#allocation6 + $0x760] sm:$0xff] %vm1285, %v2829
        %2907 = vst.msk [vmem:[#allocation6 + $0x7c8] sm:$0xff] %vm1285, %v2831
        %2908 = vst.msk [vmem:[#allocation6 + $0x830] sm:$0xff] %vm1285, %v2833
        %2909 = vst.msk [vmem:[#allocation6 + $0x898] sm:$0xff] %vm1285, %v2835
        %2910 = vst.msk [vmem:[#allocation6 + $0x900] sm:$0xff] %vm1285, %v2837
        %2911 = vst.msk [vmem:[#allocation6 + $0x968] sm:$0xff] %vm1285, %v2839
        %2912 = vst.msk [vmem:[#allocation6 + $0x9d0] sm:$0xff] %vm1285, %v2841
        %2913 = vst.msk [vmem:[#allocation6 + $0xa38] sm:$0xff] %vm1285, %v2843
        %2914 = vst.msk [vmem:[#allocation6 + $0xaa0] sm:$0xff] %vm1285, %v2845
        %2915 = vst.msk [vmem:[#allocation6 + $0xb08] sm:$0xff] %vm1285, %v2847
        %2916 = vst.msk [vmem:[#allocation6 + $0xb70] sm:$0xff] %vm1285, %v2849
        %2917 = vst.msk [vmem:[#allocation6 + $0xbd8] sm:$0xff] %vm1285, %v2851
        %2918 = vst.msk [vmem:[#allocation6 + $0xc40] sm:$0xff] %vm1285, %v2853
        %2919 = vst.msk [vmem:[#allocation6 + $0xca8] sm:$0xff] %vm1285, %v2855
        %v2920 = vld [vmem:[%s2727 + $0x1] sm:$0xff]
        %v2921 = vld [vmem:[%s2727 + $0x9] sm:$0xff]
        %v2922 = vld [vmem:[%s2727 + $0x19] sm:$0xff]
        %v2923 = vld [vmem:[%s2727 + $0x21] sm:$0xff]
        %v2924 = vld [vmem:[%s2727 + $0x31] sm:$0xff]
        %v2925 = vld [vmem:[%s2727 + $0x39] sm:$0xff]
        %v2926 = vld [vmem:[%s2727 + $0x49] sm:$0xff]
        %v2927 = vld [vmem:[%s2727 + $0x51] sm:$0xff]
        %v2928 = vld [vmem:[%s2727 + $0x61] sm:$0xff]
        %v2929 = vld [vmem:[%s2727 + $0x69] sm:$0xff]
        %v2930 = vld [vmem:[%s2727 + $0x79] sm:$0xff]
        %v2931 = vld [vmem:[%s2727 + $0x81] sm:$0xff]
        %v2932 = vld [vmem:[%s2727 + $0x91] sm:$0xff]
        %v2933 = vld [vmem:[%s2727 + $0x99] sm:$0xff]
        %v2934 = vld [vmem:[%s2727 + $0xa9] sm:$0xff]
        %v2935 = vld [vmem:[%s2727 + $0xb1] sm:$0xff]
        %v2936 = vld [vmem:[%s2727 + $0xc1] sm:$0xff]
        %v2937 = vld [vmem:[%s2727 + $0xc9] sm:$0xff]
        %v2938 = vld [vmem:[%s2727 + $0xd9] sm:$0xff]
        %v2939 = vld [vmem:[%s2727 + $0xe1] sm:$0xff]
        %v2940 = vld [vmem:[%s2727 + $0xf1] sm:$0xff]
        %v2941 = vld [vmem:[%s2727 + $0xf9] sm:$0xff]
        %v2942 = vld [vmem:[%s2727 + $0x109] sm:$0xff]
        %v2943 = vld [vmem:[%s2727 + $0x111] sm:$0xff]
        %v2944 = vld [vmem:[%s2727 + $0x121] sm:$0xff]
        %v2945 = vld [vmem:[%s2727 + $0x129] sm:$0xff]
        %v2946 = vld [vmem:[%s2727 + $0x139] sm:$0xff]
        %v2947 = vld [vmem:[%s2727 + $0x141] sm:$0xff]
        %v2948 = vld [vmem:[%s2727 + $0x151] sm:$0xff]
        %v2949 = vld [vmem:[%s2727 + $0x159] sm:$0xff]
        %v2950 = vld [vmem:[%s2727 + $0x169] sm:$0xff]
        %v2951 = vld [vmem:[%s2727 + $0x171] sm:$0xff]
        %2952 = vst.msk [vmem:[#allocation6 + $0x18] sm:$0xff] %vm331, %v2920
        %2953 = vst.msk [vmem:[#allocation6 + $0x80] sm:$0xff] %vm331, %v2921
        %2954 = vst.msk [vmem:[#allocation6 + $0xe8] sm:$0xff] %vm331, %v2922
        %2955 = vst.msk [vmem:[#allocation6 + $0x150] sm:$0xff] %vm331, %v2923
        %2956 = vst.msk [vmem:[#allocation6 + $0x1b8] sm:$0xff] %vm331, %v2924
        %2957 = vst.msk [vmem:[#allocation6 + $0x220] sm:$0xff] %vm331, %v2925
        %2958 = vst.msk [vmem:[#allocation6 + $0x288] sm:$0xff] %vm331, %v2926
        %2959 = vst.msk [vmem:[#allocation6 + $0x2f0] sm:$0xff] %vm331, %v2927
        %2960 = vst.msk [vmem:[#allocation6 + $0x358] sm:$0xff] %vm331, %v2928
        %2961 = vst.msk [vmem:[#allocation6 + $0x3c0] sm:$0xff] %vm331, %v2929
        %2962 = vst.msk [vmem:[#allocation6 + $0x428] sm:$0xff] %vm331, %v2930
        %2963 = vst.msk [vmem:[#allocation6 + $0x490] sm:$0xff] %vm331, %v2931
        %2964 = vst.msk [vmem:[#allocation6 + $0x4f8] sm:$0xff] %vm331, %v2932
        %2965 = vst.msk [vmem:[#allocation6 + $0x560] sm:$0xff] %vm331, %v2933
        %2966 = vst.msk [vmem:[#allocation6 + $0x5c8] sm:$0xff] %vm331, %v2934
        %2967 = vst.msk [vmem:[#allocation6 + $0x630] sm:$0xff] %vm331, %v2935
        %2968 = vst.msk [vmem:[#allocation6 + $0x698] sm:$0xff] %vm331, %v2936
        %2969 = vst.msk [vmem:[#allocation6 + $0x700] sm:$0xff] %vm331, %v2937
        %2970 = vst.msk [vmem:[#allocation6 + $0x768] sm:$0xff] %vm331, %v2938
        %2971 = vst.msk [vmem:[#allocation6 + $0x7d0] sm:$0xff] %vm331, %v2939
        %2972 = vst.msk [vmem:[#allocation6 + $0x838] sm:$0xff] %vm331, %v2940
        %2973 = vst.msk [vmem:[#allocation6 + $0x8a0] sm:$0xff] %vm331, %v2941
        %2974 = vst.msk [vmem:[#allocation6 + $0x908] sm:$0xff] %vm331, %v2942
        %2975 = vst.msk [vmem:[#allocation6 + $0x970] sm:$0xff] %vm331, %v2943
        %2976 = vst.msk [vmem:[#allocation6 + $0x9d8] sm:$0xff] %vm331, %v2944
        %2977 = vst.msk [vmem:[#allocation6 + $0xa40] sm:$0xff] %vm331, %v2945
        %2978 = vst.msk [vmem:[#allocation6 + $0xaa8] sm:$0xff] %vm331, %v2946
        %2979 = vst.msk [vmem:[#allocation6 + $0xb10] sm:$0xff] %vm331, %v2947
        %2980 = vst.msk [vmem:[#allocation6 + $0xb78] sm:$0xff] %vm331, %v2948
        %2981 = vst.msk [vmem:[#allocation6 + $0xbe0] sm:$0xff] %vm331, %v2949
        %2982 = vst.msk [vmem:[#allocation6 + $0xc48] sm:$0xff] %vm331, %v2950
        %2983 = vst.msk [vmem:[#allocation6 + $0xcb0] sm:$0xff] %vm331, %v2951
        %v2984 = vld [vmem:[%s2727 + $0x2] sm:$0xff]
        %v2985 = vld [vmem:[%s2727 + $0xa] sm:$0xff]
        %v2986 = vld [vmem:[%s2727 + $0x1a] sm:$0xff]
        %v2987 = vld [vmem:[%s2727 + $0x22] sm:$0xff]
        %v2988 = vld [vmem:[%s2727 + $0x32] sm:$0xff]
        %v2989 = vld [vmem:[%s2727 + $0x3a] sm:$0xff]
        %v2990 = vld [vmem:[%s2727 + $0x4a] sm:$0xff]
        %v2991 = vld [vmem:[%s2727 + $0x52] sm:$0xff]
        %v2992 = vld [vmem:[%s2727 + $0x62] sm:$0xff]
        %v2993 = vld [vmem:[%s2727 + $0x6a] sm:$0xff]
        %v2994 = vld [vmem:[%s2727 + $0x7a] sm:$0xff]
        %v2995 = vld [vmem:[%s2727 + $0x82] sm:$0xff]
        %v2996 = vld [vmem:[%s2727 + $0x92] sm:$0xff]
        %v2997 = vld [vmem:[%s2727 + $0x9a] sm:$0xff]
        %v2998 = vld [vmem:[%s2727 + $0xaa] sm:$0xff]
        %v2999 = vld [vmem:[%s2727 + $0xb2] sm:$0xff]
        %v3000 = vld [vmem:[%s2727 + $0xc2] sm:$0xff]
        %v3001 = vld [vmem:[%s2727 + $0xca] sm:$0xff]
        %v3002 = vld [vmem:[%s2727 + $0xda] sm:$0xff]
        %v3003 = vld [vmem:[%s2727 + $0xe2] sm:$0xff]
        %v3004 = vld [vmem:[%s2727 + $0xf2] sm:$0xff]
        %v3005 = vld [vmem:[%s2727 + $0xfa] sm:$0xff]
        %v3006 = vld [vmem:[%s2727 + $0x10a] sm:$0xff]
        %v3007 = vld [vmem:[%s2727 + $0x112] sm:$0xff]
        %v3008 = vld [vmem:[%s2727 + $0x122] sm:$0xff]
        %v3009 = vld [vmem:[%s2727 + $0x12a] sm:$0xff]
        %v3010 = vld [vmem:[%s2727 + $0x13a] sm:$0xff]
        %v3011 = vld [vmem:[%s2727 + $0x142] sm:$0xff]
        %v3012 = vld [vmem:[%s2727 + $0x152] sm:$0xff]
        %v3013 = vld [vmem:[%s2727 + $0x15a] sm:$0xff]
        %v3014 = vld [vmem:[%s2727 + $0x16a] sm:$0xff]
        %v3015 = vld [vmem:[%s2727 + $0x172] sm:$0xff]
        %3048 = vrot.lane.b32.xlu0 %v2984, 64
        %v3049 = vpop.permute.xlu0 %3048
        %3050 = vrot.lane.b32.xlu0 %v2985, 64
        %v3051 = vpop.permute.xlu0 %3050
        %3052 = vrot.lane.b32.xlu0 %v2986, 64
        %v3053 = vpop.permute.xlu0 %3052
        %3054 = vrot.lane.b32.xlu0 %v2987, 64
        %v3055 = vpop.permute.xlu0 %3054
        %3056 = vrot.lane.b32.xlu0 %v2988, 64
        %v3057 = vpop.permute.xlu0 %3056
        %3058 = vrot.lane.b32.xlu0 %v2989, 64
        %v3059 = vpop.permute.xlu0 %3058
        %3060 = vrot.lane.b32.xlu0 %v2990, 64
        %v3061 = vpop.permute.xlu0 %3060
        %3062 = vrot.lane.b32.xlu0 %v2991, 64
        %v3063 = vpop.permute.xlu0 %3062
        %3064 = vrot.lane.b32.xlu0 %v2992, 64
        %v3065 = vpop.permute.xlu0 %3064
        %3066 = vrot.lane.b32.xlu0 %v2993, 64
        %v3067 = vpop.permute.xlu0 %3066
        %3068 = vrot.lane.b32.xlu0 %v2994, 64
        %v3069 = vpop.permute.xlu0 %3068
        %3070 = vrot.lane.b32.xlu0 %v2995, 64
        %v3071 = vpop.permute.xlu0 %3070
        %3072 = vrot.lane.b32.xlu0 %v2996, 64
        %v3073 = vpop.permute.xlu0 %3072
        %3074 = vrot.lane.b32.xlu0 %v2997, 64
        %v3075 = vpop.permute.xlu0 %3074
        %3076 = vrot.lane.b32.xlu0 %v2998, 64
        %v3077 = vpop.permute.xlu0 %3076
        %3078 = vrot.lane.b32.xlu0 %v2999, 64
        %v3079 = vpop.permute.xlu0 %3078
        %3080 = vrot.lane.b32.xlu0 %v3000, 64
        %v3081 = vpop.permute.xlu0 %3080
        %3082 = vrot.lane.b32.xlu0 %v3001, 64
        %v3083 = vpop.permute.xlu0 %3082
        %3084 = vrot.lane.b32.xlu0 %v3002, 64
        %v3085 = vpop.permute.xlu0 %3084
        %3086 = vrot.lane.b32.xlu0 %v3003, 64
        %v3087 = vpop.permute.xlu0 %3086
        %3088 = vrot.lane.b32.xlu0 %v3004, 64
        %v3089 = vpop.permute.xlu0 %3088
        %3090 = vrot.lane.b32.xlu0 %v3005, 64
        %v3091 = vpop.permute.xlu0 %3090
        %3092 = vrot.lane.b32.xlu0 %v3006, 64
        %v3093 = vpop.permute.xlu0 %3092
        %3094 = vrot.lane.b32.xlu0 %v3007, 64
        %v3095 = vpop.permute.xlu0 %3094
        %3096 = vrot.lane.b32.xlu0 %v3008, 64
        %v3097 = vpop.permute.xlu0 %3096
        %3098 = vrot.lane.b32.xlu0 %v3009, 64
        %v3099 = vpop.permute.xlu0 %3098
        %3100 = vrot.lane.b32.xlu0 %v3010, 64
        %v3101 = vpop.permute.xlu0 %3100
        %3102 = vrot.lane.b32.xlu0 %v3011, 64
        %v3103 = vpop.permute.xlu0 %3102
        %3104 = vrot.lane.b32.xlu0 %v3012, 64
        %v3105 = vpop.permute.xlu0 %3104
        %3106 = vrot.lane.b32.xlu0 %v3013, 64
        %v3107 = vpop.permute.xlu0 %3106
        %3108 = vrot.lane.b32.xlu0 %v3014, 64
        %v3109 = vpop.permute.xlu0 %3108
        %3110 = vrot.lane.b32.xlu0 %v3015, 64
        %v3111 = vpop.permute.xlu0 %3110
        %3144 = vst.msk [vmem:[#allocation6 + $0x18] sm:$0xff] %vm1285, %v3049
        %3145 = vst.msk [vmem:[#allocation6 + $0x80] sm:$0xff] %vm1285, %v3051
        %3146 = vst.msk [vmem:[#allocation6 + $0xe8] sm:$0xff] %vm1285, %v3053
        %3147 = vst.msk [vmem:[#allocation6 + $0x150] sm:$0xff] %vm1285, %v3055
        %3148 = vst.msk [vmem:[#allocation6 + $0x1b8] sm:$0xff] %vm1285, %v3057
        %3149 = vst.msk [vmem:[#allocation6 + $0x220] sm:$0xff] %vm1285, %v3059
        %3150 = vst.msk [vmem:[#allocation6 + $0x288] sm:$0xff] %vm1285, %v3061
        %3151 = vst.msk [vmem:[#allocation6 + $0x2f0] sm:$0xff] %vm1285, %v3063
        %3152 = vst.msk [vmem:[#allocation6 + $0x358] sm:$0xff] %vm1285, %v3065
        %3153 = vst.msk [vmem:[#allocation6 + $0x3c0] sm:$0xff] %vm1285, %v3067
        %3154 = vst.msk [vmem:[#allocation6 + $0x428] sm:$0xff] %vm1285, %v3069
        %3155 = vst.msk [vmem:[#allocation6 + $0x490] sm:$0xff] %vm1285, %v3071
        %3156 = vst.msk [vmem:[#allocation6 + $0x4f8] sm:$0xff] %vm1285, %v3073
        %3157 = vst.msk [vmem:[#allocation6 + $0x560] sm:$0xff] %vm1285, %v3075
        %3158 = vst.msk [vmem:[#allocation6 + $0x5c8] sm:$0xff] %vm1285, %v3077
        %3159 = vst.msk [vmem:[#allocation6 + $0x630] sm:$0xff] %vm1285, %v3079
        %3160 = vst.msk [vmem:[#allocation6 + $0x698] sm:$0xff] %vm1285, %v3081
        %3161 = vst.msk [vmem:[#allocation6 + $0x700] sm:$0xff] %vm1285, %v3083
        %3162 = vst.msk [vmem:[#allocation6 + $0x768] sm:$0xff] %vm1285, %v3085
        %3163 = vst.msk [vmem:[#allocation6 + $0x7d0] sm:$0xff] %vm1285, %v3087
        %3164 = vst.msk [vmem:[#allocation6 + $0x838] sm:$0xff] %vm1285, %v3089
        %3165 = vst.msk [vmem:[#allocation6 + $0x8a0] sm:$0xff] %vm1285, %v3091
        %3166 = vst.msk [vmem:[#allocation6 + $0x908] sm:$0xff] %vm1285, %v3093
        %3167 = vst.msk [vmem:[#allocation6 + $0x970] sm:$0xff] %vm1285, %v3095
        %3168 = vst.msk [vmem:[#allocation6 + $0x9d8] sm:$0xff] %vm1285, %v3097
        %3169 = vst.msk [vmem:[#allocation6 + $0xa40] sm:$0xff] %vm1285, %v3099
        %3170 = vst.msk [vmem:[#allocation6 + $0xaa8] sm:$0xff] %vm1285, %v3101
        %3171 = vst.msk [vmem:[#allocation6 + $0xb10] sm:$0xff] %vm1285, %v3103
        %3172 = vst.msk [vmem:[#allocation6 + $0xb78] sm:$0xff] %vm1285, %v3105
        %3173 = vst.msk [vmem:[#allocation6 + $0xbe0] sm:$0xff] %vm1285, %v3107
        %3174 = vst.msk [vmem:[#allocation6 + $0xc48] sm:$0xff] %vm1285, %v3109
        %3175 = vst.msk [vmem:[#allocation6 + $0xcb0] sm:$0xff] %vm1285, %v3111
        %v3176 = vld [vmem:[%s2727 + $0x3] sm:$0xff]
        %v3177 = vld [vmem:[%s2727 + $0xb] sm:$0xff]
        %v3178 = vld [vmem:[%s2727 + $0x1b] sm:$0xff]
        %v3179 = vld [vmem:[%s2727 + $0x23] sm:$0xff]
        %v3180 = vld [vmem:[%s2727 + $0x33] sm:$0xff]
        %v3181 = vld [vmem:[%s2727 + $0x3b] sm:$0xff]
        %v3182 = vld [vmem:[%s2727 + $0x4b] sm:$0xff]
        %v3183 = vld [vmem:[%s2727 + $0x53] sm:$0xff]
        %v3184 = vld [vmem:[%s2727 + $0x63] sm:$0xff]
        %v3185 = vld [vmem:[%s2727 + $0x6b] sm:$0xff]
        %v3186 = vld [vmem:[%s2727 + $0x7b] sm:$0xff]
        %v3187 = vld [vmem:[%s2727 + $0x83] sm:$0xff]
        %v3188 = vld [vmem:[%s2727 + $0x93] sm:$0xff]
        %v3189 = vld [vmem:[%s2727 + $0x9b] sm:$0xff]
        %v3190 = vld [vmem:[%s2727 + $0xab] sm:$0xff]
        %v3191 = vld [vmem:[%s2727 + $0xb3] sm:$0xff]
        %v3192 = vld [vmem:[%s2727 + $0xc3] sm:$0xff]
        %v3193 = vld [vmem:[%s2727 + $0xcb] sm:$0xff]
        %v3194 = vld [vmem:[%s2727 + $0xdb] sm:$0xff]
        %v3195 = vld [vmem:[%s2727 + $0xe3] sm:$0xff]
        %v3196 = vld [vmem:[%s2727 + $0xf3] sm:$0xff]
        %v3197 = vld [vmem:[%s2727 + $0xfb] sm:$0xff]
        %v3198 = vld [vmem:[%s2727 + $0x10b] sm:$0xff]
        %v3199 = vld [vmem:[%s2727 + $0x113] sm:$0xff]
        %v3200 = vld [vmem:[%s2727 + $0x123] sm:$0xff]
        %v3201 = vld [vmem:[%s2727 + $0x12b] sm:$0xff]
        %v3202 = vld [vmem:[%s2727 + $0x13b] sm:$0xff]
        %v3203 = vld [vmem:[%s2727 + $0x143] sm:$0xff]
        %v3204 = vld [vmem:[%s2727 + $0x153] sm:$0xff]
        %v3205 = vld [vmem:[%s2727 + $0x15b] sm:$0xff]
        %v3206 = vld [vmem:[%s2727 + $0x16b] sm:$0xff]
        %v3207 = vld [vmem:[%s2727 + $0x173] sm:$0xff]
        %3208 = vst.msk [vmem:[#allocation6 + $0x20] sm:$0xff] %vm331, %v3176
        %3209 = vst.msk [vmem:[#allocation6 + $0x88] sm:$0xff] %vm331, %v3177
        %3210 = vst.msk [vmem:[#allocation6 + $0xf0] sm:$0xff] %vm331, %v3178
        %3211 = vst.msk [vmem:[#allocation6 + $0x158] sm:$0xff] %vm331, %v3179
        %3212 = vst.msk [vmem:[#allocation6 + $0x1c0] sm:$0xff] %vm331, %v3180
        %3213 = vst.msk [vmem:[#allocation6 + $0x228] sm:$0xff] %vm331, %v3181
        %3214 = vst.msk [vmem:[#allocation6 + $0x290] sm:$0xff] %vm331, %v3182
        %3215 = vst.msk [vmem:[#allocation6 + $0x2f8] sm:$0xff] %vm331, %v3183
        %3216 = vst.msk [vmem:[#allocation6 + $0x360] sm:$0xff] %vm331, %v3184
        %3217 = vst.msk [vmem:[#allocation6 + $0x3c8] sm:$0xff] %vm331, %v3185
        %3218 = vst.msk [vmem:[#allocation6 + $0x430] sm:$0xff] %vm331, %v3186
        %3219 = vst.msk [vmem:[#allocation6 + $0x498] sm:$0xff] %vm331, %v3187
        %3220 = vst.msk [vmem:[#allocation6 + $0x500] sm:$0xff] %vm331, %v3188
        %3221 = vst.msk [vmem:[#allocation6 + $0x568] sm:$0xff] %vm331, %v3189
        %3222 = vst.msk [vmem:[#allocation6 + $0x5d0] sm:$0xff] %vm331, %v3190
        %3223 = vst.msk [vmem:[#allocation6 + $0x638] sm:$0xff] %vm331, %v3191
        %3224 = vst.msk [vmem:[#allocation6 + $0x6a0] sm:$0xff] %vm331, %v3192
        %3225 = vst.msk [vmem:[#allocation6 + $0x708] sm:$0xff] %vm331, %v3193
        %3226 = vst.msk [vmem:[#allocation6 + $0x770] sm:$0xff] %vm331, %v3194
        %3227 = vst.msk [vmem:[#allocation6 + $0x7d8] sm:$0xff] %vm331, %v3195
        %3228 = vst.msk [vmem:[#allocation6 + $0x840] sm:$0xff] %vm331, %v3196
        %3229 = vst.msk [vmem:[#allocation6 + $0x8a8] sm:$0xff] %vm331, %v3197
        %3230 = vst.msk [vmem:[#allocation6 + $0x910] sm:$0xff] %vm331, %v3198
        %3231 = vst.msk [vmem:[#allocation6 + $0x978] sm:$0xff] %vm331, %v3199
        %3232 = vst.msk [vmem:[#allocation6 + $0x9e0] sm:$0xff] %vm331, %v3200
        %3233 = vst.msk [vmem:[#allocation6 + $0xa48] sm:$0xff] %vm331, %v3201
        %3234 = vst.msk [vmem:[#allocation6 + $0xab0] sm:$0xff] %vm331, %v3202
        %3235 = vst.msk [vmem:[#allocation6 + $0xb18] sm:$0xff] %vm331, %v3203
        %3236 = vst.msk [vmem:[#allocation6 + $0xb80] sm:$0xff] %vm331, %v3204
        %3237 = vst.msk [vmem:[#allocation6 + $0xbe8] sm:$0xff] %vm331, %v3205
        %3238 = vst.msk [vmem:[#allocation6 + $0xc50] sm:$0xff] %vm331, %v3206
        %3239 = vst.msk [vmem:[#allocation6 + $0xcb8] sm:$0xff] %vm331, %v3207
        %v3240 = vld [vmem:[%s2727 + $0x4] sm:$0xff]
        %v3241 = vld [vmem:[%s2727 + $0xc] sm:$0xff]
        %v3242 = vld [vmem:[%s2727 + $0x1c] sm:$0xff]
        %v3243 = vld [vmem:[%s2727 + $0x24] sm:$0xff]
        %v3244 = vld [vmem:[%s2727 + $0x34] sm:$0xff]
        %v3245 = vld [vmem:[%s2727 + $0x3c] sm:$0xff]
        %v3246 = vld [vmem:[%s2727 + $0x4c] sm:$0xff]
        %v3247 = vld [vmem:[%s2727 + $0x54] sm:$0xff]
        %v3248 = vld [vmem:[%s2727 + $0x64] sm:$0xff]
        %v3249 = vld [vmem:[%s2727 + $0x6c] sm:$0xff]
        %v3250 = vld [vmem:[%s2727 + $0x7c] sm:$0xff]
        %v3251 = vld [vmem:[%s2727 + $0x84] sm:$0xff]
        %v3252 = vld [vmem:[%s2727 + $0x94] sm:$0xff]
        %v3253 = vld [vmem:[%s2727 + $0x9c] sm:$0xff]
        %v3254 = vld [vmem:[%s2727 + $0xac] sm:$0xff]
        %v3255 = vld [vmem:[%s2727 + $0xb4] sm:$0xff]
        %v3256 = vld [vmem:[%s2727 + $0xc4] sm:$0xff]
        %v3257 = vld [vmem:[%s2727 + $0xcc] sm:$0xff]
        %v3258 = vld [vmem:[%s2727 + $0xdc] sm:$0xff]
        %v3259 = vld [vmem:[%s2727 + $0xe4] sm:$0xff]
        %v3260 = vld [vmem:[%s2727 + $0xf4] sm:$0xff]
        %v3261 = vld [vmem:[%s2727 + $0xfc] sm:$0xff]
        %v3262 = vld [vmem:[%s2727 + $0x10c] sm:$0xff]
        %v3263 = vld [vmem:[%s2727 + $0x114] sm:$0xff]
        %v3264 = vld [vmem:[%s2727 + $0x124] sm:$0xff]
        %v3265 = vld [vmem:[%s2727 + $0x12c] sm:$0xff]
        %v3266 = vld [vmem:[%s2727 + $0x13c] sm:$0xff]
        %v3267 = vld [vmem:[%s2727 + $0x144] sm:$0xff]
        %v3268 = vld [vmem:[%s2727 + $0x154] sm:$0xff]
        %v3269 = vld [vmem:[%s2727 + $0x15c] sm:$0xff]
        %v3270 = vld [vmem:[%s2727 + $0x16c] sm:$0xff]
        %v3271 = vld [vmem:[%s2727 + $0x174] sm:$0xff]
        %3304 = vrot.lane.b32.xlu0 %v3240, 64
        %v3305 = vpop.permute.xlu0 %3304
        %3306 = vrot.lane.b32.xlu0 %v3241, 64
        %v3307 = vpop.permute.xlu0 %3306
        %3308 = vrot.lane.b32.xlu0 %v3242, 64
        %v3309 = vpop.permute.xlu0 %3308
        %3310 = vrot.lane.b32.xlu0 %v3243, 64
        %v3311 = vpop.permute.xlu0 %3310
        %3312 = vrot.lane.b32.xlu0 %v3244, 64
        %v3313 = vpop.permute.xlu0 %3312
        %3314 = vrot.lane.b32.xlu0 %v3245, 64
        %v3315 = vpop.permute.xlu0 %3314
        %3316 = vrot.lane.b32.xlu0 %v3246, 64
        %v3317 = vpop.permute.xlu0 %3316
        %3318 = vrot.lane.b32.xlu0 %v3247, 64
        %v3319 = vpop.permute.xlu0 %3318
        %3320 = vrot.lane.b32.xlu0 %v3248, 64
        %v3321 = vpop.permute.xlu0 %3320
        %3322 = vrot.lane.b32.xlu0 %v3249, 64
        %v3323 = vpop.permute.xlu0 %3322
        %3324 = vrot.lane.b32.xlu0 %v3250, 64
        %v3325 = vpop.permute.xlu0 %3324
        %3326 = vrot.lane.b32.xlu0 %v3251, 64
        %v3327 = vpop.permute.xlu0 %3326
        %3328 = vrot.lane.b32.xlu0 %v3252, 64
        %v3329 = vpop.permute.xlu0 %3328
        %3330 = vrot.lane.b32.xlu0 %v3253, 64
        %v3331 = vpop.permute.xlu0 %3330
        %3332 = vrot.lane.b32.xlu0 %v3254, 64
        %v3333 = vpop.permute.xlu0 %3332
        %3334 = vrot.lane.b32.xlu0 %v3255, 64
        %v3335 = vpop.permute.xlu0 %3334
        %3336 = vrot.lane.b32.xlu0 %v3256, 64
        %v3337 = vpop.permute.xlu0 %3336
        %3338 = vrot.lane.b32.xlu0 %v3257, 64
        %v3339 = vpop.permute.xlu0 %3338
        %3340 = vrot.lane.b32.xlu0 %v3258, 64
        %v3341 = vpop.permute.xlu0 %3340
        %3342 = vrot.lane.b32.xlu0 %v3259, 64
        %v3343 = vpop.permute.xlu0 %3342
        %3344 = vrot.lane.b32.xlu0 %v3260, 64
        %v3345 = vpop.permute.xlu0 %3344
        %3346 = vrot.lane.b32.xlu0 %v3261, 64
        %v3347 = vpop.permute.xlu0 %3346
        %3348 = vrot.lane.b32.xlu0 %v3262, 64
        %v3349 = vpop.permute.xlu0 %3348
        %3350 = vrot.lane.b32.xlu0 %v3263, 64
        %v3351 = vpop.permute.xlu0 %3350
        %3352 = vrot.lane.b32.xlu0 %v3264, 64
        %v3353 = vpop.permute.xlu0 %3352
        %3354 = vrot.lane.b32.xlu0 %v3265, 64
        %v3355 = vpop.permute.xlu0 %3354
        %3356 = vrot.lane.b32.xlu0 %v3266, 64
        %v3357 = vpop.permute.xlu0 %3356
        %3358 = vrot.lane.b32.xlu0 %v3267, 64
        %v3359 = vpop.permute.xlu0 %3358
        %3360 = vrot.lane.b32.xlu0 %v3268, 64
        %v3361 = vpop.permute.xlu0 %3360
        %3362 = vrot.lane.b32.xlu0 %v3269, 64
        %v3363 = vpop.permute.xlu0 %3362
        %3364 = vrot.lane.b32.xlu0 %v3270, 64
        %v3365 = vpop.permute.xlu0 %3364
        %3366 = vrot.lane.b32.xlu0 %v3271, 64
        %v3367 = vpop.permute.xlu0 %3366
        %3400 = vst.msk [vmem:[#allocation6 + $0x20] sm:$0xff] %vm1285, %v3305
        %3401 = vst.msk [vmem:[#allocation6 + $0x88] sm:$0xff] %vm1285, %v3307
        %3402 = vst.msk [vmem:[#allocation6 + $0xf0] sm:$0xff] %vm1285, %v3309
        %3403 = vst.msk [vmem:[#allocation6 + $0x158] sm:$0xff] %vm1285, %v3311
        %3404 = vst.msk [vmem:[#allocation6 + $0x1c0] sm:$0xff] %vm1285, %v3313
        %3405 = vst.msk [vmem:[#allocation6 + $0x228] sm:$0xff] %vm1285, %v3315
        %3406 = vst.msk [vmem:[#allocation6 + $0x290] sm:$0xff] %vm1285, %v3317
        %3407 = vst.msk [vmem:[#allocation6 + $0x2f8] sm:$0xff] %vm1285, %v3319
        %3408 = vst.msk [vmem:[#allocation6 + $0x360] sm:$0xff] %vm1285, %v3321
        %3409 = vst.msk [vmem:[#allocation6 + $0x3c8] sm:$0xff] %vm1285, %v3323
        %3410 = vst.msk [vmem:[#allocation6 + $0x430] sm:$0xff] %vm1285, %v3325
        %3411 = vst.msk [vmem:[#allocation6 + $0x498] sm:$0xff] %vm1285, %v3327
        %3412 = vst.msk [vmem:[#allocation6 + $0x500] sm:$0xff] %vm1285, %v3329
        %3413 = vst.msk [vmem:[#allocation6 + $0x568] sm:$0xff] %vm1285, %v3331
        %3414 = vst.msk [vmem:[#allocation6 + $0x5d0] sm:$0xff] %vm1285, %v3333
        %3415 = vst.msk [vmem:[#allocation6 + $0x638] sm:$0xff] %vm1285, %v3335
        %3416 = vst.msk [vmem:[#allocation6 + $0x6a0] sm:$0xff] %vm1285, %v3337
        %3417 = vst.msk [vmem:[#allocation6 + $0x708] sm:$0xff] %vm1285, %v3339
        %3418 = vst.msk [vmem:[#allocation6 + $0x770] sm:$0xff] %vm1285, %v3341
        %3419 = vst.msk [vmem:[#allocation6 + $0x7d8] sm:$0xff] %vm1285, %v3343
        %3420 = vst.msk [vmem:[#allocation6 + $0x840] sm:$0xff] %vm1285, %v3345
        %3421 = vst.msk [vmem:[#allocation6 + $0x8a8] sm:$0xff] %vm1285, %v3347
        %3422 = vst.msk [vmem:[#allocation6 + $0x910] sm:$0xff] %vm1285, %v3349
        %3423 = vst.msk [vmem:[#allocation6 + $0x978] sm:$0xff] %vm1285, %v3351
        %3424 = vst.msk [vmem:[#allocation6 + $0x9e0] sm:$0xff] %vm1285, %v3353
        %3425 = vst.msk [vmem:[#allocation6 + $0xa48] sm:$0xff] %vm1285, %v3355
        %3426 = vst.msk [vmem:[#allocation6 + $0xab0] sm:$0xff] %vm1285, %v3357
        %3427 = vst.msk [vmem:[#allocation6 + $0xb18] sm:$0xff] %vm1285, %v3359
        %3428 = vst.msk [vmem:[#allocation6 + $0xb80] sm:$0xff] %vm1285, %v3361
        %3429 = vst.msk [vmem:[#allocation6 + $0xbe8] sm:$0xff] %vm1285, %v3363
        %3430 = vst.msk [vmem:[#allocation6 + $0xc50] sm:$0xff] %vm1285, %v3365
        %3431 = vst.msk [vmem:[#allocation6 + $0xcb8] sm:$0xff] %vm1285, %v3367
        %v3432 = vld [vmem:[%s388] sm:$0xff]
        %v3433 = vld [vmem:[%s388 + $0x8] sm:$0xff]
        %v3434 = vld [vmem:[%s388 + $0x18] sm:$0xff]
        %v3435 = vld [vmem:[%s388 + $0x20] sm:$0xff]
        %v3436 = vld [vmem:[%s388 + $0x30] sm:$0xff]
        %v3437 = vld [vmem:[%s388 + $0x38] sm:$0xff]
        %v3438 = vld [vmem:[%s388 + $0x48] sm:$0xff]
        %v3439 = vld [vmem:[%s388 + $0x50] sm:$0xff]
        %v3440 = vld [vmem:[%s388 + $0x60] sm:$0xff]
        %v3441 = vld [vmem:[%s388 + $0x68] sm:$0xff]
        %v3442 = vld [vmem:[%s388 + $0x78] sm:$0xff]
        %v3443 = vld [vmem:[%s388 + $0x80] sm:$0xff]
        %v3444 = vld [vmem:[%s388 + $0x90] sm:$0xff]
        %v3445 = vld [vmem:[%s388 + $0x98] sm:$0xff]
        %v3446 = vld [vmem:[%s388 + $0xa8] sm:$0xff]
        %v3447 = vld [vmem:[%s388 + $0xb0] sm:$0xff]
        %v3448 = vld [vmem:[%s388 + $0xc0] sm:$0xff]
        %v3449 = vld [vmem:[%s388 + $0xc8] sm:$0xff]
        %v3450 = vld [vmem:[%s388 + $0xd8] sm:$0xff]
        %v3451 = vld [vmem:[%s388 + $0xe0] sm:$0xff]
        %v3452 = vld [vmem:[%s388 + $0xf0] sm:$0xff]
        %v3453 = vld [vmem:[%s388 + $0xf8] sm:$0xff]
        %v3454 = vld [vmem:[%s388 + $0x108] sm:$0xff]
        %v3455 = vld [vmem:[%s388 + $0x110] sm:$0xff]
        %v3456 = vld [vmem:[%s388 + $0x120] sm:$0xff]
        %v3457 = vld [vmem:[%s388 + $0x128] sm:$0xff]
        %v3458 = vld [vmem:[%s388 + $0x138] sm:$0xff]
        %v3459 = vld [vmem:[%s388 + $0x140] sm:$0xff]
        %v3460 = vld [vmem:[%s388 + $0x150] sm:$0xff]
        %v3461 = vld [vmem:[%s388 + $0x158] sm:$0xff]
        %v3462 = vld [vmem:[%s388 + $0x168] sm:$0xff]
        %v3463 = vld [vmem:[%s388 + $0x170] sm:$0xff]
        %3464 = vst.msk [vmem:[#allocation6 + $0x28] sm:$0xff] %vm331, %v3432
        %3465 = vst.msk [vmem:[#allocation6 + $0x90] sm:$0xff] %vm331, %v3433
        %3466 = vst.msk [vmem:[#allocation6 + $0xf8] sm:$0xff] %vm331, %v3434
        %3467 = vst.msk [vmem:[#allocation6 + $0x160] sm:$0xff] %vm331, %v3435
        %3468 = vst.msk [vmem:[#allocation6 + $0x1c8] sm:$0xff] %vm331, %v3436
        %3469 = vst.msk [vmem:[#allocation6 + $0x230] sm:$0xff] %vm331, %v3437
        %3470 = vst.msk [vmem:[#allocation6 + $0x298] sm:$0xff] %vm331, %v3438
        %3471 = vst.msk [vmem:[#allocation6 + $0x300] sm:$0xff] %vm331, %v3439
        %3472 = vst.msk [vmem:[#allocation6 + $0x368] sm:$0xff] %vm331, %v3440
        %3473 = vst.msk [vmem:[#allocation6 + $0x3d0] sm:$0xff] %vm331, %v3441
        %3474 = vst.msk [vmem:[#allocation6 + $0x438] sm:$0xff] %vm331, %v3442
        %3475 = vst.msk [vmem:[#allocation6 + $0x4a0] sm:$0xff] %vm331, %v3443
        %3476 = vst.msk [vmem:[#allocation6 + $0x508] sm:$0xff] %vm331, %v3444
        %3477 = vst.msk [vmem:[#allocation6 + $0x570] sm:$0xff] %vm331, %v3445
        %3478 = vst.msk [vmem:[#allocation6 + $0x5d8] sm:$0xff] %vm331, %v3446
        %3479 = vst.msk [vmem:[#allocation6 + $0x640] sm:$0xff] %vm331, %v3447
        %3480 = vst.msk [vmem:[#allocation6 + $0x6a8] sm:$0xff] %vm331, %v3448
        %3481 = vst.msk [vmem:[#allocation6 + $0x710] sm:$0xff] %vm331, %v3449
        %3482 = vst.msk [vmem:[#allocation6 + $0x778] sm:$0xff] %vm331, %v3450
        %3483 = vst.msk [vmem:[#allocation6 + $0x7e0] sm:$0xff] %vm331, %v3451
        %3484 = vst.msk [vmem:[#allocation6 + $0x848] sm:$0xff] %vm331, %v3452
        %3485 = vst.msk [vmem:[#allocation6 + $0x8b0] sm:$0xff] %vm331, %v3453
        %3486 = vst.msk [vmem:[#allocation6 + $0x918] sm:$0xff] %vm331, %v3454
        %3487 = vst.msk [vmem:[#allocation6 + $0x980] sm:$0xff] %vm331, %v3455
        %3488 = vst.msk [vmem:[#allocation6 + $0x9e8] sm:$0xff] %vm331, %v3456
        %3489 = vst.msk [vmem:[#allocation6 + $0xa50] sm:$0xff] %vm331, %v3457
        %3490 = vst.msk [vmem:[#allocation6 + $0xab8] sm:$0xff] %vm331, %v3458
        %3491 = vst.msk [vmem:[#allocation6 + $0xb20] sm:$0xff] %vm331, %v3459
        %3492 = vst.msk [vmem:[#allocation6 + $0xb88] sm:$0xff] %vm331, %v3460
        %3493 = vst.msk [vmem:[#allocation6 + $0xbf0] sm:$0xff] %vm331, %v3461
        %3494 = vst.msk [vmem:[#allocation6 + $0xc58] sm:$0xff] %vm331, %v3462
        %3495 = vst.msk [vmem:[#allocation6 + $0xcc0] sm:$0xff] %vm331, %v3463
        %v3496 = vld [vmem:[%s388 + $0x1] sm:$0xff]
        %v3497 = vld [vmem:[%s388 + $0x9] sm:$0xff]
        %v3498 = vld [vmem:[%s388 + $0x19] sm:$0xff]
        %v3499 = vld [vmem:[%s388 + $0x21] sm:$0xff]
        %v3500 = vld [vmem:[%s388 + $0x31] sm:$0xff]
        %v3501 = vld [vmem:[%s388 + $0x39] sm:$0xff]
        %v3502 = vld [vmem:[%s388 + $0x49] sm:$0xff]
        %v3503 = vld [vmem:[%s388 + $0x51] sm:$0xff]
        %v3504 = vld [vmem:[%s388 + $0x61] sm:$0xff]
        %v3505 = vld [vmem:[%s388 + $0x69] sm:$0xff]
        %v3506 = vld [vmem:[%s388 + $0x79] sm:$0xff]
        %v3507 = vld [vmem:[%s388 + $0x81] sm:$0xff]
        %v3508 = vld [vmem:[%s388 + $0x91] sm:$0xff]
        %v3509 = vld [vmem:[%s388 + $0x99] sm:$0xff]
        %v3510 = vld [vmem:[%s388 + $0xa9] sm:$0xff]
        %v3511 = vld [vmem:[%s388 + $0xb1] sm:$0xff]
        %v3512 = vld [vmem:[%s388 + $0xc1] sm:$0xff]
        %v3513 = vld [vmem:[%s388 + $0xc9] sm:$0xff]
        %v3514 = vld [vmem:[%s388 + $0xd9] sm:$0xff]
        %v3515 = vld [vmem:[%s388 + $0xe1] sm:$0xff]
        %v3516 = vld [vmem:[%s388 + $0xf1] sm:$0xff]
        %v3517 = vld [vmem:[%s388 + $0xf9] sm:$0xff]
        %v3518 = vld [vmem:[%s388 + $0x109] sm:$0xff]
        %v3519 = vld [vmem:[%s388 + $0x111] sm:$0xff]
        %v3520 = vld [vmem:[%s388 + $0x121] sm:$0xff]
        %v3521 = vld [vmem:[%s388 + $0x129] sm:$0xff]
        %v3522 = vld [vmem:[%s388 + $0x139] sm:$0xff]
        %v3523 = vld [vmem:[%s388 + $0x141] sm:$0xff]
        %v3524 = vld [vmem:[%s388 + $0x151] sm:$0xff]
        %v3525 = vld [vmem:[%s388 + $0x159] sm:$0xff]
        %v3526 = vld [vmem:[%s388 + $0x169] sm:$0xff]
        %v3527 = vld [vmem:[%s388 + $0x171] sm:$0xff]
        %3560 = vrot.lane.b32.xlu0 %v3496, 64
        %v3561 = vpop.permute.xlu0 %3560
        %3562 = vrot.lane.b32.xlu0 %v3497, 64
        %v3563 = vpop.permute.xlu0 %3562
        %3564 = vrot.lane.b32.xlu0 %v3498, 64
        %v3565 = vpop.permute.xlu0 %3564
        %3566 = vrot.lane.b32.xlu0 %v3499, 64
        %v3567 = vpop.permute.xlu0 %3566
        %3568 = vrot.lane.b32.xlu0 %v3500, 64
        %v3569 = vpop.permute.xlu0 %3568
        %3570 = vrot.lane.b32.xlu0 %v3501, 64
        %v3571 = vpop.permute.xlu0 %3570
        %3572 = vrot.lane.b32.xlu0 %v3502, 64
        %v3573 = vpop.permute.xlu0 %3572
        %3574 = vrot.lane.b32.xlu0 %v3503, 64
        %v3575 = vpop.permute.xlu0 %3574
        %3576 = vrot.lane.b32.xlu0 %v3504, 64
        %v3577 = vpop.permute.xlu0 %3576
        %3578 = vrot.lane.b32.xlu0 %v3505, 64
        %v3579 = vpop.permute.xlu0 %3578
        %3580 = vrot.lane.b32.xlu0 %v3506, 64
        %v3581 = vpop.permute.xlu0 %3580
        %3582 = vrot.lane.b32.xlu0 %v3507, 64
        %v3583 = vpop.permute.xlu0 %3582
        %3584 = vrot.lane.b32.xlu0 %v3508, 64
        %v3585 = vpop.permute.xlu0 %3584
        %3586 = vrot.lane.b32.xlu0 %v3509, 64
        %v3587 = vpop.permute.xlu0 %3586
        %3588 = vrot.lane.b32.xlu0 %v3510, 64
        %v3589 = vpop.permute.xlu0 %3588
        %3590 = vrot.lane.b32.xlu0 %v3511, 64
        %v3591 = vpop.permute.xlu0 %3590
        %3592 = vrot.lane.b32.xlu0 %v3512, 64
        %v3593 = vpop.permute.xlu0 %3592
        %3594 = vrot.lane.b32.xlu0 %v3513, 64
        %v3595 = vpop.permute.xlu0 %3594
        %3596 = vrot.lane.b32.xlu0 %v3514, 64
        %v3597 = vpop.permute.xlu0 %3596
        %3598 = vrot.lane.b32.xlu0 %v3515, 64
        %v3599 = vpop.permute.xlu0 %3598
        %3600 = vrot.lane.b32.xlu0 %v3516, 64
        %v3601 = vpop.permute.xlu0 %3600
        %3602 = vrot.lane.b32.xlu0 %v3517, 64
        %v3603 = vpop.permute.xlu0 %3602
        %3604 = vrot.lane.b32.xlu0 %v3518, 64
        %v3605 = vpop.permute.xlu0 %3604
        %3606 = vrot.lane.b32.xlu0 %v3519, 64
        %v3607 = vpop.permute.xlu0 %3606
        %3608 = vrot.lane.b32.xlu0 %v3520, 64
        %v3609 = vpop.permute.xlu0 %3608
        %3610 = vrot.lane.b32.xlu0 %v3521, 64
        %v3611 = vpop.permute.xlu0 %3610
        %3612 = vrot.lane.b32.xlu0 %v3522, 64
        %v3613 = vpop.permute.xlu0 %3612
        %3614 = vrot.lane.b32.xlu0 %v3523, 64
        %v3615 = vpop.permute.xlu0 %3614
        %3616 = vrot.lane.b32.xlu0 %v3524, 64
        %v3617 = vpop.permute.xlu0 %3616
        %3618 = vrot.lane.b32.xlu0 %v3525, 64
        %v3619 = vpop.permute.xlu0 %3618
        %3620 = vrot.lane.b32.xlu0 %v3526, 64
        %v3621 = vpop.permute.xlu0 %3620
        %3622 = vrot.lane.b32.xlu0 %v3527, 64
        %v3623 = vpop.permute.xlu0 %3622
        %3656 = vst.msk [vmem:[#allocation6 + $0x28] sm:$0xff] %vm1285, %v3561
        %3657 = vst.msk [vmem:[#allocation6 + $0x90] sm:$0xff] %vm1285, %v3563
        %3658 = vst.msk [vmem:[#allocation6 + $0xf8] sm:$0xff] %vm1285, %v3565
        %3659 = vst.msk [vmem:[#allocation6 + $0x160] sm:$0xff] %vm1285, %v3567
        %3660 = vst.msk [vmem:[#allocation6 + $0x1c8] sm:$0xff] %vm1285, %v3569
        %3661 = vst.msk [vmem:[#allocation6 + $0x230] sm:$0xff] %vm1285, %v3571
        %3662 = vst.msk [vmem:[#allocation6 + $0x298] sm:$0xff] %vm1285, %v3573
        %3663 = vst.msk [vmem:[#allocation6 + $0x300] sm:$0xff] %vm1285, %v3575
        %3664 = vst.msk [vmem:[#allocation6 + $0x368] sm:$0xff] %vm1285, %v3577
        %3665 = vst.msk [vmem:[#allocation6 + $0x3d0] sm:$0xff] %vm1285, %v3579
        %3666 = vst.msk [vmem:[#allocation6 + $0x438] sm:$0xff] %vm1285, %v3581
        %3667 = vst.msk [vmem:[#allocation6 + $0x4a0] sm:$0xff] %vm1285, %v3583
        %3668 = vst.msk [vmem:[#allocation6 + $0x508] sm:$0xff] %vm1285, %v3585
        %3669 = vst.msk [vmem:[#allocation6 + $0x570] sm:$0xff] %vm1285, %v3587
        %3670 = vst.msk [vmem:[#allocation6 + $0x5d8] sm:$0xff] %vm1285, %v3589
        %3671 = vst.msk [vmem:[#allocation6 + $0x640] sm:$0xff] %vm1285, %v3591
        %3672 = vst.msk [vmem:[#allocation6 + $0x6a8] sm:$0xff] %vm1285, %v3593
        %3673 = vst.msk [vmem:[#allocation6 + $0x710] sm:$0xff] %vm1285, %v3595
        %3674 = vst.msk [vmem:[#allocation6 + $0x778] sm:$0xff] %vm1285, %v3597
        %3675 = vst.msk [vmem:[#allocation6 + $0x7e0] sm:$0xff] %vm1285, %v3599
        %3676 = vst.msk [vmem:[#allocation6 + $0x848] sm:$0xff] %vm1285, %v3601
        %3677 = vst.msk [vmem:[#allocation6 + $0x8b0] sm:$0xff] %vm1285, %v3603
        %3678 = vst.msk [vmem:[#allocation6 + $0x918] sm:$0xff] %vm1285, %v3605
        %3679 = vst.msk [vmem:[#allocation6 + $0x980] sm:$0xff] %vm1285, %v3607
        %3680 = vst.msk [vmem:[#allocation6 + $0x9e8] sm:$0xff] %vm1285, %v3609
        %3681 = vst.msk [vmem:[#allocation6 + $0xa50] sm:$0xff] %vm1285, %v3611
        %3682 = vst.msk [vmem:[#allocation6 + $0xab8] sm:$0xff] %vm1285, %v3613
        %3683 = vst.msk [vmem:[#allocation6 + $0xb20] sm:$0xff] %vm1285, %v3615
        %3684 = vst.msk [vmem:[#allocation6 + $0xb88] sm:$0xff] %vm1285, %v3617
        %3685 = vst.msk [vmem:[#allocation6 + $0xbf0] sm:$0xff] %vm1285, %v3619
        %3686 = vst.msk [vmem:[#allocation6 + $0xc58] sm:$0xff] %vm1285, %v3621
        %3687 = vst.msk [vmem:[#allocation6 + $0xcc0] sm:$0xff] %vm1285, %v3623
        %v3688 = vld [vmem:[%s388 + $0x2] sm:$0xff]
        %v3689 = vld [vmem:[%s388 + $0xa] sm:$0xff]
        %v3690 = vld [vmem:[%s388 + $0x1a] sm:$0xff]
        %v3691 = vld [vmem:[%s388 + $0x22] sm:$0xff]
        %v3692 = vld [vmem:[%s388 + $0x32] sm:$0xff]
        %v3693 = vld [vmem:[%s388 + $0x3a] sm:$0xff]
        %v3694 = vld [vmem:[%s388 + $0x4a] sm:$0xff]
        %v3695 = vld [vmem:[%s388 + $0x52] sm:$0xff]
        %v3696 = vld [vmem:[%s388 + $0x62] sm:$0xff]
        %v3697 = vld [vmem:[%s388 + $0x6a] sm:$0xff]
        %v3698 = vld [vmem:[%s388 + $0x7a] sm:$0xff]
        %v3699 = vld [vmem:[%s388 + $0x82] sm:$0xff]
        %v3700 = vld [vmem:[%s388 + $0x92] sm:$0xff]
        %v3701 = vld [vmem:[%s388 + $0x9a] sm:$0xff]
        %v3702 = vld [vmem:[%s388 + $0xaa] sm:$0xff]
        %v3703 = vld [vmem:[%s388 + $0xb2] sm:$0xff]
        %v3704 = vld [vmem:[%s388 + $0xc2] sm:$0xff]
        %v3705 = vld [vmem:[%s388 + $0xca] sm:$0xff]
        %v3706 = vld [vmem:[%s388 + $0xda] sm:$0xff]
        %v3707 = vld [vmem:[%s388 + $0xe2] sm:$0xff]
        %v3708 = vld [vmem:[%s388 + $0xf2] sm:$0xff]
        %v3709 = vld [vmem:[%s388 + $0xfa] sm:$0xff]
        %v3710 = vld [vmem:[%s388 + $0x10a] sm:$0xff]
        %v3711 = vld [vmem:[%s388 + $0x112] sm:$0xff]
        %v3712 = vld [vmem:[%s388 + $0x122] sm:$0xff]
        %v3713 = vld [vmem:[%s388 + $0x12a] sm:$0xff]
        %v3714 = vld [vmem:[%s388 + $0x13a] sm:$0xff]
        %v3715 = vld [vmem:[%s388 + $0x142] sm:$0xff]
        %v3716 = vld [vmem:[%s388 + $0x152] sm:$0xff]
        %v3717 = vld [vmem:[%s388 + $0x15a] sm:$0xff]
        %v3718 = vld [vmem:[%s388 + $0x16a] sm:$0xff]
        %v3719 = vld [vmem:[%s388 + $0x172] sm:$0xff]
        %3720 = vst.msk [vmem:[#allocation6 + $0x30] sm:$0xff] %vm331, %v3688
        %3721 = vst.msk [vmem:[#allocation6 + $0x98] sm:$0xff] %vm331, %v3689
        %3722 = vst.msk [vmem:[#allocation6 + $0x100] sm:$0xff] %vm331, %v3690
        %3723 = vst.msk [vmem:[#allocation6 + $0x168] sm:$0xff] %vm331, %v3691
        %3724 = vst.msk [vmem:[#allocation6 + $0x1d0] sm:$0xff] %vm331, %v3692
        %3725 = vst.msk [vmem:[#allocation6 + $0x238] sm:$0xff] %vm331, %v3693
        %3726 = vst.msk [vmem:[#allocation6 + $0x2a0] sm:$0xff] %vm331, %v3694
        %3727 = vst.msk [vmem:[#allocation6 + $0x308] sm:$0xff] %vm331, %v3695
        %3728 = vst.msk [vmem:[#allocation6 + $0x370] sm:$0xff] %vm331, %v3696
        %3729 = vst.msk [vmem:[#allocation6 + $0x3d8] sm:$0xff] %vm331, %v3697
        %3730 = vst.msk [vmem:[#allocation6 + $0x440] sm:$0xff] %vm331, %v3698
        %3731 = vst.msk [vmem:[#allocation6 + $0x4a8] sm:$0xff] %vm331, %v3699
        %3732 = vst.msk [vmem:[#allocation6 + $0x510] sm:$0xff] %vm331, %v3700
        %3733 = vst.msk [vmem:[#allocation6 + $0x578] sm:$0xff] %vm331, %v3701
        %3734 = vst.msk [vmem:[#allocation6 + $0x5e0] sm:$0xff] %vm331, %v3702
        %3735 = vst.msk [vmem:[#allocation6 + $0x648] sm:$0xff] %vm331, %v3703
        %3736 = vst.msk [vmem:[#allocation6 + $0x6b0] sm:$0xff] %vm331, %v3704
        %3737 = vst.msk [vmem:[#allocation6 + $0x718] sm:$0xff] %vm331, %v3705
        %3738 = vst.msk [vmem:[#allocation6 + $0x780] sm:$0xff] %vm331, %v3706
        %3739 = vst.msk [vmem:[#allocation6 + $0x7e8] sm:$0xff] %vm331, %v3707
        %3740 = vst.msk [vmem:[#allocation6 + $0x850] sm:$0xff] %vm331, %v3708
        %3741 = vst.msk [vmem:[#allocation6 + $0x8b8] sm:$0xff] %vm331, %v3709
        %3742 = vst.msk [vmem:[#allocation6 + $0x920] sm:$0xff] %vm331, %v3710
        %3743 = vst.msk [vmem:[#allocation6 + $0x988] sm:$0xff] %vm331, %v3711
        %3744 = vst.msk [vmem:[#allocation6 + $0x9f0] sm:$0xff] %vm331, %v3712
        %3745 = vst.msk [vmem:[#allocation6 + $0xa58] sm:$0xff] %vm331, %v3713
        %3746 = vst.msk [vmem:[#allocation6 + $0xac0] sm:$0xff] %vm331, %v3714
        %3747 = vst.msk [vmem:[#allocation6 + $0xb28] sm:$0xff] %vm331, %v3715
        %3748 = vst.msk [vmem:[#allocation6 + $0xb90] sm:$0xff] %vm331, %v3716
        %3749 = vst.msk [vmem:[#allocation6 + $0xbf8] sm:$0xff] %vm331, %v3717
        %3750 = vst.msk [vmem:[#allocation6 + $0xc60] sm:$0xff] %vm331, %v3718
        %3751 = vst.msk [vmem:[#allocation6 + $0xcc8] sm:$0xff] %vm331, %v3719
        %v3752 = vld [vmem:[%s388 + $0x3] sm:$0xff]
        %v3753 = vld [vmem:[%s388 + $0xb] sm:$0xff]
        %v3754 = vld [vmem:[%s388 + $0x1b] sm:$0xff]
        %v3755 = vld [vmem:[%s388 + $0x23] sm:$0xff]
        %v3756 = vld [vmem:[%s388 + $0x33] sm:$0xff]
        %v3757 = vld [vmem:[%s388 + $0x3b] sm:$0xff]
        %v3758 = vld [vmem:[%s388 + $0x4b] sm:$0xff]
        %v3759 = vld [vmem:[%s388 + $0x53] sm:$0xff]
        %v3760 = vld [vmem:[%s388 + $0x63] sm:$0xff]
        %v3761 = vld [vmem:[%s388 + $0x6b] sm:$0xff]
        %v3762 = vld [vmem:[%s388 + $0x7b] sm:$0xff]
        %v3763 = vld [vmem:[%s388 + $0x83] sm:$0xff]
        %v3764 = vld [vmem:[%s388 + $0x93] sm:$0xff]
        %v3765 = vld [vmem:[%s388 + $0x9b] sm:$0xff]
        %v3766 = vld [vmem:[%s388 + $0xab] sm:$0xff]
        %v3767 = vld [vmem:[%s388 + $0xb3] sm:$0xff]
        %v3768 = vld [vmem:[%s388 + $0xc3] sm:$0xff]
        %v3769 = vld [vmem:[%s388 + $0xcb] sm:$0xff]
        %v3770 = vld [vmem:[%s388 + $0xdb] sm:$0xff]
        %v3771 = vld [vmem:[%s388 + $0xe3] sm:$0xff]
        %v3772 = vld [vmem:[%s388 + $0xf3] sm:$0xff]
        %v3773 = vld [vmem:[%s388 + $0xfb] sm:$0xff]
        %v3774 = vld [vmem:[%s388 + $0x10b] sm:$0xff]
        %v3775 = vld [vmem:[%s388 + $0x113] sm:$0xff]
        %v3776 = vld [vmem:[%s388 + $0x123] sm:$0xff]
        %v3777 = vld [vmem:[%s388 + $0x12b] sm:$0xff]
        %v3778 = vld [vmem:[%s388 + $0x13b] sm:$0xff]
        %v3779 = vld [vmem:[%s388 + $0x143] sm:$0xff]
        %v3780 = vld [vmem:[%s388 + $0x153] sm:$0xff]
        %v3781 = vld [vmem:[%s388 + $0x15b] sm:$0xff]
        %v3782 = vld [vmem:[%s388 + $0x16b] sm:$0xff]
        %v3783 = vld [vmem:[%s388 + $0x173] sm:$0xff]
        %3816 = vrot.lane.b32.xlu0 %v3752, 64
        %v3817 = vpop.permute.xlu0 %3816
        %3818 = vrot.lane.b32.xlu0 %v3753, 64
        %v3819 = vpop.permute.xlu0 %3818
        %3820 = vrot.lane.b32.xlu0 %v3754, 64
        %v3821 = vpop.permute.xlu0 %3820
        %3822 = vrot.lane.b32.xlu0 %v3755, 64
        %v3823 = vpop.permute.xlu0 %3822
        %3824 = vrot.lane.b32.xlu0 %v3756, 64
        %v3825 = vpop.permute.xlu0 %3824
        %3826 = vrot.lane.b32.xlu0 %v3757, 64
        %v3827 = vpop.permute.xlu0 %3826
        %3828 = vrot.lane.b32.xlu0 %v3758, 64
        %v3829 = vpop.permute.xlu0 %3828
        %3830 = vrot.lane.b32.xlu0 %v3759, 64
        %v3831 = vpop.permute.xlu0 %3830
        %3832 = vrot.lane.b32.xlu0 %v3760, 64
        %v3833 = vpop.permute.xlu0 %3832
        %3834 = vrot.lane.b32.xlu0 %v3761, 64
        %v3835 = vpop.permute.xlu0 %3834
        %3836 = vrot.lane.b32.xlu0 %v3762, 64
        %v3837 = vpop.permute.xlu0 %3836
        %3838 = vrot.lane.b32.xlu0 %v3763, 64
        %v3839 = vpop.permute.xlu0 %3838
        %3840 = vrot.lane.b32.xlu0 %v3764, 64
        %v3841 = vpop.permute.xlu0 %3840
        %3842 = vrot.lane.b32.xlu0 %v3765, 64
        %v3843 = vpop.permute.xlu0 %3842
        %3844 = vrot.lane.b32.xlu0 %v3766, 64
        %v3845 = vpop.permute.xlu0 %3844
        %3846 = vrot.lane.b32.xlu0 %v3767, 64
        %v3847 = vpop.permute.xlu0 %3846
        %3848 = vrot.lane.b32.xlu0 %v3768, 64
        %v3849 = vpop.permute.xlu0 %3848
        %3850 = vrot.lane.b32.xlu0 %v3769, 64
        %v3851 = vpop.permute.xlu0 %3850
        %3852 = vrot.lane.b32.xlu0 %v3770, 64
        %v3853 = vpop.permute.xlu0 %3852
        %3854 = vrot.lane.b32.xlu0 %v3771, 64
        %v3855 = vpop.permute.xlu0 %3854
        %3856 = vrot.lane.b32.xlu0 %v3772, 64
        %v3857 = vpop.permute.xlu0 %3856
        %3858 = vrot.lane.b32.xlu0 %v3773, 64
        %v3859 = vpop.permute.xlu0 %3858
        %3860 = vrot.lane.b32.xlu0 %v3774, 64
        %v3861 = vpop.permute.xlu0 %3860
        %3862 = vrot.lane.b32.xlu0 %v3775, 64
        %v3863 = vpop.permute.xlu0 %3862
        %3864 = vrot.lane.b32.xlu0 %v3776, 64
        %v3865 = vpop.permute.xlu0 %3864
        %3866 = vrot.lane.b32.xlu0 %v3777, 64
        %v3867 = vpop.permute.xlu0 %3866
        %3868 = vrot.lane.b32.xlu0 %v3778, 64
        %v3869 = vpop.permute.xlu0 %3868
        %3870 = vrot.lane.b32.xlu0 %v3779, 64
        %v3871 = vpop.permute.xlu0 %3870
        %3872 = vrot.lane.b32.xlu0 %v3780, 64
        %v3873 = vpop.permute.xlu0 %3872
        %3874 = vrot.lane.b32.xlu0 %v3781, 64
        %v3875 = vpop.permute.xlu0 %3874
        %3876 = vrot.lane.b32.xlu0 %v3782, 64
        %v3877 = vpop.permute.xlu0 %3876
        %3878 = vrot.lane.b32.xlu0 %v3783, 64
        %v3879 = vpop.permute.xlu0 %3878
        %3912 = vst.msk [vmem:[#allocation6 + $0x30] sm:$0xff] %vm1285, %v3817
        %3913 = vst.msk [vmem:[#allocation6 + $0x98] sm:$0xff] %vm1285, %v3819
        %3914 = vst.msk [vmem:[#allocation6 + $0x100] sm:$0xff] %vm1285, %v3821
        %3915 = vst.msk [vmem:[#allocation6 + $0x168] sm:$0xff] %vm1285, %v3823
        %3916 = vst.msk [vmem:[#allocation6 + $0x1d0] sm:$0xff] %vm1285, %v3825
        %3917 = vst.msk [vmem:[#allocation6 + $0x238] sm:$0xff] %vm1285, %v3827
        %3918 = vst.msk [vmem:[#allocation6 + $0x2a0] sm:$0xff] %vm1285, %v3829
        %3919 = vst.msk [vmem:[#allocation6 + $0x308] sm:$0xff] %vm1285, %v3831
        %3920 = vst.msk [vmem:[#allocation6 + $0x370] sm:$0xff] %vm1285, %v3833
        %3921 = vst.msk [vmem:[#allocation6 + $0x3d8] sm:$0xff] %vm1285, %v3835
        %3922 = vst.msk [vmem:[#allocation6 + $0x440] sm:$0xff] %vm1285, %v3837
        %3923 = vst.msk [vmem:[#allocation6 + $0x4a8] sm:$0xff] %vm1285, %v3839
        %3924 = vst.msk [vmem:[#allocation6 + $0x510] sm:$0xff] %vm1285, %v3841
        %3925 = vst.msk [vmem:[#allocation6 + $0x578] sm:$0xff] %vm1285, %v3843
        %3926 = vst.msk [vmem:[#allocation6 + $0x5e0] sm:$0xff] %vm1285, %v3845
        %3927 = vst.msk [vmem:[#allocation6 + $0x648] sm:$0xff] %vm1285, %v3847
        %3928 = vst.msk [vmem:[#allocation6 + $0x6b0] sm:$0xff] %vm1285, %v3849
        %3929 = vst.msk [vmem:[#allocation6 + $0x718] sm:$0xff] %vm1285, %v3851
        %3930 = vst.msk [vmem:[#allocation6 + $0x780] sm:$0xff] %vm1285, %v3853
        %3931 = vst.msk [vmem:[#allocation6 + $0x7e8] sm:$0xff] %vm1285, %v3855
        %3932 = vst.msk [vmem:[#allocation6 + $0x850] sm:$0xff] %vm1285, %v3857
        %3933 = vst.msk [vmem:[#allocation6 + $0x8b8] sm:$0xff] %vm1285, %v3859
        %3934 = vst.msk [vmem:[#allocation6 + $0x920] sm:$0xff] %vm1285, %v3861
        %3935 = vst.msk [vmem:[#allocation6 + $0x988] sm:$0xff] %vm1285, %v3863
        %3936 = vst.msk [vmem:[#allocation6 + $0x9f0] sm:$0xff] %vm1285, %v3865
        %3937 = vst.msk [vmem:[#allocation6 + $0xa58] sm:$0xff] %vm1285, %v3867
        %3938 = vst.msk [vmem:[#allocation6 + $0xac0] sm:$0xff] %vm1285, %v3869
        %3939 = vst.msk [vmem:[#allocation6 + $0xb28] sm:$0xff] %vm1285, %v3871
        %3940 = vst.msk [vmem:[#allocation6 + $0xb90] sm:$0xff] %vm1285, %v3873
        %3941 = vst.msk [vmem:[#allocation6 + $0xbf8] sm:$0xff] %vm1285, %v3875
        %3942 = vst.msk [vmem:[#allocation6 + $0xc60] sm:$0xff] %vm1285, %v3877
        %3943 = vst.msk [vmem:[#allocation6 + $0xcc8] sm:$0xff] %vm1285, %v3879
        %v3944 = vld [vmem:[%s388 + $0x4] sm:$0xff]
        %v3945 = vld [vmem:[%s388 + $0xc] sm:$0xff]
        %v3946 = vld [vmem:[%s388 + $0x1c] sm:$0xff]
        %v3947 = vld [vmem:[%s388 + $0x24] sm:$0xff]
        %v3948 = vld [vmem:[%s388 + $0x34] sm:$0xff]
        %v3949 = vld [vmem:[%s388 + $0x3c] sm:$0xff]
        %v3950 = vld [vmem:[%s388 + $0x4c] sm:$0xff]
        %v3951 = vld [vmem:[%s388 + $0x54] sm:$0xff]
        %v3952 = vld [vmem:[%s388 + $0x64] sm:$0xff]
        %v3953 = vld [vmem:[%s388 + $0x6c] sm:$0xff]
        %v3954 = vld [vmem:[%s388 + $0x7c] sm:$0xff]
        %v3955 = vld [vmem:[%s388 + $0x84] sm:$0xff]
        %v3956 = vld [vmem:[%s388 + $0x94] sm:$0xff]
        %v3957 = vld [vmem:[%s388 + $0x9c] sm:$0xff]
        %v3958 = vld [vmem:[%s388 + $0xac] sm:$0xff]
        %v3959 = vld [vmem:[%s388 + $0xb4] sm:$0xff]
        %v3960 = vld [vmem:[%s388 + $0xc4] sm:$0xff]
        %v3961 = vld [vmem:[%s388 + $0xcc] sm:$0xff]
        %v3962 = vld [vmem:[%s388 + $0xdc] sm:$0xff]
        %v3963 = vld [vmem:[%s388 + $0xe4] sm:$0xff]
        %v3964 = vld [vmem:[%s388 + $0xf4] sm:$0xff]
        %v3965 = vld [vmem:[%s388 + $0xfc] sm:$0xff]
        %v3966 = vld [vmem:[%s388 + $0x10c] sm:$0xff]
        %v3967 = vld [vmem:[%s388 + $0x114] sm:$0xff]
        %v3968 = vld [vmem:[%s388 + $0x124] sm:$0xff]
        %v3969 = vld [vmem:[%s388 + $0x12c] sm:$0xff]
        %v3970 = vld [vmem:[%s388 + $0x13c] sm:$0xff]
        %v3971 = vld [vmem:[%s388 + $0x144] sm:$0xff]
        %v3972 = vld [vmem:[%s388 + $0x154] sm:$0xff]
        %v3973 = vld [vmem:[%s388 + $0x15c] sm:$0xff]
        %v3974 = vld [vmem:[%s388 + $0x16c] sm:$0xff]
        %v3975 = vld [vmem:[%s388 + $0x174] sm:$0xff]
        %3976 = vst.msk [vmem:[#allocation6 + $0x38] sm:$0xff] %vm331, %v3944
        %3977 = vst.msk [vmem:[#allocation6 + $0xa0] sm:$0xff] %vm331, %v3945
        %3978 = vst.msk [vmem:[#allocation6 + $0x108] sm:$0xff] %vm331, %v3946
        %3979 = vst.msk [vmem:[#allocation6 + $0x170] sm:$0xff] %vm331, %v3947
        %3980 = vst.msk [vmem:[#allocation6 + $0x1d8] sm:$0xff] %vm331, %v3948
        %3981 = vst.msk [vmem:[#allocation6 + $0x240] sm:$0xff] %vm331, %v3949
        %3982 = vst.msk [vmem:[#allocation6 + $0x2a8] sm:$0xff] %vm331, %v3950
        %3983 = vst.msk [vmem:[#allocation6 + $0x310] sm:$0xff] %vm331, %v3951
        %3984 = vst.msk [vmem:[#allocation6 + $0x378] sm:$0xff] %vm331, %v3952
        %3985 = vst.msk [vmem:[#allocation6 + $0x3e0] sm:$0xff] %vm331, %v3953
        %3986 = vst.msk [vmem:[#allocation6 + $0x448] sm:$0xff] %vm331, %v3954
        %3987 = vst.msk [vmem:[#allocation6 + $0x4b0] sm:$0xff] %vm331, %v3955
        %3988 = vst.msk [vmem:[#allocation6 + $0x518] sm:$0xff] %vm331, %v3956
        %3989 = vst.msk [vmem:[#allocation6 + $0x580] sm:$0xff] %vm331, %v3957
        %3990 = vst.msk [vmem:[#allocation6 + $0x5e8] sm:$0xff] %vm331, %v3958
        %3991 = vst.msk [vmem:[#allocation6 + $0x650] sm:$0xff] %vm331, %v3959
        %3992 = vst.msk [vmem:[#allocation6 + $0x6b8] sm:$0xff] %vm331, %v3960
        %3993 = vst.msk [vmem:[#allocation6 + $0x720] sm:$0xff] %vm331, %v3961
        %3994 = vst.msk [vmem:[#allocation6 + $0x788] sm:$0xff] %vm331, %v3962
        %3995 = vst.msk [vmem:[#allocation6 + $0x7f0] sm:$0xff] %vm331, %v3963
        %3996 = vst.msk [vmem:[#allocation6 + $0x858] sm:$0xff] %vm331, %v3964
        %3997 = vst.msk [vmem:[#allocation6 + $0x8c0] sm:$0xff] %vm331, %v3965
        %3998 = vst.msk [vmem:[#allocation6 + $0x928] sm:$0xff] %vm331, %v3966
        %3999 = vst.msk [vmem:[#allocation6 + $0x990] sm:$0xff] %vm331, %v3967
        %4000 = vst.msk [vmem:[#allocation6 + $0x9f8] sm:$0xff] %vm331, %v3968
        %4001 = vst.msk [vmem:[#allocation6 + $0xa60] sm:$0xff] %vm331, %v3969
        %4002 = vst.msk [vmem:[#allocation6 + $0xac8] sm:$0xff] %vm331, %v3970
        %4003 = vst.msk [vmem:[#allocation6 + $0xb30] sm:$0xff] %vm331, %v3971
        %4004 = vst.msk [vmem:[#allocation6 + $0xb98] sm:$0xff] %vm331, %v3972
        %4005 = vst.msk [vmem:[#allocation6 + $0xc00] sm:$0xff] %vm331, %v3973
        %4006 = vst.msk [vmem:[#allocation6 + $0xc68] sm:$0xff] %vm331, %v3974
        %4007 = vst.msk [vmem:[#allocation6 + $0xcd0] sm:$0xff] %vm331, %v3975
        %s4008 = scalar_lea.vmem [#allocation3], 72
        %v4009 = vld [vmem:[%s4008] sm:$0xff]
        %v4010 = vld [vmem:[%s4008 + $0x8] sm:$0xff]
        %v4011 = vld [vmem:[%s4008 + $0x18] sm:$0xff]
        %v4012 = vld [vmem:[%s4008 + $0x20] sm:$0xff]
        %v4013 = vld [vmem:[%s4008 + $0x30] sm:$0xff]
        %v4014 = vld [vmem:[%s4008 + $0x38] sm:$0xff]
        %v4015 = vld [vmem:[%s4008 + $0x48] sm:$0xff]
        %v4016 = vld [vmem:[%s4008 + $0x50] sm:$0xff]
        %v4017 = vld [vmem:[%s4008 + $0x60] sm:$0xff]
        %v4018 = vld [vmem:[%s4008 + $0x68] sm:$0xff]
        %v4019 = vld [vmem:[%s4008 + $0x78] sm:$0xff]
        %v4020 = vld [vmem:[%s4008 + $0x80] sm:$0xff]
        %v4021 = vld [vmem:[%s4008 + $0x90] sm:$0xff]
        %v4022 = vld [vmem:[%s4008 + $0x98] sm:$0xff]
        %v4023 = vld [vmem:[%s4008 + $0xa8] sm:$0xff]
        %v4024 = vld [vmem:[%s4008 + $0xb0] sm:$0xff]
        %v4025 = vld [vmem:[%s4008 + $0xc0] sm:$0xff]
        %v4026 = vld [vmem:[%s4008 + $0xc8] sm:$0xff]
        %v4027 = vld [vmem:[%s4008 + $0xd8] sm:$0xff]
        %v4028 = vld [vmem:[%s4008 + $0xe0] sm:$0xff]
        %v4029 = vld [vmem:[%s4008 + $0xf0] sm:$0xff]
        %v4030 = vld [vmem:[%s4008 + $0xf8] sm:$0xff]
        %v4031 = vld [vmem:[%s4008 + $0x108] sm:$0xff]
        %v4032 = vld [vmem:[%s4008 + $0x110] sm:$0xff]
        %v4033 = vld [vmem:[%s4008 + $0x120] sm:$0xff]
        %v4034 = vld [vmem:[%s4008 + $0x128] sm:$0xff]
        %v4035 = vld [vmem:[%s4008 + $0x138] sm:$0xff]
        %v4036 = vld [vmem:[%s4008 + $0x140] sm:$0xff]
        %v4037 = vld [vmem:[%s4008 + $0x150] sm:$0xff]
        %v4038 = vld [vmem:[%s4008 + $0x158] sm:$0xff]
        %v4039 = vld [vmem:[%s4008 + $0x168] sm:$0xff]
        %v4040 = vld [vmem:[%s4008 + $0x170] sm:$0xff]
        %4073 = vrot.lane.b32.xlu0 %v4009, 64
        %v4074 = vpop.permute.xlu0 %4073
        %4075 = vrot.lane.b32.xlu0 %v4010, 64
        %v4076 = vpop.permute.xlu0 %4075
        %4077 = vrot.lane.b32.xlu0 %v4011, 64
        %v4078 = vpop.permute.xlu0 %4077
        %4079 = vrot.lane.b32.xlu0 %v4012, 64
        %v4080 = vpop.permute.xlu0 %4079
        %4081 = vrot.lane.b32.xlu0 %v4013, 64
        %v4082 = vpop.permute.xlu0 %4081
        %4083 = vrot.lane.b32.xlu0 %v4014, 64
        %v4084 = vpop.permute.xlu0 %4083
        %4085 = vrot.lane.b32.xlu0 %v4015, 64
        %v4086 = vpop.permute.xlu0 %4085
        %4087 = vrot.lane.b32.xlu0 %v4016, 64
        %v4088 = vpop.permute.xlu0 %4087
        %4089 = vrot.lane.b32.xlu0 %v4017, 64
        %v4090 = vpop.permute.xlu0 %4089
        %4091 = vrot.lane.b32.xlu0 %v4018, 64
        %v4092 = vpop.permute.xlu0 %4091
        %4093 = vrot.lane.b32.xlu0 %v4019, 64
        %v4094 = vpop.permute.xlu0 %4093
        %4095 = vrot.lane.b32.xlu0 %v4020, 64
        %v4096 = vpop.permute.xlu0 %4095
        %4097 = vrot.lane.b32.xlu0 %v4021, 64
        %v4098 = vpop.permute.xlu0 %4097
        %4099 = vrot.lane.b32.xlu0 %v4022, 64
        %v4100 = vpop.permute.xlu0 %4099
        %4101 = vrot.lane.b32.xlu0 %v4023, 64
        %v4102 = vpop.permute.xlu0 %4101
        %4103 = vrot.lane.b32.xlu0 %v4024, 64
        %v4104 = vpop.permute.xlu0 %4103
        %4105 = vrot.lane.b32.xlu0 %v4025, 64
        %v4106 = vpop.permute.xlu0 %4105
        %4107 = vrot.lane.b32.xlu0 %v4026, 64
        %v4108 = vpop.permute.xlu0 %4107
        %4109 = vrot.lane.b32.xlu0 %v4027, 64
        %v4110 = vpop.permute.xlu0 %4109
        %4111 = vrot.lane.b32.xlu0 %v4028, 64
        %v4112 = vpop.permute.xlu0 %4111
        %4113 = vrot.lane.b32.xlu0 %v4029, 64
        %v4114 = vpop.permute.xlu0 %4113
        %4115 = vrot.lane.b32.xlu0 %v4030, 64
        %v4116 = vpop.permute.xlu0 %4115
        %4117 = vrot.lane.b32.xlu0 %v4031, 64
        %v4118 = vpop.permute.xlu0 %4117
        %4119 = vrot.lane.b32.xlu0 %v4032, 64
        %v4120 = vpop.permute.xlu0 %4119
        %4121 = vrot.lane.b32.xlu0 %v4033, 64
        %v4122 = vpop.permute.xlu0 %4121
        %4123 = vrot.lane.b32.xlu0 %v4034, 64
        %v4124 = vpop.permute.xlu0 %4123
        %4125 = vrot.lane.b32.xlu0 %v4035, 64
        %v4126 = vpop.permute.xlu0 %4125
        %4127 = vrot.lane.b32.xlu0 %v4036, 64
        %v4128 = vpop.permute.xlu0 %4127
        %4129 = vrot.lane.b32.xlu0 %v4037, 64
        %v4130 = vpop.permute.xlu0 %4129
        %4131 = vrot.lane.b32.xlu0 %v4038, 64
        %v4132 = vpop.permute.xlu0 %4131
        %4133 = vrot.lane.b32.xlu0 %v4039, 64
        %v4134 = vpop.permute.xlu0 %4133
        %4135 = vrot.lane.b32.xlu0 %v4040, 64
        %v4136 = vpop.permute.xlu0 %4135
        %4169 = vst.msk [vmem:[#allocation6 + $0x38] sm:$0xff] %vm1285, %v4074
        %4170 = vst.msk [vmem:[#allocation6 + $0xa0] sm:$0xff] %vm1285, %v4076
        %4171 = vst.msk [vmem:[#allocation6 + $0x108] sm:$0xff] %vm1285, %v4078
        %4172 = vst.msk [vmem:[#allocation6 + $0x170] sm:$0xff] %vm1285, %v4080
        %4173 = vst.msk [vmem:[#allocation6 + $0x1d8] sm:$0xff] %vm1285, %v4082
        %4174 = vst.msk [vmem:[#allocation6 + $0x240] sm:$0xff] %vm1285, %v4084
        %4175 = vst.msk [vmem:[#allocation6 + $0x2a8] sm:$0xff] %vm1285, %v4086
        %4176 = vst.msk [vmem:[#allocation6 + $0x310] sm:$0xff] %vm1285, %v4088
        %4177 = vst.msk [vmem:[#allocation6 + $0x378] sm:$0xff] %vm1285, %v4090
        %4178 = vst.msk [vmem:[#allocation6 + $0x3e0] sm:$0xff] %vm1285, %v4092
        %4179 = vst.msk [vmem:[#allocation6 + $0x448] sm:$0xff] %vm1285, %v4094
        %4180 = vst.msk [vmem:[#allocation6 + $0x4b0] sm:$0xff] %vm1285, %v4096
        %4181 = vst.msk [vmem:[#allocation6 + $0x518] sm:$0xff] %vm1285, %v4098
        %4182 = vst.msk [vmem:[#allocation6 + $0x580] sm:$0xff] %vm1285, %v4100
        %4183 = vst.msk [vmem:[#allocation6 + $0x5e8] sm:$0xff] %vm1285, %v4102
        %4184 = vst.msk [vmem:[#allocation6 + $0x650] sm:$0xff] %vm1285, %v4104
        %4185 = vst.msk [vmem:[#allocation6 + $0x6b8] sm:$0xff] %vm1285, %v4106
        %4186 = vst.msk [vmem:[#allocation6 + $0x720] sm:$0xff] %vm1285, %v4108
        %4187 = vst.msk [vmem:[#allocation6 + $0x788] sm:$0xff] %vm1285, %v4110
        %4188 = vst.msk [vmem:[#allocation6 + $0x7f0] sm:$0xff] %vm1285, %v4112
        %4189 = vst.msk [vmem:[#allocation6 + $0x858] sm:$0xff] %vm1285, %v4114
        %4190 = vst.msk [vmem:[#allocation6 + $0x8c0] sm:$0xff] %vm1285, %v4116
        %4191 = vst.msk [vmem:[#allocation6 + $0x928] sm:$0xff] %vm1285, %v4118
        %4192 = vst.msk [vmem:[#allocation6 + $0x990] sm:$0xff] %vm1285, %v4120
        %4193 = vst.msk [vmem:[#allocation6 + $0x9f8] sm:$0xff] %vm1285, %v4122
        %4194 = vst.msk [vmem:[#allocation6 + $0xa60] sm:$0xff] %vm1285, %v4124
        %4195 = vst.msk [vmem:[#allocation6 + $0xac8] sm:$0xff] %vm1285, %v4126
        %4196 = vst.msk [vmem:[#allocation6 + $0xb30] sm:$0xff] %vm1285, %v4128
        %4197 = vst.msk [vmem:[#allocation6 + $0xb98] sm:$0xff] %vm1285, %v4130
        %4198 = vst.msk [vmem:[#allocation6 + $0xc00] sm:$0xff] %vm1285, %v4132
        %4199 = vst.msk [vmem:[#allocation6 + $0xc68] sm:$0xff] %vm1285, %v4134
        %4200 = vst.msk [vmem:[#allocation6 + $0xcd0] sm:$0xff] %vm1285, %v4136
        %v4201 = vld [vmem:[%s4008 + $0x1] sm:$0xff]
        %v4202 = vld [vmem:[%s4008 + $0x9] sm:$0xff]
        %v4203 = vld [vmem:[%s4008 + $0x19] sm:$0xff]
        %v4204 = vld [vmem:[%s4008 + $0x21] sm:$0xff]
        %v4205 = vld [vmem:[%s4008 + $0x31] sm:$0xff]
        %v4206 = vld [vmem:[%s4008 + $0x39] sm:$0xff]
        %v4207 = vld [vmem:[%s4008 + $0x49] sm:$0xff]
        %v4208 = vld [vmem:[%s4008 + $0x51] sm:$0xff]
        %v4209 = vld [vmem:[%s4008 + $0x61] sm:$0xff]
        %v4210 = vld [vmem:[%s4008 + $0x69] sm:$0xff]
        %v4211 = vld [vmem:[%s4008 + $0x79] sm:$0xff]
        %v4212 = vld [vmem:[%s4008 + $0x81] sm:$0xff]
        %v4213 = vld [vmem:[%s4008 + $0x91] sm:$0xff]
        %v4214 = vld [vmem:[%s4008 + $0x99] sm:$0xff]
        %v4215 = vld [vmem:[%s4008 + $0xa9] sm:$0xff]
        %v4216 = vld [vmem:[%s4008 + $0xb1] sm:$0xff]
        %v4217 = vld [vmem:[%s4008 + $0xc1] sm:$0xff]
        %v4218 = vld [vmem:[%s4008 + $0xc9] sm:$0xff]
        %v4219 = vld [vmem:[%s4008 + $0xd9] sm:$0xff]
        %v4220 = vld [vmem:[%s4008 + $0xe1] sm:$0xff]
        %v4221 = vld [vmem:[%s4008 + $0xf1] sm:$0xff]
        %v4222 = vld [vmem:[%s4008 + $0xf9] sm:$0xff]
        %v4223 = vld [vmem:[%s4008 + $0x109] sm:$0xff]
        %v4224 = vld [vmem:[%s4008 + $0x111] sm:$0xff]
        %v4225 = vld [vmem:[%s4008 + $0x121] sm:$0xff]
        %v4226 = vld [vmem:[%s4008 + $0x129] sm:$0xff]
        %v4227 = vld [vmem:[%s4008 + $0x139] sm:$0xff]
        %v4228 = vld [vmem:[%s4008 + $0x141] sm:$0xff]
        %v4229 = vld [vmem:[%s4008 + $0x151] sm:$0xff]
        %v4230 = vld [vmem:[%s4008 + $0x159] sm:$0xff]
        %v4231 = vld [vmem:[%s4008 + $0x169] sm:$0xff]
        %v4232 = vld [vmem:[%s4008 + $0x171] sm:$0xff]
        %4233 = vst.msk [vmem:[#allocation6 + $0x40] sm:$0xff] %vm331, %v4201
        %4234 = vst.msk [vmem:[#allocation6 + $0xa8] sm:$0xff] %vm331, %v4202
        %4235 = vst.msk [vmem:[#allocation6 + $0x110] sm:$0xff] %vm331, %v4203
        %4236 = vst.msk [vmem:[#allocation6 + $0x178] sm:$0xff] %vm331, %v4204
        %4237 = vst.msk [vmem:[#allocation6 + $0x1e0] sm:$0xff] %vm331, %v4205
        %4238 = vst.msk [vmem:[#allocation6 + $0x248] sm:$0xff] %vm331, %v4206
        %4239 = vst.msk [vmem:[#allocation6 + $0x2b0] sm:$0xff] %vm331, %v4207
        %4240 = vst.msk [vmem:[#allocation6 + $0x318] sm:$0xff] %vm331, %v4208
        %4241 = vst.msk [vmem:[#allocation6 + $0x380] sm:$0xff] %vm331, %v4209
        %4242 = vst.msk [vmem:[#allocation6 + $0x3e8] sm:$0xff] %vm331, %v4210
        %4243 = vst.msk [vmem:[#allocation6 + $0x450] sm:$0xff] %vm331, %v4211
        %4244 = vst.msk [vmem:[#allocation6 + $0x4b8] sm:$0xff] %vm331, %v4212
        %4245 = vst.msk [vmem:[#allocation6 + $0x520] sm:$0xff] %vm331, %v4213
        %4246 = vst.msk [vmem:[#allocation6 + $0x588] sm:$0xff] %vm331, %v4214
        %4247 = vst.msk [vmem:[#allocation6 + $0x5f0] sm:$0xff] %vm331, %v4215
        %4248 = vst.msk [vmem:[#allocation6 + $0x658] sm:$0xff] %vm331, %v4216
        %4249 = vst.msk [vmem:[#allocation6 + $0x6c0] sm:$0xff] %vm331, %v4217
        %4250 = vst.msk [vmem:[#allocation6 + $0x728] sm:$0xff] %vm331, %v4218
        %4251 = vst.msk [vmem:[#allocation6 + $0x790] sm:$0xff] %vm331, %v4219
        %4252 = vst.msk [vmem:[#allocation6 + $0x7f8] sm:$0xff] %vm331, %v4220
        %4253 = vst.msk [vmem:[#allocation6 + $0x860] sm:$0xff] %vm331, %v4221
        %4254 = vst.msk [vmem:[#allocation6 + $0x8c8] sm:$0xff] %vm331, %v4222
        %4255 = vst.msk [vmem:[#allocation6 + $0x930] sm:$0xff] %vm331, %v4223
        %4256 = vst.msk [vmem:[#allocation6 + $0x998] sm:$0xff] %vm331, %v4224
        %4257 = vst.msk [vmem:[#allocation6 + $0xa00] sm:$0xff] %vm331, %v4225
        %4258 = vst.msk [vmem:[#allocation6 + $0xa68] sm:$0xff] %vm331, %v4226
        %4259 = vst.msk [vmem:[#allocation6 + $0xad0] sm:$0xff] %vm331, %v4227
        %4260 = vst.msk [vmem:[#allocation6 + $0xb38] sm:$0xff] %vm331, %v4228
        %4261 = vst.msk [vmem:[#allocation6 + $0xba0] sm:$0xff] %vm331, %v4229
        %4262 = vst.msk [vmem:[#allocation6 + $0xc08] sm:$0xff] %vm331, %v4230
        %4263 = vst.msk [vmem:[#allocation6 + $0xc70] sm:$0xff] %vm331, %v4231
        %4264 = vst.msk [vmem:[#allocation6 + $0xcd8] sm:$0xff] %vm331, %v4232
        %v4265 = vld [vmem:[%s4008 + $0x2] sm:$0xff]
        %v4266 = vld [vmem:[%s4008 + $0xa] sm:$0xff]
        %v4267 = vld [vmem:[%s4008 + $0x1a] sm:$0xff]
        %v4268 = vld [vmem:[%s4008 + $0x22] sm:$0xff]
        %v4269 = vld [vmem:[%s4008 + $0x32] sm:$0xff]
        %v4270 = vld [vmem:[%s4008 + $0x3a] sm:$0xff]
        %v4271 = vld [vmem:[%s4008 + $0x4a] sm:$0xff]
        %v4272 = vld [vmem:[%s4008 + $0x52] sm:$0xff]
        %v4273 = vld [vmem:[%s4008 + $0x62] sm:$0xff]
        %v4274 = vld [vmem:[%s4008 + $0x6a] sm:$0xff]
        %v4275 = vld [vmem:[%s4008 + $0x7a] sm:$0xff]
        %v4276 = vld [vmem:[%s4008 + $0x82] sm:$0xff]
        %v4277 = vld [vmem:[%s4008 + $0x92] sm:$0xff]
        %v4278 = vld [vmem:[%s4008 + $0x9a] sm:$0xff]
        %v4279 = vld [vmem:[%s4008 + $0xaa] sm:$0xff]
        %v4280 = vld [vmem:[%s4008 + $0xb2] sm:$0xff]
        %v4281 = vld [vmem:[%s4008 + $0xc2] sm:$0xff]
        %v4282 = vld [vmem:[%s4008 + $0xca] sm:$0xff]
        %v4283 = vld [vmem:[%s4008 + $0xda] sm:$0xff]
        %v4284 = vld [vmem:[%s4008 + $0xe2] sm:$0xff]
        %v4285 = vld [vmem:[%s4008 + $0xf2] sm:$0xff]
        %v4286 = vld [vmem:[%s4008 + $0xfa] sm:$0xff]
        %v4287 = vld [vmem:[%s4008 + $0x10a] sm:$0xff]
        %v4288 = vld [vmem:[%s4008 + $0x112] sm:$0xff]
        %v4289 = vld [vmem:[%s4008 + $0x122] sm:$0xff]
        %v4290 = vld [vmem:[%s4008 + $0x12a] sm:$0xff]
        %v4291 = vld [vmem:[%s4008 + $0x13a] sm:$0xff]
        %v4292 = vld [vmem:[%s4008 + $0x142] sm:$0xff]
        %v4293 = vld [vmem:[%s4008 + $0x152] sm:$0xff]
        %v4294 = vld [vmem:[%s4008 + $0x15a] sm:$0xff]
        %v4295 = vld [vmem:[%s4008 + $0x16a] sm:$0xff]
        %v4296 = vld [vmem:[%s4008 + $0x172] sm:$0xff]
        %4329 = vrot.lane.b32.xlu0 %v4265, 64
        %v4330 = vpop.permute.xlu0 %4329
        %4331 = vrot.lane.b32.xlu0 %v4266, 64
        %v4332 = vpop.permute.xlu0 %4331
        %4333 = vrot.lane.b32.xlu0 %v4267, 64
        %v4334 = vpop.permute.xlu0 %4333
        %4335 = vrot.lane.b32.xlu0 %v4268, 64
        %v4336 = vpop.permute.xlu0 %4335
        %4337 = vrot.lane.b32.xlu0 %v4269, 64
        %v4338 = vpop.permute.xlu0 %4337
        %4339 = vrot.lane.b32.xlu0 %v4270, 64
        %v4340 = vpop.permute.xlu0 %4339
        %4341 = vrot.lane.b32.xlu0 %v4271, 64
        %v4342 = vpop.permute.xlu0 %4341
        %4343 = vrot.lane.b32.xlu0 %v4272, 64
        %v4344 = vpop.permute.xlu0 %4343
        %4345 = vrot.lane.b32.xlu0 %v4273, 64
        %v4346 = vpop.permute.xlu0 %4345
        %4347 = vrot.lane.b32.xlu0 %v4274, 64
        %v4348 = vpop.permute.xlu0 %4347
        %4349 = vrot.lane.b32.xlu0 %v4275, 64
        %v4350 = vpop.permute.xlu0 %4349
        %4351 = vrot.lane.b32.xlu0 %v4276, 64
        %v4352 = vpop.permute.xlu0 %4351
        %4353 = vrot.lane.b32.xlu0 %v4277, 64
        %v4354 = vpop.permute.xlu0 %4353
        %4355 = vrot.lane.b32.xlu0 %v4278, 64
        %v4356 = vpop.permute.xlu0 %4355
        %4357 = vrot.lane.b32.xlu0 %v4279, 64
        %v4358 = vpop.permute.xlu0 %4357
        %4359 = vrot.lane.b32.xlu0 %v4280, 64
        %v4360 = vpop.permute.xlu0 %4359
        %4361 = vrot.lane.b32.xlu0 %v4281, 64
        %v4362 = vpop.permute.xlu0 %4361
        %4363 = vrot.lane.b32.xlu0 %v4282, 64
        %v4364 = vpop.permute.xlu0 %4363
        %4365 = vrot.lane.b32.xlu0 %v4283, 64
        %v4366 = vpop.permute.xlu0 %4365
        %4367 = vrot.lane.b32.xlu0 %v4284, 64
        %v4368 = vpop.permute.xlu0 %4367
        %4369 = vrot.lane.b32.xlu0 %v4285, 64
        %v4370 = vpop.permute.xlu0 %4369
        %4371 = vrot.lane.b32.xlu0 %v4286, 64
        %v4372 = vpop.permute.xlu0 %4371
        %4373 = vrot.lane.b32.xlu0 %v4287, 64
        %v4374 = vpop.permute.xlu0 %4373
        %4375 = vrot.lane.b32.xlu0 %v4288, 64
        %v4376 = vpop.permute.xlu0 %4375
        %4377 = vrot.lane.b32.xlu0 %v4289, 64
        %v4378 = vpop.permute.xlu0 %4377
        %4379 = vrot.lane.b32.xlu0 %v4290, 64
        %v4380 = vpop.permute.xlu0 %4379
        %4381 = vrot.lane.b32.xlu0 %v4291, 64
        %v4382 = vpop.permute.xlu0 %4381
        %4383 = vrot.lane.b32.xlu0 %v4292, 64
        %v4384 = vpop.permute.xlu0 %4383
        %4385 = vrot.lane.b32.xlu0 %v4293, 64
        %v4386 = vpop.permute.xlu0 %4385
        %4387 = vrot.lane.b32.xlu0 %v4294, 64
        %v4388 = vpop.permute.xlu0 %4387
        %4389 = vrot.lane.b32.xlu0 %v4295, 64
        %v4390 = vpop.permute.xlu0 %4389
        %4391 = vrot.lane.b32.xlu0 %v4296, 64
        %v4392 = vpop.permute.xlu0 %4391
        %4425 = vst.msk [vmem:[#allocation6 + $0x40] sm:$0xff] %vm1285, %v4330
        %4426 = vst.msk [vmem:[#allocation6 + $0xa8] sm:$0xff] %vm1285, %v4332
        %4427 = vst.msk [vmem:[#allocation6 + $0x110] sm:$0xff] %vm1285, %v4334
        %4428 = vst.msk [vmem:[#allocation6 + $0x178] sm:$0xff] %vm1285, %v4336
        %4429 = vst.msk [vmem:[#allocation6 + $0x1e0] sm:$0xff] %vm1285, %v4338
        %4430 = vst.msk [vmem:[#allocation6 + $0x248] sm:$0xff] %vm1285, %v4340
        %4431 = vst.msk [vmem:[#allocation6 + $0x2b0] sm:$0xff] %vm1285, %v4342
        %4432 = vst.msk [vmem:[#allocation6 + $0x318] sm:$0xff] %vm1285, %v4344
        %4433 = vst.msk [vmem:[#allocation6 + $0x380] sm:$0xff] %vm1285, %v4346
        %4434 = vst.msk [vmem:[#allocation6 + $0x3e8] sm:$0xff] %vm1285, %v4348
        %4435 = vst.msk [vmem:[#allocation6 + $0x450] sm:$0xff] %vm1285, %v4350
        %4436 = vst.msk [vmem:[#allocation6 + $0x4b8] sm:$0xff] %vm1285, %v4352
        %4437 = vst.msk [vmem:[#allocation6 + $0x520] sm:$0xff] %vm1285, %v4354
        %4438 = vst.msk [vmem:[#allocation6 + $0x588] sm:$0xff] %vm1285, %v4356
        %4439 = vst.msk [vmem:[#allocation6 + $0x5f0] sm:$0xff] %vm1285, %v4358
        %4440 = vst.msk [vmem:[#allocation6 + $0x658] sm:$0xff] %vm1285, %v4360
        %4441 = vst.msk [vmem:[#allocation6 + $0x6c0] sm:$0xff] %vm1285, %v4362
        %4442 = vst.msk [vmem:[#allocation6 + $0x728] sm:$0xff] %vm1285, %v4364
        %4443 = vst.msk [vmem:[#allocation6 + $0x790] sm:$0xff] %vm1285, %v4366
        %4444 = vst.msk [vmem:[#allocation6 + $0x7f8] sm:$0xff] %vm1285, %v4368
        %4445 = vst.msk [vmem:[#allocation6 + $0x860] sm:$0xff] %vm1285, %v4370
        %4446 = vst.msk [vmem:[#allocation6 + $0x8c8] sm:$0xff] %vm1285, %v4372
        %4447 = vst.msk [vmem:[#allocation6 + $0x930] sm:$0xff] %vm1285, %v4374
        %4448 = vst.msk [vmem:[#allocation6 + $0x998] sm:$0xff] %vm1285, %v4376
        %4449 = vst.msk [vmem:[#allocation6 + $0xa00] sm:$0xff] %vm1285, %v4378
        %4450 = vst.msk [vmem:[#allocation6 + $0xa68] sm:$0xff] %vm1285, %v4380
        %4451 = vst.msk [vmem:[#allocation6 + $0xad0] sm:$0xff] %vm1285, %v4382
        %4452 = vst.msk [vmem:[#allocation6 + $0xb38] sm:$0xff] %vm1285, %v4384
        %4453 = vst.msk [vmem:[#allocation6 + $0xba0] sm:$0xff] %vm1285, %v4386
        %4454 = vst.msk [vmem:[#allocation6 + $0xc08] sm:$0xff] %vm1285, %v4388
        %4455 = vst.msk [vmem:[#allocation6 + $0xc70] sm:$0xff] %vm1285, %v4390
        %4456 = vst.msk [vmem:[#allocation6 + $0xcd8] sm:$0xff] %vm1285, %v4392
        %v4457 = vld [vmem:[%s4008 + $0x3] sm:$0xff]
        %v4458 = vld [vmem:[%s4008 + $0xb] sm:$0xff]
        %v4459 = vld [vmem:[%s4008 + $0x1b] sm:$0xff]
        %v4460 = vld [vmem:[%s4008 + $0x23] sm:$0xff]
        %v4461 = vld [vmem:[%s4008 + $0x33] sm:$0xff]
        %v4462 = vld [vmem:[%s4008 + $0x3b] sm:$0xff]
        %v4463 = vld [vmem:[%s4008 + $0x4b] sm:$0xff]
        %v4464 = vld [vmem:[%s4008 + $0x53] sm:$0xff]
        %v4465 = vld [vmem:[%s4008 + $0x63] sm:$0xff]
        %v4466 = vld [vmem:[%s4008 + $0x6b] sm:$0xff]
        %v4467 = vld [vmem:[%s4008 + $0x7b] sm:$0xff]
        %v4468 = vld [vmem:[%s4008 + $0x83] sm:$0xff]
        %v4469 = vld [vmem:[%s4008 + $0x93] sm:$0xff]
        %v4470 = vld [vmem:[%s4008 + $0x9b] sm:$0xff]
        %v4471 = vld [vmem:[%s4008 + $0xab] sm:$0xff]
        %v4472 = vld [vmem:[%s4008 + $0xb3] sm:$0xff]
        %v4473 = vld [vmem:[%s4008 + $0xc3] sm:$0xff]
        %v4474 = vld [vmem:[%s4008 + $0xcb] sm:$0xff]
        %v4475 = vld [vmem:[%s4008 + $0xdb] sm:$0xff]
        %v4476 = vld [vmem:[%s4008 + $0xe3] sm:$0xff]
        %v4477 = vld [vmem:[%s4008 + $0xf3] sm:$0xff]
        %v4478 = vld [vmem:[%s4008 + $0xfb] sm:$0xff]
        %v4479 = vld [vmem:[%s4008 + $0x10b] sm:$0xff]
        %v4480 = vld [vmem:[%s4008 + $0x113] sm:$0xff]
        %v4481 = vld [vmem:[%s4008 + $0x123] sm:$0xff]
        %v4482 = vld [vmem:[%s4008 + $0x12b] sm:$0xff]
        %v4483 = vld [vmem:[%s4008 + $0x13b] sm:$0xff]
        %v4484 = vld [vmem:[%s4008 + $0x143] sm:$0xff]
        %v4485 = vld [vmem:[%s4008 + $0x153] sm:$0xff]
        %v4486 = vld [vmem:[%s4008 + $0x15b] sm:$0xff]
        %v4487 = vld [vmem:[%s4008 + $0x16b] sm:$0xff]
        %v4488 = vld [vmem:[%s4008 + $0x173] sm:$0xff]
        %4489 = vst.msk [vmem:[#allocation6 + $0x48] sm:$0xff] %vm331, %v4457
        %4490 = vst.msk [vmem:[#allocation6 + $0xb0] sm:$0xff] %vm331, %v4458
        %4491 = vst.msk [vmem:[#allocation6 + $0x118] sm:$0xff] %vm331, %v4459
        %4492 = vst.msk [vmem:[#allocation6 + $0x180] sm:$0xff] %vm331, %v4460
        %4493 = vst.msk [vmem:[#allocation6 + $0x1e8] sm:$0xff] %vm331, %v4461
        %4494 = vst.msk [vmem:[#allocation6 + $0x250] sm:$0xff] %vm331, %v4462
        %4495 = vst.msk [vmem:[#allocation6 + $0x2b8] sm:$0xff] %vm331, %v4463
        %4496 = vst.msk [vmem:[#allocation6 + $0x320] sm:$0xff] %vm331, %v4464
        %4497 = vst.msk [vmem:[#allocation6 + $0x388] sm:$0xff] %vm331, %v4465
        %4498 = vst.msk [vmem:[#allocation6 + $0x3f0] sm:$0xff] %vm331, %v4466
        %4499 = vst.msk [vmem:[#allocation6 + $0x458] sm:$0xff] %vm331, %v4467
        %4500 = vst.msk [vmem:[#allocation6 + $0x4c0] sm:$0xff] %vm331, %v4468
        %4501 = vst.msk [vmem:[#allocation6 + $0x528] sm:$0xff] %vm331, %v4469
        %4502 = vst.msk [vmem:[#allocation6 + $0x590] sm:$0xff] %vm331, %v4470
        %4503 = vst.msk [vmem:[#allocation6 + $0x5f8] sm:$0xff] %vm331, %v4471
        %4504 = vst.msk [vmem:[#allocation6 + $0x660] sm:$0xff] %vm331, %v4472
        %4505 = vst.msk [vmem:[#allocation6 + $0x6c8] sm:$0xff] %vm331, %v4473
        %4506 = vst.msk [vmem:[#allocation6 + $0x730] sm:$0xff] %vm331, %v4474
        %4507 = vst.msk [vmem:[#allocation6 + $0x798] sm:$0xff] %vm331, %v4475
        %4508 = vst.msk [vmem:[#allocation6 + $0x800] sm:$0xff] %vm331, %v4476
        %4509 = vst.msk [vmem:[#allocation6 + $0x868] sm:$0xff] %vm331, %v4477
        %4510 = vst.msk [vmem:[#allocation6 + $0x8d0] sm:$0xff] %vm331, %v4478
        %4511 = vst.msk [vmem:[#allocation6 + $0x938] sm:$0xff] %vm331, %v4479
        %4512 = vst.msk [vmem:[#allocation6 + $0x9a0] sm:$0xff] %vm331, %v4480
        %4513 = vst.msk [vmem:[#allocation6 + $0xa08] sm:$0xff] %vm331, %v4481
        %4514 = vst.msk [vmem:[#allocation6 + $0xa70] sm:$0xff] %vm331, %v4482
        %4515 = vst.msk [vmem:[#allocation6 + $0xad8] sm:$0xff] %vm331, %v4483
        %4516 = vst.msk [vmem:[#allocation6 + $0xb40] sm:$0xff] %vm331, %v4484
        %4517 = vst.msk [vmem:[#allocation6 + $0xba8] sm:$0xff] %vm331, %v4485
        %4518 = vst.msk [vmem:[#allocation6 + $0xc10] sm:$0xff] %vm331, %v4486
        %4519 = vst.msk [vmem:[#allocation6 + $0xc78] sm:$0xff] %vm331, %v4487
        %4520 = vst.msk [vmem:[#allocation6 + $0xce0] sm:$0xff] %vm331, %v4488
        %v4521 = vld [vmem:[%s4008 + $0x4] sm:$0xff]
        %v4522 = vld [vmem:[%s4008 + $0xc] sm:$0xff]
        %v4523 = vld [vmem:[%s4008 + $0x1c] sm:$0xff]
        %v4524 = vld [vmem:[%s4008 + $0x24] sm:$0xff]
        %v4525 = vld [vmem:[%s4008 + $0x34] sm:$0xff]
        %v4526 = vld [vmem:[%s4008 + $0x3c] sm:$0xff]
        %v4527 = vld [vmem:[%s4008 + $0x4c] sm:$0xff]
        %v4528 = vld [vmem:[%s4008 + $0x54] sm:$0xff]
        %v4529 = vld [vmem:[%s4008 + $0x64] sm:$0xff]
        %v4530 = vld [vmem:[%s4008 + $0x6c] sm:$0xff]
        %v4531 = vld [vmem:[%s4008 + $0x7c] sm:$0xff]
        %v4532 = vld [vmem:[%s4008 + $0x84] sm:$0xff]
        %v4533 = vld [vmem:[%s4008 + $0x94] sm:$0xff]
        %v4534 = vld [vmem:[%s4008 + $0x9c] sm:$0xff]
        %v4535 = vld [vmem:[%s4008 + $0xac] sm:$0xff]
        %v4536 = vld [vmem:[%s4008 + $0xb4] sm:$0xff]
        %v4537 = vld [vmem:[%s4008 + $0xc4] sm:$0xff]
        %v4538 = vld [vmem:[%s4008 + $0xcc] sm:$0xff]
        %v4539 = vld [vmem:[%s4008 + $0xdc] sm:$0xff]
        %v4540 = vld [vmem:[%s4008 + $0xe4] sm:$0xff]
        %v4541 = vld [vmem:[%s4008 + $0xf4] sm:$0xff]
        %v4542 = vld [vmem:[%s4008 + $0xfc] sm:$0xff]
        %v4543 = vld [vmem:[%s4008 + $0x10c] sm:$0xff]
        %v4544 = vld [vmem:[%s4008 + $0x114] sm:$0xff]
        %v4545 = vld [vmem:[%s4008 + $0x124] sm:$0xff]
        %v4546 = vld [vmem:[%s4008 + $0x12c] sm:$0xff]
        %v4547 = vld [vmem:[%s4008 + $0x13c] sm:$0xff]
        %v4548 = vld [vmem:[%s4008 + $0x144] sm:$0xff]
        %v4549 = vld [vmem:[%s4008 + $0x154] sm:$0xff]
        %v4550 = vld [vmem:[%s4008 + $0x15c] sm:$0xff]
        %v4551 = vld [vmem:[%s4008 + $0x16c] sm:$0xff]
        %v4552 = vld [vmem:[%s4008 + $0x174] sm:$0xff]
        %4585 = vrot.lane.b32.xlu0 %v4521, 64
        %v4586 = vpop.permute.xlu0 %4585
        %4587 = vrot.lane.b32.xlu0 %v4522, 64
        %v4588 = vpop.permute.xlu0 %4587
        %4589 = vrot.lane.b32.xlu0 %v4523, 64
        %v4590 = vpop.permute.xlu0 %4589
        %4591 = vrot.lane.b32.xlu0 %v4524, 64
        %v4592 = vpop.permute.xlu0 %4591
        %4593 = vrot.lane.b32.xlu0 %v4525, 64
        %v4594 = vpop.permute.xlu0 %4593
        %4595 = vrot.lane.b32.xlu0 %v4526, 64
        %v4596 = vpop.permute.xlu0 %4595
        %4597 = vrot.lane.b32.xlu0 %v4527, 64
        %v4598 = vpop.permute.xlu0 %4597
        %4599 = vrot.lane.b32.xlu0 %v4528, 64
        %v4600 = vpop.permute.xlu0 %4599
        %4601 = vrot.lane.b32.xlu0 %v4529, 64
        %v4602 = vpop.permute.xlu0 %4601
        %4603 = vrot.lane.b32.xlu0 %v4530, 64
        %v4604 = vpop.permute.xlu0 %4603
        %4605 = vrot.lane.b32.xlu0 %v4531, 64
        %v4606 = vpop.permute.xlu0 %4605
        %4607 = vrot.lane.b32.xlu0 %v4532, 64
        %v4608 = vpop.permute.xlu0 %4607
        %4609 = vrot.lane.b32.xlu0 %v4533, 64
        %v4610 = vpop.permute.xlu0 %4609
        %4611 = vrot.lane.b32.xlu0 %v4534, 64
        %v4612 = vpop.permute.xlu0 %4611
        %4613 = vrot.lane.b32.xlu0 %v4535, 64
        %v4614 = vpop.permute.xlu0 %4613
        %4615 = vrot.lane.b32.xlu0 %v4536, 64
        %v4616 = vpop.permute.xlu0 %4615
        %4617 = vrot.lane.b32.xlu0 %v4537, 64
        %v4618 = vpop.permute.xlu0 %4617
        %4619 = vrot.lane.b32.xlu0 %v4538, 64
        %v4620 = vpop.permute.xlu0 %4619
        %4621 = vrot.lane.b32.xlu0 %v4539, 64
        %v4622 = vpop.permute.xlu0 %4621
        %4623 = vrot.lane.b32.xlu0 %v4540, 64
        %v4624 = vpop.permute.xlu0 %4623
        %4625 = vrot.lane.b32.xlu0 %v4541, 64
        %v4626 = vpop.permute.xlu0 %4625
        %4627 = vrot.lane.b32.xlu0 %v4542, 64
        %v4628 = vpop.permute.xlu0 %4627
        %4629 = vrot.lane.b32.xlu0 %v4543, 64
        %v4630 = vpop.permute.xlu0 %4629
        %4631 = vrot.lane.b32.xlu0 %v4544, 64
        %v4632 = vpop.permute.xlu0 %4631
        %4633 = vrot.lane.b32.xlu0 %v4545, 64
        %v4634 = vpop.permute.xlu0 %4633
        %4635 = vrot.lane.b32.xlu0 %v4546, 64
        %v4636 = vpop.permute.xlu0 %4635
        %4637 = vrot.lane.b32.xlu0 %v4547, 64
        %v4638 = vpop.permute.xlu0 %4637
        %4639 = vrot.lane.b32.xlu0 %v4548, 64
        %v4640 = vpop.permute.xlu0 %4639
        %4641 = vrot.lane.b32.xlu0 %v4549, 64
        %v4642 = vpop.permute.xlu0 %4641
        %4643 = vrot.lane.b32.xlu0 %v4550, 64
        %v4644 = vpop.permute.xlu0 %4643
        %4645 = vrot.lane.b32.xlu0 %v4551, 64
        %v4646 = vpop.permute.xlu0 %4645
        %4647 = vrot.lane.b32.xlu0 %v4552, 64
        %v4648 = vpop.permute.xlu0 %4647
        %4681 = vst.msk [vmem:[#allocation6 + $0x48] sm:$0xff] %vm1285, %v4586
        %4682 = vst.msk [vmem:[#allocation6 + $0xb0] sm:$0xff] %vm1285, %v4588
        %4683 = vst.msk [vmem:[#allocation6 + $0x118] sm:$0xff] %vm1285, %v4590
        %4684 = vst.msk [vmem:[#allocation6 + $0x180] sm:$0xff] %vm1285, %v4592
        %4685 = vst.msk [vmem:[#allocation6 + $0x1e8] sm:$0xff] %vm1285, %v4594
        %4686 = vst.msk [vmem:[#allocation6 + $0x250] sm:$0xff] %vm1285, %v4596
        %4687 = vst.msk [vmem:[#allocation6 + $0x2b8] sm:$0xff] %vm1285, %v4598
        %4688 = vst.msk [vmem:[#allocation6 + $0x320] sm:$0xff] %vm1285, %v4600
        %4689 = vst.msk [vmem:[#allocation6 + $0x388] sm:$0xff] %vm1285, %v4602
        %4690 = vst.msk [vmem:[#allocation6 + $0x3f0] sm:$0xff] %vm1285, %v4604
        %4691 = vst.msk [vmem:[#allocation6 + $0x458] sm:$0xff] %vm1285, %v4606
        %4692 = vst.msk [vmem:[#allocation6 + $0x4c0] sm:$0xff] %vm1285, %v4608
        %4693 = vst.msk [vmem:[#allocation6 + $0x528] sm:$0xff] %vm1285, %v4610
        %4694 = vst.msk [vmem:[#allocation6 + $0x590] sm:$0xff] %vm1285, %v4612
        %4695 = vst.msk [vmem:[#allocation6 + $0x5f8] sm:$0xff] %vm1285, %v4614
        %4696 = vst.msk [vmem:[#allocation6 + $0x660] sm:$0xff] %vm1285, %v4616
        %4697 = vst.msk [vmem:[#allocation6 + $0x6c8] sm:$0xff] %vm1285, %v4618
        %4698 = vst.msk [vmem:[#allocation6 + $0x730] sm:$0xff] %vm1285, %v4620
        %4699 = vst.msk [vmem:[#allocation6 + $0x798] sm:$0xff] %vm1285, %v4622
        %4700 = vst.msk [vmem:[#allocation6 + $0x800] sm:$0xff] %vm1285, %v4624
        %4701 = vst.msk [vmem:[#allocation6 + $0x868] sm:$0xff] %vm1285, %v4626
        %4702 = vst.msk [vmem:[#allocation6 + $0x8d0] sm:$0xff] %vm1285, %v4628
        %4703 = vst.msk [vmem:[#allocation6 + $0x938] sm:$0xff] %vm1285, %v4630
        %4704 = vst.msk [vmem:[#allocation6 + $0x9a0] sm:$0xff] %vm1285, %v4632
        %4705 = vst.msk [vmem:[#allocation6 + $0xa08] sm:$0xff] %vm1285, %v4634
        %4706 = vst.msk [vmem:[#allocation6 + $0xa70] sm:$0xff] %vm1285, %v4636
        %4707 = vst.msk [vmem:[#allocation6 + $0xad8] sm:$0xff] %vm1285, %v4638
        %4708 = vst.msk [vmem:[#allocation6 + $0xb40] sm:$0xff] %vm1285, %v4640
        %4709 = vst.msk [vmem:[#allocation6 + $0xba8] sm:$0xff] %vm1285, %v4642
        %4710 = vst.msk [vmem:[#allocation6 + $0xc10] sm:$0xff] %vm1285, %v4644
        %4711 = vst.msk [vmem:[#allocation6 + $0xc78] sm:$0xff] %vm1285, %v4646
        %4712 = vst.msk [vmem:[#allocation6 + $0xce0] sm:$0xff] %vm1285, %v4648
        %s4713 = scalar_lea.vmem [#allocation3], 96
        %v4714 = vld [vmem:[%s4713] sm:$0xff]
        %v4715 = vld [vmem:[%s4713 + $0x8] sm:$0xff]
        %v4716 = vld [vmem:[%s4713 + $0x18] sm:$0xff]
        %v4717 = vld [vmem:[%s4713 + $0x20] sm:$0xff]
        %v4718 = vld [vmem:[%s4713 + $0x30] sm:$0xff]
        %v4719 = vld [vmem:[%s4713 + $0x38] sm:$0xff]
        %v4720 = vld [vmem:[%s4713 + $0x48] sm:$0xff]
        %v4721 = vld [vmem:[%s4713 + $0x50] sm:$0xff]
        %v4722 = vld [vmem:[%s4713 + $0x60] sm:$0xff]
        %v4723 = vld [vmem:[%s4713 + $0x68] sm:$0xff]
        %v4724 = vld [vmem:[%s4713 + $0x78] sm:$0xff]
        %v4725 = vld [vmem:[%s4713 + $0x80] sm:$0xff]
        %v4726 = vld [vmem:[%s4713 + $0x90] sm:$0xff]
        %v4727 = vld [vmem:[%s4713 + $0x98] sm:$0xff]
        %v4728 = vld [vmem:[%s4713 + $0xa8] sm:$0xff]
        %v4729 = vld [vmem:[%s4713 + $0xb0] sm:$0xff]
        %v4730 = vld [vmem:[%s4713 + $0xc0] sm:$0xff]
        %v4731 = vld [vmem:[%s4713 + $0xc8] sm:$0xff]
        %v4732 = vld [vmem:[%s4713 + $0xd8] sm:$0xff]
        %v4733 = vld [vmem:[%s4713 + $0xe0] sm:$0xff]
        %v4734 = vld [vmem:[%s4713 + $0xf0] sm:$0xff]
        %v4735 = vld [vmem:[%s4713 + $0xf8] sm:$0xff]
        %v4736 = vld [vmem:[%s4713 + $0x108] sm:$0xff]
        %v4737 = vld [vmem:[%s4713 + $0x110] sm:$0xff]
        %v4738 = vld [vmem:[%s4713 + $0x120] sm:$0xff]
        %v4739 = vld [vmem:[%s4713 + $0x128] sm:$0xff]
        %v4740 = vld [vmem:[%s4713 + $0x138] sm:$0xff]
        %v4741 = vld [vmem:[%s4713 + $0x140] sm:$0xff]
        %v4742 = vld [vmem:[%s4713 + $0x150] sm:$0xff]
        %v4743 = vld [vmem:[%s4713 + $0x158] sm:$0xff]
        %v4744 = vld [vmem:[%s4713 + $0x168] sm:$0xff]
        %v4745 = vld [vmem:[%s4713 + $0x170] sm:$0xff]
        %4746 = vst.msk [vmem:[#allocation6 + $0x50] sm:$0xff] %vm331, %v4714
        %4747 = vst.msk [vmem:[#allocation6 + $0xb8] sm:$0xff] %vm331, %v4715
        %4748 = vst.msk [vmem:[#allocation6 + $0x120] sm:$0xff] %vm331, %v4716
        %4749 = vst.msk [vmem:[#allocation6 + $0x188] sm:$0xff] %vm331, %v4717
        %4750 = vst.msk [vmem:[#allocation6 + $0x1f0] sm:$0xff] %vm331, %v4718
        %4751 = vst.msk [vmem:[#allocation6 + $0x258] sm:$0xff] %vm331, %v4719
        %4752 = vst.msk [vmem:[#allocation6 + $0x2c0] sm:$0xff] %vm331, %v4720
        %4753 = vst.msk [vmem:[#allocation6 + $0x328] sm:$0xff] %vm331, %v4721
        %4754 = vst.msk [vmem:[#allocation6 + $0x390] sm:$0xff] %vm331, %v4722
        %4755 = vst.msk [vmem:[#allocation6 + $0x3f8] sm:$0xff] %vm331, %v4723
        %4756 = vst.msk [vmem:[#allocation6 + $0x460] sm:$0xff] %vm331, %v4724
        %4757 = vst.msk [vmem:[#allocation6 + $0x4c8] sm:$0xff] %vm331, %v4725
        %4758 = vst.msk [vmem:[#allocation6 + $0x530] sm:$0xff] %vm331, %v4726
        %4759 = vst.msk [vmem:[#allocation6 + $0x598] sm:$0xff] %vm331, %v4727
        %4760 = vst.msk [vmem:[#allocation6 + $0x600] sm:$0xff] %vm331, %v4728
        %4761 = vst.msk [vmem:[#allocation6 + $0x668] sm:$0xff] %vm331, %v4729
        %4762 = vst.msk [vmem:[#allocation6 + $0x6d0] sm:$0xff] %vm331, %v4730
        %4763 = vst.msk [vmem:[#allocation6 + $0x738] sm:$0xff] %vm331, %v4731
        %4764 = vst.msk [vmem:[#allocation6 + $0x7a0] sm:$0xff] %vm331, %v4732
        %4765 = vst.msk [vmem:[#allocation6 + $0x808] sm:$0xff] %vm331, %v4733
        %4766 = vst.msk [vmem:[#allocation6 + $0x870] sm:$0xff] %vm331, %v4734
        %4767 = vst.msk [vmem:[#allocation6 + $0x8d8] sm:$0xff] %vm331, %v4735
        %4768 = vst.msk [vmem:[#allocation6 + $0x940] sm:$0xff] %vm331, %v4736
        %4769 = vst.msk [vmem:[#allocation6 + $0x9a8] sm:$0xff] %vm331, %v4737
        %4770 = vst.msk [vmem:[#allocation6 + $0xa10] sm:$0xff] %vm331, %v4738
        %4771 = vst.msk [vmem:[#allocation6 + $0xa78] sm:$0xff] %vm331, %v4739
        %4772 = vst.msk [vmem:[#allocation6 + $0xae0] sm:$0xff] %vm331, %v4740
        %4773 = vst.msk [vmem:[#allocation6 + $0xb48] sm:$0xff] %vm331, %v4741
        %4774 = vst.msk [vmem:[#allocation6 + $0xbb0] sm:$0xff] %vm331, %v4742
        %4775 = vst.msk [vmem:[#allocation6 + $0xc18] sm:$0xff] %vm331, %v4743
        %4776 = vst.msk [vmem:[#allocation6 + $0xc80] sm:$0xff] %vm331, %v4744
        %4777 = vst.msk [vmem:[#allocation6 + $0xce8] sm:$0xff] %vm331, %v4745
        %v4778 = vld [vmem:[%s4713 + $0x1] sm:$0xff]
        %v4779 = vld [vmem:[%s4713 + $0x9] sm:$0xff]
        %v4780 = vld [vmem:[%s4713 + $0x19] sm:$0xff]
        %v4781 = vld [vmem:[%s4713 + $0x21] sm:$0xff]
        %v4782 = vld [vmem:[%s4713 + $0x31] sm:$0xff]
        %v4783 = vld [vmem:[%s4713 + $0x39] sm:$0xff]
        %v4784 = vld [vmem:[%s4713 + $0x49] sm:$0xff]
        %v4785 = vld [vmem:[%s4713 + $0x51] sm:$0xff]
        %v4786 = vld [vmem:[%s4713 + $0x61] sm:$0xff]
        %v4787 = vld [vmem:[%s4713 + $0x69] sm:$0xff]
        %v4788 = vld [vmem:[%s4713 + $0x79] sm:$0xff]
        %v4789 = vld [vmem:[%s4713 + $0x81] sm:$0xff]
        %v4790 = vld [vmem:[%s4713 + $0x91] sm:$0xff]
        %v4791 = vld [vmem:[%s4713 + $0x99] sm:$0xff]
        %v4792 = vld [vmem:[%s4713 + $0xa9] sm:$0xff]
        %v4793 = vld [vmem:[%s4713 + $0xb1] sm:$0xff]
        %v4794 = vld [vmem:[%s4713 + $0xc1] sm:$0xff]
        %v4795 = vld [vmem:[%s4713 + $0xc9] sm:$0xff]
        %v4796 = vld [vmem:[%s4713 + $0xd9] sm:$0xff]
        %v4797 = vld [vmem:[%s4713 + $0xe1] sm:$0xff]
        %v4798 = vld [vmem:[%s4713 + $0xf1] sm:$0xff]
        %v4799 = vld [vmem:[%s4713 + $0xf9] sm:$0xff]
        %v4800 = vld [vmem:[%s4713 + $0x109] sm:$0xff]
        %v4801 = vld [vmem:[%s4713 + $0x111] sm:$0xff]
        %v4802 = vld [vmem:[%s4713 + $0x121] sm:$0xff]
        %v4803 = vld [vmem:[%s4713 + $0x129] sm:$0xff]
        %v4804 = vld [vmem:[%s4713 + $0x139] sm:$0xff]
        %v4805 = vld [vmem:[%s4713 + $0x141] sm:$0xff]
        %v4806 = vld [vmem:[%s4713 + $0x151] sm:$0xff]
        %v4807 = vld [vmem:[%s4713 + $0x159] sm:$0xff]
        %v4808 = vld [vmem:[%s4713 + $0x169] sm:$0xff]
        %v4809 = vld [vmem:[%s4713 + $0x171] sm:$0xff]
        %4842 = vrot.lane.b32.xlu0 %v4778, 64
        %v4843 = vpop.permute.xlu0 %4842
        %4844 = vrot.lane.b32.xlu0 %v4779, 64
        %v4845 = vpop.permute.xlu0 %4844
        %4846 = vrot.lane.b32.xlu0 %v4780, 64
        %v4847 = vpop.permute.xlu0 %4846
        %4848 = vrot.lane.b32.xlu0 %v4781, 64
        %v4849 = vpop.permute.xlu0 %4848
        %4850 = vrot.lane.b32.xlu0 %v4782, 64
        %v4851 = vpop.permute.xlu0 %4850
        %4852 = vrot.lane.b32.xlu0 %v4783, 64
        %v4853 = vpop.permute.xlu0 %4852
        %4854 = vrot.lane.b32.xlu0 %v4784, 64
        %v4855 = vpop.permute.xlu0 %4854
        %4856 = vrot.lane.b32.xlu0 %v4785, 64
        %v4857 = vpop.permute.xlu0 %4856
        %4858 = vrot.lane.b32.xlu0 %v4786, 64
        %v4859 = vpop.permute.xlu0 %4858
        %4860 = vrot.lane.b32.xlu0 %v4787, 64
        %v4861 = vpop.permute.xlu0 %4860
        %4862 = vrot.lane.b32.xlu0 %v4788, 64
        %v4863 = vpop.permute.xlu0 %4862
        %4864 = vrot.lane.b32.xlu0 %v4789, 64
        %v4865 = vpop.permute.xlu0 %4864
        %4866 = vrot.lane.b32.xlu0 %v4790, 64
        %v4867 = vpop.permute.xlu0 %4866
        %4868 = vrot.lane.b32.xlu0 %v4791, 64
        %v4869 = vpop.permute.xlu0 %4868
        %4870 = vrot.lane.b32.xlu0 %v4792, 64
        %v4871 = vpop.permute.xlu0 %4870
        %4872 = vrot.lane.b32.xlu0 %v4793, 64
        %v4873 = vpop.permute.xlu0 %4872
        %4874 = vrot.lane.b32.xlu0 %v4794, 64
        %v4875 = vpop.permute.xlu0 %4874
        %4876 = vrot.lane.b32.xlu0 %v4795, 64
        %v4877 = vpop.permute.xlu0 %4876
        %4878 = vrot.lane.b32.xlu0 %v4796, 64
        %v4879 = vpop.permute.xlu0 %4878
        %4880 = vrot.lane.b32.xlu0 %v4797, 64
        %v4881 = vpop.permute.xlu0 %4880
        %4882 = vrot.lane.b32.xlu0 %v4798, 64
        %v4883 = vpop.permute.xlu0 %4882
        %4884 = vrot.lane.b32.xlu0 %v4799, 64
        %v4885 = vpop.permute.xlu0 %4884
        %4886 = vrot.lane.b32.xlu0 %v4800, 64
        %v4887 = vpop.permute.xlu0 %4886
        %4888 = vrot.lane.b32.xlu0 %v4801, 64
        %v4889 = vpop.permute.xlu0 %4888
        %4890 = vrot.lane.b32.xlu0 %v4802, 64
        %v4891 = vpop.permute.xlu0 %4890
        %4892 = vrot.lane.b32.xlu0 %v4803, 64
        %v4893 = vpop.permute.xlu0 %4892
        %4894 = vrot.lane.b32.xlu0 %v4804, 64
        %v4895 = vpop.permute.xlu0 %4894
        %4896 = vrot.lane.b32.xlu0 %v4805, 64
        %v4897 = vpop.permute.xlu0 %4896
        %4898 = vrot.lane.b32.xlu0 %v4806, 64
        %v4899 = vpop.permute.xlu0 %4898
        %4900 = vrot.lane.b32.xlu0 %v4807, 64
        %v4901 = vpop.permute.xlu0 %4900
        %4902 = vrot.lane.b32.xlu0 %v4808, 64
        %v4903 = vpop.permute.xlu0 %4902
        %4904 = vrot.lane.b32.xlu0 %v4809, 64
        %v4905 = vpop.permute.xlu0 %4904
        %4938 = vst.msk [vmem:[#allocation6 + $0x50] sm:$0xff] %vm1285, %v4843
        %4939 = vst.msk [vmem:[#allocation6 + $0xb8] sm:$0xff] %vm1285, %v4845
        %4940 = vst.msk [vmem:[#allocation6 + $0x120] sm:$0xff] %vm1285, %v4847
        %4941 = vst.msk [vmem:[#allocation6 + $0x188] sm:$0xff] %vm1285, %v4849
        %4942 = vst.msk [vmem:[#allocation6 + $0x1f0] sm:$0xff] %vm1285, %v4851
        %4943 = vst.msk [vmem:[#allocation6 + $0x258] sm:$0xff] %vm1285, %v4853
        %4944 = vst.msk [vmem:[#allocation6 + $0x2c0] sm:$0xff] %vm1285, %v4855
        %4945 = vst.msk [vmem:[#allocation6 + $0x328] sm:$0xff] %vm1285, %v4857
        %4946 = vst.msk [vmem:[#allocation6 + $0x390] sm:$0xff] %vm1285, %v4859
        %4947 = vst.msk [vmem:[#allocation6 + $0x3f8] sm:$0xff] %vm1285, %v4861
        %4948 = vst.msk [vmem:[#allocation6 + $0x460] sm:$0xff] %vm1285, %v4863
        %4949 = vst.msk [vmem:[#allocation6 + $0x4c8] sm:$0xff] %vm1285, %v4865
        %4950 = vst.msk [vmem:[#allocation6 + $0x530] sm:$0xff] %vm1285, %v4867
        %4951 = vst.msk [vmem:[#allocation6 + $0x598] sm:$0xff] %vm1285, %v4869
        %4952 = vst.msk [vmem:[#allocation6 + $0x600] sm:$0xff] %vm1285, %v4871
        %4953 = vst.msk [vmem:[#allocation6 + $0x668] sm:$0xff] %vm1285, %v4873
        %4954 = vst.msk [vmem:[#allocation6 + $0x6d0] sm:$0xff] %vm1285, %v4875
        %4955 = vst.msk [vmem:[#allocation6 + $0x738] sm:$0xff] %vm1285, %v4877
        %4956 = vst.msk [vmem:[#allocation6 + $0x7a0] sm:$0xff] %vm1285, %v4879
        %4957 = vst.msk [vmem:[#allocation6 + $0x808] sm:$0xff] %vm1285, %v4881
        %4958 = vst.msk [vmem:[#allocation6 + $0x870] sm:$0xff] %vm1285, %v4883
        %4959 = vst.msk [vmem:[#allocation6 + $0x8d8] sm:$0xff] %vm1285, %v4885
        %4960 = vst.msk [vmem:[#allocation6 + $0x940] sm:$0xff] %vm1285, %v4887
        %4961 = vst.msk [vmem:[#allocation6 + $0x9a8] sm:$0xff] %vm1285, %v4889
        %4962 = vst.msk [vmem:[#allocation6 + $0xa10] sm:$0xff] %vm1285, %v4891
        %4963 = vst.msk [vmem:[#allocation6 + $0xa78] sm:$0xff] %vm1285, %v4893
        %4964 = vst.msk [vmem:[#allocation6 + $0xae0] sm:$0xff] %vm1285, %v4895
        %4965 = vst.msk [vmem:[#allocation6 + $0xb48] sm:$0xff] %vm1285, %v4897
        %4966 = vst.msk [vmem:[#allocation6 + $0xbb0] sm:$0xff] %vm1285, %v4899
        %4967 = vst.msk [vmem:[#allocation6 + $0xc18] sm:$0xff] %vm1285, %v4901
        %4968 = vst.msk [vmem:[#allocation6 + $0xc80] sm:$0xff] %vm1285, %v4903
        %4969 = vst.msk [vmem:[#allocation6 + $0xce8] sm:$0xff] %vm1285, %v4905
        %v4970 = vld [vmem:[%s4713 + $0x2] sm:$0xff]
        %v4971 = vld [vmem:[%s4713 + $0xa] sm:$0xff]
        %v4972 = vld [vmem:[%s4713 + $0x1a] sm:$0xff]
        %v4973 = vld [vmem:[%s4713 + $0x22] sm:$0xff]
        %v4974 = vld [vmem:[%s4713 + $0x32] sm:$0xff]
        %v4975 = vld [vmem:[%s4713 + $0x3a] sm:$0xff]
        %v4976 = vld [vmem:[%s4713 + $0x4a] sm:$0xff]
        %v4977 = vld [vmem:[%s4713 + $0x52] sm:$0xff]
        %v4978 = vld [vmem:[%s4713 + $0x62] sm:$0xff]
        %v4979 = vld [vmem:[%s4713 + $0x6a] sm:$0xff]
        %v4980 = vld [vmem:[%s4713 + $0x7a] sm:$0xff]
        %v4981 = vld [vmem:[%s4713 + $0x82] sm:$0xff]
        %v4982 = vld [vmem:[%s4713 + $0x92] sm:$0xff]
        %v4983 = vld [vmem:[%s4713 + $0x9a] sm:$0xff]
        %v4984 = vld [vmem:[%s4713 + $0xaa] sm:$0xff]
        %v4985 = vld [vmem:[%s4713 + $0xb2] sm:$0xff]
        %v4986 = vld [vmem:[%s4713 + $0xc2] sm:$0xff]
        %v4987 = vld [vmem:[%s4713 + $0xca] sm:$0xff]
        %v4988 = vld [vmem:[%s4713 + $0xda] sm:$0xff]
        %v4989 = vld [vmem:[%s4713 + $0xe2] sm:$0xff]
        %v4990 = vld [vmem:[%s4713 + $0xf2] sm:$0xff]
        %v4991 = vld [vmem:[%s4713 + $0xfa] sm:$0xff]
        %v4992 = vld [vmem:[%s4713 + $0x10a] sm:$0xff]
        %v4993 = vld [vmem:[%s4713 + $0x112] sm:$0xff]
        %v4994 = vld [vmem:[%s4713 + $0x122] sm:$0xff]
        %v4995 = vld [vmem:[%s4713 + $0x12a] sm:$0xff]
        %v4996 = vld [vmem:[%s4713 + $0x13a] sm:$0xff]
        %v4997 = vld [vmem:[%s4713 + $0x142] sm:$0xff]
        %v4998 = vld [vmem:[%s4713 + $0x152] sm:$0xff]
        %v4999 = vld [vmem:[%s4713 + $0x15a] sm:$0xff]
        %v5000 = vld [vmem:[%s4713 + $0x16a] sm:$0xff]
        %v5001 = vld [vmem:[%s4713 + $0x172] sm:$0xff]
        %5002 = vst.msk [vmem:[#allocation6 + $0x58] sm:$0xff] %vm331, %v4970
        %5003 = vst.msk [vmem:[#allocation6 + $0xc0] sm:$0xff] %vm331, %v4971
        %5004 = vst.msk [vmem:[#allocation6 + $0x128] sm:$0xff] %vm331, %v4972
        %5005 = vst.msk [vmem:[#allocation6 + $0x190] sm:$0xff] %vm331, %v4973
        %5006 = vst.msk [vmem:[#allocation6 + $0x1f8] sm:$0xff] %vm331, %v4974
        %5007 = vst.msk [vmem:[#allocation6 + $0x260] sm:$0xff] %vm331, %v4975
        %5008 = vst.msk [vmem:[#allocation6 + $0x2c8] sm:$0xff] %vm331, %v4976
        %5009 = vst.msk [vmem:[#allocation6 + $0x330] sm:$0xff] %vm331, %v4977
        %5010 = vst.msk [vmem:[#allocation6 + $0x398] sm:$0xff] %vm331, %v4978
        %5011 = vst.msk [vmem:[#allocation6 + $0x400] sm:$0xff] %vm331, %v4979
        %5012 = vst.msk [vmem:[#allocation6 + $0x468] sm:$0xff] %vm331, %v4980
        %5013 = vst.msk [vmem:[#allocation6 + $0x4d0] sm:$0xff] %vm331, %v4981
        %5014 = vst.msk [vmem:[#allocation6 + $0x538] sm:$0xff] %vm331, %v4982
        %5015 = vst.msk [vmem:[#allocation6 + $0x5a0] sm:$0xff] %vm331, %v4983
        %5016 = vst.msk [vmem:[#allocation6 + $0x608] sm:$0xff] %vm331, %v4984
        %5017 = vst.msk [vmem:[#allocation6 + $0x670] sm:$0xff] %vm331, %v4985
        %5018 = vst.msk [vmem:[#allocation6 + $0x6d8] sm:$0xff] %vm331, %v4986
        %5019 = vst.msk [vmem:[#allocation6 + $0x740] sm:$0xff] %vm331, %v4987
        %5020 = vst.msk [vmem:[#allocation6 + $0x7a8] sm:$0xff] %vm331, %v4988
        %5021 = vst.msk [vmem:[#allocation6 + $0x810] sm:$0xff] %vm331, %v4989
        %5022 = vst.msk [vmem:[#allocation6 + $0x878] sm:$0xff] %vm331, %v4990
        %5023 = vst.msk [vmem:[#allocation6 + $0x8e0] sm:$0xff] %vm331, %v4991
        %5024 = vst.msk [vmem:[#allocation6 + $0x948] sm:$0xff] %vm331, %v4992
        %5025 = vst.msk [vmem:[#allocation6 + $0x9b0] sm:$0xff] %vm331, %v4993
        %5026 = vst.msk [vmem:[#allocation6 + $0xa18] sm:$0xff] %vm331, %v4994
        %5027 = vst.msk [vmem:[#allocation6 + $0xa80] sm:$0xff] %vm331, %v4995
        %5028 = vst.msk [vmem:[#allocation6 + $0xae8] sm:$0xff] %vm331, %v4996
        %5029 = vst.msk [vmem:[#allocation6 + $0xb50] sm:$0xff] %vm331, %v4997
        %5030 = vst.msk [vmem:[#allocation6 + $0xbb8] sm:$0xff] %vm331, %v4998
        %5031 = vst.msk [vmem:[#allocation6 + $0xc20] sm:$0xff] %vm331, %v4999
        %5032 = vst.msk [vmem:[#allocation6 + $0xc88] sm:$0xff] %vm331, %v5000
        %5033 = vst.msk [vmem:[#allocation6 + $0xcf0] sm:$0xff] %vm331, %v5001
        %v5034 = vld [vmem:[%s4713 + $0x3] sm:$0xff]
        %v5035 = vld [vmem:[%s4713 + $0xb] sm:$0xff]
        %v5036 = vld [vmem:[%s4713 + $0x1b] sm:$0xff]
        %v5037 = vld [vmem:[%s4713 + $0x23] sm:$0xff]
        %v5038 = vld [vmem:[%s4713 + $0x33] sm:$0xff]
        %v5039 = vld [vmem:[%s4713 + $0x3b] sm:$0xff]
        %v5040 = vld [vmem:[%s4713 + $0x4b] sm:$0xff]
        %v5041 = vld [vmem:[%s4713 + $0x53] sm:$0xff]
        %v5042 = vld [vmem:[%s4713 + $0x63] sm:$0xff]
        %v5043 = vld [vmem:[%s4713 + $0x6b] sm:$0xff]
        %v5044 = vld [vmem:[%s4713 + $0x7b] sm:$0xff]
        %v5045 = vld [vmem:[%s4713 + $0x83] sm:$0xff]
        %v5046 = vld [vmem:[%s4713 + $0x93] sm:$0xff]
        %v5047 = vld [vmem:[%s4713 + $0x9b] sm:$0xff]
        %v5048 = vld [vmem:[%s4713 + $0xab] sm:$0xff]
        %v5049 = vld [vmem:[%s4713 + $0xb3] sm:$0xff]
        %v5050 = vld [vmem:[%s4713 + $0xc3] sm:$0xff]
        %v5051 = vld [vmem:[%s4713 + $0xcb] sm:$0xff]
        %v5052 = vld [vmem:[%s4713 + $0xdb] sm:$0xff]
        %v5053 = vld [vmem:[%s4713 + $0xe3] sm:$0xff]
        %v5054 = vld [vmem:[%s4713 + $0xf3] sm:$0xff]
        %v5055 = vld [vmem:[%s4713 + $0xfb] sm:$0xff]
        %v5056 = vld [vmem:[%s4713 + $0x10b] sm:$0xff]
        %v5057 = vld [vmem:[%s4713 + $0x113] sm:$0xff]
        %v5058 = vld [vmem:[%s4713 + $0x123] sm:$0xff]
        %v5059 = vld [vmem:[%s4713 + $0x12b] sm:$0xff]
        %v5060 = vld [vmem:[%s4713 + $0x13b] sm:$0xff]
        %v5061 = vld [vmem:[%s4713 + $0x143] sm:$0xff]
        %v5062 = vld [vmem:[%s4713 + $0x153] sm:$0xff]
        %v5063 = vld [vmem:[%s4713 + $0x15b] sm:$0xff]
        %v5064 = vld [vmem:[%s4713 + $0x16b] sm:$0xff]
        %v5065 = vld [vmem:[%s4713 + $0x173] sm:$0xff]
        %5098 = vrot.lane.b32.xlu0 %v5034, 64
        %v5099 = vpop.permute.xlu0 %5098
        %5100 = vrot.lane.b32.xlu0 %v5035, 64
        %v5101 = vpop.permute.xlu0 %5100
        %5102 = vrot.lane.b32.xlu0 %v5036, 64
        %v5103 = vpop.permute.xlu0 %5102
        %5104 = vrot.lane.b32.xlu0 %v5037, 64
        %v5105 = vpop.permute.xlu0 %5104
        %5106 = vrot.lane.b32.xlu0 %v5038, 64
        %v5107 = vpop.permute.xlu0 %5106
        %5108 = vrot.lane.b32.xlu0 %v5039, 64
        %v5109 = vpop.permute.xlu0 %5108
        %5110 = vrot.lane.b32.xlu0 %v5040, 64
        %v5111 = vpop.permute.xlu0 %5110
        %5112 = vrot.lane.b32.xlu0 %v5041, 64
        %v5113 = vpop.permute.xlu0 %5112
        %5114 = vrot.lane.b32.xlu0 %v5042, 64
        %v5115 = vpop.permute.xlu0 %5114
        %5116 = vrot.lane.b32.xlu0 %v5043, 64
        %v5117 = vpop.permute.xlu0 %5116
        %5118 = vrot.lane.b32.xlu0 %v5044, 64
        %v5119 = vpop.permute.xlu0 %5118
        %5120 = vrot.lane.b32.xlu0 %v5045, 64
        %v5121 = vpop.permute.xlu0 %5120
        %5122 = vrot.lane.b32.xlu0 %v5046, 64
        %v5123 = vpop.permute.xlu0 %5122
        %5124 = vrot.lane.b32.xlu0 %v5047, 64
        %v5125 = vpop.permute.xlu0 %5124
        %5126 = vrot.lane.b32.xlu0 %v5048, 64
        %v5127 = vpop.permute.xlu0 %5126
        %5128 = vrot.lane.b32.xlu0 %v5049, 64
        %v5129 = vpop.permute.xlu0 %5128
        %5130 = vrot.lane.b32.xlu0 %v5050, 64
        %v5131 = vpop.permute.xlu0 %5130
        %5132 = vrot.lane.b32.xlu0 %v5051, 64
        %v5133 = vpop.permute.xlu0 %5132
        %5134 = vrot.lane.b32.xlu0 %v5052, 64
        %v5135 = vpop.permute.xlu0 %5134
        %5136 = vrot.lane.b32.xlu0 %v5053, 64
        %v5137 = vpop.permute.xlu0 %5136
        %5138 = vrot.lane.b32.xlu0 %v5054, 64
        %v5139 = vpop.permute.xlu0 %5138
        %5140 = vrot.lane.b32.xlu0 %v5055, 64
        %v5141 = vpop.permute.xlu0 %5140
        %5142 = vrot.lane.b32.xlu0 %v5056, 64
        %v5143 = vpop.permute.xlu0 %5142
        %5144 = vrot.lane.b32.xlu0 %v5057, 64
        %v5145 = vpop.permute.xlu0 %5144
        %5146 = vrot.lane.b32.xlu0 %v5058, 64
        %v5147 = vpop.permute.xlu0 %5146
        %5148 = vrot.lane.b32.xlu0 %v5059, 64
        %v5149 = vpop.permute.xlu0 %5148
        %5150 = vrot.lane.b32.xlu0 %v5060, 64
        %v5151 = vpop.permute.xlu0 %5150
        %5152 = vrot.lane.b32.xlu0 %v5061, 64
        %v5153 = vpop.permute.xlu0 %5152
        %5154 = vrot.lane.b32.xlu0 %v5062, 64
        %v5155 = vpop.permute.xlu0 %5154
        %5156 = vrot.lane.b32.xlu0 %v5063, 64
        %v5157 = vpop.permute.xlu0 %5156
        %5158 = vrot.lane.b32.xlu0 %v5064, 64
        %v5159 = vpop.permute.xlu0 %5158
        %5160 = vrot.lane.b32.xlu0 %v5065, 64
        %v5161 = vpop.permute.xlu0 %5160
        %5194 = vst.msk [vmem:[#allocation6 + $0x58] sm:$0xff] %vm1285, %v5099
        %5195 = vst.msk [vmem:[#allocation6 + $0xc0] sm:$0xff] %vm1285, %v5101
        %5196 = vst.msk [vmem:[#allocation6 + $0x128] sm:$0xff] %vm1285, %v5103
        %5197 = vst.msk [vmem:[#allocation6 + $0x190] sm:$0xff] %vm1285, %v5105
        %5198 = vst.msk [vmem:[#allocation6 + $0x1f8] sm:$0xff] %vm1285, %v5107
        %5199 = vst.msk [vmem:[#allocation6 + $0x260] sm:$0xff] %vm1285, %v5109
        %5200 = vst.msk [vmem:[#allocation6 + $0x2c8] sm:$0xff] %vm1285, %v5111
        %5201 = vst.msk [vmem:[#allocation6 + $0x330] sm:$0xff] %vm1285, %v5113
        %5202 = vst.msk [vmem:[#allocation6 + $0x398] sm:$0xff] %vm1285, %v5115
        %5203 = vst.msk [vmem:[#allocation6 + $0x400] sm:$0xff] %vm1285, %v5117
        %5204 = vst.msk [vmem:[#allocation6 + $0x468] sm:$0xff] %vm1285, %v5119
        %5205 = vst.msk [vmem:[#allocation6 + $0x4d0] sm:$0xff] %vm1285, %v5121
        %5206 = vst.msk [vmem:[#allocation6 + $0x538] sm:$0xff] %vm1285, %v5123
        %5207 = vst.msk [vmem:[#allocation6 + $0x5a0] sm:$0xff] %vm1285, %v5125
        %5208 = vst.msk [vmem:[#allocation6 + $0x608] sm:$0xff] %vm1285, %v5127
        %5209 = vst.msk [vmem:[#allocation6 + $0x670] sm:$0xff] %vm1285, %v5129
        %5210 = vst.msk [vmem:[#allocation6 + $0x6d8] sm:$0xff] %vm1285, %v5131
        %5211 = vst.msk [vmem:[#allocation6 + $0x740] sm:$0xff] %vm1285, %v5133
        %5212 = vst.msk [vmem:[#allocation6 + $0x7a8] sm:$0xff] %vm1285, %v5135
        %5213 = vst.msk [vmem:[#allocation6 + $0x810] sm:$0xff] %vm1285, %v5137
        %5214 = vst.msk [vmem:[#allocation6 + $0x878] sm:$0xff] %vm1285, %v5139
        %5215 = vst.msk [vmem:[#allocation6 + $0x8e0] sm:$0xff] %vm1285, %v5141
        %5216 = vst.msk [vmem:[#allocation6 + $0x948] sm:$0xff] %vm1285, %v5143
        %5217 = vst.msk [vmem:[#allocation6 + $0x9b0] sm:$0xff] %vm1285, %v5145
        %5218 = vst.msk [vmem:[#allocation6 + $0xa18] sm:$0xff] %vm1285, %v5147
        %5219 = vst.msk [vmem:[#allocation6 + $0xa80] sm:$0xff] %vm1285, %v5149
        %5220 = vst.msk [vmem:[#allocation6 + $0xae8] sm:$0xff] %vm1285, %v5151
        %5221 = vst.msk [vmem:[#allocation6 + $0xb50] sm:$0xff] %vm1285, %v5153
        %5222 = vst.msk [vmem:[#allocation6 + $0xbb8] sm:$0xff] %vm1285, %v5155
        %5223 = vst.msk [vmem:[#allocation6 + $0xc20] sm:$0xff] %vm1285, %v5157
        %5224 = vst.msk [vmem:[#allocation6 + $0xc88] sm:$0xff] %vm1285, %v5159
        %5225 = vst.msk [vmem:[#allocation6 + $0xcf0] sm:$0xff] %vm1285, %v5161
        %v5226 = vld [vmem:[%s4713 + $0x4] sm:$0xff]
        %v5227 = vld [vmem:[%s4713 + $0xc] sm:$0xff]
        %v5228 = vld [vmem:[%s4713 + $0x1c] sm:$0xff]
        %v5229 = vld [vmem:[%s4713 + $0x24] sm:$0xff]
        %v5230 = vld [vmem:[%s4713 + $0x34] sm:$0xff]
        %v5231 = vld [vmem:[%s4713 + $0x3c] sm:$0xff]
        %v5232 = vld [vmem:[%s4713 + $0x4c] sm:$0xff]
        %v5233 = vld [vmem:[%s4713 + $0x54] sm:$0xff]
        %v5234 = vld [vmem:[%s4713 + $0x64] sm:$0xff]
        %v5235 = vld [vmem:[%s4713 + $0x6c] sm:$0xff]
        %v5236 = vld [vmem:[%s4713 + $0x7c] sm:$0xff]
        %v5237 = vld [vmem:[%s4713 + $0x84] sm:$0xff]
        %v5238 = vld [vmem:[%s4713 + $0x94] sm:$0xff]
        %v5239 = vld [vmem:[%s4713 + $0x9c] sm:$0xff]
        %v5240 = vld [vmem:[%s4713 + $0xac] sm:$0xff]
        %v5241 = vld [vmem:[%s4713 + $0xb4] sm:$0xff]
        %v5242 = vld [vmem:[%s4713 + $0xc4] sm:$0xff]
        %v5243 = vld [vmem:[%s4713 + $0xcc] sm:$0xff]
        %v5244 = vld [vmem:[%s4713 + $0xdc] sm:$0xff]
        %v5245 = vld [vmem:[%s4713 + $0xe4] sm:$0xff]
        %v5246 = vld [vmem:[%s4713 + $0xf4] sm:$0xff]
        %v5247 = vld [vmem:[%s4713 + $0xfc] sm:$0xff]
        %v5248 = vld [vmem:[%s4713 + $0x10c] sm:$0xff]
        %v5249 = vld [vmem:[%s4713 + $0x114] sm:$0xff]
        %v5250 = vld [vmem:[%s4713 + $0x124] sm:$0xff]
        %v5251 = vld [vmem:[%s4713 + $0x12c] sm:$0xff]
        %v5252 = vld [vmem:[%s4713 + $0x13c] sm:$0xff]
        %v5253 = vld [vmem:[%s4713 + $0x144] sm:$0xff]
        %v5254 = vld [vmem:[%s4713 + $0x154] sm:$0xff]
        %v5255 = vld [vmem:[%s4713 + $0x15c] sm:$0xff]
        %v5256 = vld [vmem:[%s4713 + $0x16c] sm:$0xff]
        %v5257 = vld [vmem:[%s4713 + $0x174] sm:$0xff]
        %5258 = vst.msk [vmem:[#allocation6 + $0x60] sm:$0xff] %vm331, %v5226
        %5259 = vst.msk [vmem:[#allocation6 + $0xc8] sm:$0xff] %vm331, %v5227
        %5260 = vst.msk [vmem:[#allocation6 + $0x130] sm:$0xff] %vm331, %v5228
        %5261 = vst.msk [vmem:[#allocation6 + $0x198] sm:$0xff] %vm331, %v5229
        %5262 = vst.msk [vmem:[#allocation6 + $0x200] sm:$0xff] %vm331, %v5230
        %5263 = vst.msk [vmem:[#allocation6 + $0x268] sm:$0xff] %vm331, %v5231
        %5264 = vst.msk [vmem:[#allocation6 + $0x2d0] sm:$0xff] %vm331, %v5232
        %5265 = vst.msk [vmem:[#allocation6 + $0x338] sm:$0xff] %vm331, %v5233
        %5266 = vst.msk [vmem:[#allocation6 + $0x3a0] sm:$0xff] %vm331, %v5234
        %5267 = vst.msk [vmem:[#allocation6 + $0x408] sm:$0xff] %vm331, %v5235
        %5268 = vst.msk [vmem:[#allocation6 + $0x470] sm:$0xff] %vm331, %v5236
        %5269 = vst.msk [vmem:[#allocation6 + $0x4d8] sm:$0xff] %vm331, %v5237
        %5270 = vst.msk [vmem:[#allocation6 + $0x540] sm:$0xff] %vm331, %v5238
        %5271 = vst.msk [vmem:[#allocation6 + $0x5a8] sm:$0xff] %vm331, %v5239
        %5272 = vst.msk [vmem:[#allocation6 + $0x610] sm:$0xff] %vm331, %v5240
        %5273 = vst.msk [vmem:[#allocation6 + $0x678] sm:$0xff] %vm331, %v5241
        %5274 = vst.msk [vmem:[#allocation6 + $0x6e0] sm:$0xff] %vm331, %v5242
        %5275 = vst.msk [vmem:[#allocation6 + $0x748] sm:$0xff] %vm331, %v5243
        %5276 = vst.msk [vmem:[#allocation6 + $0x7b0] sm:$0xff] %vm331, %v5244
        %5277 = vst.msk [vmem:[#allocation6 + $0x818] sm:$0xff] %vm331, %v5245
        %5278 = vst.msk [vmem:[#allocation6 + $0x880] sm:$0xff] %vm331, %v5246
        %5279 = vst.msk [vmem:[#allocation6 + $0x8e8] sm:$0xff] %vm331, %v5247
        %5280 = vst.msk [vmem:[#allocation6 + $0x950] sm:$0xff] %vm331, %v5248
        %5281 = vst.msk [vmem:[#allocation6 + $0x9b8] sm:$0xff] %vm331, %v5249
        %5282 = vst.msk [vmem:[#allocation6 + $0xa20] sm:$0xff] %vm331, %v5250
        %5283 = vst.msk [vmem:[#allocation6 + $0xa88] sm:$0xff] %vm331, %v5251
        %5284 = vst.msk [vmem:[#allocation6 + $0xaf0] sm:$0xff] %vm331, %v5252
        %5285 = vst.msk [vmem:[#allocation6 + $0xb58] sm:$0xff] %vm331, %v5253
        %5286 = vst.msk [vmem:[#allocation6 + $0xbc0] sm:$0xff] %vm331, %v5254
        %5287 = vst.msk [vmem:[#allocation6 + $0xc28] sm:$0xff] %vm331, %v5255
        %5288 = vst.msk [vmem:[#allocation6 + $0xc90] sm:$0xff] %vm331, %v5256
        %5289 = vst.msk [vmem:[#allocation6 + $0xcf8] sm:$0xff] %vm331, %v5257
        %v5290 = vld [vmem:[#allocation5] sm:$0xff]
        %v5291 = vld [vmem:[#allocation5 + $0x8] sm:$0xff]
        %v5292 = vld [vmem:[#allocation5 + $0x10] sm:$0xff]
        %v5293 = vld [vmem:[#allocation5 + $0x18] sm:$0xff]
        %v5294 = vld [vmem:[#allocation5 + $0x20] sm:$0xff]
        %v5295 = vld [vmem:[#allocation5 + $0x28] sm:$0xff]
        %v5296 = vld [vmem:[#allocation5 + $0x30] sm:$0xff]
        %v5297 = vld [vmem:[#allocation5 + $0x38] sm:$0xff]
        %v5298 = vld [vmem:[#allocation5 + $0x40] sm:$0xff]
        %v5299 = vld [vmem:[#allocation5 + $0x48] sm:$0xff]
        %v5300 = vld [vmem:[#allocation5 + $0x50] sm:$0xff]
        %v5301 = vld [vmem:[#allocation5 + $0x58] sm:$0xff]
        %v5302 = vld [vmem:[#allocation5 + $0x60] sm:$0xff]
        %v5303 = vld [vmem:[#allocation5 + $0x68] sm:$0xff]
        %v5304 = vld [vmem:[#allocation5 + $0x70] sm:$0xff]
        %v5305 = vld [vmem:[#allocation5 + $0x78] sm:$0xff]
        %v5306 = vld [vmem:[#allocation5 + $0x80] sm:$0xff]
        %v5307 = vld [vmem:[#allocation5 + $0x88] sm:$0xff]
        %v5308 = vld [vmem:[#allocation5 + $0x90] sm:$0xff]
        %v5309 = vld [vmem:[#allocation5 + $0x98] sm:$0xff]
        %v5310 = vld [vmem:[#allocation5 + $0xa0] sm:$0xff]
        %v5311 = vld [vmem:[#allocation5 + $0xa8] sm:$0xff]
        %v5312 = vld [vmem:[#allocation5 + $0xb0] sm:$0xff]
        %v5313 = vld [vmem:[#allocation5 + $0xb8] sm:$0xff]
        %v5314 = vld [vmem:[#allocation5 + $0xc0] sm:$0xff]
        %v5315 = vld [vmem:[#allocation5 + $0xc8] sm:$0xff]
        %v5316 = vld [vmem:[#allocation5 + $0xd0] sm:$0xff]
        %v5317 = vld [vmem:[#allocation5 + $0xd8] sm:$0xff]
        %v5318 = vld [vmem:[#allocation5 + $0xe0] sm:$0xff]
        %v5319 = vld [vmem:[#allocation5 + $0xe8] sm:$0xff]
        %v5320 = vld [vmem:[#allocation5 + $0xf0] sm:$0xff]
        %v5321 = vld [vmem:[#allocation5 + $0xf8] sm:$0xff]
        %v5322 = vld [vmem:[#allocation5 + $0x100] sm:$0xff]
        %v5323 = vld [vmem:[#allocation5 + $0x108] sm:$0xff]
        %v5324 = vld [vmem:[#allocation5 + $0x110] sm:$0xff]
        %v5325 = vld [vmem:[#allocation5 + $0x118] sm:$0xff]
        %v5326 = vld [vmem:[#allocation5 + $0x120] sm:$0xff]
        %v5327 = vld [vmem:[#allocation5 + $0x128] sm:$0xff]
        %v5328 = vld [vmem:[#allocation5 + $0x130] sm:$0xff]
        %v5329 = vld [vmem:[#allocation5 + $0x138] sm:$0xff]
        %v5330 = vld [vmem:[#allocation5 + $0x140] sm:$0xff]
        %v5331 = vld [vmem:[#allocation5 + $0x148] sm:$0xff]
        %v5332 = vld [vmem:[#allocation5 + $0x150] sm:$0xff]
        %v5333 = vld [vmem:[#allocation5 + $0x158] sm:$0xff]
        %v5334 = vld [vmem:[#allocation5 + $0x160] sm:$0xff]
        %v5335 = vld [vmem:[#allocation5 + $0x168] sm:$0xff]
        %v5336 = vld [vmem:[#allocation5 + $0x170] sm:$0xff]
        %v5337 = vld [vmem:[#allocation5 + $0x178] sm:$0xff]
        %v5338 = vld [vmem:[#allocation5 + $0x180] sm:$0xff]
        %v5339 = vld [vmem:[#allocation5 + $0x188] sm:$0xff]
        %v5340 = vld [vmem:[#allocation5 + $0x190] sm:$0xff]
        %v5341 = vld [vmem:[#allocation5 + $0x198] sm:$0xff]
        %v5342 = vld [vmem:[#allocation5 + $0x1a0] sm:$0xff]
        %v5343 = vld [vmem:[#allocation5 + $0x1a8] sm:$0xff]
        %v5344 = vld [vmem:[#allocation5 + $0x1b0] sm:$0xff]
        %v5345 = vld [vmem:[#allocation5 + $0x1b8] sm:$0xff]
        %v5346 = vld [vmem:[#allocation5 + $0x1c0] sm:$0xff]
        %v5347 = vld [vmem:[#allocation5 + $0x1c8] sm:$0xff]
        %v5348 = vld [vmem:[#allocation5 + $0x1d0] sm:$0xff]
        %v5349 = vld [vmem:[#allocation5 + $0x1d8] sm:$0xff]
        %v5350 = vld [vmem:[#allocation5 + $0x1e0] sm:$0xff]
        %v5351 = vld [vmem:[#allocation5 + $0x1e8] sm:$0xff]
        %v5352 = vld [vmem:[#allocation5 + $0x1f0] sm:$0xff]
        %v5353 = vld [vmem:[#allocation5 + $0x1f8] sm:$0xff]
        %v5354 = vld [vmem:[#allocation5 + $0x200] sm:$0xff]
        %v5355 = vld [vmem:[#allocation5 + $0x208] sm:$0xff]
        %v5356 = vld [vmem:[#allocation5 + $0x210] sm:$0xff]
        %v5357 = vld [vmem:[#allocation5 + $0x218] sm:$0xff]
        %v5358 = vld [vmem:[#allocation5 + $0x220] sm:$0xff]
        %v5359 = vld [vmem:[#allocation5 + $0x228] sm:$0xff]
        %v5360 = vld [vmem:[#allocation5 + $0x230] sm:$0xff]
        %v5361 = vld [vmem:[#allocation5 + $0x238] sm:$0xff]
        %v5362 = vld [vmem:[#allocation5 + $0x240] sm:$0xff]
        %v5363 = vld [vmem:[#allocation5 + $0x248] sm:$0xff]
        %v5364 = vld [vmem:[#allocation5 + $0x250] sm:$0xff]
        %v5365 = vld [vmem:[#allocation5 + $0x258] sm:$0xff]
        %v5366 = vld [vmem:[#allocation5 + $0x260] sm:$0xff]
        %v5367 = vld [vmem:[#allocation5 + $0x268] sm:$0xff]
        %v5368 = vld [vmem:[#allocation5 + $0x270] sm:$0xff]
        %v5369 = vld [vmem:[#allocation5 + $0x278] sm:$0xff]
        %v5370 = vld [vmem:[#allocation5 + $0x280] sm:$0xff]
        %v5371 = vld [vmem:[#allocation5 + $0x288] sm:$0xff]
        %v5372 = vld [vmem:[#allocation5 + $0x290] sm:$0xff]
        %v5373 = vld [vmem:[#allocation5 + $0x298] sm:$0xff]
        %v5374 = vld [vmem:[#allocation5 + $0x2a0] sm:$0xff]
        %v5375 = vld [vmem:[#allocation5 + $0x2a8] sm:$0xff]
        %v5376 = vld [vmem:[#allocation5 + $0x2b0] sm:$0xff]
        %v5377 = vld [vmem:[#allocation5 + $0x2b8] sm:$0xff]
        %v5378 = vld [vmem:[#allocation5 + $0x2c0] sm:$0xff]
        %v5379 = vld [vmem:[#allocation5 + $0x2c8] sm:$0xff]
        %v5380 = vld [vmem:[#allocation5 + $0x2d0] sm:$0xff]
        %v5381 = vld [vmem:[#allocation5 + $0x2d8] sm:$0xff]
        %v5382 = vld [vmem:[#allocation5 + $0x2e0] sm:$0xff]
        %v5383 = vld [vmem:[#allocation5 + $0x2e8] sm:$0xff]
        %v5384 = vld [vmem:[#allocation5 + $0x2f0] sm:$0xff]
        %v5385 = vld [vmem:[#allocation5 + $0x2f8] sm:$0xff]
        %v5386 = vld [vmem:[#allocation5 + $0x300] sm:$0xff]
        %v5387 = vld [vmem:[#allocation5 + $0x308] sm:$0xff]
        %v5388 = vld [vmem:[#allocation5 + $0x310] sm:$0xff]
        %v5389 = vld [vmem:[#allocation5 + $0x318] sm:$0xff]
        %v5390 = vld [vmem:[#allocation5 + $0x320] sm:$0xff]
        %v5391 = vld [vmem:[#allocation5 + $0x328] sm:$0xff]
        %v5392 = vld [vmem:[#allocation5 + $0x330] sm:$0xff]
        %v5393 = vld [vmem:[#allocation5 + $0x338] sm:$0xff]
        %v5394 = vld [vmem:[#allocation5 + $0x340] sm:$0xff]
        %v5395 = vld [vmem:[#allocation5 + $0x348] sm:$0xff]
        %v5396 = vld [vmem:[#allocation5 + $0x350] sm:$0xff]
        %v5397 = vld [vmem:[#allocation5 + $0x358] sm:$0xff]
        %v5398 = vld [vmem:[#allocation5 + $0x360] sm:$0xff]
        %v5399 = vld [vmem:[#allocation5 + $0x368] sm:$0xff]
        %v5400 = vld [vmem:[#allocation5 + $0x370] sm:$0xff]
        %v5401 = vld [vmem:[#allocation5 + $0x378] sm:$0xff]
        %v5402 = vld [vmem:[#allocation5 + $0x380] sm:$0xff]
        %v5403 = vld [vmem:[#allocation5 + $0x388] sm:$0xff]
        %v5404 = vld [vmem:[#allocation5 + $0x390] sm:$0xff]
        %v5405 = vld [vmem:[#allocation5 + $0x398] sm:$0xff]
        %v5406 = vld [vmem:[#allocation5 + $0x3a0] sm:$0xff]
        %v5407 = vld [vmem:[#allocation5 + $0x3a8] sm:$0xff]
        %v5408 = vld [vmem:[#allocation5 + $0x3b0] sm:$0xff]
        %v5409 = vld [vmem:[#allocation5 + $0x3b8] sm:$0xff]
        %v5410 = vld [vmem:[#allocation5 + $0x3c0] sm:$0xff]
        %v5411 = vld [vmem:[#allocation5 + $0x3c8] sm:$0xff]
        %v5412 = vld [vmem:[#allocation5 + $0x3d0] sm:$0xff]
        %v5413 = vld [vmem:[#allocation5 + $0x3d8] sm:$0xff]
        %v5414 = vld [vmem:[#allocation5 + $0x3e0] sm:$0xff]
        %v5415 = vld [vmem:[#allocation5 + $0x3e8] sm:$0xff]
        %v5416 = vld [vmem:[#allocation5 + $0x3f0] sm:$0xff]
        %v5417 = vld [vmem:[#allocation5 + $0x3f8] sm:$0xff]
        %v5418 = vld [vmem:[#allocation5 + $0x400] sm:$0xff]
        %v5419 = vld [vmem:[#allocation5 + $0x408] sm:$0xff]
        %v5420 = vld [vmem:[#allocation5 + $0x410] sm:$0xff]
        %v5421 = vld [vmem:[#allocation5 + $0x418] sm:$0xff]
        %v5422 = vld [vmem:[#allocation5 + $0x420] sm:$0xff]
        %v5423 = vld [vmem:[#allocation5 + $0x428] sm:$0xff]
        %v5424 = vld [vmem:[#allocation5 + $0x430] sm:$0xff]
        %v5425 = vld [vmem:[#allocation5 + $0x438] sm:$0xff]
        %v5426 = vld [vmem:[#allocation5 + $0x440] sm:$0xff]
        %v5427 = vld [vmem:[#allocation5 + $0x448] sm:$0xff]
        %v5428 = vld [vmem:[#allocation5 + $0x450] sm:$0xff]
        %v5429 = vld [vmem:[#allocation5 + $0x458] sm:$0xff]
        %v5430 = vld [vmem:[#allocation5 + $0x460] sm:$0xff]
        %v5431 = vld [vmem:[#allocation5 + $0x468] sm:$0xff]
        %v5432 = vld [vmem:[#allocation5 + $0x470] sm:$0xff]
        %v5433 = vld [vmem:[#allocation5 + $0x478] sm:$0xff]
        %v5434 = vld [vmem:[#allocation5 + $0x480] sm:$0xff]
        %v5435 = vld [vmem:[#allocation5 + $0x488] sm:$0xff]
        %v5436 = vld [vmem:[#allocation5 + $0x490] sm:$0xff]
        %v5437 = vld [vmem:[#allocation5 + $0x498] sm:$0xff]
        %v5438 = vld [vmem:[#allocation5 + $0x4a0] sm:$0xff]
        %v5439 = vld [vmem:[#allocation5 + $0x4a8] sm:$0xff]
        %v5440 = vld [vmem:[#allocation5 + $0x4b0] sm:$0xff]
        %v5441 = vld [vmem:[#allocation5 + $0x4b8] sm:$0xff]
        %v5442 = vld [vmem:[#allocation5 + $0x4c0] sm:$0xff]
        %v5443 = vld [vmem:[#allocation5 + $0x4c8] sm:$0xff]
        %v5444 = vld [vmem:[#allocation5 + $0x4d0] sm:$0xff]
        %v5445 = vld [vmem:[#allocation5 + $0x4d8] sm:$0xff]
        %v5446 = vld [vmem:[#allocation5 + $0x4e0] sm:$0xff]
        %v5447 = vld [vmem:[#allocation5 + $0x4e8] sm:$0xff]
        %v5448 = vld [vmem:[#allocation5 + $0x4f0] sm:$0xff]
        %v5449 = vld [vmem:[#allocation5 + $0x4f8] sm:$0xff]
        %v5450 = vld [vmem:[%s3] sm:$0xff]
        %v5451 = vld [vmem:[%s3 + $0x8] sm:$0xff]
        %v5452 = vld [vmem:[%s3 + $0x10] sm:$0xff]
        %v5453 = vld [vmem:[%s3 + $0x18] sm:$0xff]
        %v5454 = vld [vmem:[%s3 + $0x20] sm:$0xff]
        %v5455 = vld [vmem:[%s3 + $0x28] sm:$0xff]
        %v5456 = vld [vmem:[%s3 + $0x30] sm:$0xff]
        %v5457 = vld [vmem:[%s3 + $0x38] sm:$0xff]
        %v5458 = vld [vmem:[%s3 + $0x40] sm:$0xff]
        %v5459 = vld [vmem:[%s3 + $0x48] sm:$0xff]
        %v5460 = vld [vmem:[%s3 + $0x50] sm:$0xff]
        %v5461 = vld [vmem:[%s3 + $0x58] sm:$0xff]
        %v5462 = vld [vmem:[%s3 + $0x60] sm:$0xff]
        %v5463 = vld [vmem:[%s3 + $0x68] sm:$0xff]
        %v5464 = vld [vmem:[%s3 + $0x70] sm:$0xff]
        %v5465 = vld [vmem:[%s3 + $0x78] sm:$0xff]
        %v5466 = vld [vmem:[%s3 + $0x80] sm:$0xff]
        %v5467 = vld [vmem:[%s3 + $0x88] sm:$0xff]
        %v5468 = vld [vmem:[%s3 + $0x90] sm:$0xff]
        %v5469 = vld [vmem:[%s3 + $0x98] sm:$0xff]
        %v5470 = vld [vmem:[%s3 + $0xa0] sm:$0xff]
        %v5471 = vld [vmem:[%s3 + $0xa8] sm:$0xff]
        %v5472 = vld [vmem:[%s3 + $0xb0] sm:$0xff]
        %v5473 = vld [vmem:[%s3 + $0xb8] sm:$0xff]
        %v5474 = vld [vmem:[%s3 + $0xc0] sm:$0xff]
        %v5475 = vld [vmem:[%s3 + $0xc8] sm:$0xff]
        %v5476 = vld [vmem:[%s3 + $0xd0] sm:$0xff]
        %v5477 = vld [vmem:[%s3 + $0xd8] sm:$0xff]
        %v5478 = vld [vmem:[%s3 + $0xe0] sm:$0xff]
        %v5479 = vld [vmem:[%s3 + $0xe8] sm:$0xff]
        %v5480 = vld [vmem:[%s3 + $0xf0] sm:$0xff]
        %v5481 = vld [vmem:[%s3 + $0xf8] sm:$0xff]
        %v5482 = vld [vmem:[%s3 + $0x100] sm:$0xff]
        %v5483 = vld [vmem:[%s3 + $0x108] sm:$0xff]
        %v5484 = vld [vmem:[%s3 + $0x110] sm:$0xff]
        %v5485 = vld [vmem:[%s3 + $0x118] sm:$0xff]
        %v5486 = vld [vmem:[%s3 + $0x120] sm:$0xff]
        %v5487 = vld [vmem:[%s3 + $0x128] sm:$0xff]
        %v5488 = vld [vmem:[%s3 + $0x130] sm:$0xff]
        %v5489 = vld [vmem:[%s3 + $0x138] sm:$0xff]
        %v5490 = vld [vmem:[%s3 + $0x140] sm:$0xff]
        %v5491 = vld [vmem:[%s3 + $0x148] sm:$0xff]
        %v5492 = vld [vmem:[%s3 + $0x150] sm:$0xff]
        %v5493 = vld [vmem:[%s3 + $0x158] sm:$0xff]
        %v5494 = vld [vmem:[%s3 + $0x160] sm:$0xff]
        %v5495 = vld [vmem:[%s3 + $0x168] sm:$0xff]
        %v5496 = vld [vmem:[%s3 + $0x170] sm:$0xff]
        %v5497 = vld [vmem:[%s3 + $0x178] sm:$0xff]
        %v5498 = vld [vmem:[%s3 + $0x180] sm:$0xff]
        %v5499 = vld [vmem:[%s3 + $0x188] sm:$0xff]
        %v5500 = vld [vmem:[%s3 + $0x190] sm:$0xff]
        %v5501 = vld [vmem:[%s3 + $0x198] sm:$0xff]
        %v5502 = vld [vmem:[%s3 + $0x1a0] sm:$0xff]
        %v5503 = vld [vmem:[%s3 + $0x1a8] sm:$0xff]
        %v5504 = vld [vmem:[%s3 + $0x1b0] sm:$0xff]
        %v5505 = vld [vmem:[%s3 + $0x1b8] sm:$0xff]
        %v5506 = vld [vmem:[%s3 + $0x1c0] sm:$0xff]
        %v5507 = vld [vmem:[%s3 + $0x1c8] sm:$0xff]
        %v5508 = vld [vmem:[%s3 + $0x1d0] sm:$0xff]
        %v5509 = vld [vmem:[%s3 + $0x1d8] sm:$0xff]
        %v5510 = vld [vmem:[%s3 + $0x1e0] sm:$0xff]
        %v5511 = vld [vmem:[%s3 + $0x1e8] sm:$0xff]
        %v5512 = vld [vmem:[%s3 + $0x1f0] sm:$0xff]
        %v5513 = vld [vmem:[%s3 + $0x1f8] sm:$0xff]
        %v5514 = vld [vmem:[%s3 + $0x200] sm:$0xff]
        %v5515 = vld [vmem:[%s3 + $0x208] sm:$0xff]
        %v5516 = vld [vmem:[%s3 + $0x210] sm:$0xff]
        %v5517 = vld [vmem:[%s3 + $0x218] sm:$0xff]
        %v5518 = vld [vmem:[%s3 + $0x220] sm:$0xff]
        %v5519 = vld [vmem:[%s3 + $0x228] sm:$0xff]
        %v5520 = vld [vmem:[%s3 + $0x230] sm:$0xff]
        %v5521 = vld [vmem:[%s3 + $0x238] sm:$0xff]
        %v5522 = vld [vmem:[%s4] sm:$0x1]
        %v5524 = vlaneseq
        %v5525 = vshrl.u32 %v5524, 7
        %v5526 = vsub.s32 0, %v5525
        %v5527 = vrot.slane %v5522, %v5526
        %v5530 = vsel %vm331, %v5294, 0
        %v5533 = vsel %vm331, %v5299, 0
        %v5536 = vsel %vm331, %v5304, 0
        %v5539 = vsel %vm331, %v5309, 0
        %v5542 = vsel %vm331, %v5314, 0
        %v5545 = vsel %vm331, %v5319, 0
        %v5548 = vsel %vm331, %v5324, 0
        %v5551 = vsel %vm331, %v5329, 0
        %v5554 = vsel %vm331, %v5334, 0
        %v5557 = vsel %vm331, %v5339, 0
        %v5560 = vsel %vm331, %v5344, 0
        %v5563 = vsel %vm331, %v5349, 0
        %v5566 = vsel %vm331, %v5354, 0
        %v5569 = vsel %vm331, %v5359, 0
        %v5572 = vsel %vm331, %v5364, 0
        %v5575 = vsel %vm331, %v5369, 0
        %v5578 = vsel %vm331, %v5374, 0
        %v5581 = vsel %vm331, %v5379, 0
        %v5584 = vsel %vm331, %v5384, 0
        %v5587 = vsel %vm331, %v5389, 0
        %v5590 = vsel %vm331, %v5394, 0
        %v5593 = vsel %vm331, %v5399, 0
        %v5596 = vsel %vm331, %v5404, 0
        %v5599 = vsel %vm331, %v5409, 0
        %v5602 = vsel %vm331, %v5414, 0
        %v5605 = vsel %vm331, %v5419, 0
        %v5608 = vsel %vm331, %v5424, 0
        %v5611 = vsel %vm331, %v5429, 0
        %v5614 = vsel %vm331, %v5434, 0
        %v5617 = vsel %vm331, %v5439, 0
        %v5620 = vsel %vm331, %v5444, 0
        %v5623 = vsel %vm331, %v5449, 0
        %5625 = vmatprep.subr.mxu0 0.0
        %5626 = vmatpush1.msra.mxu0 %v5465
        %5627 = vmatprep.subr.mxu0 0.0
        %5628 = vmatpush1.msra.mxu0 %v5464
        %5629 = vmatprep.subr.mxu0 0.0
        %5630 = vmatpush1.msra.mxu0 %v5463
        %5631 = vmatprep.subr.mxu0 0.0
        %5632 = vmatpush1.msra.mxu0 %v5462
        %5633 = vmatprep.subr.mxu0 0.0
        %5634 = vmatpush1.msra.mxu0 %v5461
        %5635 = vmatprep.subr.mxu0 0.0
        %5636 = vmatpush1.msra.mxu0 %v5460
        %5637 = vmatprep.subr.mxu0 0.0
        %5638 = vmatpush1.msra.mxu0 %v5459
        %5639 = vmatprep.subr.mxu0 0.0
        %5640 = vmatpush1.msra.mxu0 %v5458
        %5641 = vmatprep.subr.mxu0 0.0
        %5642 = vmatpush1.msra.mxu0 %v5457
        %5643 = vmatprep.subr.mxu0 0.0
        %5644 = vmatpush1.msra.mxu0 %v5456
        %5645 = vmatprep.subr.mxu0 0.0
        %5646 = vmatpush1.msra.mxu0 %v5455
        %5647 = vmatprep.subr.mxu0 0.0
        %5648 = vmatpush1.msra.mxu0 %v5454
        %5649 = vmatprep.subr.mxu0 0.0
        %5650 = vmatpush1.msra.mxu0 %v5453
        %5651 = vmatprep.subr.mxu0 0.0
        %5652 = vmatpush1.msra.mxu0 %v5452
        %5653 = vmatprep.subr.mxu0 0.0
        %5654 = vmatpush1.msra.mxu0 %v5451
        %5655 = vmatprep.subr.mxu0 0.0
        %5656 = vmatpush1.msra.mxu0 %v5450
        %5657 = vmatprep.subr.mxu0 0.0
        %5658 = vmatpush2.msra.mxu0 %v5481
        %5659 = vmatprep.subr.mxu0 0.0
        %5660 = vmatpush2.msra.mxu0 %v5480
        %5661 = vmatprep.subr.mxu0 0.0
        %5662 = vmatpush2.msra.mxu0 %v5479
        %5663 = vmatprep.subr.mxu0 0.0
        %5664 = vmatpush2.msra.mxu0 %v5478
        %5665 = vmatprep.subr.mxu0 0.0
        %5666 = vmatpush2.msra.mxu0 %v5477
        %5667 = vmatprep.subr.mxu0 0.0
        %5668 = vmatpush2.msra.mxu0 %v5476
        %5669 = vmatprep.subr.mxu0 0.0
        %5670 = vmatpush2.msra.mxu0 %v5475
        %5671 = vmatprep.subr.mxu0 0.0
        %5672 = vmatpush2.msra.mxu0 %v5474
        %5673 = vmatprep.subr.mxu0 0.0
        %5674 = vmatpush2.msra.mxu0 %v5473
        %5675 = vmatprep.subr.mxu0 0.0
        %5676 = vmatpush2.msra.mxu0 %v5472
        %5677 = vmatprep.subr.mxu0 0.0
        %5678 = vmatpush2.msra.mxu0 %v5471
        %5679 = vmatprep.subr.mxu0 0.0
        %5680 = vmatpush2.msra.mxu0 %v5470
        %5681 = vmatprep.subr.mxu0 0.0
        %5682 = vmatpush2.msra.mxu0 %v5469
        %5683 = vmatprep.subr.mxu0 0.0
        %5684 = vmatpush2.msra.mxu0 %v5468
        %5685 = vmatprep.subr.mxu0 0.0
        %5686 = vmatpush2.msra.mxu0 %v5467
        %5687 = vmatprep.subr.mxu0 0.0
        %5688 = vmatpush2.msra.mxu0 %v5466
        %5689 = vmatprep.mubr.f32.mxu0 %v5291
        %5690 = vmatmul.mubr.f32.gmra.mxu0 %v5290
        %v5691 = vpop.f32.mrf.mxu0
        %v5692 = vadd.f32 %v5527, %v5691
        %v5693 = vpop.f32.mrf.mxu0
        %5694 = vmatprep.mubr.f32.mxu0 %v5296
        %5695 = vmatmul.mubr.f32.gmra.mxu0 %v5295
        %v5696 = vpop.f32.mrf.mxu0
        %v5697 = vadd.f32 %v5527, %v5696
        %v5698 = vpop.f32.mrf.mxu0
        %5699 = vmatprep.mubr.f32.mxu0 %v5301
        %5700 = vmatmul.mubr.f32.gmra.mxu0 %v5300
        %v5701 = vpop.f32.mrf.mxu0
        %v5702 = vadd.f32 %v5527, %v5701
        %v5703 = vpop.f32.mrf.mxu0
        %5704 = vmatprep.mubr.f32.mxu0 %v5306
        %5705 = vmatmul.mubr.f32.gmra.mxu0 %v5305
        %v5706 = vpop.f32.mrf.mxu0
        %v5707 = vadd.f32 %v5527, %v5706
        %v5708 = vpop.f32.mrf.mxu0
        %5709 = vmatprep.mubr.f32.mxu0 %v5311
        %5710 = vmatmul.mubr.f32.gmra.mxu0 %v5310
        %v5711 = vpop.f32.mrf.mxu0
        %v5712 = vadd.f32 %v5527, %v5711
        %v5713 = vpop.f32.mrf.mxu0
        %5714 = vmatprep.mubr.f32.mxu0 %v5316
        %5715 = vmatmul.mubr.f32.gmra.mxu0 %v5315
        %v5716 = vpop.f32.mrf.mxu0
        %v5717 = vadd.f32 %v5527, %v5716
        %v5718 = vpop.f32.mrf.mxu0
        %5719 = vmatprep.mubr.f32.mxu0 %v5321
        %5720 = vmatmul.mubr.f32.gmra.mxu0 %v5320
        %v5721 = vpop.f32.mrf.mxu0
        %v5722 = vadd.f32 %v5527, %v5721
        %v5723 = vpop.f32.mrf.mxu0
        %5724 = vmatprep.mubr.f32.mxu0 %v5326
        %5725 = vmatmul.mubr.f32.gmra.mxu0 %v5325
        %v5726 = vpop.f32.mrf.mxu0
        %v5727 = vadd.f32 %v5527, %v5726
        %v5728 = vpop.f32.mrf.mxu0
        %5729 = vmatprep.mubr.f32.mxu0 %v5331
        %5730 = vmatmul.mubr.f32.gmra.mxu0 %v5330
        %v5731 = vpop.f32.mrf.mxu0
        %v5732 = vadd.f32 %v5527, %v5731
        %v5733 = vpop.f32.mrf.mxu0
        %5734 = vmatprep.mubr.f32.mxu0 %v5336
        %5735 = vmatmul.mubr.f32.gmra.mxu0 %v5335
        %v5736 = vpop.f32.mrf.mxu0
        %v5737 = vadd.f32 %v5527, %v5736
        %v5738 = vpop.f32.mrf.mxu0
        %5739 = vmatprep.mubr.f32.mxu0 %v5341
        %5740 = vmatmul.mubr.f32.gmra.mxu0 %v5340
        %v5741 = vpop.f32.mrf.mxu0
        %v5742 = vadd.f32 %v5527, %v5741
        %v5743 = vpop.f32.mrf.mxu0
        %5744 = vmatprep.mubr.f32.mxu0 %v5346
        %5745 = vmatmul.mubr.f32.gmra.mxu0 %v5345
        %v5746 = vpop.f32.mrf.mxu0
        %v5747 = vadd.f32 %v5527, %v5746
        %v5748 = vpop.f32.mrf.mxu0
        %5749 = vmatprep.mubr.f32.mxu0 %v5351
        %5750 = vmatmul.mubr.f32.gmra.mxu0 %v5350
        %v5751 = vpop.f32.mrf.mxu0
        %v5752 = vadd.f32 %v5527, %v5751
        %v5753 = vpop.f32.mrf.mxu0
        %5754 = vmatprep.mubr.f32.mxu0 %v5356
        %5755 = vmatmul.mubr.f32.gmra.mxu0 %v5355
        %v5756 = vpop.f32.mrf.mxu0
        %v5757 = vadd.f32 %v5527, %v5756
        %v5758 = vpop.f32.mrf.mxu0
        %5759 = vmatprep.mubr.f32.mxu0 %v5361
        %5760 = vmatmul.mubr.f32.gmra.mxu0 %v5360
        %v5761 = vpop.f32.mrf.mxu0
        %v5762 = vadd.f32 %v5527, %v5761
        %v5763 = vpop.f32.mrf.mxu0
        %5764 = vmatprep.mubr.f32.mxu0 %v5366
        %5765 = vmatmul.mubr.f32.gmra.mxu0 %v5365
        %v5766 = vpop.f32.mrf.mxu0
        %v5767 = vadd.f32 %v5527, %v5766
        %v5768 = vpop.f32.mrf.mxu0
        %5769 = vmatprep.mubr.f32.mxu0 %v5371
        %5770 = vmatmul.mubr.f32.gmra.mxu0 %v5370
        %v5771 = vpop.f32.mrf.mxu0
        %v5772 = vadd.f32 %v5527, %v5771
        %v5773 = vpop.f32.mrf.mxu0
        %5774 = vmatprep.mubr.f32.mxu0 %v5376
        %5775 = vmatmul.mubr.f32.gmra.mxu0 %v5375
        %v5776 = vpop.f32.mrf.mxu0
        %v5777 = vadd.f32 %v5527, %v5776
        %v5778 = vpop.f32.mrf.mxu0
        %5779 = vmatprep.mubr.f32.mxu0 %v5381
        %5780 = vmatmul.mubr.f32.gmra.mxu0 %v5380
        %v5781 = vpop.f32.mrf.mxu0
        %v5782 = vadd.f32 %v5527, %v5781
        %v5783 = vpop.f32.mrf.mxu0
        %5784 = vmatprep.mubr.f32.mxu0 %v5386
        %5785 = vmatmul.mubr.f32.gmra.mxu0 %v5385
        %v5786 = vpop.f32.mrf.mxu0
        %v5787 = vadd.f32 %v5527, %v5786
        %v5788 = vpop.f32.mrf.mxu0
        %5789 = vmatprep.mubr.f32.mxu0 %v5391
        %5790 = vmatmul.mubr.f32.gmra.mxu0 %v5390
        %v5791 = vpop.f32.mrf.mxu0
        %v5792 = vadd.f32 %v5527, %v5791
        %v5793 = vpop.f32.mrf.mxu0
        %5794 = vmatprep.mubr.f32.mxu0 %v5396
        %5795 = vmatmul.mubr.f32.gmra.mxu0 %v5395
        %v5796 = vpop.f32.mrf.mxu0
        %v5797 = vadd.f32 %v5527, %v5796
        %v5798 = vpop.f32.mrf.mxu0
        %5799 = vmatprep.mubr.f32.mxu0 %v5401
        %5800 = vmatmul.mubr.f32.gmra.mxu0 %v5400
        %v5801 = vpop.f32.mrf.mxu0
        %v5802 = vadd.f32 %v5527, %v5801
        %v5803 = vpop.f32.mrf.mxu0
        %5804 = vmatprep.mubr.f32.mxu0 %v5406
        %5805 = vmatmul.mubr.f32.gmra.mxu0 %v5405
        %v5806 = vpop.f32.mrf.mxu0
        %v5807 = vadd.f32 %v5527, %v5806
        %v5808 = vpop.f32.mrf.mxu0
        %5809 = vmatprep.mubr.f32.mxu0 %v5411
        %5810 = vmatmul.mubr.f32.gmra.mxu0 %v5410
        %v5811 = vpop.f32.mrf.mxu0
        %v5812 = vadd.f32 %v5527, %v5811
        %v5813 = vpop.f32.mrf.mxu0
        %5814 = vmatprep.mubr.f32.mxu0 %v5416
        %5815 = vmatmul.mubr.f32.gmra.mxu0 %v5415
        %v5816 = vpop.f32.mrf.mxu0
        %v5817 = vadd.f32 %v5527, %v5816
        %v5818 = vpop.f32.mrf.mxu0
        %5819 = vmatprep.mubr.f32.mxu0 %v5421
        %5820 = vmatmul.mubr.f32.gmra.mxu0 %v5420
        %v5821 = vpop.f32.mrf.mxu0
        %v5822 = vadd.f32 %v5527, %v5821
        %v5823 = vpop.f32.mrf.mxu0
        %5824 = vmatprep.mubr.f32.mxu0 %v5426
        %5825 = vmatmul.mubr.f32.gmra.mxu0 %v5425
        %v5826 = vpop.f32.mrf.mxu0
        %v5827 = vadd.f32 %v5527, %v5826
        %v5828 = vpop.f32.mrf.mxu0
        %5829 = vmatprep.mubr.f32.mxu0 %v5431
        %5830 = vmatmul.mubr.f32.gmra.mxu0 %v5430
        %v5831 = vpop.f32.mrf.mxu0
        %v5832 = vadd.f32 %v5527, %v5831
        %v5833 = vpop.f32.mrf.mxu0
        %5834 = vmatprep.mubr.f32.mxu0 %v5436
        %5835 = vmatmul.mubr.f32.gmra.mxu0 %v5435
        %v5836 = vpop.f32.mrf.mxu0
        %v5837 = vadd.f32 %v5527, %v5836
        %v5838 = vpop.f32.mrf.mxu0
        %5839 = vmatprep.mubr.f32.mxu0 %v5441
        %5840 = vmatmul.mubr.f32.gmra.mxu0 %v5440
        %v5841 = vpop.f32.mrf.mxu0
        %v5842 = vadd.f32 %v5527, %v5841
        %v5843 = vpop.f32.mrf.mxu0
        %5844 = vmatprep.mubr.f32.mxu0 %v5446
        %5845 = vmatmul.mubr.f32.gmra.mxu0 %v5445
        %v5846 = vpop.f32.mrf.mxu0
        %v5847 = vadd.f32 %v5527, %v5846
        %v5848 = vpop.f32.mrf.mxu0
        %5849 = vdwg.mxu0
        %5850 = vmatprep.subr.mxu0 0.0
        %5851 = vmatpush1.msra.mxu0 %v5497
        %5852 = vmatprep.subr.mxu0 0.0
        %5853 = vmatpush1.msra.mxu0 %v5496
        %5854 = vmatprep.subr.mxu0 0.0
        %5855 = vmatpush1.msra.mxu0 %v5495
        %5856 = vmatprep.subr.mxu0 0.0
        %5857 = vmatpush1.msra.mxu0 %v5494
        %5858 = vmatprep.subr.mxu0 0.0
        %5859 = vmatpush1.msra.mxu0 %v5493
        %5860 = vmatprep.subr.mxu0 0.0
        %5861 = vmatpush1.msra.mxu0 %v5492
        %5862 = vmatprep.subr.mxu0 0.0
        %5863 = vmatpush1.msra.mxu0 %v5491
        %5864 = vmatprep.subr.mxu0 0.0
        %5865 = vmatpush1.msra.mxu0 %v5490
        %5866 = vmatprep.subr.mxu0 0.0
        %5867 = vmatpush1.msra.mxu0 %v5489
        %5868 = vmatprep.subr.mxu0 0.0
        %5869 = vmatpush1.msra.mxu0 %v5488
        %5870 = vmatprep.subr.mxu0 0.0
        %5871 = vmatpush1.msra.mxu0 %v5487
        %5872 = vmatprep.subr.mxu0 0.0
        %5873 = vmatpush1.msra.mxu0 %v5486
        %5874 = vmatprep.subr.mxu0 0.0
        %5875 = vmatpush1.msra.mxu0 %v5485
        %5876 = vmatprep.subr.mxu0 0.0
        %5877 = vmatpush1.msra.mxu0 %v5484
        %5878 = vmatprep.subr.mxu0 0.0
        %5879 = vmatpush1.msra.mxu0 %v5483
        %5880 = vmatprep.subr.mxu0 0.0
        %5881 = vmatpush1.msra.mxu0 %v5482
        %5882 = vmatprep.subr.mxu0 0.0
        %5883 = vmatpush2.msra.mxu0 %v5513
        %5884 = vmatprep.subr.mxu0 0.0
        %5885 = vmatpush2.msra.mxu0 %v5512
        %5886 = vmatprep.subr.mxu0 0.0
        %5887 = vmatpush2.msra.mxu0 %v5511
        %5888 = vmatprep.subr.mxu0 0.0
        %5889 = vmatpush2.msra.mxu0 %v5510
        %5890 = vmatprep.subr.mxu0 0.0
        %5891 = vmatpush2.msra.mxu0 %v5509
        %5892 = vmatprep.subr.mxu0 0.0
        %5893 = vmatpush2.msra.mxu0 %v5508
        %5894 = vmatprep.subr.mxu0 0.0
        %5895 = vmatpush2.msra.mxu0 %v5507
        %5896 = vmatprep.subr.mxu0 0.0
        %5897 = vmatpush2.msra.mxu0 %v5506
        %5898 = vmatprep.subr.mxu0 0.0
        %5899 = vmatpush2.msra.mxu0 %v5505
        %5900 = vmatprep.subr.mxu0 0.0
        %5901 = vmatpush2.msra.mxu0 %v5504
        %5902 = vmatprep.subr.mxu0 0.0
        %5903 = vmatpush2.msra.mxu0 %v5503
        %5904 = vmatprep.subr.mxu0 0.0
        %5905 = vmatpush2.msra.mxu0 %v5502
        %5906 = vmatprep.subr.mxu0 0.0
        %5907 = vmatpush2.msra.mxu0 %v5501
        %5908 = vmatprep.subr.mxu0 0.0
        %5909 = vmatpush2.msra.mxu0 %v5500
        %5910 = vmatprep.subr.mxu0 0.0
        %5911 = vmatpush2.msra.mxu0 %v5499
        %5912 = vmatprep.subr.mxu0 0.0
        %5913 = vmatpush2.msra.mxu0 %v5498
        %5914 = vmatprep.mubr.f32.mxu0 %v5293
        %5915 = vmatmul.mubr.f32.gmra.mxu0 %v5292
        %v5916 = vpop.f32.mrf.mxu0
        %v5917 = vadd.f32 %v5692, %v5916
        %v5918 = vpop.f32.mrf.mxu0
        %5919 = vmatprep.mubr.f32.mxu0 %v5298
        %5920 = vmatmul.mubr.f32.gmra.mxu0 %v5297
        %v5921 = vpop.f32.mrf.mxu0
        %v5922 = vadd.f32 %v5697, %v5921
        %v5923 = vpop.f32.mrf.mxu0
        %5924 = vmatprep.mubr.f32.mxu0 %v5303
        %5925 = vmatmul.mubr.f32.gmra.mxu0 %v5302
        %v5926 = vpop.f32.mrf.mxu0
        %v5927 = vadd.f32 %v5702, %v5926
        %v5928 = vpop.f32.mrf.mxu0
        %5929 = vmatprep.mubr.f32.mxu0 %v5308
        %5930 = vmatmul.mubr.f32.gmra.mxu0 %v5307
        %v5931 = vpop.f32.mrf.mxu0
        %v5932 = vadd.f32 %v5707, %v5931
        %v5933 = vpop.f32.mrf.mxu0
        %5934 = vmatprep.mubr.f32.mxu0 %v5313
        %5935 = vmatmul.mubr.f32.gmra.mxu0 %v5312
        %v5936 = vpop.f32.mrf.mxu0
        %v5937 = vadd.f32 %v5712, %v5936
        %v5938 = vpop.f32.mrf.mxu0
        %5939 = vmatprep.mubr.f32.mxu0 %v5318
        %5940 = vmatmul.mubr.f32.gmra.mxu0 %v5317
        %v5941 = vpop.f32.mrf.mxu0
        %v5942 = vadd.f32 %v5717, %v5941
        %v5943 = vpop.f32.mrf.mxu0
        %5944 = vmatprep.mubr.f32.mxu0 %v5323
        %5945 = vmatmul.mubr.f32.gmra.mxu0 %v5322
        %v5946 = vpop.f32.mrf.mxu0
        %v5947 = vadd.f32 %v5722, %v5946
        %v5948 = vpop.f32.mrf.mxu0
        %5949 = vmatprep.mubr.f32.mxu0 %v5328
        %5950 = vmatmul.mubr.f32.gmra.mxu0 %v5327
        %v5951 = vpop.f32.mrf.mxu0
        %v5952 = vadd.f32 %v5727, %v5951
        %v5953 = vpop.f32.mrf.mxu0
        %5954 = vmatprep.mubr.f32.mxu0 %v5333
        %5955 = vmatmul.mubr.f32.gmra.mxu0 %v5332
        %v5956 = vpop.f32.mrf.mxu0
        %v5957 = vadd.f32 %v5732, %v5956
        %v5958 = vpop.f32.mrf.mxu0
        %5959 = vmatprep.mubr.f32.mxu0 %v5338
        %5960 = vmatmul.mubr.f32.gmra.mxu0 %v5337
        %v5961 = vpop.f32.mrf.mxu0
        %v5962 = vadd.f32 %v5737, %v5961
        %v5963 = vpop.f32.mrf.mxu0
        %5964 = vmatprep.mubr.f32.mxu0 %v5343
        %5965 = vmatmul.mubr.f32.gmra.mxu0 %v5342
        %v5966 = vpop.f32.mrf.mxu0
        %v5967 = vadd.f32 %v5742, %v5966
        %v5968 = vpop.f32.mrf.mxu0
        %5969 = vmatprep.mubr.f32.mxu0 %v5348
        %5970 = vmatmul.mubr.f32.gmra.mxu0 %v5347
        %v5971 = vpop.f32.mrf.mxu0
        %v5972 = vadd.f32 %v5747, %v5971
        %v5973 = vpop.f32.mrf.mxu0
        %5974 = vmatprep.mubr.f32.mxu0 %v5353
        %5975 = vmatmul.mubr.f32.gmra.mxu0 %v5352
        %v5976 = vpop.f32.mrf.mxu0
        %v5977 = vadd.f32 %v5752, %v5976
        %v5978 = vpop.f32.mrf.mxu0
        %5979 = vmatprep.mubr.f32.mxu0 %v5358
        %5980 = vmatmul.mubr.f32.gmra.mxu0 %v5357
        %v5981 = vpop.f32.mrf.mxu0
        %v5982 = vadd.f32 %v5757, %v5981
        %v5983 = vpop.f32.mrf.mxu0
        %5984 = vmatprep.mubr.f32.mxu0 %v5363
        %5985 = vmatmul.mubr.f32.gmra.mxu0 %v5362
        %v5986 = vpop.f32.mrf.mxu0
        %v5987 = vadd.f32 %v5762, %v5986
        %v5988 = vpop.f32.mrf.mxu0
        %5989 = vmatprep.mubr.f32.mxu0 %v5368
        %5990 = vmatmul.mubr.f32.gmra.mxu0 %v5367
        %v5991 = vpop.f32.mrf.mxu0
        %v5992 = vadd.f32 %v5767, %v5991
        %v5993 = vpop.f32.mrf.mxu0
        %5994 = vmatprep.mubr.f32.mxu0 %v5373
        %5995 = vmatmul.mubr.f32.gmra.mxu0 %v5372
        %v5996 = vpop.f32.mrf.mxu0
        %v5997 = vadd.f32 %v5772, %v5996
        %v5998 = vpop.f32.mrf.mxu0
        %5999 = vmatprep.mubr.f32.mxu0 %v5378
        %6000 = vmatmul.mubr.f32.gmra.mxu0 %v5377
        %v6001 = vpop.f32.mrf.mxu0
        %v6002 = vadd.f32 %v5777, %v6001
        %v6003 = vpop.f32.mrf.mxu0
        %6004 = vmatprep.mubr.f32.mxu0 %v5383
        %6005 = vmatmul.mubr.f32.gmra.mxu0 %v5382
        %v6006 = vpop.f32.mrf.mxu0
        %v6007 = vadd.f32 %v5782, %v6006
        %v6008 = vpop.f32.mrf.mxu0
        %6009 = vmatprep.mubr.f32.mxu0 %v5388
        %6010 = vmatmul.mubr.f32.gmra.mxu0 %v5387
        %v6011 = vpop.f32.mrf.mxu0
        %v6012 = vadd.f32 %v5787, %v6011
        %v6013 = vpop.f32.mrf.mxu0
        %6014 = vmatprep.mubr.f32.mxu0 %v5393
        %6015 = vmatmul.mubr.f32.gmra.mxu0 %v5392
        %v6016 = vpop.f32.mrf.mxu0
        %v6017 = vadd.f32 %v5792, %v6016
        %v6018 = vpop.f32.mrf.mxu0
        %6019 = vmatprep.mubr.f32.mxu0 %v5398
        %6020 = vmatmul.mubr.f32.gmra.mxu0 %v5397
        %v6021 = vpop.f32.mrf.mxu0
        %v6022 = vadd.f32 %v5797, %v6021
        %v6023 = vpop.f32.mrf.mxu0
        %6024 = vmatprep.mubr.f32.mxu0 %v5403
        %6025 = vmatmul.mubr.f32.gmra.mxu0 %v5402
        %v6026 = vpop.f32.mrf.mxu0
        %v6027 = vadd.f32 %v5802, %v6026
        %v6028 = vpop.f32.mrf.mxu0
        %6029 = vmatprep.mubr.f32.mxu0 %v5408
        %6030 = vmatmul.mubr.f32.gmra.mxu0 %v5407
        %v6031 = vpop.f32.mrf.mxu0
        %v6032 = vadd.f32 %v5807, %v6031
        %v6033 = vpop.f32.mrf.mxu0
        %6034 = vmatprep.mubr.f32.mxu0 %v5413
        %6035 = vmatmul.mubr.f32.gmra.mxu0 %v5412
        %v6036 = vpop.f32.mrf.mxu0
        %v6037 = vadd.f32 %v5812, %v6036
        %v6038 = vpop.f32.mrf.mxu0
        %6039 = vmatprep.mubr.f32.mxu0 %v5418
        %6040 = vmatmul.mubr.f32.gmra.mxu0 %v5417
        %v6041 = vpop.f32.mrf.mxu0
        %v6042 = vadd.f32 %v5817, %v6041
        %v6043 = vpop.f32.mrf.mxu0
        %6044 = vmatprep.mubr.f32.mxu0 %v5423
        %6045 = vmatmul.mubr.f32.gmra.mxu0 %v5422
        %v6046 = vpop.f32.mrf.mxu0
        %v6047 = vadd.f32 %v5822, %v6046
        %v6048 = vpop.f32.mrf.mxu0
        %6049 = vmatprep.mubr.f32.mxu0 %v5428
        %6050 = vmatmul.mubr.f32.gmra.mxu0 %v5427
        %v6051 = vpop.f32.mrf.mxu0
        %v6052 = vadd.f32 %v5827, %v6051
        %v6053 = vpop.f32.mrf.mxu0
        %6054 = vmatprep.mubr.f32.mxu0 %v5433
        %6055 = vmatmul.mubr.f32.gmra.mxu0 %v5432
        %v6056 = vpop.f32.mrf.mxu0
        %v6057 = vadd.f32 %v5832, %v6056
        %v6058 = vpop.f32.mrf.mxu0
        %6059 = vmatprep.mubr.f32.mxu0 %v5438
        %6060 = vmatmul.mubr.f32.gmra.mxu0 %v5437
        %v6061 = vpop.f32.mrf.mxu0
        %v6062 = vadd.f32 %v5837, %v6061
        %v6063 = vpop.f32.mrf.mxu0
        %6064 = vmatprep.mubr.f32.mxu0 %v5443
        %6065 = vmatmul.mubr.f32.gmra.mxu0 %v5442
        %v6066 = vpop.f32.mrf.mxu0
        %v6067 = vadd.f32 %v5842, %v6066
        %v6068 = vpop.f32.mrf.mxu0
        %6069 = vmatprep.mubr.f32.mxu0 %v5448
        %6070 = vmatmul.mubr.f32.gmra.mxu0 %v5447
        %v6071 = vpop.f32.mrf.mxu0
        %v6072 = vadd.f32 %v5847, %v6071
        %v6073 = vpop.f32.mrf.mxu0
        %6074 = vdwg.mxu0
        %6075 = vmatprep.subr.mxu0 0.0
        %6076 = vmatpush1.msra.mxu0 0.0
        %6077 = vmatprep.subr.mxu0 0.0
        %6078 = vmatpush1.msra.mxu0 0.0
        %6079 = vmatprep.subr.mxu0 0.0
        %6080 = vmatpush1.msra.mxu0 0.0
        %6081 = vmatprep.subr.mxu0 0.0
        %6082 = vmatpush1.msra.mxu0 0.0
        %6083 = vmatprep.subr.mxu0 0.0
        %6084 = vmatpush1.msra.mxu0 0.0
        %6085 = vmatprep.subr.mxu0 0.0
        %6086 = vmatpush1.msra.mxu0 0.0
        %6087 = vmatprep.subr.mxu0 0.0
        %6088 = vmatpush1.msra.mxu0 0.0
        %6089 = vmatprep.subr.mxu0 0.0
        %6090 = vmatpush1.msra.mxu0 0.0
        %6091 = vmatprep.subr.mxu0 0.0
        %6092 = vmatpush1.msra.mxu0 %v5521
        %6093 = vmatprep.subr.mxu0 0.0
        %6094 = vmatpush1.msra.mxu0 %v5520
        %6095 = vmatprep.subr.mxu0 0.0
        %6096 = vmatpush1.msra.mxu0 %v5519
        %6097 = vmatprep.subr.mxu0 0.0
        %6098 = vmatpush1.msra.mxu0 %v5518
        %6099 = vmatprep.subr.mxu0 0.0
        %6100 = vmatpush1.msra.mxu0 %v5517
        %6101 = vmatprep.subr.mxu0 0.0
        %6102 = vmatpush1.msra.mxu0 %v5516
        %6103 = vmatprep.subr.mxu0 0.0
        %6104 = vmatpush1.msra.mxu0 %v5515
        %6105 = vmatprep.subr.mxu0 0.0
        %6106 = vmatpush1.msra.mxu0 %v5514
        %6107 = vmatprep.subr.mxu0 0.0
        %6108 = vmatpush2.msra.mxu0 0.0
        %6109 = vmatprep.subr.mxu0 0.0
        %6110 = vmatpush2.msra.mxu0 0.0
        %6111 = vmatprep.subr.mxu0 0.0
        %6112 = vmatpush2.msra.mxu0 0.0
        %6113 = vmatprep.subr.mxu0 0.0
        %6114 = vmatpush2.msra.mxu0 0.0
        %6115 = vmatprep.subr.mxu0 0.0
        %6116 = vmatpush2.msra.mxu0 0.0
        %6117 = vmatprep.subr.mxu0 0.0
        %6118 = vmatpush2.msra.mxu0 0.0
        %6119 = vmatprep.subr.mxu0 0.0
        %6120 = vmatpush2.msra.mxu0 0.0
        %6121 = vmatprep.subr.mxu0 0.0
        %6122 = vmatpush2.msra.mxu0 0.0
        %6123 = vmatprep.subr.mxu0 0.0
        %6124 = vmatpush2.msra.mxu0 0.0
        %6125 = vmatprep.subr.mxu0 0.0
        %6126 = vmatpush2.msra.mxu0 0.0
        %6127 = vmatprep.subr.mxu0 0.0
        %6128 = vmatpush2.msra.mxu0 0.0
        %6129 = vmatprep.subr.mxu0 0.0
        %6130 = vmatpush2.msra.mxu0 0.0
        %6131 = vmatprep.subr.mxu0 0.0
        %6132 = vmatpush2.msra.mxu0 0.0
        %6133 = vmatprep.subr.mxu0 0.0
        %6134 = vmatpush2.msra.mxu0 0.0
        %6135 = vmatprep.subr.mxu0 0.0
        %6136 = vmatpush2.msra.mxu0 0.0
        %6137 = vmatprep.subr.mxu0 0.0
        %6138 = vmatpush2.msra.mxu0 0.0
        %6139 = vmatprep.mubr.f32.mxu0 0.0
        %6140 = vmatmul.mubr.f32.gmra.mxu0 %v5530
        %v6141 = vpop.f32.mrf.mxu0
        %v6142 = vadd.f32 %v5917, %v6141
        %v6143 = vpop.f32.mrf.mxu0
        %6144 = vmatprep.mubr.f32.mxu0 0.0
        %6145 = vmatmul.mubr.f32.gmra.mxu0 %v5533
        %v6146 = vpop.f32.mrf.mxu0
        %v6147 = vadd.f32 %v5922, %v6146
        %v6148 = vpop.f32.mrf.mxu0
        %6149 = vmatprep.mubr.f32.mxu0 0.0
        %6150 = vmatmul.mubr.f32.gmra.mxu0 %v5536
        %v6151 = vpop.f32.mrf.mxu0
        %v6152 = vadd.f32 %v5927, %v6151
        %v6153 = vpop.f32.mrf.mxu0
        %6154 = vmatprep.mubr.f32.mxu0 0.0
        %6155 = vmatmul.mubr.f32.gmra.mxu0 %v5539
        %v6156 = vpop.f32.mrf.mxu0
        %v6157 = vadd.f32 %v5932, %v6156
        %v6158 = vpop.f32.mrf.mxu0
        %6159 = vmatprep.mubr.f32.mxu0 0.0
        %6160 = vmatmul.mubr.f32.gmra.mxu0 %v5542
        %v6161 = vpop.f32.mrf.mxu0
        %v6162 = vadd.f32 %v5937, %v6161
        %v6163 = vpop.f32.mrf.mxu0
        %6164 = vmatprep.mubr.f32.mxu0 0.0
        %6165 = vmatmul.mubr.f32.gmra.mxu0 %v5545
        %v6166 = vpop.f32.mrf.mxu0
        %v6167 = vadd.f32 %v5942, %v6166
        %v6168 = vpop.f32.mrf.mxu0
        %6169 = vmatprep.mubr.f32.mxu0 0.0
        %6170 = vmatmul.mubr.f32.gmra.mxu0 %v5548
        %v6171 = vpop.f32.mrf.mxu0
        %v6172 = vadd.f32 %v5947, %v6171
        %v6173 = vpop.f32.mrf.mxu0
        %6174 = vmatprep.mubr.f32.mxu0 0.0
        %6175 = vmatmul.mubr.f32.gmra.mxu0 %v5551
        %v6176 = vpop.f32.mrf.mxu0
        %v6177 = vadd.f32 %v5952, %v6176
        %v6178 = vpop.f32.mrf.mxu0
        %6179 = vmatprep.mubr.f32.mxu0 0.0
        %6180 = vmatmul.mubr.f32.gmra.mxu0 %v5554
        %v6181 = vpop.f32.mrf.mxu0
        %v6182 = vadd.f32 %v5957, %v6181
        %v6183 = vpop.f32.mrf.mxu0
        %6184 = vmatprep.mubr.f32.mxu0 0.0
        %6185 = vmatmul.mubr.f32.gmra.mxu0 %v5557
        %v6186 = vpop.f32.mrf.mxu0
        %v6187 = vadd.f32 %v5962, %v6186
        %v6188 = vpop.f32.mrf.mxu0
        %6189 = vmatprep.mubr.f32.mxu0 0.0
        %6190 = vmatmul.mubr.f32.gmra.mxu0 %v5560
        %v6191 = vpop.f32.mrf.mxu0
        %v6192 = vadd.f32 %v5967, %v6191
        %v6193 = vpop.f32.mrf.mxu0
        %6194 = vmatprep.mubr.f32.mxu0 0.0
        %6195 = vmatmul.mubr.f32.gmra.mxu0 %v5563
        %v6196 = vpop.f32.mrf.mxu0
        %v6197 = vadd.f32 %v5972, %v6196
        %v6198 = vpop.f32.mrf.mxu0
        %6199 = vmatprep.mubr.f32.mxu0 0.0
        %6200 = vmatmul.mubr.f32.gmra.mxu0 %v5566
        %v6201 = vpop.f32.mrf.mxu0
        %v6202 = vadd.f32 %v5977, %v6201
        %v6203 = vpop.f32.mrf.mxu0
        %6204 = vmatprep.mubr.f32.mxu0 0.0
        %6205 = vmatmul.mubr.f32.gmra.mxu0 %v5569
        %v6206 = vpop.f32.mrf.mxu0
        %v6207 = vadd.f32 %v5982, %v6206
        %v6208 = vpop.f32.mrf.mxu0
        %6209 = vmatprep.mubr.f32.mxu0 0.0
        %6210 = vmatmul.mubr.f32.gmra.mxu0 %v5572
        %v6211 = vpop.f32.mrf.mxu0
        %v6212 = vadd.f32 %v5987, %v6211
        %v6213 = vpop.f32.mrf.mxu0
        %6214 = vmatprep.mubr.f32.mxu0 0.0
        %6215 = vmatmul.mubr.f32.gmra.mxu0 %v5575
        %v6216 = vpop.f32.mrf.mxu0
        %v6217 = vadd.f32 %v5992, %v6216
        %v6218 = vpop.f32.mrf.mxu0
        %6219 = vmatprep.mubr.f32.mxu0 0.0
        %6220 = vmatmul.mubr.f32.gmra.mxu0 %v5578
        %v6221 = vpop.f32.mrf.mxu0
        %v6222 = vadd.f32 %v5997, %v6221
        %v6223 = vpop.f32.mrf.mxu0
        %6224 = vmatprep.mubr.f32.mxu0 0.0
        %6225 = vmatmul.mubr.f32.gmra.mxu0 %v5581
        %v6226 = vpop.f32.mrf.mxu0
        %v6227 = vadd.f32 %v6002, %v6226
        %v6228 = vpop.f32.mrf.mxu0
        %6229 = vmatprep.mubr.f32.mxu0 0.0
        %6230 = vmatmul.mubr.f32.gmra.mxu0 %v5584
        %v6231 = vpop.f32.mrf.mxu0
        %v6232 = vadd.f32 %v6007, %v6231
        %v6233 = vpop.f32.mrf.mxu0
        %6234 = vmatprep.mubr.f32.mxu0 0.0
        %6235 = vmatmul.mubr.f32.gmra.mxu0 %v5587
        %v6236 = vpop.f32.mrf.mxu0
        %v6237 = vadd.f32 %v6012, %v6236
        %v6238 = vpop.f32.mrf.mxu0
        %6239 = vmatprep.mubr.f32.mxu0 0.0
        %6240 = vmatmul.mubr.f32.gmra.mxu0 %v5590
        %v6241 = vpop.f32.mrf.mxu0
        %v6242 = vadd.f32 %v6017, %v6241
        %v6243 = vpop.f32.mrf.mxu0
        %6244 = vmatprep.mubr.f32.mxu0 0.0
        %6245 = vmatmul.mubr.f32.gmra.mxu0 %v5593
        %v6246 = vpop.f32.mrf.mxu0
        %v6247 = vadd.f32 %v6022, %v6246
        %v6248 = vpop.f32.mrf.mxu0
        %6249 = vmatprep.mubr.f32.mxu0 0.0
        %6250 = vmatmul.mubr.f32.gmra.mxu0 %v5596
        %v6251 = vpop.f32.mrf.mxu0
        %v6252 = vadd.f32 %v6027, %v6251
        %v6253 = vpop.f32.mrf.mxu0
        %6254 = vmatprep.mubr.f32.mxu0 0.0
        %6255 = vmatmul.mubr.f32.gmra.mxu0 %v5599
        %v6256 = vpop.f32.mrf.mxu0
        %v6257 = vadd.f32 %v6032, %v6256
        %v6258 = vpop.f32.mrf.mxu0
        %6259 = vmatprep.mubr.f32.mxu0 0.0
        %6260 = vmatmul.mubr.f32.gmra.mxu0 %v5602
        %v6261 = vpop.f32.mrf.mxu0
        %v6262 = vadd.f32 %v6037, %v6261
        %v6263 = vpop.f32.mrf.mxu0
        %6264 = vmatprep.mubr.f32.mxu0 0.0
        %6265 = vmatmul.mubr.f32.gmra.mxu0 %v5605
        %v6266 = vpop.f32.mrf.mxu0
        %v6267 = vadd.f32 %v6042, %v6266
        %v6268 = vpop.f32.mrf.mxu0
        %6269 = vmatprep.mubr.f32.mxu0 0.0
        %6270 = vmatmul.mubr.f32.gmra.mxu0 %v5608
        %v6271 = vpop.f32.mrf.mxu0
        %v6272 = vadd.f32 %v6047, %v6271
        %v6273 = vpop.f32.mrf.mxu0
        %6274 = vmatprep.mubr.f32.mxu0 0.0
        %6275 = vmatmul.mubr.f32.gmra.mxu0 %v5611
        %v6276 = vpop.f32.mrf.mxu0
        %v6277 = vadd.f32 %v6052, %v6276
        %v6278 = vpop.f32.mrf.mxu0
        %6279 = vmatprep.mubr.f32.mxu0 0.0
        %6280 = vmatmul.mubr.f32.gmra.mxu0 %v5614
        %v6281 = vpop.f32.mrf.mxu0
        %v6282 = vadd.f32 %v6057, %v6281
        %v6283 = vpop.f32.mrf.mxu0
        %6284 = vmatprep.mubr.f32.mxu0 0.0
        %6285 = vmatmul.mubr.f32.gmra.mxu0 %v5617
        %v6286 = vpop.f32.mrf.mxu0
        %v6287 = vadd.f32 %v6062, %v6286
        %v6288 = vpop.f32.mrf.mxu0
        %6289 = vmatprep.mubr.f32.mxu0 0.0
        %6290 = vmatmul.mubr.f32.gmra.mxu0 %v5620
        %v6291 = vpop.f32.mrf.mxu0
        %v6292 = vadd.f32 %v6067, %v6291
        %v6293 = vpop.f32.mrf.mxu0
        %6294 = vmatprep.mubr.f32.mxu0 0.0
        %6295 = vmatmul.mubr.f32.gmra.mxu0 %v5623
        %v6296 = vpop.f32.mrf.mxu0
        %v6297 = vadd.f32 %v6072, %v6296
        %v6298 = vpop.f32.mrf.mxu0
        %6299 = vdwg.mxu0
        %v6300 = vld [vmem:[#allocation6] sm:$0xff]
        %v6301 = vld [vmem:[#allocation6 + $0x8] sm:$0xff]
        %v6302 = vld [vmem:[#allocation6 + $0x10] sm:$0xff]
        %v6303 = vld [vmem:[#allocation6 + $0x18] sm:$0xff]
        %v6304 = vld [vmem:[#allocation6 + $0x20] sm:$0xff]
        %v6305 = vld [vmem:[#allocation6 + $0x28] sm:$0xff]
        %v6306 = vld [vmem:[#allocation6 + $0x30] sm:$0xff]
        %v6307 = vld [vmem:[#allocation6 + $0x38] sm:$0xff]
        %v6308 = vld [vmem:[#allocation6 + $0x40] sm:$0xff]
        %v6309 = vld [vmem:[#allocation6 + $0x48] sm:$0xff]
        %v6310 = vld [vmem:[#allocation6 + $0x50] sm:$0xff]
        %v6311 = vld [vmem:[#allocation6 + $0x58] sm:$0xff]
        %v6312 = vld [vmem:[#allocation6 + $0x60] sm:$0xff]
        %v6313 = vld [vmem:[#allocation6 + $0x68] sm:$0xff]
        %v6314 = vld [vmem:[#allocation6 + $0x70] sm:$0xff]
        %v6315 = vld [vmem:[#allocation6 + $0x78] sm:$0xff]
        %v6316 = vld [vmem:[#allocation6 + $0x80] sm:$0xff]
        %v6317 = vld [vmem:[#allocation6 + $0x88] sm:$0xff]
        %v6318 = vld [vmem:[#allocation6 + $0x90] sm:$0xff]
        %v6319 = vld [vmem:[#allocation6 + $0x98] sm:$0xff]
        %v6320 = vld [vmem:[#allocation6 + $0xa0] sm:$0xff]
        %v6321 = vld [vmem:[#allocation6 + $0xa8] sm:$0xff]
        %v6322 = vld [vmem:[#allocation6 + $0xb0] sm:$0xff]
        %v6323 = vld [vmem:[#allocation6 + $0xb8] sm:$0xff]
        %v6324 = vld [vmem:[#allocation6 + $0xc0] sm:$0xff]
        %v6325 = vld [vmem:[#allocation6 + $0xc8] sm:$0xff]
        %v6326 = vld [vmem:[#allocation6 + $0xd0] sm:$0xff]
        %v6327 = vld [vmem:[#allocation6 + $0xd8] sm:$0xff]
        %v6328 = vld [vmem:[#allocation6 + $0xe0] sm:$0xff]
        %v6329 = vld [vmem:[#allocation6 + $0xe8] sm:$0xff]
        %v6330 = vld [vmem:[#allocation6 + $0xf0] sm:$0xff]
        %v6331 = vld [vmem:[#allocation6 + $0xf8] sm:$0xff]
        %v6332 = vld [vmem:[#allocation6 + $0x100] sm:$0xff]
        %v6333 = vld [vmem:[#allocation6 + $0x108] sm:$0xff]
        %v6334 = vld [vmem:[#allocation6 + $0x110] sm:$0xff]
        %v6335 = vld [vmem:[#allocation6 + $0x118] sm:$0xff]
        %v6336 = vld [vmem:[#allocation6 + $0x120] sm:$0xff]
        %v6337 = vld [vmem:[#allocation6 + $0x128] sm:$0xff]
        %v6338 = vld [vmem:[#allocation6 + $0x130] sm:$0xff]
        %v6339 = vld [vmem:[#allocation6 + $0x138] sm:$0xff]
        %v6340 = vld [vmem:[#allocation6 + $0x140] sm:$0xff]
        %v6341 = vld [vmem:[#allocation6 + $0x148] sm:$0xff]
        %v6342 = vld [vmem:[#allocation6 + $0x150] sm:$0xff]
        %v6343 = vld [vmem:[#allocation6 + $0x158] sm:$0xff]
        %v6344 = vld [vmem:[#allocation6 + $0x160] sm:$0xff]
        %v6345 = vld [vmem:[#allocation6 + $0x168] sm:$0xff]
        %v6346 = vld [vmem:[#allocation6 + $0x170] sm:$0xff]
        %v6347 = vld [vmem:[#allocation6 + $0x178] sm:$0xff]
        %v6348 = vld [vmem:[#allocation6 + $0x180] sm:$0xff]
        %v6349 = vld [vmem:[#allocation6 + $0x188] sm:$0xff]
        %v6350 = vld [vmem:[#allocation6 + $0x190] sm:$0xff]
        %v6351 = vld [vmem:[#allocation6 + $0x198] sm:$0xff]
        %v6352 = vld [vmem:[#allocation6 + $0x1a0] sm:$0xff]
        %v6353 = vld [vmem:[#allocation6 + $0x1a8] sm:$0xff]
        %v6354 = vld [vmem:[#allocation6 + $0x1b0] sm:$0xff]
        %v6355 = vld [vmem:[#allocation6 + $0x1b8] sm:$0xff]
        %v6356 = vld [vmem:[#allocation6 + $0x1c0] sm:$0xff]
        %v6357 = vld [vmem:[#allocation6 + $0x1c8] sm:$0xff]
        %v6358 = vld [vmem:[#allocation6 + $0x1d0] sm:$0xff]
        %v6359 = vld [vmem:[#allocation6 + $0x1d8] sm:$0xff]
        %v6360 = vld [vmem:[#allocation6 + $0x1e0] sm:$0xff]
        %v6361 = vld [vmem:[#allocation6 + $0x1e8] sm:$0xff]
        %v6362 = vld [vmem:[#allocation6 + $0x1f0] sm:$0xff]
        %v6363 = vld [vmem:[#allocation6 + $0x1f8] sm:$0xff]
        %v6364 = vld [vmem:[#allocation6 + $0x200] sm:$0xff]
        %v6365 = vld [vmem:[#allocation6 + $0x208] sm:$0xff]
        %v6366 = vld [vmem:[#allocation6 + $0x210] sm:$0xff]
        %v6367 = vld [vmem:[#allocation6 + $0x218] sm:$0xff]
        %v6368 = vld [vmem:[#allocation6 + $0x220] sm:$0xff]
        %v6369 = vld [vmem:[#allocation6 + $0x228] sm:$0xff]
        %v6370 = vld [vmem:[#allocation6 + $0x230] sm:$0xff]
        %v6371 = vld [vmem:[#allocation6 + $0x238] sm:$0xff]
        %v6372 = vld [vmem:[#allocation6 + $0x240] sm:$0xff]
        %v6373 = vld [vmem:[#allocation6 + $0x248] sm:$0xff]
        %v6374 = vld [vmem:[#allocation6 + $0x250] sm:$0xff]
        %v6375 = vld [vmem:[#allocation6 + $0x258] sm:$0xff]
        %v6376 = vld [vmem:[#allocation6 + $0x260] sm:$0xff]
        %v6377 = vld [vmem:[#allocation6 + $0x268] sm:$0xff]
        %v6378 = vld [vmem:[#allocation6 + $0x270] sm:$0xff]
        %v6379 = vld [vmem:[#allocation6 + $0x278] sm:$0xff]
        %v6380 = vld [vmem:[#allocation6 + $0x280] sm:$0xff]
        %v6381 = vld [vmem:[#allocation6 + $0x288] sm:$0xff]
        %v6382 = vld [vmem:[#allocation6 + $0x290] sm:$0xff]
        %v6383 = vld [vmem:[#allocation6 + $0x298] sm:$0xff]
        %v6384 = vld [vmem:[#allocation6 + $0x2a0] sm:$0xff]
        %v6385 = vld [vmem:[#allocation6 + $0x2a8] sm:$0xff]
        %v6386 = vld [vmem:[#allocation6 + $0x2b0] sm:$0xff]
        %v6387 = vld [vmem:[#allocation6 + $0x2b8] sm:$0xff]
        %v6388 = vld [vmem:[#allocation6 + $0x2c0] sm:$0xff]
        %v6389 = vld [vmem:[#allocation6 + $0x2c8] sm:$0xff]
        %v6390 = vld [vmem:[#allocation6 + $0x2d0] sm:$0xff]
        %v6391 = vld [vmem:[#allocation6 + $0x2d8] sm:$0xff]
        %v6392 = vld [vmem:[#allocation6 + $0x2e0] sm:$0xff]
        %v6393 = vld [vmem:[#allocation6 + $0x2e8] sm:$0xff]
        %v6394 = vld [vmem:[#allocation6 + $0x2f0] sm:$0xff]
        %v6395 = vld [vmem:[#allocation6 + $0x2f8] sm:$0xff]
        %v6396 = vld [vmem:[#allocation6 + $0x300] sm:$0xff]
        %v6397 = vld [vmem:[#allocation6 + $0x308] sm:$0xff]
        %v6398 = vld [vmem:[#allocation6 + $0x310] sm:$0xff]
        %v6399 = vld [vmem:[#allocation6 + $0x318] sm:$0xff]
        %v6400 = vld [vmem:[#allocation6 + $0x320] sm:$0xff]
        %v6401 = vld [vmem:[#allocation6 + $0x328] sm:$0xff]
        %v6402 = vld [vmem:[#allocation6 + $0x330] sm:$0xff]
        %v6403 = vld [vmem:[#allocation6 + $0x338] sm:$0xff]
        %v6404 = vld [vmem:[#allocation6 + $0x340] sm:$0xff]
        %v6405 = vld [vmem:[#allocation6 + $0x348] sm:$0xff]
        %v6406 = vld [vmem:[#allocation6 + $0x350] sm:$0xff]
        %v6407 = vld [vmem:[#allocation6 + $0x358] sm:$0xff]
        %v6408 = vld [vmem:[#allocation6 + $0x360] sm:$0xff]
        %v6409 = vld [vmem:[#allocation6 + $0x368] sm:$0xff]
        %v6410 = vld [vmem:[#allocation6 + $0x370] sm:$0xff]
        %v6411 = vld [vmem:[#allocation6 + $0x378] sm:$0xff]
        %v6412 = vld [vmem:[#allocation6 + $0x380] sm:$0xff]
        %v6413 = vld [vmem:[#allocation6 + $0x388] sm:$0xff]
        %v6414 = vld [vmem:[#allocation6 + $0x390] sm:$0xff]
        %v6415 = vld [vmem:[#allocation6 + $0x398] sm:$0xff]
        %v6416 = vld [vmem:[#allocation6 + $0x3a0] sm:$0xff]
        %v6417 = vld [vmem:[#allocation6 + $0x3a8] sm:$0xff]
        %v6418 = vld [vmem:[#allocation6 + $0x3b0] sm:$0xff]
        %v6419 = vld [vmem:[#allocation6 + $0x3b8] sm:$0xff]
        %v6420 = vld [vmem:[#allocation6 + $0x3c0] sm:$0xff]
        %v6421 = vld [vmem:[#allocation6 + $0x3c8] sm:$0xff]
        %v6422 = vld [vmem:[#allocation6 + $0x3d0] sm:$0xff]
        %v6423 = vld [vmem:[#allocation6 + $0x3d8] sm:$0xff]
        %v6424 = vld [vmem:[#allocation6 + $0x3e0] sm:$0xff]
        %v6425 = vld [vmem:[#allocation6 + $0x3e8] sm:$0xff]
        %v6426 = vld [vmem:[#allocation6 + $0x3f0] sm:$0xff]
        %v6427 = vld [vmem:[#allocation6 + $0x3f8] sm:$0xff]
        %v6428 = vld [vmem:[#allocation6 + $0x400] sm:$0xff]
        %v6429 = vld [vmem:[#allocation6 + $0x408] sm:$0xff]
        %v6430 = vld [vmem:[#allocation6 + $0x410] sm:$0xff]
        %v6431 = vld [vmem:[#allocation6 + $0x418] sm:$0xff]
        %v6432 = vld [vmem:[#allocation6 + $0x420] sm:$0xff]
        %v6433 = vld [vmem:[#allocation6 + $0x428] sm:$0xff]
        %v6434 = vld [vmem:[#allocation6 + $0x430] sm:$0xff]
        %v6435 = vld [vmem:[#allocation6 + $0x438] sm:$0xff]
        %v6436 = vld [vmem:[#allocation6 + $0x440] sm:$0xff]
        %v6437 = vld [vmem:[#allocation6 + $0x448] sm:$0xff]
        %v6438 = vld [vmem:[#allocation6 + $0x450] sm:$0xff]
        %v6439 = vld [vmem:[#allocation6 + $0x458] sm:$0xff]
        %v6440 = vld [vmem:[#allocation6 + $0x460] sm:$0xff]
        %v6441 = vld [vmem:[#allocation6 + $0x468] sm:$0xff]
        %v6442 = vld [vmem:[#allocation6 + $0x470] sm:$0xff]
        %v6443 = vld [vmem:[#allocation6 + $0x478] sm:$0xff]
        %v6444 = vld [vmem:[#allocation6 + $0x480] sm:$0xff]
        %v6445 = vld [vmem:[#allocation6 + $0x488] sm:$0xff]
        %v6446 = vld [vmem:[#allocation6 + $0x490] sm:$0xff]
        %v6447 = vld [vmem:[#allocation6 + $0x498] sm:$0xff]
        %v6448 = vld [vmem:[#allocation6 + $0x4a0] sm:$0xff]
        %v6449 = vld [vmem:[#allocation6 + $0x4a8] sm:$0xff]
        %v6450 = vld [vmem:[#allocation6 + $0x4b0] sm:$0xff]
        %v6451 = vld [vmem:[#allocation6 + $0x4b8] sm:$0xff]
        %v6452 = vld [vmem:[#allocation6 + $0x4c0] sm:$0xff]
        %v6453 = vld [vmem:[#allocation6 + $0x4c8] sm:$0xff]
        %v6454 = vld [vmem:[#allocation6 + $0x4d0] sm:$0xff]
        %v6455 = vld [vmem:[#allocation6 + $0x4d8] sm:$0xff]
        %v6456 = vld [vmem:[#allocation6 + $0x4e0] sm:$0xff]
        %v6457 = vld [vmem:[#allocation6 + $0x4e8] sm:$0xff]
        %v6458 = vld [vmem:[#allocation6 + $0x4f0] sm:$0xff]
        %v6459 = vld [vmem:[#allocation6 + $0x4f8] sm:$0xff]
        %v6460 = vld [vmem:[#allocation6 + $0x500] sm:$0xff]
        %v6461 = vld [vmem:[#allocation6 + $0x508] sm:$0xff]
        %v6462 = vld [vmem:[#allocation6 + $0x510] sm:$0xff]
        %v6463 = vld [vmem:[#allocation6 + $0x518] sm:$0xff]
        %v6464 = vld [vmem:[#allocation6 + $0x520] sm:$0xff]
        %v6465 = vld [vmem:[#allocation6 + $0x528] sm:$0xff]
        %v6466 = vld [vmem:[#allocation6 + $0x530] sm:$0xff]
        %v6467 = vld [vmem:[#allocation6 + $0x538] sm:$0xff]
        %v6468 = vld [vmem:[#allocation6 + $0x540] sm:$0xff]
        %v6469 = vld [vmem:[#allocation6 + $0x548] sm:$0xff]
        %v6470 = vld [vmem:[#allocation6 + $0x550] sm:$0xff]
        %v6471 = vld [vmem:[#allocation6 + $0x558] sm:$0xff]
        %v6472 = vld [vmem:[#allocation6 + $0x560] sm:$0xff]
        %v6473 = vld [vmem:[#allocation6 + $0x568] sm:$0xff]
        %v6474 = vld [vmem:[#allocation6 + $0x570] sm:$0xff]
        %v6475 = vld [vmem:[#allocation6 + $0x578] sm:$0xff]
        %v6476 = vld [vmem:[#allocation6 + $0x580] sm:$0xff]
        %v6477 = vld [vmem:[#allocation6 + $0x588] sm:$0xff]
        %v6478 = vld [vmem:[#allocation6 + $0x590] sm:$0xff]
        %v6479 = vld [vmem:[#allocation6 + $0x598] sm:$0xff]
        %v6480 = vld [vmem:[#allocation6 + $0x5a0] sm:$0xff]
        %v6481 = vld [vmem:[#allocation6 + $0x5a8] sm:$0xff]
        %v6482 = vld [vmem:[#allocation6 + $0x5b0] sm:$0xff]
        %v6483 = vld [vmem:[#allocation6 + $0x5b8] sm:$0xff]
        %v6484 = vld [vmem:[#allocation6 + $0x5c0] sm:$0xff]
        %v6485 = vld [vmem:[#allocation6 + $0x5c8] sm:$0xff]
        %v6486 = vld [vmem:[#allocation6 + $0x5d0] sm:$0xff]
        %v6487 = vld [vmem:[#allocation6 + $0x5d8] sm:$0xff]
        %v6488 = vld [vmem:[#allocation6 + $0x5e0] sm:$0xff]
        %v6489 = vld [vmem:[#allocation6 + $0x5e8] sm:$0xff]
        %v6490 = vld [vmem:[#allocation6 + $0x5f0] sm:$0xff]
        %v6491 = vld [vmem:[#allocation6 + $0x5f8] sm:$0xff]
        %v6492 = vld [vmem:[#allocation6 + $0x600] sm:$0xff]
        %v6493 = vld [vmem:[#allocation6 + $0x608] sm:$0xff]
        %v6494 = vld [vmem:[#allocation6 + $0x610] sm:$0xff]
        %v6495 = vld [vmem:[#allocation6 + $0x618] sm:$0xff]
        %v6496 = vld [vmem:[#allocation6 + $0x620] sm:$0xff]
        %v6497 = vld [vmem:[#allocation6 + $0x628] sm:$0xff]
        %v6498 = vld [vmem:[#allocation6 + $0x630] sm:$0xff]
        %v6499 = vld [vmem:[#allocation6 + $0x638] sm:$0xff]
        %v6500 = vld [vmem:[#allocation6 + $0x640] sm:$0xff]
        %v6501 = vld [vmem:[#allocation6 + $0x648] sm:$0xff]
        %v6502 = vld [vmem:[#allocation6 + $0x650] sm:$0xff]
        %v6503 = vld [vmem:[#allocation6 + $0x658] sm:$0xff]
        %v6504 = vld [vmem:[#allocation6 + $0x660] sm:$0xff]
        %v6505 = vld [vmem:[#allocation6 + $0x668] sm:$0xff]
        %v6506 = vld [vmem:[#allocation6 + $0x670] sm:$0xff]
        %v6507 = vld [vmem:[#allocation6 + $0x678] sm:$0xff]
        %v6508 = vld [vmem:[#allocation6 + $0x680] sm:$0xff]
        %v6509 = vld [vmem:[#allocation6 + $0x688] sm:$0xff]
        %v6510 = vld [vmem:[#allocation6 + $0x690] sm:$0xff]
        %v6511 = vld [vmem:[#allocation6 + $0x698] sm:$0xff]
        %v6512 = vld [vmem:[#allocation6 + $0x6a0] sm:$0xff]
        %v6513 = vld [vmem:[#allocation6 + $0x6a8] sm:$0xff]
        %v6514 = vld [vmem:[#allocation6 + $0x6b0] sm:$0xff]
        %v6515 = vld [vmem:[#allocation6 + $0x6b8] sm:$0xff]
        %v6516 = vld [vmem:[#allocation6 + $0x6c0] sm:$0xff]
        %v6517 = vld [vmem:[#allocation6 + $0x6c8] sm:$0xff]
        %v6518 = vld [vmem:[#allocation6 + $0x6d0] sm:$0xff]
        %v6519 = vld [vmem:[#allocation6 + $0x6d8] sm:$0xff]
        %v6520 = vld [vmem:[#allocation6 + $0x6e0] sm:$0xff]
        %v6521 = vld [vmem:[#allocation6 + $0x6e8] sm:$0xff]
        %v6522 = vld [vmem:[#allocation6 + $0x6f0] sm:$0xff]
        %v6523 = vld [vmem:[#allocation6 + $0x6f8] sm:$0xff]
        %v6524 = vld [vmem:[#allocation6 + $0x700] sm:$0xff]
        %v6525 = vld [vmem:[#allocation6 + $0x708] sm:$0xff]
        %v6526 = vld [vmem:[#allocation6 + $0x710] sm:$0xff]
        %v6527 = vld [vmem:[#allocation6 + $0x718] sm:$0xff]
        %v6528 = vld [vmem:[#allocation6 + $0x720] sm:$0xff]
        %v6529 = vld [vmem:[#allocation6 + $0x728] sm:$0xff]
        %v6530 = vld [vmem:[#allocation6 + $0x730] sm:$0xff]
        %v6531 = vld [vmem:[#allocation6 + $0x738] sm:$0xff]
        %v6532 = vld [vmem:[#allocation6 + $0x740] sm:$0xff]
        %v6533 = vld [vmem:[#allocation6 + $0x748] sm:$0xff]
        %v6534 = vld [vmem:[#allocation6 + $0x750] sm:$0xff]
        %v6535 = vld [vmem:[#allocation6 + $0x758] sm:$0xff]
        %v6536 = vld [vmem:[#allocation6 + $0x760] sm:$0xff]
        %v6537 = vld [vmem:[#allocation6 + $0x768] sm:$0xff]
        %v6538 = vld [vmem:[#allocation6 + $0x770] sm:$0xff]
        %v6539 = vld [vmem:[#allocation6 + $0x778] sm:$0xff]
        %v6540 = vld [vmem:[#allocation6 + $0x780] sm:$0xff]
        %v6541 = vld [vmem:[#allocation6 + $0x788] sm:$0xff]
        %v6542 = vld [vmem:[#allocation6 + $0x790] sm:$0xff]
        %v6543 = vld [vmem:[#allocation6 + $0x798] sm:$0xff]
        %v6544 = vld [vmem:[#allocation6 + $0x7a0] sm:$0xff]
        %v6545 = vld [vmem:[#allocation6 + $0x7a8] sm:$0xff]
        %v6546 = vld [vmem:[#allocation6 + $0x7b0] sm:$0xff]
        %v6547 = vld [vmem:[#allocation6 + $0x7b8] sm:$0xff]
        %v6548 = vld [vmem:[#allocation6 + $0x7c0] sm:$0xff]
        %v6549 = vld [vmem:[#allocation6 + $0x7c8] sm:$0xff]
        %v6550 = vld [vmem:[#allocation6 + $0x7d0] sm:$0xff]
        %v6551 = vld [vmem:[#allocation6 + $0x7d8] sm:$0xff]
        %v6552 = vld [vmem:[#allocation6 + $0x7e0] sm:$0xff]
        %v6553 = vld [vmem:[#allocation6 + $0x7e8] sm:$0xff]
        %v6554 = vld [vmem:[#allocation6 + $0x7f0] sm:$0xff]
        %v6555 = vld [vmem:[#allocation6 + $0x7f8] sm:$0xff]
        %v6556 = vld [vmem:[#allocation6 + $0x800] sm:$0xff]
        %v6557 = vld [vmem:[#allocation6 + $0x808] sm:$0xff]
        %v6558 = vld [vmem:[#allocation6 + $0x810] sm:$0xff]
        %v6559 = vld [vmem:[#allocation6 + $0x818] sm:$0xff]
        %v6560 = vld [vmem:[#allocation6 + $0x820] sm:$0xff]
        %v6561 = vld [vmem:[#allocation6 + $0x828] sm:$0xff]
        %v6562 = vld [vmem:[#allocation6 + $0x830] sm:$0xff]
        %v6563 = vld [vmem:[#allocation6 + $0x838] sm:$0xff]
        %v6564 = vld [vmem:[#allocation6 + $0x840] sm:$0xff]
        %v6565 = vld [vmem:[#allocation6 + $0x848] sm:$0xff]
        %v6566 = vld [vmem:[#allocation6 + $0x850] sm:$0xff]
        %v6567 = vld [vmem:[#allocation6 + $0x858] sm:$0xff]
        %v6568 = vld [vmem:[#allocation6 + $0x860] sm:$0xff]
        %v6569 = vld [vmem:[#allocation6 + $0x868] sm:$0xff]
        %v6570 = vld [vmem:[#allocation6 + $0x870] sm:$0xff]
        %v6571 = vld [vmem:[#allocation6 + $0x878] sm:$0xff]
        %v6572 = vld [vmem:[#allocation6 + $0x880] sm:$0xff]
        %v6573 = vld [vmem:[#allocation6 + $0x888] sm:$0xff]
        %v6574 = vld [vmem:[#allocation6 + $0x890] sm:$0xff]
        %v6575 = vld [vmem:[#allocation6 + $0x898] sm:$0xff]
        %v6576 = vld [vmem:[#allocation6 + $0x8a0] sm:$0xff]
        %v6577 = vld [vmem:[#allocation6 + $0x8a8] sm:$0xff]
        %v6578 = vld [vmem:[#allocation6 + $0x8b0] sm:$0xff]
        %v6579 = vld [vmem:[#allocation6 + $0x8b8] sm:$0xff]
        %v6580 = vld [vmem:[#allocation6 + $0x8c0] sm:$0xff]
        %v6581 = vld [vmem:[#allocation6 + $0x8c8] sm:$0xff]
        %v6582 = vld [vmem:[#allocation6 + $0x8d0] sm:$0xff]
        %v6583 = vld [vmem:[#allocation6 + $0x8d8] sm:$0xff]
        %v6584 = vld [vmem:[#allocation6 + $0x8e0] sm:$0xff]
        %v6585 = vld [vmem:[#allocation6 + $0x8e8] sm:$0xff]
        %v6586 = vld [vmem:[#allocation6 + $0x8f0] sm:$0xff]
        %v6587 = vld [vmem:[#allocation6 + $0x8f8] sm:$0xff]
        %v6588 = vld [vmem:[#allocation6 + $0x900] sm:$0xff]
        %v6589 = vld [vmem:[#allocation6 + $0x908] sm:$0xff]
        %v6590 = vld [vmem:[#allocation6 + $0x910] sm:$0xff]
        %v6591 = vld [vmem:[#allocation6 + $0x918] sm:$0xff]
        %v6592 = vld [vmem:[#allocation6 + $0x920] sm:$0xff]
        %v6593 = vld [vmem:[#allocation6 + $0x928] sm:$0xff]
        %v6594 = vld [vmem:[#allocation6 + $0x930] sm:$0xff]
        %v6595 = vld [vmem:[#allocation6 + $0x938] sm:$0xff]
        %v6596 = vld [vmem:[#allocation6 + $0x940] sm:$0xff]
        %v6597 = vld [vmem:[#allocation6 + $0x948] sm:$0xff]
        %v6598 = vld [vmem:[#allocation6 + $0x950] sm:$0xff]
        %v6599 = vld [vmem:[#allocation6 + $0x958] sm:$0xff]
        %v6600 = vld [vmem:[#allocation6 + $0x960] sm:$0xff]
        %v6601 = vld [vmem:[#allocation6 + $0x968] sm:$0xff]
        %v6602 = vld [vmem:[#allocation6 + $0x970] sm:$0xff]
        %v6603 = vld [vmem:[#allocation6 + $0x978] sm:$0xff]
        %v6604 = vld [vmem:[#allocation6 + $0x980] sm:$0xff]
        %v6605 = vld [vmem:[#allocation6 + $0x988] sm:$0xff]
        %v6606 = vld [vmem:[#allocation6 + $0x990] sm:$0xff]
        %v6607 = vld [vmem:[#allocation6 + $0x998] sm:$0xff]
        %v6608 = vld [vmem:[#allocation6 + $0x9a0] sm:$0xff]
        %v6609 = vld [vmem:[#allocation6 + $0x9a8] sm:$0xff]
        %v6610 = vld [vmem:[#allocation6 + $0x9b0] sm:$0xff]
        %v6611 = vld [vmem:[#allocation6 + $0x9b8] sm:$0xff]
        %v6612 = vld [vmem:[#allocation6 + $0x9c0] sm:$0xff]
        %v6613 = vld [vmem:[#allocation6 + $0x9c8] sm:$0xff]
        %v6614 = vld [vmem:[#allocation6 + $0x9d0] sm:$0xff]
        %v6615 = vld [vmem:[#allocation6 + $0x9d8] sm:$0xff]
        %v6616 = vld [vmem:[#allocation6 + $0x9e0] sm:$0xff]
        %v6617 = vld [vmem:[#allocation6 + $0x9e8] sm:$0xff]
        %v6618 = vld [vmem:[#allocation6 + $0x9f0] sm:$0xff]
        %v6619 = vld [vmem:[#allocation6 + $0x9f8] sm:$0xff]
        %v6620 = vld [vmem:[#allocation6 + $0xa00] sm:$0xff]
        %v6621 = vld [vmem:[#allocation6 + $0xa08] sm:$0xff]
        %v6622 = vld [vmem:[#allocation6 + $0xa10] sm:$0xff]
        %v6623 = vld [vmem:[#allocation6 + $0xa18] sm:$0xff]
        %v6624 = vld [vmem:[#allocation6 + $0xa20] sm:$0xff]
        %v6625 = vld [vmem:[#allocation6 + $0xa28] sm:$0xff]
        %v6626 = vld [vmem:[#allocation6 + $0xa30] sm:$0xff]
        %v6627 = vld [vmem:[#allocation6 + $0xa38] sm:$0xff]
        %v6628 = vld [vmem:[#allocation6 + $0xa40] sm:$0xff]
        %v6629 = vld [vmem:[#allocation6 + $0xa48] sm:$0xff]
        %v6630 = vld [vmem:[#allocation6 + $0xa50] sm:$0xff]
        %v6631 = vld [vmem:[#allocation6 + $0xa58] sm:$0xff]
        %v6632 = vld [vmem:[#allocation6 + $0xa60] sm:$0xff]
        %v6633 = vld [vmem:[#allocation6 + $0xa68] sm:$0xff]
        %v6634 = vld [vmem:[#allocation6 + $0xa70] sm:$0xff]
        %v6635 = vld [vmem:[#allocation6 + $0xa78] sm:$0xff]
        %v6636 = vld [vmem:[#allocation6 + $0xa80] sm:$0xff]
        %v6637 = vld [vmem:[#allocation6 + $0xa88] sm:$0xff]
        %v6638 = vld [vmem:[#allocation6 + $0xa90] sm:$0xff]
        %v6639 = vld [vmem:[#allocation6 + $0xa98] sm:$0xff]
        %v6640 = vld [vmem:[#allocation6 + $0xaa0] sm:$0xff]
        %v6641 = vld [vmem:[#allocation6 + $0xaa8] sm:$0xff]
        %v6642 = vld [vmem:[#allocation6 + $0xab0] sm:$0xff]
        %v6643 = vld [vmem:[#allocation6 + $0xab8] sm:$0xff]
        %v6644 = vld [vmem:[#allocation6 + $0xac0] sm:$0xff]
        %v6645 = vld [vmem:[#allocation6 + $0xac8] sm:$0xff]
        %v6646 = vld [vmem:[#allocation6 + $0xad0] sm:$0xff]
        %v6647 = vld [vmem:[#allocation6 + $0xad8] sm:$0xff]
        %v6648 = vld [vmem:[#allocation6 + $0xae0] sm:$0xff]
        %v6649 = vld [vmem:[#allocation6 + $0xae8] sm:$0xff]
        %v6650 = vld [vmem:[#allocation6 + $0xaf0] sm:$0xff]
        %v6651 = vld [vmem:[#allocation6 + $0xaf8] sm:$0xff]
        %v6652 = vld [vmem:[#allocation6 + $0xb00] sm:$0xff]
        %v6653 = vld [vmem:[#allocation6 + $0xb08] sm:$0xff]
        %v6654 = vld [vmem:[#allocation6 + $0xb10] sm:$0xff]
        %v6655 = vld [vmem:[#allocation6 + $0xb18] sm:$0xff]
        %v6656 = vld [vmem:[#allocation6 + $0xb20] sm:$0xff]
        %v6657 = vld [vmem:[#allocation6 + $0xb28] sm:$0xff]
        %v6658 = vld [vmem:[#allocation6 + $0xb30] sm:$0xff]
        %v6659 = vld [vmem:[#allocation6 + $0xb38] sm:$0xff]
        %v6660 = vld [vmem:[#allocation6 + $0xb40] sm:$0xff]
        %v6661 = vld [vmem:[#allocation6 + $0xb48] sm:$0xff]
        %v6662 = vld [vmem:[#allocation6 + $0xb50] sm:$0xff]
        %v6663 = vld [vmem:[#allocation6 + $0xb58] sm:$0xff]
        %v6664 = vld [vmem:[#allocation6 + $0xb60] sm:$0xff]
        %v6665 = vld [vmem:[#allocation6 + $0xb68] sm:$0xff]
        %v6666 = vld [vmem:[#allocation6 + $0xb70] sm:$0xff]
        %v6667 = vld [vmem:[#allocation6 + $0xb78] sm:$0xff]
        %v6668 = vld [vmem:[#allocation6 + $0xb80] sm:$0xff]
        %v6669 = vld [vmem:[#allocation6 + $0xb88] sm:$0xff]
        %v6670 = vld [vmem:[#allocation6 + $0xb90] sm:$0xff]
        %v6671 = vld [vmem:[#allocation6 + $0xb98] sm:$0xff]
        %v6672 = vld [vmem:[#allocation6 + $0xba0] sm:$0xff]
        %v6673 = vld [vmem:[#allocation6 + $0xba8] sm:$0xff]
        %v6674 = vld [vmem:[#allocation6 + $0xbb0] sm:$0xff]
        %v6675 = vld [vmem:[#allocation6 + $0xbb8] sm:$0xff]
        %v6676 = vld [vmem:[#allocation6 + $0xbc0] sm:$0xff]
        %v6677 = vld [vmem:[#allocation6 + $0xbc8] sm:$0xff]
        %v6678 = vld [vmem:[#allocation6 + $0xbd0] sm:$0xff]
        %v6679 = vld [vmem:[#allocation6 + $0xbd8] sm:$0xff]
        %v6680 = vld [vmem:[#allocation6 + $0xbe0] sm:$0xff]
        %v6681 = vld [vmem:[#allocation6 + $0xbe8] sm:$0xff]
        %v6682 = vld [vmem:[#allocation6 + $0xbf0] sm:$0xff]
        %v6683 = vld [vmem:[#allocation6 + $0xbf8] sm:$0xff]
        %v6684 = vld [vmem:[#allocation6 + $0xc00] sm:$0xff]
        %v6685 = vld [vmem:[#allocation6 + $0xc08] sm:$0xff]
        %v6686 = vld [vmem:[#allocation6 + $0xc10] sm:$0xff]
        %v6687 = vld [vmem:[#allocation6 + $0xc18] sm:$0xff]
        %v6688 = vld [vmem:[#allocation6 + $0xc20] sm:$0xff]
        %v6689 = vld [vmem:[#allocation6 + $0xc28] sm:$0xff]
        %v6690 = vld [vmem:[#allocation6 + $0xc30] sm:$0xff]
        %v6691 = vld [vmem:[#allocation6 + $0xc38] sm:$0xff]
        %v6692 = vld [vmem:[#allocation6 + $0xc40] sm:$0xff]
        %v6693 = vld [vmem:[#allocation6 + $0xc48] sm:$0xff]
        %v6694 = vld [vmem:[#allocation6 + $0xc50] sm:$0xff]
        %v6695 = vld [vmem:[#allocation6 + $0xc58] sm:$0xff]
        %v6696 = vld [vmem:[#allocation6 + $0xc60] sm:$0xff]
        %v6697 = vld [vmem:[#allocation6 + $0xc68] sm:$0xff]
        %v6698 = vld [vmem:[#allocation6 + $0xc70] sm:$0xff]
        %v6699 = vld [vmem:[#allocation6 + $0xc78] sm:$0xff]
        %v6700 = vld [vmem:[#allocation6 + $0xc80] sm:$0xff]
        %v6701 = vld [vmem:[#allocation6 + $0xc88] sm:$0xff]
        %v6702 = vld [vmem:[#allocation6 + $0xc90] sm:$0xff]
        %v6703 = vld [vmem:[#allocation6 + $0xc98] sm:$0xff]
        %v6704 = vld [vmem:[#allocation6 + $0xca0] sm:$0xff]
        %v6705 = vld [vmem:[#allocation6 + $0xca8] sm:$0xff]
        %v6706 = vld [vmem:[#allocation6 + $0xcb0] sm:$0xff]
        %v6707 = vld [vmem:[#allocation6 + $0xcb8] sm:$0xff]
        %v6708 = vld [vmem:[#allocation6 + $0xcc0] sm:$0xff]
        %v6709 = vld [vmem:[#allocation6 + $0xcc8] sm:$0xff]
        %v6710 = vld [vmem:[#allocation6 + $0xcd0] sm:$0xff]
        %v6711 = vld [vmem:[#allocation6 + $0xcd8] sm:$0xff]
        %v6712 = vld [vmem:[#allocation6 + $0xce0] sm:$0xff]
        %v6713 = vld [vmem:[#allocation6 + $0xce8] sm:$0xff]
        %v6714 = vld [vmem:[#allocation6 + $0xcf0] sm:$0xff]
        %v6715 = vld [vmem:[#allocation6 + $0xcf8] sm:$0xff]
        %v6716 = vld [vmem:[%s5] sm:$0xff]
        %v6717 = vld [vmem:[%s5 + $0x8] sm:$0xff]
        %v6718 = vld [vmem:[%s5 + $0x10] sm:$0xff]
        %v6719 = vld [vmem:[%s5 + $0x18] sm:$0xff]
        %v6720 = vld [vmem:[%s5 + $0x20] sm:$0xff]
        %v6721 = vld [vmem:[%s5 + $0x28] sm:$0xff]
        %v6722 = vld [vmem:[%s5 + $0x30] sm:$0xff]
        %v6723 = vld [vmem:[%s5 + $0x38] sm:$0xff]
        %v6724 = vld [vmem:[%s5 + $0x40] sm:$0xff]
        %v6725 = vld [vmem:[%s5 + $0x48] sm:$0xff]
        %v6726 = vld [vmem:[%s5 + $0x50] sm:$0xff]
        %v6727 = vld [vmem:[%s5 + $0x58] sm:$0xff]
        %v6728 = vld [vmem:[%s5 + $0x60] sm:$0xff]
        %v6729 = vld [vmem:[%s5 + $0x68] sm:$0xff]
        %v6730 = vld [vmem:[%s5 + $0x70] sm:$0xff]
        %v6731 = vld [vmem:[%s5 + $0x78] sm:$0xff]
        %v6732 = vld [vmem:[%s5 + $0x80] sm:$0xff]
        %v6733 = vld [vmem:[%s5 + $0x88] sm:$0xff]
        %v6734 = vld [vmem:[%s5 + $0x90] sm:$0xff]
        %v6735 = vld [vmem:[%s5 + $0x98] sm:$0xff]
        %v6736 = vld [vmem:[%s5 + $0xa0] sm:$0xff]
        %v6737 = vld [vmem:[%s5 + $0xa8] sm:$0xff]
        %v6738 = vld [vmem:[%s5 + $0xb0] sm:$0xff]
        %v6739 = vld [vmem:[%s5 + $0xb8] sm:$0xff]
        %v6740 = vld [vmem:[%s5 + $0xc0] sm:$0xff]
        %v6741 = vld [vmem:[%s5 + $0xc8] sm:$0xff]
        %v6742 = vld [vmem:[%s5 + $0xd0] sm:$0xff]
        %v6743 = vld [vmem:[%s5 + $0xd8] sm:$0xff]
        %v6744 = vld [vmem:[%s5 + $0xe0] sm:$0xff]
        %v6745 = vld [vmem:[%s5 + $0xe8] sm:$0xff]
        %v6746 = vld [vmem:[%s5 + $0xf0] sm:$0xff]
        %v6747 = vld [vmem:[%s5 + $0xf8] sm:$0xff]
        %v6748 = vld [vmem:[%s5 + $0x100] sm:$0xff]
        %v6749 = vld [vmem:[%s5 + $0x108] sm:$0xff]
        %v6750 = vld [vmem:[%s5 + $0x110] sm:$0xff]
        %v6751 = vld [vmem:[%s5 + $0x118] sm:$0xff]
        %v6752 = vld [vmem:[%s5 + $0x120] sm:$0xff]
        %v6753 = vld [vmem:[%s5 + $0x128] sm:$0xff]
        %v6754 = vld [vmem:[%s5 + $0x130] sm:$0xff]
        %v6755 = vld [vmem:[%s5 + $0x138] sm:$0xff]
        %v6756 = vld [vmem:[%s5 + $0x140] sm:$0xff]
        %v6757 = vld [vmem:[%s5 + $0x148] sm:$0xff]
        %v6758 = vld [vmem:[%s5 + $0x150] sm:$0xff]
        %v6759 = vld [vmem:[%s5 + $0x158] sm:$0xff]
        %v6760 = vld [vmem:[%s5 + $0x160] sm:$0xff]
        %v6761 = vld [vmem:[%s5 + $0x168] sm:$0xff]
        %v6762 = vld [vmem:[%s5 + $0x170] sm:$0xff]
        %v6763 = vld [vmem:[%s5 + $0x178] sm:$0xff]
        %v6764 = vld [vmem:[%s5 + $0x180] sm:$0xff]
        %v6765 = vld [vmem:[%s5 + $0x188] sm:$0xff]
        %v6766 = vld [vmem:[%s5 + $0x190] sm:$0xff]
        %v6767 = vld [vmem:[%s5 + $0x198] sm:$0xff]
        %v6768 = vld [vmem:[%s5 + $0x1a0] sm:$0xff]
        %v6769 = vld [vmem:[%s5 + $0x1a8] sm:$0xff]
        %v6770 = vld [vmem:[%s5 + $0x1b0] sm:$0xff]
        %v6771 = vld [vmem:[%s5 + $0x1b8] sm:$0xff]
        %v6772 = vld [vmem:[%s5 + $0x1c0] sm:$0xff]
        %v6773 = vld [vmem:[%s5 + $0x1c8] sm:$0xff]
        %v6774 = vld [vmem:[%s5 + $0x1d0] sm:$0xff]
        %v6775 = vld [vmem:[%s5 + $0x1d8] sm:$0xff]
        %v6776 = vld [vmem:[%s5 + $0x1e0] sm:$0xff]
        %v6777 = vld [vmem:[%s5 + $0x1e8] sm:$0xff]
        %v6778 = vld [vmem:[%s5 + $0x1f0] sm:$0xff]
        %v6779 = vld [vmem:[%s5 + $0x1f8] sm:$0xff]
        %v6780 = vld [vmem:[%s5 + $0x200] sm:$0xff]
        %v6781 = vld [vmem:[%s5 + $0x208] sm:$0xff]
        %v6782 = vld [vmem:[%s5 + $0x210] sm:$0xff]
        %v6783 = vld [vmem:[%s5 + $0x218] sm:$0xff]
        %v6784 = vld [vmem:[%s5 + $0x220] sm:$0xff]
        %v6785 = vld [vmem:[%s5 + $0x228] sm:$0xff]
        %v6786 = vld [vmem:[%s5 + $0x230] sm:$0xff]
        %v6787 = vld [vmem:[%s5 + $0x238] sm:$0xff]
        %v6788 = vld [vmem:[%s5 + $0x240] sm:$0xff]
        %v6789 = vld [vmem:[%s5 + $0x248] sm:$0xff]
        %v6790 = vld [vmem:[%s5 + $0x250] sm:$0xff]
        %v6791 = vld [vmem:[%s5 + $0x258] sm:$0xff]
        %v6792 = vld [vmem:[%s5 + $0x260] sm:$0xff]
        %v6793 = vld [vmem:[%s5 + $0x268] sm:$0xff]
        %v6794 = vld [vmem:[%s5 + $0x270] sm:$0xff]
        %v6795 = vld [vmem:[%s5 + $0x278] sm:$0xff]
        %v6796 = vld [vmem:[%s5 + $0x280] sm:$0xff]
        %v6797 = vld [vmem:[%s5 + $0x288] sm:$0xff]
        %v6798 = vld [vmem:[%s5 + $0x290] sm:$0xff]
        %v6799 = vld [vmem:[%s5 + $0x298] sm:$0xff]
        %v6800 = vld [vmem:[%s5 + $0x2a0] sm:$0xff]
        %v6801 = vld [vmem:[%s5 + $0x2a8] sm:$0xff]
        %v6802 = vld [vmem:[%s5 + $0x2b0] sm:$0xff]
        %v6803 = vld [vmem:[%s5 + $0x2b8] sm:$0xff]
        %v6804 = vld [vmem:[%s5 + $0x2c0] sm:$0xff]
        %v6805 = vld [vmem:[%s5 + $0x2c8] sm:$0xff]
        %v6806 = vld [vmem:[%s5 + $0x2d0] sm:$0xff]
        %v6807 = vld [vmem:[%s5 + $0x2d8] sm:$0xff]
        %v6808 = vld [vmem:[%s5 + $0x2e0] sm:$0xff]
        %v6809 = vld [vmem:[%s5 + $0x2e8] sm:$0xff]
        %v6810 = vld [vmem:[%s5 + $0x2f0] sm:$0xff]
        %v6811 = vld [vmem:[%s5 + $0x2f8] sm:$0xff]
        %v6812 = vld [vmem:[%s5 + $0x300] sm:$0xff]
        %v6813 = vld [vmem:[%s5 + $0x308] sm:$0xff]
        %v6814 = vld [vmem:[%s5 + $0x310] sm:$0xff]
        %v6815 = vld [vmem:[%s5 + $0x318] sm:$0xff]
        %v6816 = vld [vmem:[%s5 + $0x320] sm:$0xff]
        %v6817 = vld [vmem:[%s5 + $0x328] sm:$0xff]
        %v6818 = vld [vmem:[%s5 + $0x330] sm:$0xff]
        %v6819 = vld [vmem:[%s5 + $0x338] sm:$0xff]
        %v6820 = vld [vmem:[%s5 + $0x340] sm:$0xff]
        %v6821 = vld [vmem:[%s5 + $0x348] sm:$0xff]
        %v6822 = vld [vmem:[%s5 + $0x350] sm:$0xff]
        %v6823 = vld [vmem:[%s5 + $0x358] sm:$0xff]
        %v6824 = vld [vmem:[%s5 + $0x360] sm:$0xff]
        %v6825 = vld [vmem:[%s5 + $0x368] sm:$0xff]
        %v6826 = vld [vmem:[%s5 + $0x370] sm:$0xff]
        %v6827 = vld [vmem:[%s5 + $0x378] sm:$0xff]
        %v6828 = vld [vmem:[%s5 + $0x380] sm:$0xff]
        %v6829 = vld [vmem:[%s5 + $0x388] sm:$0xff]
        %v6830 = vld [vmem:[%s5 + $0x390] sm:$0xff]
        %v6831 = vld [vmem:[%s5 + $0x398] sm:$0xff]
        %v6832 = vld [vmem:[%s5 + $0x3a0] sm:$0xff]
        %v6833 = vld [vmem:[%s5 + $0x3a8] sm:$0xff]
        %v6834 = vld [vmem:[%s5 + $0x3b0] sm:$0xff]
        %v6835 = vld [vmem:[%s5 + $0x3b8] sm:$0xff]
        %v6836 = vld [vmem:[%s5 + $0x3c0] sm:$0xff]
        %v6837 = vld [vmem:[%s5 + $0x3c8] sm:$0xff]
        %v6838 = vld [vmem:[%s5 + $0x3d0] sm:$0xff]
        %v6839 = vld [vmem:[%s5 + $0x3d8] sm:$0xff]
        %v6840 = vld [vmem:[%s5 + $0x3e0] sm:$0xff]
        %v6841 = vld [vmem:[%s5 + $0x3e8] sm:$0xff]
        %v6842 = vld [vmem:[%s5 + $0x3f0] sm:$0xff]
        %v6843 = vld [vmem:[%s5 + $0x3f8] sm:$0xff]
        %v6844 = vld [vmem:[%s5 + $0x400] sm:$0xff]
        %v6845 = vld [vmem:[%s5 + $0x408] sm:$0xff]
        %v6846 = vld [vmem:[%s5 + $0x410] sm:$0xff]
        %v6847 = vld [vmem:[%s5 + $0x418] sm:$0xff]
        %v6848 = vld [vmem:[%s5 + $0x420] sm:$0xff]
        %v6849 = vld [vmem:[%s5 + $0x428] sm:$0xff]
        %v6850 = vld [vmem:[%s5 + $0x430] sm:$0xff]
        %v6851 = vld [vmem:[%s5 + $0x438] sm:$0xff]
        %v6852 = vld [vmem:[%s5 + $0x440] sm:$0xff]
        %v6853 = vld [vmem:[%s5 + $0x448] sm:$0xff]
        %v6854 = vld [vmem:[%s5 + $0x450] sm:$0xff]
        %v6855 = vld [vmem:[%s5 + $0x458] sm:$0xff]
        %v6856 = vld [vmem:[%s5 + $0x460] sm:$0xff]
        %v6857 = vld [vmem:[%s5 + $0x468] sm:$0xff]
        %v6858 = vld [vmem:[%s5 + $0x470] sm:$0xff]
        %v6859 = vld [vmem:[%s5 + $0x478] sm:$0xff]
        %v6860 = vld [vmem:[%s5 + $0x480] sm:$0xff]
        %v6861 = vld [vmem:[%s5 + $0x488] sm:$0xff]
        %v6862 = vld [vmem:[%s5 + $0x490] sm:$0xff]
        %v6863 = vld [vmem:[%s5 + $0x498] sm:$0xff]
        %v6864 = vld [vmem:[%s5 + $0x4a0] sm:$0xff]
        %v6865 = vld [vmem:[%s5 + $0x4a8] sm:$0xff]
        %v6866 = vld [vmem:[%s5 + $0x4b0] sm:$0xff]
        %v6867 = vld [vmem:[%s5 + $0x4b8] sm:$0xff]
        %v6868 = vld [vmem:[%s5 + $0x4c0] sm:$0xff]
        %v6869 = vld [vmem:[%s5 + $0x4c8] sm:$0xff]
        %v6870 = vld [vmem:[%s5 + $0x4d0] sm:$0xff]
        %v6871 = vld [vmem:[%s5 + $0x4d8] sm:$0xff]
        %v6872 = vld [vmem:[%s5 + $0x4e0] sm:$0xff]
        %v6873 = vld [vmem:[%s5 + $0x4e8] sm:$0xff]
        %v6874 = vld [vmem:[%s5 + $0x4f0] sm:$0xff]
        %v6875 = vld [vmem:[%s5 + $0x4f8] sm:$0xff]
        %v6876 = vld [vmem:[%s5 + $0x500] sm:$0xff]
        %v6877 = vld [vmem:[%s5 + $0x508] sm:$0xff]
        %v6878 = vld [vmem:[%s5 + $0x510] sm:$0xff]
        %v6879 = vld [vmem:[%s5 + $0x518] sm:$0xff]
        %v6880 = vld [vmem:[%s5 + $0x520] sm:$0xff]
        %v6881 = vld [vmem:[%s5 + $0x528] sm:$0xff]
        %v6882 = vld [vmem:[%s5 + $0x530] sm:$0xff]
        %v6883 = vld [vmem:[%s5 + $0x538] sm:$0xff]
        %v6884 = vld [vmem:[%s5 + $0x540] sm:$0xff]
        %v6885 = vld [vmem:[%s5 + $0x548] sm:$0xff]
        %v6886 = vld [vmem:[%s5 + $0x550] sm:$0xff]
        %v6887 = vld [vmem:[%s5 + $0x558] sm:$0xff]
        %v6888 = vld [vmem:[%s5 + $0x560] sm:$0xff]
        %v6889 = vld [vmem:[%s5 + $0x568] sm:$0xff]
        %v6890 = vld [vmem:[%s5 + $0x570] sm:$0xff]
        %v6891 = vld [vmem:[%s5 + $0x578] sm:$0xff]
        %v6892 = vld [vmem:[%s5 + $0x580] sm:$0xff]
        %v6893 = vld [vmem:[%s5 + $0x588] sm:$0xff]
        %v6894 = vld [vmem:[%s5 + $0x590] sm:$0xff]
        %v6895 = vld [vmem:[%s5 + $0x598] sm:$0xff]
        %v6896 = vld [vmem:[%s5 + $0x5a0] sm:$0xff]
        %v6897 = vld [vmem:[%s5 + $0x5a8] sm:$0xff]
        %v6898 = vld [vmem:[%s5 + $0x5b0] sm:$0xff]
        %v6899 = vld [vmem:[%s5 + $0x5b8] sm:$0xff]
        %v6900 = vld [vmem:[%s5 + $0x5c0] sm:$0xff]
        %v6901 = vld [vmem:[%s5 + $0x5c8] sm:$0xff]
        %v6902 = vld [vmem:[%s5 + $0x5d0] sm:$0xff]
        %v6903 = vld [vmem:[%s5 + $0x5d8] sm:$0xff]
        %v6904 = vld [vmem:[%s5 + $0x5e0] sm:$0xff]
        %v6905 = vld [vmem:[%s5 + $0x5e8] sm:$0xff]
        %v6906 = vld [vmem:[%s5 + $0x5f0] sm:$0xff]
        %v6907 = vld [vmem:[%s5 + $0x5f8] sm:$0xff]
        %v6908 = vld [vmem:[%s5 + $0x600] sm:$0xff]
        %v6909 = vld [vmem:[%s5 + $0x608] sm:$0xff]
        %v6910 = vld [vmem:[%s5 + $0x610] sm:$0xff]
        %v6911 = vld [vmem:[%s5 + $0x618] sm:$0xff]
        %v6912 = vld [vmem:[%s5 + $0x620] sm:$0xff]
        %v6913 = vld [vmem:[%s5 + $0x628] sm:$0xff]
        %v6914 = vld [vmem:[%s5 + $0x630] sm:$0xff]
        %v6915 = vld [vmem:[%s5 + $0x638] sm:$0xff]
        %v6916 = vld [vmem:[%s6] sm:$0x1]
        %v6918 = vlaneseq
        %v6919 = vshrl.u32 %v6918, 7
        %v6920 = vsub.s32 0, %v6919
        %v6921 = vrot.slane %v6916, %v6920
        %v6924 = vsel %vm331, %v6312, 0
        %v6927 = vsel %vm331, %v6325, 0
        %v6930 = vsel %vm331, %v6338, 0
        %v6933 = vsel %vm331, %v6351, 0
        %v6936 = vsel %vm331, %v6364, 0
        %v6939 = vsel %vm331, %v6377, 0
        %v6942 = vsel %vm331, %v6390, 0
        %v6945 = vsel %vm331, %v6403, 0
        %v6948 = vsel %vm331, %v6416, 0
        %v6951 = vsel %vm331, %v6429, 0
        %v6954 = vsel %vm331, %v6442, 0
        %v6957 = vsel %vm331, %v6455, 0
        %v6960 = vsel %vm331, %v6468, 0
        %v6963 = vsel %vm331, %v6481, 0
        %v6966 = vsel %vm331, %v6494, 0
        %v6969 = vsel %vm331, %v6507, 0
        %v6972 = vsel %vm331, %v6520, 0
        %v6975 = vsel %vm331, %v6533, 0
        %v6978 = vsel %vm331, %v6546, 0
        %v6981 = vsel %vm331, %v6559, 0
        %v6984 = vsel %vm331, %v6572, 0
        %v6987 = vsel %vm331, %v6585, 0
        %v6990 = vsel %vm331, %v6598, 0
        %v6993 = vsel %vm331, %v6611, 0
        %v6996 = vsel %vm331, %v6624, 0
        %v6999 = vsel %vm331, %v6637, 0
        %v7002 = vsel %vm331, %v6650, 0
        %v7005 = vsel %vm331, %v6663, 0
        %v7008 = vsel %vm331, %v6676, 0
        %v7011 = vsel %vm331, %v6689, 0
        %v7014 = vsel %vm331, %v6702, 0
        %v7017 = vsel %vm331, %v6715, 0
        %7019 = vmatprep.subr.mxu0 0.0
        %7020 = vmatpush1.msra.mxu0 %v6731
        %7021 = vmatprep.subr.mxu0 0.0
        %7022 = vmatpush1.msra.mxu0 %v6730
        %7023 = vmatprep.subr.mxu0 0.0
        %7024 = vmatpush1.msra.mxu0 %v6729
        %7025 = vmatprep.subr.mxu0 0.0
        %7026 = vmatpush1.msra.mxu0 %v6728
        %7027 = vmatprep.subr.mxu0 0.0
        %7028 = vmatpush1.msra.mxu0 %v6727
        %7029 = vmatprep.subr.mxu0 0.0
        %7030 = vmatpush1.msra.mxu0 %v6726
        %7031 = vmatprep.subr.mxu0 0.0
        %7032 = vmatpush1.msra.mxu0 %v6725
        %7033 = vmatprep.subr.mxu0 0.0
        %7034 = vmatpush1.msra.mxu0 %v6724
        %7035 = vmatprep.subr.mxu0 0.0
        %7036 = vmatpush1.msra.mxu0 %v6723
        %7037 = vmatprep.subr.mxu0 0.0
        %7038 = vmatpush1.msra.mxu0 %v6722
        %7039 = vmatprep.subr.mxu0 0.0
        %7040 = vmatpush1.msra.mxu0 %v6721
        %7041 = vmatprep.subr.mxu0 0.0
        %7042 = vmatpush1.msra.mxu0 %v6720
        %7043 = vmatprep.subr.mxu0 0.0
        %7044 = vmatpush1.msra.mxu0 %v6719
        %7045 = vmatprep.subr.mxu0 0.0
        %7046 = vmatpush1.msra.mxu0 %v6718
        %7047 = vmatprep.subr.mxu0 0.0
        %7048 = vmatpush1.msra.mxu0 %v6717
        %7049 = vmatprep.subr.mxu0 0.0
        %7050 = vmatpush1.msra.mxu0 %v6716
        %7051 = vmatprep.subr.mxu0 0.0
        %7052 = vmatpush2.msra.mxu0 %v6747
        %7053 = vmatprep.subr.mxu0 0.0
        %7054 = vmatpush2.msra.mxu0 %v6746
        %7055 = vmatprep.subr.mxu0 0.0
        %7056 = vmatpush2.msra.mxu0 %v6745
        %7057 = vmatprep.subr.mxu0 0.0
        %7058 = vmatpush2.msra.mxu0 %v6744
        %7059 = vmatprep.subr.mxu0 0.0
        %7060 = vmatpush2.msra.mxu0 %v6743
        %7061 = vmatprep.subr.mxu0 0.0
        %7062 = vmatpush2.msra.mxu0 %v6742
        %7063 = vmatprep.subr.mxu0 0.0
        %7064 = vmatpush2.msra.mxu0 %v6741
        %7065 = vmatprep.subr.mxu0 0.0
        %7066 = vmatpush2.msra.mxu0 %v6740
        %7067 = vmatprep.subr.mxu0 0.0
        %7068 = vmatpush2.msra.mxu0 %v6739
        %7069 = vmatprep.subr.mxu0 0.0
        %7070 = vmatpush2.msra.mxu0 %v6738
        %7071 = vmatprep.subr.mxu0 0.0
        %7072 = vmatpush2.msra.mxu0 %v6737
        %7073 = vmatprep.subr.mxu0 0.0
        %7074 = vmatpush2.msra.mxu0 %v6736
        %7075 = vmatprep.subr.mxu0 0.0
        %7076 = vmatpush2.msra.mxu0 %v6735
        %7077 = vmatprep.subr.mxu0 0.0
        %7078 = vmatpush2.msra.mxu0 %v6734
        %7079 = vmatprep.subr.mxu0 0.0
        %7080 = vmatpush2.msra.mxu0 %v6733
        %7081 = vmatprep.subr.mxu0 0.0
        %7082 = vmatpush2.msra.mxu0 %v6732
        %7083 = vmatprep.mubr.f32.mxu0 %v6301
        %7084 = vmatmul.mubr.f32.gmra.mxu0 %v6300
        %v7085 = vpop.f32.mrf.mxu0
        %v7086 = vadd.f32 %v6921, %v7085
        %v7087 = vpop.f32.mrf.mxu0
        %7088 = vmatprep.mubr.f32.mxu0 %v6314
        %7089 = vmatmul.mubr.f32.gmra.mxu0 %v6313
        %v7090 = vpop.f32.mrf.mxu0
        %v7091 = vadd.f32 %v6921, %v7090
        %v7092 = vpop.f32.mrf.mxu0
        %7093 = vmatprep.mubr.f32.mxu0 %v6327
        %7094 = vmatmul.mubr.f32.gmra.mxu0 %v6326
        %v7095 = vpop.f32.mrf.mxu0
        %v7096 = vadd.f32 %v6921, %v7095
        %v7097 = vpop.f32.mrf.mxu0
        %7098 = vmatprep.mubr.f32.mxu0 %v6340
        %7099 = vmatmul.mubr.f32.gmra.mxu0 %v6339
        %v7100 = vpop.f32.mrf.mxu0
        %v7101 = vadd.f32 %v6921, %v7100
        %v7102 = vpop.f32.mrf.mxu0
        %7103 = vmatprep.mubr.f32.mxu0 %v6353
        %7104 = vmatmul.mubr.f32.gmra.mxu0 %v6352
        %v7105 = vpop.f32.mrf.mxu0
        %v7106 = vadd.f32 %v6921, %v7105
        %v7107 = vpop.f32.mrf.mxu0
        %7108 = vmatprep.mubr.f32.mxu0 %v6366
        %7109 = vmatmul.mubr.f32.gmra.mxu0 %v6365
        %v7110 = vpop.f32.mrf.mxu0
        %v7111 = vadd.f32 %v6921, %v7110
        %v7112 = vpop.f32.mrf.mxu0
        %7113 = vmatprep.mubr.f32.mxu0 %v6379
        %7114 = vmatmul.mubr.f32.gmra.mxu0 %v6378
        %v7115 = vpop.f32.mrf.mxu0
        %v7116 = vadd.f32 %v6921, %v7115
        %v7117 = vpop.f32.mrf.mxu0
        %7118 = vmatprep.mubr.f32.mxu0 %v6392
        %7119 = vmatmul.mubr.f32.gmra.mxu0 %v6391
        %v7120 = vpop.f32.mrf.mxu0
        %v7121 = vadd.f32 %v6921, %v7120
        %v7122 = vpop.f32.mrf.mxu0
        %7123 = vmatprep.mubr.f32.mxu0 %v6405
        %7124 = vmatmul.mubr.f32.gmra.mxu0 %v6404
        %v7125 = vpop.f32.mrf.mxu0
        %v7126 = vadd.f32 %v6921, %v7125
        %v7127 = vpop.f32.mrf.mxu0
        %7128 = vmatprep.mubr.f32.mxu0 %v6418
        %7129 = vmatmul.mubr.f32.gmra.mxu0 %v6417
        %v7130 = vpop.f32.mrf.mxu0
        %v7131 = vadd.f32 %v6921, %v7130
        %v7132 = vpop.f32.mrf.mxu0
        %7133 = vmatprep.mubr.f32.mxu0 %v6431
        %7134 = vmatmul.mubr.f32.gmra.mxu0 %v6430
        %v7135 = vpop.f32.mrf.mxu0
        %v7136 = vadd.f32 %v6921, %v7135
        %v7137 = vpop.f32.mrf.mxu0
        %7138 = vmatprep.mubr.f32.mxu0 %v6444
        %7139 = vmatmul.mubr.f32.gmra.mxu0 %v6443
        %v7140 = vpop.f32.mrf.mxu0
        %v7141 = vadd.f32 %v6921, %v7140
        %v7142 = vpop.f32.mrf.mxu0
        %7143 = vmatprep.mubr.f32.mxu0 %v6457
        %7144 = vmatmul.mubr.f32.gmra.mxu0 %v6456
        %v7145 = vpop.f32.mrf.mxu0
        %v7146 = vadd.f32 %v6921, %v7145
        %v7147 = vpop.f32.mrf.mxu0
        %7148 = vmatprep.mubr.f32.mxu0 %v6470
        %7149 = vmatmul.mubr.f32.gmra.mxu0 %v6469
        %v7150 = vpop.f32.mrf.mxu0
        %v7151 = vadd.f32 %v6921, %v7150
        %v7152 = vpop.f32.mrf.mxu0
        %7153 = vmatprep.mubr.f32.mxu0 %v6483
        %7154 = vmatmul.mubr.f32.gmra.mxu0 %v6482
        %v7155 = vpop.f32.mrf.mxu0
        %v7156 = vadd.f32 %v6921, %v7155
        %v7157 = vpop.f32.mrf.mxu0
        %7158 = vmatprep.mubr.f32.mxu0 %v6496
        %7159 = vmatmul.mubr.f32.gmra.mxu0 %v6495
        %v7160 = vpop.f32.mrf.mxu0
        %v7161 = vadd.f32 %v6921, %v7160
        %v7162 = vpop.f32.mrf.mxu0
        %7163 = vmatprep.mubr.f32.mxu0 %v6509
        %7164 = vmatmul.mubr.f32.gmra.mxu0 %v6508
        %v7165 = vpop.f32.mrf.mxu0
        %v7166 = vadd.f32 %v6921, %v7165
        %v7167 = vpop.f32.mrf.mxu0
        %7168 = vmatprep.mubr.f32.mxu0 %v6522
        %7169 = vmatmul.mubr.f32.gmra.mxu0 %v6521
        %v7170 = vpop.f32.mrf.mxu0
        %v7171 = vadd.f32 %v6921, %v7170
        %v7172 = vpop.f32.mrf.mxu0
        %7173 = vmatprep.mubr.f32.mxu0 %v6535
        %7174 = vmatmul.mubr.f32.gmra.mxu0 %v6534
        %v7175 = vpop.f32.mrf.mxu0
        %v7176 = vadd.f32 %v6921, %v7175
        %v7177 = vpop.f32.mrf.mxu0
        %7178 = vmatprep.mubr.f32.mxu0 %v6548
        %7179 = vmatmul.mubr.f32.gmra.mxu0 %v6547
        %v7180 = vpop.f32.mrf.mxu0
        %v7181 = vadd.f32 %v6921, %v7180
        %v7182 = vpop.f32.mrf.mxu0
        %7183 = vmatprep.mubr.f32.mxu0 %v6561
        %7184 = vmatmul.mubr.f32.gmra.mxu0 %v6560
        %v7185 = vpop.f32.mrf.mxu0
        %v7186 = vadd.f32 %v6921, %v7185
        %v7187 = vpop.f32.mrf.mxu0
        %7188 = vmatprep.mubr.f32.mxu0 %v6574
        %7189 = vmatmul.mubr.f32.gmra.mxu0 %v6573
        %v7190 = vpop.f32.mrf.mxu0
        %v7191 = vadd.f32 %v6921, %v7190
        %v7192 = vpop.f32.mrf.mxu0
        %7193 = vmatprep.mubr.f32.mxu0 %v6587
        %7194 = vmatmul.mubr.f32.gmra.mxu0 %v6586
        %v7195 = vpop.f32.mrf.mxu0
        %v7196 = vadd.f32 %v6921, %v7195
        %v7197 = vpop.f32.mrf.mxu0
        %7198 = vmatprep.mubr.f32.mxu0 %v6600
        %7199 = vmatmul.mubr.f32.gmra.mxu0 %v6599
        %v7200 = vpop.f32.mrf.mxu0
        %v7201 = vadd.f32 %v6921, %v7200
        %v7202 = vpop.f32.mrf.mxu0
        %7203 = vmatprep.mubr.f32.mxu0 %v6613
        %7204 = vmatmul.mubr.f32.gmra.mxu0 %v6612
        %v7205 = vpop.f32.mrf.mxu0
        %v7206 = vadd.f32 %v6921, %v7205
        %v7207 = vpop.f32.mrf.mxu0
        %7208 = vmatprep.mubr.f32.mxu0 %v6626
        %7209 = vmatmul.mubr.f32.gmra.mxu0 %v6625
        %v7210 = vpop.f32.mrf.mxu0
        %v7211 = vadd.f32 %v6921, %v7210
        %v7212 = vpop.f32.mrf.mxu0
        %7213 = vmatprep.mubr.f32.mxu0 %v6639
        %7214 = vmatmul.mubr.f32.gmra.mxu0 %v6638
        %v7215 = vpop.f32.mrf.mxu0
        %v7216 = vadd.f32 %v6921, %v7215
        %v7217 = vpop.f32.mrf.mxu0
        %7218 = vmatprep.mubr.f32.mxu0 %v6652
        %7219 = vmatmul.mubr.f32.gmra.mxu0 %v6651
        %v7220 = vpop.f32.mrf.mxu0
        %v7221 = vadd.f32 %v6921, %v7220
        %v7222 = vpop.f32.mrf.mxu0
        %7223 = vmatprep.mubr.f32.mxu0 %v6665
        %7224 = vmatmul.mubr.f32.gmra.mxu0 %v6664
        %v7225 = vpop.f32.mrf.mxu0
        %v7226 = vadd.f32 %v6921, %v7225
        %v7227 = vpop.f32.mrf.mxu0
        %7228 = vmatprep.mubr.f32.mxu0 %v6678
        %7229 = vmatmul.mubr.f32.gmra.mxu0 %v6677
        %v7230 = vpop.f32.mrf.mxu0
        %v7231 = vadd.f32 %v6921, %v7230
        %v7232 = vpop.f32.mrf.mxu0
        %7233 = vmatprep.mubr.f32.mxu0 %v6691
        %7234 = vmatmul.mubr.f32.gmra.mxu0 %v6690
        %v7235 = vpop.f32.mrf.mxu0
        %v7236 = vadd.f32 %v6921, %v7235
        %v7237 = vpop.f32.mrf.mxu0
        %7238 = vmatprep.mubr.f32.mxu0 %v6704
        %7239 = vmatmul.mubr.f32.gmra.mxu0 %v6703
        %v7240 = vpop.f32.mrf.mxu0
        %v7241 = vadd.f32 %v6921, %v7240
        %v7242 = vpop.f32.mrf.mxu0
        %7243 = vdwg.mxu0
        %7244 = vmatprep.subr.mxu0 0.0
        %7245 = vmatpush1.msra.mxu0 %v6763
        %7246 = vmatprep.subr.mxu0 0.0
        %7247 = vmatpush1.msra.mxu0 %v6762
        %7248 = vmatprep.subr.mxu0 0.0
        %7249 = vmatpush1.msra.mxu0 %v6761
        %7250 = vmatprep.subr.mxu0 0.0
        %7251 = vmatpush1.msra.mxu0 %v6760
        %7252 = vmatprep.subr.mxu0 0.0
        %7253 = vmatpush1.msra.mxu0 %v6759
        %7254 = vmatprep.subr.mxu0 0.0
        %7255 = vmatpush1.msra.mxu0 %v6758
        %7256 = vmatprep.subr.mxu0 0.0
        %7257 = vmatpush1.msra.mxu0 %v6757
        %7258 = vmatprep.subr.mxu0 0.0
        %7259 = vmatpush1.msra.mxu0 %v6756
        %7260 = vmatprep.subr.mxu0 0.0
        %7261 = vmatpush1.msra.mxu0 %v6755
        %7262 = vmatprep.subr.mxu0 0.0
        %7263 = vmatpush1.msra.mxu0 %v6754
        %7264 = vmatprep.subr.mxu0 0.0
        %7265 = vmatpush1.msra.mxu0 %v6753
        %7266 = vmatprep.subr.mxu0 0.0
        %7267 = vmatpush1.msra.mxu0 %v6752
        %7268 = vmatprep.subr.mxu0 0.0
        %7269 = vmatpush1.msra.mxu0 %v6751
        %7270 = vmatprep.subr.mxu0 0.0
        %7271 = vmatpush1.msra.mxu0 %v6750
        %7272 = vmatprep.subr.mxu0 0.0
        %7273 = vmatpush1.msra.mxu0 %v6749
        %7274 = vmatprep.subr.mxu0 0.0
        %7275 = vmatpush1.msra.mxu0 %v6748
        %7276 = vmatprep.subr.mxu0 0.0
        %7277 = vmatpush2.msra.mxu0 %v6779
        %7278 = vmatprep.subr.mxu0 0.0
        %7279 = vmatpush2.msra.mxu0 %v6778
        %7280 = vmatprep.subr.mxu0 0.0
        %7281 = vmatpush2.msra.mxu0 %v6777
        %7282 = vmatprep.subr.mxu0 0.0
        %7283 = vmatpush2.msra.mxu0 %v6776
        %7284 = vmatprep.subr.mxu0 0.0
        %7285 = vmatpush2.msra.mxu0 %v6775
        %7286 = vmatprep.subr.mxu0 0.0
        %7287 = vmatpush2.msra.mxu0 %v6774
        %7288 = vmatprep.subr.mxu0 0.0
        %7289 = vmatpush2.msra.mxu0 %v6773
        %7290 = vmatprep.subr.mxu0 0.0
        %7291 = vmatpush2.msra.mxu0 %v6772
        %7292 = vmatprep.subr.mxu0 0.0
        %7293 = vmatpush2.msra.mxu0 %v6771
        %7294 = vmatprep.subr.mxu0 0.0
        %7295 = vmatpush2.msra.mxu0 %v6770
        %7296 = vmatprep.subr.mxu0 0.0
        %7297 = vmatpush2.msra.mxu0 %v6769
        %7298 = vmatprep.subr.mxu0 0.0
        %7299 = vmatpush2.msra.mxu0 %v6768
        %7300 = vmatprep.subr.mxu0 0.0
        %7301 = vmatpush2.msra.mxu0 %v6767
        %7302 = vmatprep.subr.mxu0 0.0
        %7303 = vmatpush2.msra.mxu0 %v6766
        %7304 = vmatprep.subr.mxu0 0.0
        %7305 = vmatpush2.msra.mxu0 %v6765
        %7306 = vmatprep.subr.mxu0 0.0
        %7307 = vmatpush2.msra.mxu0 %v6764
        %7308 = vmatprep.mubr.f32.mxu0 %v6303
        %7309 = vmatmul.mubr.f32.gmra.mxu0 %v6302
        %v7310 = vpop.f32.mrf.mxu0
        %v7311 = vadd.f32 %v7086, %v7310
        %v7312 = vpop.f32.mrf.mxu0
        %7313 = vmatprep.mubr.f32.mxu0 %v6316
        %7314 = vmatmul.mubr.f32.gmra.mxu0 %v6315
        %v7315 = vpop.f32.mrf.mxu0
        %v7316 = vadd.f32 %v7091, %v7315
        %v7317 = vpop.f32.mrf.mxu0
        %7318 = vmatprep.mubr.f32.mxu0 %v6329
        %7319 = vmatmul.mubr.f32.gmra.mxu0 %v6328
        %v7320 = vpop.f32.mrf.mxu0
        %v7321 = vadd.f32 %v7096, %v7320
        %v7322 = vpop.f32.mrf.mxu0
        %7323 = vmatprep.mubr.f32.mxu0 %v6342
        %7324 = vmatmul.mubr.f32.gmra.mxu0 %v6341
        %v7325 = vpop.f32.mrf.mxu0
        %v7326 = vadd.f32 %v7101, %v7325
        %v7327 = vpop.f32.mrf.mxu0
        %7328 = vmatprep.mubr.f32.mxu0 %v6355
        %7329 = vmatmul.mubr.f32.gmra.mxu0 %v6354
        %v7330 = vpop.f32.mrf.mxu0
        %v7331 = vadd.f32 %v7106, %v7330
        %v7332 = vpop.f32.mrf.mxu0
        %7333 = vmatprep.mubr.f32.mxu0 %v6368
        %7334 = vmatmul.mubr.f32.gmra.mxu0 %v6367
        %v7335 = vpop.f32.mrf.mxu0
        %v7336 = vadd.f32 %v7111, %v7335
        %v7337 = vpop.f32.mrf.mxu0
        %7338 = vmatprep.mubr.f32.mxu0 %v6381
        %7339 = vmatmul.mubr.f32.gmra.mxu0 %v6380
        %v7340 = vpop.f32.mrf.mxu0
        %v7341 = vadd.f32 %v7116, %v7340
        %v7342 = vpop.f32.mrf.mxu0
        %7343 = vmatprep.mubr.f32.mxu0 %v6394
        %7344 = vmatmul.mubr.f32.gmra.mxu0 %v6393
        %v7345 = vpop.f32.mrf.mxu0
        %v7346 = vadd.f32 %v7121, %v7345
        %v7347 = vpop.f32.mrf.mxu0
        %7348 = vmatprep.mubr.f32.mxu0 %v6407
        %7349 = vmatmul.mubr.f32.gmra.mxu0 %v6406
        %v7350 = vpop.f32.mrf.mxu0
        %v7351 = vadd.f32 %v7126, %v7350
        %v7352 = vpop.f32.mrf.mxu0
        %7353 = vmatprep.mubr.f32.mxu0 %v6420
        %7354 = vmatmul.mubr.f32.gmra.mxu0 %v6419
        %v7355 = vpop.f32.mrf.mxu0
        %v7356 = vadd.f32 %v7131, %v7355
        %v7357 = vpop.f32.mrf.mxu0
        %7358 = vmatprep.mubr.f32.mxu0 %v6433
        %7359 = vmatmul.mubr.f32.gmra.mxu0 %v6432
        %v7360 = vpop.f32.mrf.mxu0
        %v7361 = vadd.f32 %v7136, %v7360
        %v7362 = vpop.f32.mrf.mxu0
        %7363 = vmatprep.mubr.f32.mxu0 %v6446
        %7364 = vmatmul.mubr.f32.gmra.mxu0 %v6445
        %v7365 = vpop.f32.mrf.mxu0
        %v7366 = vadd.f32 %v7141, %v7365
        %v7367 = vpop.f32.mrf.mxu0
        %7368 = vmatprep.mubr.f32.mxu0 %v6459
        %7369 = vmatmul.mubr.f32.gmra.mxu0 %v6458
        %v7370 = vpop.f32.mrf.mxu0
        %v7371 = vadd.f32 %v7146, %v7370
        %v7372 = vpop.f32.mrf.mxu0
        %7373 = vmatprep.mubr.f32.mxu0 %v6472
        %7374 = vmatmul.mubr.f32.gmra.mxu0 %v6471
        %v7375 = vpop.f32.mrf.mxu0
        %v7376 = vadd.f32 %v7151, %v7375
        %v7377 = vpop.f32.mrf.mxu0
        %7378 = vmatprep.mubr.f32.mxu0 %v6485
        %7379 = vmatmul.mubr.f32.gmra.mxu0 %v6484
        %v7380 = vpop.f32.mrf.mxu0
        %v7381 = vadd.f32 %v7156, %v7380
        %v7382 = vpop.f32.mrf.mxu0
        %7383 = vmatprep.mubr.f32.mxu0 %v6498
        %7384 = vmatmul.mubr.f32.gmra.mxu0 %v6497
        %v7385 = vpop.f32.mrf.mxu0
        %v7386 = vadd.f32 %v7161, %v7385
        %v7387 = vpop.f32.mrf.mxu0
        %7388 = vmatprep.mubr.f32.mxu0 %v6511
        %7389 = vmatmul.mubr.f32.gmra.mxu0 %v6510
        %v7390 = vpop.f32.mrf.mxu0
        %v7391 = vadd.f32 %v7166, %v7390
        %v7392 = vpop.f32.mrf.mxu0
        %7393 = vmatprep.mubr.f32.mxu0 %v6524
        %7394 = vmatmul.mubr.f32.gmra.mxu0 %v6523
        %v7395 = vpop.f32.mrf.mxu0
        %v7396 = vadd.f32 %v7171, %v7395
        %v7397 = vpop.f32.mrf.mxu0
        %7398 = vmatprep.mubr.f32.mxu0 %v6537
        %7399 = vmatmul.mubr.f32.gmra.mxu0 %v6536
        %v7400 = vpop.f32.mrf.mxu0
        %v7401 = vadd.f32 %v7176, %v7400
        %v7402 = vpop.f32.mrf.mxu0
        %7403 = vmatprep.mubr.f32.mxu0 %v6550
        %7404 = vmatmul.mubr.f32.gmra.mxu0 %v6549
        %v7405 = vpop.f32.mrf.mxu0
        %v7406 = vadd.f32 %v7181, %v7405
        %v7407 = vpop.f32.mrf.mxu0
        %7408 = vmatprep.mubr.f32.mxu0 %v6563
        %7409 = vmatmul.mubr.f32.gmra.mxu0 %v6562
        %v7410 = vpop.f32.mrf.mxu0
        %v7411 = vadd.f32 %v7186, %v7410
        %v7412 = vpop.f32.mrf.mxu0
        %7413 = vmatprep.mubr.f32.mxu0 %v6576
        %7414 = vmatmul.mubr.f32.gmra.mxu0 %v6575
        %v7415 = vpop.f32.mrf.mxu0
        %v7416 = vadd.f32 %v7191, %v7415
        %v7417 = vpop.f32.mrf.mxu0
        %7418 = vmatprep.mubr.f32.mxu0 %v6589
        %7419 = vmatmul.mubr.f32.gmra.mxu0 %v6588
        %v7420 = vpop.f32.mrf.mxu0
        %v7421 = vadd.f32 %v7196, %v7420
        %v7422 = vpop.f32.mrf.mxu0
        %7423 = vmatprep.mubr.f32.mxu0 %v6602
        %7424 = vmatmul.mubr.f32.gmra.mxu0 %v6601
        %v7425 = vpop.f32.mrf.mxu0
        %v7426 = vadd.f32 %v7201, %v7425
        %v7427 = vpop.f32.mrf.mxu0
        %7428 = vmatprep.mubr.f32.mxu0 %v6615
        %7429 = vmatmul.mubr.f32.gmra.mxu0 %v6614
        %v7430 = vpop.f32.mrf.mxu0
        %v7431 = vadd.f32 %v7206, %v7430
        %v7432 = vpop.f32.mrf.mxu0
        %7433 = vmatprep.mubr.f32.mxu0 %v6628
        %7434 = vmatmul.mubr.f32.gmra.mxu0 %v6627
        %v7435 = vpop.f32.mrf.mxu0
        %v7436 = vadd.f32 %v7211, %v7435
        %v7437 = vpop.f32.mrf.mxu0
        %7438 = vmatprep.mubr.f32.mxu0 %v6641
        %7439 = vmatmul.mubr.f32.gmra.mxu0 %v6640
        %v7440 = vpop.f32.mrf.mxu0
        %v7441 = vadd.f32 %v7216, %v7440
        %v7442 = vpop.f32.mrf.mxu0
        %7443 = vmatprep.mubr.f32.mxu0 %v6654
        %7444 = vmatmul.mubr.f32.gmra.mxu0 %v6653
        %v7445 = vpop.f32.mrf.mxu0
        %v7446 = vadd.f32 %v7221, %v7445
        %v7447 = vpop.f32.mrf.mxu0
        %7448 = vmatprep.mubr.f32.mxu0 %v6667
        %7449 = vmatmul.mubr.f32.gmra.mxu0 %v6666
        %v7450 = vpop.f32.mrf.mxu0
        %v7451 = vadd.f32 %v7226, %v7450
        %v7452 = vpop.f32.mrf.mxu0
        %7453 = vmatprep.mubr.f32.mxu0 %v6680
        %7454 = vmatmul.mubr.f32.gmra.mxu0 %v6679
        %v7455 = vpop.f32.mrf.mxu0
        %v7456 = vadd.f32 %v7231, %v7455
        %v7457 = vpop.f32.mrf.mxu0
        %7458 = vmatprep.mubr.f32.mxu0 %v6693
        %7459 = vmatmul.mubr.f32.gmra.mxu0 %v6692
        %v7460 = vpop.f32.mrf.mxu0
        %v7461 = vadd.f32 %v7236, %v7460
        %v7462 = vpop.f32.mrf.mxu0
        %7463 = vmatprep.mubr.f32.mxu0 %v6706
        %7464 = vmatmul.mubr.f32.gmra.mxu0 %v6705
        %v7465 = vpop.f32.mrf.mxu0
        %v7466 = vadd.f32 %v7241, %v7465
        %v7467 = vpop.f32.mrf.mxu0
        %7468 = vdwg.mxu0
        %7469 = vmatprep.subr.mxu0 0.0
        %7470 = vmatpush1.msra.mxu0 %v6795
        %7471 = vmatprep.subr.mxu0 0.0
        %7472 = vmatpush1.msra.mxu0 %v6794
        %7473 = vmatprep.subr.mxu0 0.0
        %7474 = vmatpush1.msra.mxu0 %v6793
        %7475 = vmatprep.subr.mxu0 0.0
        %7476 = vmatpush1.msra.mxu0 %v6792
        %7477 = vmatprep.subr.mxu0 0.0
        %7478 = vmatpush1.msra.mxu0 %v6791
        %7479 = vmatprep.subr.mxu0 0.0
        %7480 = vmatpush1.msra.mxu0 %v6790
        %7481 = vmatprep.subr.mxu0 0.0
        %7482 = vmatpush1.msra.mxu0 %v6789
        %7483 = vmatprep.subr.mxu0 0.0
        %7484 = vmatpush1.msra.mxu0 %v6788
        %7485 = vmatprep.subr.mxu0 0.0
        %7486 = vmatpush1.msra.mxu0 %v6787
        %7487 = vmatprep.subr.mxu0 0.0
        %7488 = vmatpush1.msra.mxu0 %v6786
        %7489 = vmatprep.subr.mxu0 0.0
        %7490 = vmatpush1.msra.mxu0 %v6785
        %7491 = vmatprep.subr.mxu0 0.0
        %7492 = vmatpush1.msra.mxu0 %v6784
        %7493 = vmatprep.subr.mxu0 0.0
        %7494 = vmatpush1.msra.mxu0 %v6783
        %7495 = vmatprep.subr.mxu0 0.0
        %7496 = vmatpush1.msra.mxu0 %v6782
        %7497 = vmatprep.subr.mxu0 0.0
        %7498 = vmatpush1.msra.mxu0 %v6781
        %7499 = vmatprep.subr.mxu0 0.0
        %7500 = vmatpush1.msra.mxu0 %v6780
        %7501 = vmatprep.subr.mxu0 0.0
        %7502 = vmatpush2.msra.mxu0 %v6811
        %7503 = vmatprep.subr.mxu0 0.0
        %7504 = vmatpush2.msra.mxu0 %v6810
        %7505 = vmatprep.subr.mxu0 0.0
        %7506 = vmatpush2.msra.mxu0 %v6809
        %7507 = vmatprep.subr.mxu0 0.0
        %7508 = vmatpush2.msra.mxu0 %v6808
        %7509 = vmatprep.subr.mxu0 0.0
        %7510 = vmatpush2.msra.mxu0 %v6807
        %7511 = vmatprep.subr.mxu0 0.0
        %7512 = vmatpush2.msra.mxu0 %v6806
        %7513 = vmatprep.subr.mxu0 0.0
        %7514 = vmatpush2.msra.mxu0 %v6805
        %7515 = vmatprep.subr.mxu0 0.0
        %7516 = vmatpush2.msra.mxu0 %v6804
        %7517 = vmatprep.subr.mxu0 0.0
        %7518 = vmatpush2.msra.mxu0 %v6803
        %7519 = vmatprep.subr.mxu0 0.0
        %7520 = vmatpush2.msra.mxu0 %v6802
        %7521 = vmatprep.subr.mxu0 0.0
        %7522 = vmatpush2.msra.mxu0 %v6801
        %7523 = vmatprep.subr.mxu0 0.0
        %7524 = vmatpush2.msra.mxu0 %v6800
        %7525 = vmatprep.subr.mxu0 0.0
        %7526 = vmatpush2.msra.mxu0 %v6799
        %7527 = vmatprep.subr.mxu0 0.0
        %7528 = vmatpush2.msra.mxu0 %v6798
        %7529 = vmatprep.subr.mxu0 0.0
        %7530 = vmatpush2.msra.mxu0 %v6797
        %7531 = vmatprep.subr.mxu0 0.0
        %7532 = vmatpush2.msra.mxu0 %v6796
        %7533 = vmatprep.mubr.f32.mxu0 %v6305
        %7534 = vmatmul.mubr.f32.gmra.mxu0 %v6304
        %v7535 = vpop.f32.mrf.mxu0
        %v7536 = vadd.f32 %v7311, %v7535
        %v7537 = vpop.f32.mrf.mxu0
        %7538 = vmatprep.mubr.f32.mxu0 %v6318
        %7539 = vmatmul.mubr.f32.gmra.mxu0 %v6317
        %v7540 = vpop.f32.mrf.mxu0
        %v7541 = vadd.f32 %v7316, %v7540
        %v7542 = vpop.f32.mrf.mxu0
        %7543 = vmatprep.mubr.f32.mxu0 %v6331
        %7544 = vmatmul.mubr.f32.gmra.mxu0 %v6330
        %v7545 = vpop.f32.mrf.mxu0
        %v7546 = vadd.f32 %v7321, %v7545
        %v7547 = vpop.f32.mrf.mxu0
        %7548 = vmatprep.mubr.f32.mxu0 %v6344
        %7549 = vmatmul.mubr.f32.gmra.mxu0 %v6343
        %v7550 = vpop.f32.mrf.mxu0
        %v7551 = vadd.f32 %v7326, %v7550
        %v7552 = vpop.f32.mrf.mxu0
        %7553 = vmatprep.mubr.f32.mxu0 %v6357
        %7554 = vmatmul.mubr.f32.gmra.mxu0 %v6356
        %v7555 = vpop.f32.mrf.mxu0
        %v7556 = vadd.f32 %v7331, %v7555
        %v7557 = vpop.f32.mrf.mxu0
        %7558 = vmatprep.mubr.f32.mxu0 %v6370
        %7559 = vmatmul.mubr.f32.gmra.mxu0 %v6369
        %v7560 = vpop.f32.mrf.mxu0
        %v7561 = vadd.f32 %v7336, %v7560
        %v7562 = vpop.f32.mrf.mxu0
        %7563 = vmatprep.mubr.f32.mxu0 %v6383
        %7564 = vmatmul.mubr.f32.gmra.mxu0 %v6382
        %v7565 = vpop.f32.mrf.mxu0
        %v7566 = vadd.f32 %v7341, %v7565
        %v7567 = vpop.f32.mrf.mxu0
        %7568 = vmatprep.mubr.f32.mxu0 %v6396
        %7569 = vmatmul.mubr.f32.gmra.mxu0 %v6395
        %v7570 = vpop.f32.mrf.mxu0
        %v7571 = vadd.f32 %v7346, %v7570
        %v7572 = vpop.f32.mrf.mxu0
        %7573 = vmatprep.mubr.f32.mxu0 %v6409
        %7574 = vmatmul.mubr.f32.gmra.mxu0 %v6408
        %v7575 = vpop.f32.mrf.mxu0
        %v7576 = vadd.f32 %v7351, %v7575
        %v7577 = vpop.f32.mrf.mxu0
        %7578 = vmatprep.mubr.f32.mxu0 %v6422
        %7579 = vmatmul.mubr.f32.gmra.mxu0 %v6421
        %v7580 = vpop.f32.mrf.mxu0
        %v7581 = vadd.f32 %v7356, %v7580
        %v7582 = vpop.f32.mrf.mxu0
        %7583 = vmatprep.mubr.f32.mxu0 %v6435
        %7584 = vmatmul.mubr.f32.gmra.mxu0 %v6434
        %v7585 = vpop.f32.mrf.mxu0
        %v7586 = vadd.f32 %v7361, %v7585
        %v7587 = vpop.f32.mrf.mxu0
        %7588 = vmatprep.mubr.f32.mxu0 %v6448
        %7589 = vmatmul.mubr.f32.gmra.mxu0 %v6447
        %v7590 = vpop.f32.mrf.mxu0
        %v7591 = vadd.f32 %v7366, %v7590
        %v7592 = vpop.f32.mrf.mxu0
        %7593 = vmatprep.mubr.f32.mxu0 %v6461
        %7594 = vmatmul.mubr.f32.gmra.mxu0 %v6460
        %v7595 = vpop.f32.mrf.mxu0
        %v7596 = vadd.f32 %v7371, %v7595
        %v7597 = vpop.f32.mrf.mxu0
        %7598 = vmatprep.mubr.f32.mxu0 %v6474
        %7599 = vmatmul.mubr.f32.gmra.mxu0 %v6473
        %v7600 = vpop.f32.mrf.mxu0
        %v7601 = vadd.f32 %v7376, %v7600
        %v7602 = vpop.f32.mrf.mxu0
        %7603 = vmatprep.mubr.f32.mxu0 %v6487
        %7604 = vmatmul.mubr.f32.gmra.mxu0 %v6486
        %v7605 = vpop.f32.mrf.mxu0
        %v7606 = vadd.f32 %v7381, %v7605
        %v7607 = vpop.f32.mrf.mxu0
        %7608 = vmatprep.mubr.f32.mxu0 %v6500
        %7609 = vmatmul.mubr.f32.gmra.mxu0 %v6499
        %v7610 = vpop.f32.mrf.mxu0
        %v7611 = vadd.f32 %v7386, %v7610
        %v7612 = vpop.f32.mrf.mxu0
        %7613 = vmatprep.mubr.f32.mxu0 %v6513
        %7614 = vmatmul.mubr.f32.gmra.mxu0 %v6512
        %v7615 = vpop.f32.mrf.mxu0
        %v7616 = vadd.f32 %v7391, %v7615
        %v7617 = vpop.f32.mrf.mxu0
        %7618 = vmatprep.mubr.f32.mxu0 %v6526
        %7619 = vmatmul.mubr.f32.gmra.mxu0 %v6525
        %v7620 = vpop.f32.mrf.mxu0
        %v7621 = vadd.f32 %v7396, %v7620
        %v7622 = vpop.f32.mrf.mxu0
        %7623 = vmatprep.mubr.f32.mxu0 %v6539
        %7624 = vmatmul.mubr.f32.gmra.mxu0 %v6538
        %v7625 = vpop.f32.mrf.mxu0
        %v7626 = vadd.f32 %v7401, %v7625
        %v7627 = vpop.f32.mrf.mxu0
        %7628 = vmatprep.mubr.f32.mxu0 %v6552
        %7629 = vmatmul.mubr.f32.gmra.mxu0 %v6551
        %v7630 = vpop.f32.mrf.mxu0
        %v7631 = vadd.f32 %v7406, %v7630
        %v7632 = vpop.f32.mrf.mxu0
        %7633 = vmatprep.mubr.f32.mxu0 %v6565
        %7634 = vmatmul.mubr.f32.gmra.mxu0 %v6564
        %v7635 = vpop.f32.mrf.mxu0
        %v7636 = vadd.f32 %v7411, %v7635
        %v7637 = vpop.f32.mrf.mxu0
        %7638 = vmatprep.mubr.f32.mxu0 %v6578
        %7639 = vmatmul.mubr.f32.gmra.mxu0 %v6577
        %v7640 = vpop.f32.mrf.mxu0
        %v7641 = vadd.f32 %v7416, %v7640
        %v7642 = vpop.f32.mrf.mxu0
        %7643 = vmatprep.mubr.f32.mxu0 %v6591
        %7644 = vmatmul.mubr.f32.gmra.mxu0 %v6590
        %v7645 = vpop.f32.mrf.mxu0
        %v7646 = vadd.f32 %v7421, %v7645
        %v7647 = vpop.f32.mrf.mxu0
        %7648 = vmatprep.mubr.f32.mxu0 %v6604
        %7649 = vmatmul.mubr.f32.gmra.mxu0 %v6603
        %v7650 = vpop.f32.mrf.mxu0
        %v7651 = vadd.f32 %v7426, %v7650
        %v7652 = vpop.f32.mrf.mxu0
        %7653 = vmatprep.mubr.f32.mxu0 %v6617
        %7654 = vmatmul.mubr.f32.gmra.mxu0 %v6616
        %v7655 = vpop.f32.mrf.mxu0
        %v7656 = vadd.f32 %v7431, %v7655
        %v7657 = vpop.f32.mrf.mxu0
        %7658 = vmatprep.mubr.f32.mxu0 %v6630
        %7659 = vmatmul.mubr.f32.gmra.mxu0 %v6629
        %v7660 = vpop.f32.mrf.mxu0
        %v7661 = vadd.f32 %v7436, %v7660
        %v7662 = vpop.f32.mrf.mxu0
        %7663 = vmatprep.mubr.f32.mxu0 %v6643
        %7664 = vmatmul.mubr.f32.gmra.mxu0 %v6642
        %v7665 = vpop.f32.mrf.mxu0
        %v7666 = vadd.f32 %v7441, %v7665
        %v7667 = vpop.f32.mrf.mxu0
        %7668 = vmatprep.mubr.f32.mxu0 %v6656
        %7669 = vmatmul.mubr.f32.gmra.mxu0 %v6655
        %v7670 = vpop.f32.mrf.mxu0
        %v7671 = vadd.f32 %v7446, %v7670
        %v7672 = vpop.f32.mrf.mxu0
        %7673 = vmatprep.mubr.f32.mxu0 %v6669
        %7674 = vmatmul.mubr.f32.gmra.mxu0 %v6668
        %v7675 = vpop.f32.mrf.mxu0
        %v7676 = vadd.f32 %v7451, %v7675
        %v7677 = vpop.f32.mrf.mxu0
        %7678 = vmatprep.mubr.f32.mxu0 %v6682
        %7679 = vmatmul.mubr.f32.gmra.mxu0 %v6681
        %v7680 = vpop.f32.mrf.mxu0
        %v7681 = vadd.f32 %v7456, %v7680
        %v7682 = vpop.f32.mrf.mxu0
        %7683 = vmatprep.mubr.f32.mxu0 %v6695
        %7684 = vmatmul.mubr.f32.gmra.mxu0 %v6694
        %v7685 = vpop.f32.mrf.mxu0
        %v7686 = vadd.f32 %v7461, %v7685
        %v7687 = vpop.f32.mrf.mxu0
        %7688 = vmatprep.mubr.f32.mxu0 %v6708
        %7689 = vmatmul.mubr.f32.gmra.mxu0 %v6707
        %v7690 = vpop.f32.mrf.mxu0
        %v7691 = vadd.f32 %v7466, %v7690
        %v7692 = vpop.f32.mrf.mxu0
        %7693 = vdwg.mxu0
        %7694 = vmatprep.subr.mxu0 0.0
        %7695 = vmatpush1.msra.mxu0 %v6827
        %7696 = vmatprep.subr.mxu0 0.0
        %7697 = vmatpush1.msra.mxu0 %v6826
        %7698 = vmatprep.subr.mxu0 0.0
        %7699 = vmatpush1.msra.mxu0 %v6825
        %7700 = vmatprep.subr.mxu0 0.0
        %7701 = vmatpush1.msra.mxu0 %v6824
        %7702 = vmatprep.subr.mxu0 0.0
        %7703 = vmatpush1.msra.mxu0 %v6823
        %7704 = vmatprep.subr.mxu0 0.0
        %7705 = vmatpush1.msra.mxu0 %v6822
        %7706 = vmatprep.subr.mxu0 0.0
        %7707 = vmatpush1.msra.mxu0 %v6821
        %7708 = vmatprep.subr.mxu0 0.0
        %7709 = vmatpush1.msra.mxu0 %v6820
        %7710 = vmatprep.subr.mxu0 0.0
        %7711 = vmatpush1.msra.mxu0 %v6819
        %7712 = vmatprep.subr.mxu0 0.0
        %7713 = vmatpush1.msra.mxu0 %v6818
        %7714 = vmatprep.subr.mxu0 0.0
        %7715 = vmatpush1.msra.mxu0 %v6817
        %7716 = vmatprep.subr.mxu0 0.0
        %7717 = vmatpush1.msra.mxu0 %v6816
        %7718 = vmatprep.subr.mxu0 0.0
        %7719 = vmatpush1.msra.mxu0 %v6815
        %7720 = vmatprep.subr.mxu0 0.0
        %7721 = vmatpush1.msra.mxu0 %v6814
        %7722 = vmatprep.subr.mxu0 0.0
        %7723 = vmatpush1.msra.mxu0 %v6813
        %7724 = vmatprep.subr.mxu0 0.0
        %7725 = vmatpush1.msra.mxu0 %v6812
        %7726 = vmatprep.subr.mxu0 0.0
        %7727 = vmatpush2.msra.mxu0 %v6843
        %7728 = vmatprep.subr.mxu0 0.0
        %7729 = vmatpush2.msra.mxu0 %v6842
        %7730 = vmatprep.subr.mxu0 0.0
        %7731 = vmatpush2.msra.mxu0 %v6841
        %7732 = vmatprep.subr.mxu0 0.0
        %7733 = vmatpush2.msra.mxu0 %v6840
        %7734 = vmatprep.subr.mxu0 0.0
        %7735 = vmatpush2.msra.mxu0 %v6839
        %7736 = vmatprep.subr.mxu0 0.0
        %7737 = vmatpush2.msra.mxu0 %v6838
        %7738 = vmatprep.subr.mxu0 0.0
        %7739 = vmatpush2.msra.mxu0 %v6837
        %7740 = vmatprep.subr.mxu0 0.0
        %7741 = vmatpush2.msra.mxu0 %v6836
        %7742 = vmatprep.subr.mxu0 0.0
        %7743 = vmatpush2.msra.mxu0 %v6835
        %7744 = vmatprep.subr.mxu0 0.0
        %7745 = vmatpush2.msra.mxu0 %v6834
        %7746 = vmatprep.subr.mxu0 0.0
        %7747 = vmatpush2.msra.mxu0 %v6833
        %7748 = vmatprep.subr.mxu0 0.0
        %7749 = vmatpush2.msra.mxu0 %v6832
        %7750 = vmatprep.subr.mxu0 0.0
        %7751 = vmatpush2.msra.mxu0 %v6831
        %7752 = vmatprep.subr.mxu0 0.0
        %7753 = vmatpush2.msra.mxu0 %v6830
        %7754 = vmatprep.subr.mxu0 0.0
        %7755 = vmatpush2.msra.mxu0 %v6829
        %7756 = vmatprep.subr.mxu0 0.0
        %7757 = vmatpush2.msra.mxu0 %v6828
        %7758 = vmatprep.mubr.f32.mxu0 %v6307
        %7759 = vmatmul.mubr.f32.gmra.mxu0 %v6306
        %v7760 = vpop.f32.mrf.mxu0
        %v7761 = vadd.f32 %v7536, %v7760
        %v7762 = vpop.f32.mrf.mxu0
        %7763 = vmatprep.mubr.f32.mxu0 %v6320
        %7764 = vmatmul.mubr.f32.gmra.mxu0 %v6319
        %v7765 = vpop.f32.mrf.mxu0
        %v7766 = vadd.f32 %v7541, %v7765
        %v7767 = vpop.f32.mrf.mxu0
        %7768 = vmatprep.mubr.f32.mxu0 %v6333
        %7769 = vmatmul.mubr.f32.gmra.mxu0 %v6332
        %v7770 = vpop.f32.mrf.mxu0
        %v7771 = vadd.f32 %v7546, %v7770
        %v7772 = vpop.f32.mrf.mxu0
        %7773 = vmatprep.mubr.f32.mxu0 %v6346
        %7774 = vmatmul.mubr.f32.gmra.mxu0 %v6345
        %v7775 = vpop.f32.mrf.mxu0
        %v7776 = vadd.f32 %v7551, %v7775
        %v7777 = vpop.f32.mrf.mxu0
        %7778 = vmatprep.mubr.f32.mxu0 %v6359
        %7779 = vmatmul.mubr.f32.gmra.mxu0 %v6358
        %v7780 = vpop.f32.mrf.mxu0
        %v7781 = vadd.f32 %v7556, %v7780
        %v7782 = vpop.f32.mrf.mxu0
        %7783 = vmatprep.mubr.f32.mxu0 %v6372
        %7784 = vmatmul.mubr.f32.gmra.mxu0 %v6371
        %v7785 = vpop.f32.mrf.mxu0
        %v7786 = vadd.f32 %v7561, %v7785
        %v7787 = vpop.f32.mrf.mxu0
        %7788 = vmatprep.mubr.f32.mxu0 %v6385
        %7789 = vmatmul.mubr.f32.gmra.mxu0 %v6384
        %v7790 = vpop.f32.mrf.mxu0
        %v7791 = vadd.f32 %v7566, %v7790
        %v7792 = vpop.f32.mrf.mxu0
        %7793 = vmatprep.mubr.f32.mxu0 %v6398
        %7794 = vmatmul.mubr.f32.gmra.mxu0 %v6397
        %v7795 = vpop.f32.mrf.mxu0
        %v7796 = vadd.f32 %v7571, %v7795
        %v7797 = vpop.f32.mrf.mxu0
        %7798 = vmatprep.mubr.f32.mxu0 %v6411
        %7799 = vmatmul.mubr.f32.gmra.mxu0 %v6410
        %v7800 = vpop.f32.mrf.mxu0
        %v7801 = vadd.f32 %v7576, %v7800
        %v7802 = vpop.f32.mrf.mxu0
        %7803 = vmatprep.mubr.f32.mxu0 %v6424
        %7804 = vmatmul.mubr.f32.gmra.mxu0 %v6423
        %v7805 = vpop.f32.mrf.mxu0
        %v7806 = vadd.f32 %v7581, %v7805
        %v7807 = vpop.f32.mrf.mxu0
        %7808 = vmatprep.mubr.f32.mxu0 %v6437
        %7809 = vmatmul.mubr.f32.gmra.mxu0 %v6436
        %v7810 = vpop.f32.mrf.mxu0
        %v7811 = vadd.f32 %v7586, %v7810
        %v7812 = vpop.f32.mrf.mxu0
        %7813 = vmatprep.mubr.f32.mxu0 %v6450
        %7814 = vmatmul.mubr.f32.gmra.mxu0 %v6449
        %v7815 = vpop.f32.mrf.mxu0
        %v7816 = vadd.f32 %v7591, %v7815
        %v7817 = vpop.f32.mrf.mxu0
        %7818 = vmatprep.mubr.f32.mxu0 %v6463
        %7819 = vmatmul.mubr.f32.gmra.mxu0 %v6462
        %v7820 = vpop.f32.mrf.mxu0
        %v7821 = vadd.f32 %v7596, %v7820
        %v7822 = vpop.f32.mrf.mxu0
        %7823 = vmatprep.mubr.f32.mxu0 %v6476
        %7824 = vmatmul.mubr.f32.gmra.mxu0 %v6475
        %v7825 = vpop.f32.mrf.mxu0
        %v7826 = vadd.f32 %v7601, %v7825
        %v7827 = vpop.f32.mrf.mxu0
        %7828 = vmatprep.mubr.f32.mxu0 %v6489
        %7829 = vmatmul.mubr.f32.gmra.mxu0 %v6488
        %v7830 = vpop.f32.mrf.mxu0
        %v7831 = vadd.f32 %v7606, %v7830
        %v7832 = vpop.f32.mrf.mxu0
        %7833 = vmatprep.mubr.f32.mxu0 %v6502
        %7834 = vmatmul.mubr.f32.gmra.mxu0 %v6501
        %v7835 = vpop.f32.mrf.mxu0
        %v7836 = vadd.f32 %v7611, %v7835
        %v7837 = vpop.f32.mrf.mxu0
        %7838 = vmatprep.mubr.f32.mxu0 %v6515
        %7839 = vmatmul.mubr.f32.gmra.mxu0 %v6514
        %v7840 = vpop.f32.mrf.mxu0
        %v7841 = vadd.f32 %v7616, %v7840
        %v7842 = vpop.f32.mrf.mxu0
        %7843 = vmatprep.mubr.f32.mxu0 %v6528
        %7844 = vmatmul.mubr.f32.gmra.mxu0 %v6527
        %v7845 = vpop.f32.mrf.mxu0
        %v7846 = vadd.f32 %v7621, %v7845
        %v7847 = vpop.f32.mrf.mxu0
        %7848 = vmatprep.mubr.f32.mxu0 %v6541
        %7849 = vmatmul.mubr.f32.gmra.mxu0 %v6540
        %v7850 = vpop.f32.mrf.mxu0
        %v7851 = vadd.f32 %v7626, %v7850
        %v7852 = vpop.f32.mrf.mxu0
        %7853 = vmatprep.mubr.f32.mxu0 %v6554
        %7854 = vmatmul.mubr.f32.gmra.mxu0 %v6553
        %v7855 = vpop.f32.mrf.mxu0
        %v7856 = vadd.f32 %v7631, %v7855
        %v7857 = vpop.f32.mrf.mxu0
        %7858 = vmatprep.mubr.f32.mxu0 %v6567
        %7859 = vmatmul.mubr.f32.gmra.mxu0 %v6566
        %v7860 = vpop.f32.mrf.mxu0
        %v7861 = vadd.f32 %v7636, %v7860
        %v7862 = vpop.f32.mrf.mxu0
        %7863 = vmatprep.mubr.f32.mxu0 %v6580
        %7864 = vmatmul.mubr.f32.gmra.mxu0 %v6579
        %v7865 = vpop.f32.mrf.mxu0
        %v7866 = vadd.f32 %v7641, %v7865
        %v7867 = vpop.f32.mrf.mxu0
        %7868 = vmatprep.mubr.f32.mxu0 %v6593
        %7869 = vmatmul.mubr.f32.gmra.mxu0 %v6592
        %v7870 = vpop.f32.mrf.mxu0
        %v7871 = vadd.f32 %v7646, %v7870
        %v7872 = vpop.f32.mrf.mxu0
        %7873 = vmatprep.mubr.f32.mxu0 %v6606
        %7874 = vmatmul.mubr.f32.gmra.mxu0 %v6605
        %v7875 = vpop.f32.mrf.mxu0
        %v7876 = vadd.f32 %v7651, %v7875
        %v7877 = vpop.f32.mrf.mxu0
        %7878 = vmatprep.mubr.f32.mxu0 %v6619
        %7879 = vmatmul.mubr.f32.gmra.mxu0 %v6618
        %v7880 = vpop.f32.mrf.mxu0
        %v7881 = vadd.f32 %v7656, %v7880
        %v7882 = vpop.f32.mrf.mxu0
        %7883 = vmatprep.mubr.f32.mxu0 %v6632
        %7884 = vmatmul.mubr.f32.gmra.mxu0 %v6631
        %v7885 = vpop.f32.mrf.mxu0
        %v7886 = vadd.f32 %v7661, %v7885
        %v7887 = vpop.f32.mrf.mxu0
        %7888 = vmatprep.mubr.f32.mxu0 %v6645
        %7889 = vmatmul.mubr.f32.gmra.mxu0 %v6644
        %v7890 = vpop.f32.mrf.mxu0
        %v7891 = vadd.f32 %v7666, %v7890
        %v7892 = vpop.f32.mrf.mxu0
        %7893 = vmatprep.mubr.f32.mxu0 %v6658
        %7894 = vmatmul.mubr.f32.gmra.mxu0 %v6657
        %v7895 = vpop.f32.mrf.mxu0
        %v7896 = vadd.f32 %v7671, %v7895
        %v7897 = vpop.f32.mrf.mxu0
        %7898 = vmatprep.mubr.f32.mxu0 %v6671
        %7899 = vmatmul.mubr.f32.gmra.mxu0 %v6670
        %v7900 = vpop.f32.mrf.mxu0
        %v7901 = vadd.f32 %v7676, %v7900
        %v7902 = vpop.f32.mrf.mxu0
        %7903 = vmatprep.mubr.f32.mxu0 %v6684
        %7904 = vmatmul.mubr.f32.gmra.mxu0 %v6683
        %v7905 = vpop.f32.mrf.mxu0
        %v7906 = vadd.f32 %v7681, %v7905
        %v7907 = vpop.f32.mrf.mxu0
        %7908 = vmatprep.mubr.f32.mxu0 %v6697
        %7909 = vmatmul.mubr.f32.gmra.mxu0 %v6696
        %v7910 = vpop.f32.mrf.mxu0
        %v7911 = vadd.f32 %v7686, %v7910
        %v7912 = vpop.f32.mrf.mxu0
        %7913 = vmatprep.mubr.f32.mxu0 %v6710
        %7914 = vmatmul.mubr.f32.gmra.mxu0 %v6709
        %v7915 = vpop.f32.mrf.mxu0
        %v7916 = vadd.f32 %v7691, %v7915
        %v7917 = vpop.f32.mrf.mxu0
        %7918 = vdwg.mxu0
        %7919 = vmatprep.subr.mxu0 0.0
        %7920 = vmatpush1.msra.mxu0 %v6859
        %7921 = vmatprep.subr.mxu0 0.0
        %7922 = vmatpush1.msra.mxu0 %v6858
        %7923 = vmatprep.subr.mxu0 0.0
        %7924 = vmatpush1.msra.mxu0 %v6857
        %7925 = vmatprep.subr.mxu0 0.0
        %7926 = vmatpush1.msra.mxu0 %v6856
        %7927 = vmatprep.subr.mxu0 0.0
        %7928 = vmatpush1.msra.mxu0 %v6855
        %7929 = vmatprep.subr.mxu0 0.0
        %7930 = vmatpush1.msra.mxu0 %v6854
        %7931 = vmatprep.subr.mxu0 0.0
        %7932 = vmatpush1.msra.mxu0 %v6853
        %7933 = vmatprep.subr.mxu0 0.0
        %7934 = vmatpush1.msra.mxu0 %v6852
        %7935 = vmatprep.subr.mxu0 0.0
        %7936 = vmatpush1.msra.mxu0 %v6851
        %7937 = vmatprep.subr.mxu0 0.0
        %7938 = vmatpush1.msra.mxu0 %v6850
        %7939 = vmatprep.subr.mxu0 0.0
        %7940 = vmatpush1.msra.mxu0 %v6849
        %7941 = vmatprep.subr.mxu0 0.0
        %7942 = vmatpush1.msra.mxu0 %v6848
        %7943 = vmatprep.subr.mxu0 0.0
        %7944 = vmatpush1.msra.mxu0 %v6847
        %7945 = vmatprep.subr.mxu0 0.0
        %7946 = vmatpush1.msra.mxu0 %v6846
        %7947 = vmatprep.subr.mxu0 0.0
        %7948 = vmatpush1.msra.mxu0 %v6845
        %7949 = vmatprep.subr.mxu0 0.0
        %7950 = vmatpush1.msra.mxu0 %v6844
        %7951 = vmatprep.subr.mxu0 0.0
        %7952 = vmatpush2.msra.mxu0 %v6875
        %7953 = vmatprep.subr.mxu0 0.0
        %7954 = vmatpush2.msra.mxu0 %v6874
        %7955 = vmatprep.subr.mxu0 0.0
        %7956 = vmatpush2.msra.mxu0 %v6873
        %7957 = vmatprep.subr.mxu0 0.0
        %7958 = vmatpush2.msra.mxu0 %v6872
        %7959 = vmatprep.subr.mxu0 0.0
        %7960 = vmatpush2.msra.mxu0 %v6871
        %7961 = vmatprep.subr.mxu0 0.0
        %7962 = vmatpush2.msra.mxu0 %v6870
        %7963 = vmatprep.subr.mxu0 0.0
        %7964 = vmatpush2.msra.mxu0 %v6869
        %7965 = vmatprep.subr.mxu0 0.0
        %7966 = vmatpush2.msra.mxu0 %v6868
        %7967 = vmatprep.subr.mxu0 0.0
        %7968 = vmatpush2.msra.mxu0 %v6867
        %7969 = vmatprep.subr.mxu0 0.0
        %7970 = vmatpush2.msra.mxu0 %v6866
        %7971 = vmatprep.subr.mxu0 0.0
        %7972 = vmatpush2.msra.mxu0 %v6865
        %7973 = vmatprep.subr.mxu0 0.0
        %7974 = vmatpush2.msra.mxu0 %v6864
        %7975 = vmatprep.subr.mxu0 0.0
        %7976 = vmatpush2.msra.mxu0 %v6863
        %7977 = vmatprep.subr.mxu0 0.0
        %7978 = vmatpush2.msra.mxu0 %v6862
        %7979 = vmatprep.subr.mxu0 0.0
        %7980 = vmatpush2.msra.mxu0 %v6861
        %7981 = vmatprep.subr.mxu0 0.0
        %7982 = vmatpush2.msra.mxu0 %v6860
        %7983 = vmatprep.mubr.f32.mxu0 %v6309
        %7984 = vmatmul.mubr.f32.gmra.mxu0 %v6308
        %v7985 = vpop.f32.mrf.mxu0
        %v7986 = vadd.f32 %v7761, %v7985
        %v7987 = vpop.f32.mrf.mxu0
        %7988 = vmatprep.mubr.f32.mxu0 %v6322
        %7989 = vmatmul.mubr.f32.gmra.mxu0 %v6321
        %v7990 = vpop.f32.mrf.mxu0
        %v7991 = vadd.f32 %v7766, %v7990
        %v7992 = vpop.f32.mrf.mxu0
        %7993 = vmatprep.mubr.f32.mxu0 %v6335
        %7994 = vmatmul.mubr.f32.gmra.mxu0 %v6334
        %v7995 = vpop.f32.mrf.mxu0
        %v7996 = vadd.f32 %v7771, %v7995
        %v7997 = vpop.f32.mrf.mxu0
        %7998 = vmatprep.mubr.f32.mxu0 %v6348
        %7999 = vmatmul.mubr.f32.gmra.mxu0 %v6347
        %v8000 = vpop.f32.mrf.mxu0
        %v8001 = vadd.f32 %v7776, %v8000
        %v8002 = vpop.f32.mrf.mxu0
        %8003 = vmatprep.mubr.f32.mxu0 %v6361
        %8004 = vmatmul.mubr.f32.gmra.mxu0 %v6360
        %v8005 = vpop.f32.mrf.mxu0
        %v8006 = vadd.f32 %v7781, %v8005
        %v8007 = vpop.f32.mrf.mxu0
        %8008 = vmatprep.mubr.f32.mxu0 %v6374
        %8009 = vmatmul.mubr.f32.gmra.mxu0 %v6373
        %v8010 = vpop.f32.mrf.mxu0
        %v8011 = vadd.f32 %v7786, %v8010
        %v8012 = vpop.f32.mrf.mxu0
        %8013 = vmatprep.mubr.f32.mxu0 %v6387
        %8014 = vmatmul.mubr.f32.gmra.mxu0 %v6386
        %v8015 = vpop.f32.mrf.mxu0
        %v8016 = vadd.f32 %v7791, %v8015
        %v8017 = vpop.f32.mrf.mxu0
        %8018 = vmatprep.mubr.f32.mxu0 %v6400
        %8019 = vmatmul.mubr.f32.gmra.mxu0 %v6399
        %v8020 = vpop.f32.mrf.mxu0
        %v8021 = vadd.f32 %v7796, %v8020
        %v8022 = vpop.f32.mrf.mxu0
        %8023 = vmatprep.mubr.f32.mxu0 %v6413
        %8024 = vmatmul.mubr.f32.gmra.mxu0 %v6412
        %v8025 = vpop.f32.mrf.mxu0
        %v8026 = vadd.f32 %v7801, %v8025
        %v8027 = vpop.f32.mrf.mxu0
        %8028 = vmatprep.mubr.f32.mxu0 %v6426
        %8029 = vmatmul.mubr.f32.gmra.mxu0 %v6425
        %v8030 = vpop.f32.mrf.mxu0
        %v8031 = vadd.f32 %v7806, %v8030
        %v8032 = vpop.f32.mrf.mxu0
        %8033 = vmatprep.mubr.f32.mxu0 %v6439
        %8034 = vmatmul.mubr.f32.gmra.mxu0 %v6438
        %v8035 = vpop.f32.mrf.mxu0
        %v8036 = vadd.f32 %v7811, %v8035
        %v8037 = vpop.f32.mrf.mxu0
        %8038 = vmatprep.mubr.f32.mxu0 %v6452
        %8039 = vmatmul.mubr.f32.gmra.mxu0 %v6451
        %v8040 = vpop.f32.mrf.mxu0
        %v8041 = vadd.f32 %v7816, %v8040
        %v8042 = vpop.f32.mrf.mxu0
        %8043 = vmatprep.mubr.f32.mxu0 %v6465
        %8044 = vmatmul.mubr.f32.gmra.mxu0 %v6464
        %v8045 = vpop.f32.mrf.mxu0
        %v8046 = vadd.f32 %v7821, %v8045
        %v8047 = vpop.f32.mrf.mxu0
        %8048 = vmatprep.mubr.f32.mxu0 %v6478
        %8049 = vmatmul.mubr.f32.gmra.mxu0 %v6477
        %v8050 = vpop.f32.mrf.mxu0
        %v8051 = vadd.f32 %v7826, %v8050
        %v8052 = vpop.f32.mrf.mxu0
        %8053 = vmatprep.mubr.f32.mxu0 %v6491
        %8054 = vmatmul.mubr.f32.gmra.mxu0 %v6490
        %v8055 = vpop.f32.mrf.mxu0
        %v8056 = vadd.f32 %v7831, %v8055
        %v8057 = vpop.f32.mrf.mxu0
        %8058 = vmatprep.mubr.f32.mxu0 %v6504
        %8059 = vmatmul.mubr.f32.gmra.mxu0 %v6503
        %v8060 = vpop.f32.mrf.mxu0
        %v8061 = vadd.f32 %v7836, %v8060
        %v8062 = vpop.f32.mrf.mxu0
        %8063 = vmatprep.mubr.f32.mxu0 %v6517
        %8064 = vmatmul.mubr.f32.gmra.mxu0 %v6516
        %v8065 = vpop.f32.mrf.mxu0
        %v8066 = vadd.f32 %v7841, %v8065
        %v8067 = vpop.f32.mrf.mxu0
        %8068 = vmatprep.mubr.f32.mxu0 %v6530
        %8069 = vmatmul.mubr.f32.gmra.mxu0 %v6529
        %v8070 = vpop.f32.mrf.mxu0
        %v8071 = vadd.f32 %v7846, %v8070
        %v8072 = vpop.f32.mrf.mxu0
        %8073 = vmatprep.mubr.f32.mxu0 %v6543
        %8074 = vmatmul.mubr.f32.gmra.mxu0 %v6542
        %v8075 = vpop.f32.mrf.mxu0
        %v8076 = vadd.f32 %v7851, %v8075
        %v8077 = vpop.f32.mrf.mxu0
        %8078 = vmatprep.mubr.f32.mxu0 %v6556
        %8079 = vmatmul.mubr.f32.gmra.mxu0 %v6555
        %v8080 = vpop.f32.mrf.mxu0
        %v8081 = vadd.f32 %v7856, %v8080
        %v8082 = vpop.f32.mrf.mxu0
        %8083 = vmatprep.mubr.f32.mxu0 %v6569
        %8084 = vmatmul.mubr.f32.gmra.mxu0 %v6568
        %v8085 = vpop.f32.mrf.mxu0
        %v8086 = vadd.f32 %v7861, %v8085
        %v8087 = vpop.f32.mrf.mxu0
        %8088 = vmatprep.mubr.f32.mxu0 %v6582
        %8089 = vmatmul.mubr.f32.gmra.mxu0 %v6581
        %v8090 = vpop.f32.mrf.mxu0
        %v8091 = vadd.f32 %v7866, %v8090
        %v8092 = vpop.f32.mrf.mxu0
        %8093 = vmatprep.mubr.f32.mxu0 %v6595
        %8094 = vmatmul.mubr.f32.gmra.mxu0 %v6594
        %v8095 = vpop.f32.mrf.mxu0
        %v8096 = vadd.f32 %v7871, %v8095
        %v8097 = vpop.f32.mrf.mxu0
        %8098 = vmatprep.mubr.f32.mxu0 %v6608
        %8099 = vmatmul.mubr.f32.gmra.mxu0 %v6607
        %v8100 = vpop.f32.mrf.mxu0
        %v8101 = vadd.f32 %v7876, %v8100
        %v8102 = vpop.f32.mrf.mxu0
        %8103 = vmatprep.mubr.f32.mxu0 %v6621
        %8104 = vmatmul.mubr.f32.gmra.mxu0 %v6620
        %v8105 = vpop.f32.mrf.mxu0
        %v8106 = vadd.f32 %v7881, %v8105
        %v8107 = vpop.f32.mrf.mxu0
        %8108 = vmatprep.mubr.f32.mxu0 %v6634
        %8109 = vmatmul.mubr.f32.gmra.mxu0 %v6633
        %v8110 = vpop.f32.mrf.mxu0
        %v8111 = vadd.f32 %v7886, %v8110
        %v8112 = vpop.f32.mrf.mxu0
        %8113 = vmatprep.mubr.f32.mxu0 %v6647
        %8114 = vmatmul.mubr.f32.gmra.mxu0 %v6646
        %v8115 = vpop.f32.mrf.mxu0
        %v8116 = vadd.f32 %v7891, %v8115
        %v8117 = vpop.f32.mrf.mxu0
        %8118 = vmatprep.mubr.f32.mxu0 %v6660
        %8119 = vmatmul.mubr.f32.gmra.mxu0 %v6659
        %v8120 = vpop.f32.mrf.mxu0
        %v8121 = vadd.f32 %v7896, %v8120
        %v8122 = vpop.f32.mrf.mxu0
        %8123 = vmatprep.mubr.f32.mxu0 %v6673
        %8124 = vmatmul.mubr.f32.gmra.mxu0 %v6672
        %v8125 = vpop.f32.mrf.mxu0
        %v8126 = vadd.f32 %v7901, %v8125
        %v8127 = vpop.f32.mrf.mxu0
        %8128 = vmatprep.mubr.f32.mxu0 %v6686
        %8129 = vmatmul.mubr.f32.gmra.mxu0 %v6685
        %v8130 = vpop.f32.mrf.mxu0
        %v8131 = vadd.f32 %v7906, %v8130
        %v8132 = vpop.f32.mrf.mxu0
        %8133 = vmatprep.mubr.f32.mxu0 %v6699
        %8134 = vmatmul.mubr.f32.gmra.mxu0 %v6698
        %v8135 = vpop.f32.mrf.mxu0
        %v8136 = vadd.f32 %v7911, %v8135
        %v8137 = vpop.f32.mrf.mxu0
        %8138 = vmatprep.mubr.f32.mxu0 %v6712
        %8139 = vmatmul.mubr.f32.gmra.mxu0 %v6711
        %v8140 = vpop.f32.mrf.mxu0
        %v8141 = vadd.f32 %v7916, %v8140
        %v8142 = vpop.f32.mrf.mxu0
        %8143 = vdwg.mxu0
        %8144 = vmatprep.subr.mxu0 0.0
        %8145 = vmatpush1.msra.mxu0 %v6891
        %8146 = vmatprep.subr.mxu0 0.0
        %8147 = vmatpush1.msra.mxu0 %v6890
        %8148 = vmatprep.subr.mxu0 0.0
        %8149 = vmatpush1.msra.mxu0 %v6889
        %8150 = vmatprep.subr.mxu0 0.0
        %8151 = vmatpush1.msra.mxu0 %v6888
        %8152 = vmatprep.subr.mxu0 0.0
        %8153 = vmatpush1.msra.mxu0 %v6887
        %8154 = vmatprep.subr.mxu0 0.0
        %8155 = vmatpush1.msra.mxu0 %v6886
        %8156 = vmatprep.subr.mxu0 0.0
        %8157 = vmatpush1.msra.mxu0 %v6885
        %8158 = vmatprep.subr.mxu0 0.0
        %8159 = vmatpush1.msra.mxu0 %v6884
        %8160 = vmatprep.subr.mxu0 0.0
        %8161 = vmatpush1.msra.mxu0 %v6883
        %8162 = vmatprep.subr.mxu0 0.0
        %8163 = vmatpush1.msra.mxu0 %v6882
        %8164 = vmatprep.subr.mxu0 0.0
        %8165 = vmatpush1.msra.mxu0 %v6881
        %8166 = vmatprep.subr.mxu0 0.0
        %8167 = vmatpush1.msra.mxu0 %v6880
        %8168 = vmatprep.subr.mxu0 0.0
        %8169 = vmatpush1.msra.mxu0 %v6879
        %8170 = vmatprep.subr.mxu0 0.0
        %8171 = vmatpush1.msra.mxu0 %v6878
        %8172 = vmatprep.subr.mxu0 0.0
        %8173 = vmatpush1.msra.mxu0 %v6877
        %8174 = vmatprep.subr.mxu0 0.0
        %8175 = vmatpush1.msra.mxu0 %v6876
        %8176 = vmatprep.subr.mxu0 0.0
        %8177 = vmatpush2.msra.mxu0 %v6907
        %8178 = vmatprep.subr.mxu0 0.0
        %8179 = vmatpush2.msra.mxu0 %v6906
        %8180 = vmatprep.subr.mxu0 0.0
        %8181 = vmatpush2.msra.mxu0 %v6905
        %8182 = vmatprep.subr.mxu0 0.0
        %8183 = vmatpush2.msra.mxu0 %v6904
        %8184 = vmatprep.subr.mxu0 0.0
        %8185 = vmatpush2.msra.mxu0 %v6903
        %8186 = vmatprep.subr.mxu0 0.0
        %8187 = vmatpush2.msra.mxu0 %v6902
        %8188 = vmatprep.subr.mxu0 0.0
        %8189 = vmatpush2.msra.mxu0 %v6901
        %8190 = vmatprep.subr.mxu0 0.0
        %8191 = vmatpush2.msra.mxu0 %v6900
        %8192 = vmatprep.subr.mxu0 0.0
        %8193 = vmatpush2.msra.mxu0 %v6899
        %8194 = vmatprep.subr.mxu0 0.0
        %8195 = vmatpush2.msra.mxu0 %v6898
        %8196 = vmatprep.subr.mxu0 0.0
        %8197 = vmatpush2.msra.mxu0 %v6897
        %8198 = vmatprep.subr.mxu0 0.0
        %8199 = vmatpush2.msra.mxu0 %v6896
        %8200 = vmatprep.subr.mxu0 0.0
        %8201 = vmatpush2.msra.mxu0 %v6895
        %8202 = vmatprep.subr.mxu0 0.0
        %8203 = vmatpush2.msra.mxu0 %v6894
        %8204 = vmatprep.subr.mxu0 0.0
        %8205 = vmatpush2.msra.mxu0 %v6893
        %8206 = vmatprep.subr.mxu0 0.0
        %8207 = vmatpush2.msra.mxu0 %v6892
        %8208 = vmatprep.mubr.f32.mxu0 %v6311
        %8209 = vmatmul.mubr.f32.gmra.mxu0 %v6310
        %v8210 = vpop.f32.mrf.mxu0
        %v8211 = vadd.f32 %v7986, %v8210
        %v8212 = vpop.f32.mrf.mxu0
        %8213 = vmatprep.mubr.f32.mxu0 %v6324
        %8214 = vmatmul.mubr.f32.gmra.mxu0 %v6323
        %v8215 = vpop.f32.mrf.mxu0
        %v8216 = vadd.f32 %v7991, %v8215
        %v8217 = vpop.f32.mrf.mxu0
        %8218 = vmatprep.mubr.f32.mxu0 %v6337
        %8219 = vmatmul.mubr.f32.gmra.mxu0 %v6336
        %v8220 = vpop.f32.mrf.mxu0
        %v8221 = vadd.f32 %v7996, %v8220
        %v8222 = vpop.f32.mrf.mxu0
        %8223 = vmatprep.mubr.f32.mxu0 %v6350
        %8224 = vmatmul.mubr.f32.gmra.mxu0 %v6349
        %v8225 = vpop.f32.mrf.mxu0
        %v8226 = vadd.f32 %v8001, %v8225
        %v8227 = vpop.f32.mrf.mxu0
        %8228 = vmatprep.mubr.f32.mxu0 %v6363
        %8229 = vmatmul.mubr.f32.gmra.mxu0 %v6362
        %v8230 = vpop.f32.mrf.mxu0
        %v8231 = vadd.f32 %v8006, %v8230
        %v8232 = vpop.f32.mrf.mxu0
        %8233 = vmatprep.mubr.f32.mxu0 %v6376
        %8234 = vmatmul.mubr.f32.gmra.mxu0 %v6375
        %v8235 = vpop.f32.mrf.mxu0
        %v8236 = vadd.f32 %v8011, %v8235
        %v8237 = vpop.f32.mrf.mxu0
        %8238 = vmatprep.mubr.f32.mxu0 %v6389
        %8239 = vmatmul.mubr.f32.gmra.mxu0 %v6388
        %v8240 = vpop.f32.mrf.mxu0
        %v8241 = vadd.f32 %v8016, %v8240
        %v8242 = vpop.f32.mrf.mxu0
        %8243 = vmatprep.mubr.f32.mxu0 %v6402
        %8244 = vmatmul.mubr.f32.gmra.mxu0 %v6401
        %v8245 = vpop.f32.mrf.mxu0
        %v8246 = vadd.f32 %v8021, %v8245
        %v8247 = vpop.f32.mrf.mxu0
        %8248 = vmatprep.mubr.f32.mxu0 %v6415
        %8249 = vmatmul.mubr.f32.gmra.mxu0 %v6414
        %v8250 = vpop.f32.mrf.mxu0
        %v8251 = vadd.f32 %v8026, %v8250
        %v8252 = vpop.f32.mrf.mxu0
        %8253 = vmatprep.mubr.f32.mxu0 %v6428
        %8254 = vmatmul.mubr.f32.gmra.mxu0 %v6427
        %v8255 = vpop.f32.mrf.mxu0
        %v8256 = vadd.f32 %v8031, %v8255
        %v8257 = vpop.f32.mrf.mxu0
        %8258 = vmatprep.mubr.f32.mxu0 %v6441
        %8259 = vmatmul.mubr.f32.gmra.mxu0 %v6440
        %v8260 = vpop.f32.mrf.mxu0
        %v8261 = vadd.f32 %v8036, %v8260
        %v8262 = vpop.f32.mrf.mxu0
        %8263 = vmatprep.mubr.f32.mxu0 %v6454
        %8264 = vmatmul.mubr.f32.gmra.mxu0 %v6453
        %v8265 = vpop.f32.mrf.mxu0
        %v8266 = vadd.f32 %v8041, %v8265
        %v8267 = vpop.f32.mrf.mxu0
        %8268 = vmatprep.mubr.f32.mxu0 %v6467
        %8269 = vmatmul.mubr.f32.gmra.mxu0 %v6466
        %v8270 = vpop.f32.mrf.mxu0
        %v8271 = vadd.f32 %v8046, %v8270
        %v8272 = vpop.f32.mrf.mxu0
        %8273 = vmatprep.mubr.f32.mxu0 %v6480
        %8274 = vmatmul.mubr.f32.gmra.mxu0 %v6479
        %v8275 = vpop.f32.mrf.mxu0
        %v8276 = vadd.f32 %v8051, %v8275
        %v8277 = vpop.f32.mrf.mxu0
        %8278 = vmatprep.mubr.f32.mxu0 %v6493
        %8279 = vmatmul.mubr.f32.gmra.mxu0 %v6492
        %v8280 = vpop.f32.mrf.mxu0
        %v8281 = vadd.f32 %v8056, %v8280
        %v8282 = vpop.f32.mrf.mxu0
        %8283 = vmatprep.mubr.f32.mxu0 %v6506
        %8284 = vmatmul.mubr.f32.gmra.mxu0 %v6505
        %v8285 = vpop.f32.mrf.mxu0
        %v8286 = vadd.f32 %v8061, %v8285
        %v8287 = vpop.f32.mrf.mxu0
        %8288 = vmatprep.mubr.f32.mxu0 %v6519
        %8289 = vmatmul.mubr.f32.gmra.mxu0 %v6518
        %v8290 = vpop.f32.mrf.mxu0
        %v8291 = vadd.f32 %v8066, %v8290
        %v8292 = vpop.f32.mrf.mxu0
        %8293 = vmatprep.mubr.f32.mxu0 %v6532
        %8294 = vmatmul.mubr.f32.gmra.mxu0 %v6531
        %v8295 = vpop.f32.mrf.mxu0
        %v8296 = vadd.f32 %v8071, %v8295
        %v8297 = vpop.f32.mrf.mxu0
        %8298 = vmatprep.mubr.f32.mxu0 %v6545
        %8299 = vmatmul.mubr.f32.gmra.mxu0 %v6544
        %v8300 = vpop.f32.mrf.mxu0
        %v8301 = vadd.f32 %v8076, %v8300
        %v8302 = vpop.f32.mrf.mxu0
        %8303 = vmatprep.mubr.f32.mxu0 %v6558
        %8304 = vmatmul.mubr.f32.gmra.mxu0 %v6557
        %v8305 = vpop.f32.mrf.mxu0
        %v8306 = vadd.f32 %v8081, %v8305
        %v8307 = vpop.f32.mrf.mxu0
        %8308 = vmatprep.mubr.f32.mxu0 %v6571
        %8309 = vmatmul.mubr.f32.gmra.mxu0 %v6570
        %v8310 = vpop.f32.mrf.mxu0
        %v8311 = vadd.f32 %v8086, %v8310
        %v8312 = vpop.f32.mrf.mxu0
        %8313 = vmatprep.mubr.f32.mxu0 %v6584
        %8314 = vmatmul.mubr.f32.gmra.mxu0 %v6583
        %v8315 = vpop.f32.mrf.mxu0
        %v8316 = vadd.f32 %v8091, %v8315
        %v8317 = vpop.f32.mrf.mxu0
        %8318 = vmatprep.mubr.f32.mxu0 %v6597
        %8319 = vmatmul.mubr.f32.gmra.mxu0 %v6596
        %v8320 = vpop.f32.mrf.mxu0
        %v8321 = vadd.f32 %v8096, %v8320
        %v8322 = vpop.f32.mrf.mxu0
        %8323 = vmatprep.mubr.f32.mxu0 %v6610
        %8324 = vmatmul.mubr.f32.gmra.mxu0 %v6609
        %v8325 = vpop.f32.mrf.mxu0
        %v8326 = vadd.f32 %v8101, %v8325
        %v8327 = vpop.f32.mrf.mxu0
        %8328 = vmatprep.mubr.f32.mxu0 %v6623
        %8329 = vmatmul.mubr.f32.gmra.mxu0 %v6622
        %v8330 = vpop.f32.mrf.mxu0
        %v8331 = vadd.f32 %v8106, %v8330
        %v8332 = vpop.f32.mrf.mxu0
        %8333 = vmatprep.mubr.f32.mxu0 %v6636
        %8334 = vmatmul.mubr.f32.gmra.mxu0 %v6635
        %v8335 = vpop.f32.mrf.mxu0
        %v8336 = vadd.f32 %v8111, %v8335
        %v8337 = vpop.f32.mrf.mxu0
        %8338 = vmatprep.mubr.f32.mxu0 %v6649
        %8339 = vmatmul.mubr.f32.gmra.mxu0 %v6648
        %v8340 = vpop.f32.mrf.mxu0
        %v8341 = vadd.f32 %v8116, %v8340
        %v8342 = vpop.f32.mrf.mxu0
        %8343 = vmatprep.mubr.f32.mxu0 %v6662
        %8344 = vmatmul.mubr.f32.gmra.mxu0 %v6661
        %v8345 = vpop.f32.mrf.mxu0
        %v8346 = vadd.f32 %v8121, %v8345
        %v8347 = vpop.f32.mrf.mxu0
        %8348 = vmatprep.mubr.f32.mxu0 %v6675
        %8349 = vmatmul.mubr.f32.gmra.mxu0 %v6674
        %v8350 = vpop.f32.mrf.mxu0
        %v8351 = vadd.f32 %v8126, %v8350
        %v8352 = vpop.f32.mrf.mxu0
        %8353 = vmatprep.mubr.f32.mxu0 %v6688
        %8354 = vmatmul.mubr.f32.gmra.mxu0 %v6687
        %v8355 = vpop.f32.mrf.mxu0
        %v8356 = vadd.f32 %v8131, %v8355
        %v8357 = vpop.f32.mrf.mxu0
        %8358 = vmatprep.mubr.f32.mxu0 %v6701
        %8359 = vmatmul.mubr.f32.gmra.mxu0 %v6700
        %v8360 = vpop.f32.mrf.mxu0
        %v8361 = vadd.f32 %v8136, %v8360
        %v8362 = vpop.f32.mrf.mxu0
        %8363 = vmatprep.mubr.f32.mxu0 %v6714
        %8364 = vmatmul.mubr.f32.gmra.mxu0 %v6713
        %v8365 = vpop.f32.mrf.mxu0
        %v8366 = vadd.f32 %v8141, %v8365
        %v8367 = vpop.f32.mrf.mxu0
        %8368 = vdwg.mxu0
        %8369 = vmatprep.subr.mxu0 0.0
        %8370 = vmatpush1.msra.mxu0 0.0
        %8371 = vmatprep.subr.mxu0 0.0
        %8372 = vmatpush1.msra.mxu0 0.0
        %8373 = vmatprep.subr.mxu0 0.0
        %8374 = vmatpush1.msra.mxu0 0.0
        %8375 = vmatprep.subr.mxu0 0.0
        %8376 = vmatpush1.msra.mxu0 0.0
        %8377 = vmatprep.subr.mxu0 0.0
        %8378 = vmatpush1.msra.mxu0 0.0
        %8379 = vmatprep.subr.mxu0 0.0
        %8380 = vmatpush1.msra.mxu0 0.0
        %8381 = vmatprep.subr.mxu0 0.0
        %8382 = vmatpush1.msra.mxu0 0.0
        %8383 = vmatprep.subr.mxu0 0.0
        %8384 = vmatpush1.msra.mxu0 0.0
        %8385 = vmatprep.subr.mxu0 0.0
        %8386 = vmatpush1.msra.mxu0 %v6915
        %8387 = vmatprep.subr.mxu0 0.0
        %8388 = vmatpush1.msra.mxu0 %v6914
        %8389 = vmatprep.subr.mxu0 0.0
        %8390 = vmatpush1.msra.mxu0 %v6913
        %8391 = vmatprep.subr.mxu0 0.0
        %8392 = vmatpush1.msra.mxu0 %v6912
        %8393 = vmatprep.subr.mxu0 0.0
        %8394 = vmatpush1.msra.mxu0 %v6911
        %8395 = vmatprep.subr.mxu0 0.0
        %8396 = vmatpush1.msra.mxu0 %v6910
        %8397 = vmatprep.subr.mxu0 0.0
        %8398 = vmatpush1.msra.mxu0 %v6909
        %8399 = vmatprep.subr.mxu0 0.0
        %8400 = vmatpush1.msra.mxu0 %v6908
        %8401 = vmatprep.subr.mxu0 0.0
        %8402 = vmatpush2.msra.mxu0 0.0
        %8403 = vmatprep.subr.mxu0 0.0
        %8404 = vmatpush2.msra.mxu0 0.0
        %8405 = vmatprep.subr.mxu0 0.0
        %8406 = vmatpush2.msra.mxu0 0.0
        %8407 = vmatprep.subr.mxu0 0.0
        %8408 = vmatpush2.msra.mxu0 0.0
        %8409 = vmatprep.subr.mxu0 0.0
        %8410 = vmatpush2.msra.mxu0 0.0
        %8411 = vmatprep.subr.mxu0 0.0
        %8412 = vmatpush2.msra.mxu0 0.0
        %8413 = vmatprep.subr.mxu0 0.0
        %8414 = vmatpush2.msra.mxu0 0.0
        %8415 = vmatprep.subr.mxu0 0.0
        %8416 = vmatpush2.msra.mxu0 0.0
        %8417 = vmatprep.subr.mxu0 0.0
        %8418 = vmatpush2.msra.mxu0 0.0
        %8419 = vmatprep.subr.mxu0 0.0
        %8420 = vmatpush2.msra.mxu0 0.0
        %8421 = vmatprep.subr.mxu0 0.0
        %8422 = vmatpush2.msra.mxu0 0.0
        %8423 = vmatprep.subr.mxu0 0.0
        %8424 = vmatpush2.msra.mxu0 0.0
        %8425 = vmatprep.subr.mxu0 0.0
        %8426 = vmatpush2.msra.mxu0 0.0
        %8427 = vmatprep.subr.mxu0 0.0
        %8428 = vmatpush2.msra.mxu0 0.0
        %8429 = vmatprep.subr.mxu0 0.0
        %8430 = vmatpush2.msra.mxu0 0.0
        %8431 = vmatprep.subr.mxu0 0.0
        %8432 = vmatpush2.msra.mxu0 0.0
        %8433 = vmatprep.mubr.f32.mxu0 0.0
        %8434 = vmatmul.mubr.f32.gmra.mxu0 %v6924
        %v8435 = vpop.f32.mrf.mxu0
        %v8436 = vadd.f32 %v8211, %v8435
        %v8437 = vpop.f32.mrf.mxu0
        %8438 = vmatprep.mubr.f32.mxu0 0.0
        %8439 = vmatmul.mubr.f32.gmra.mxu0 %v6927
        %v8440 = vpop.f32.mrf.mxu0
        %v8441 = vadd.f32 %v8216, %v8440
        %v8442 = vpop.f32.mrf.mxu0
        %8443 = vmatprep.mubr.f32.mxu0 0.0
        %8444 = vmatmul.mubr.f32.gmra.mxu0 %v6930
        %v8445 = vpop.f32.mrf.mxu0
        %v8446 = vadd.f32 %v8221, %v8445
        %v8447 = vpop.f32.mrf.mxu0
        %8448 = vmatprep.mubr.f32.mxu0 0.0
        %8449 = vmatmul.mubr.f32.gmra.mxu0 %v6933
        %v8450 = vpop.f32.mrf.mxu0
        %v8451 = vadd.f32 %v8226, %v8450
        %v8452 = vpop.f32.mrf.mxu0
        %8453 = vmatprep.mubr.f32.mxu0 0.0
        %8454 = vmatmul.mubr.f32.gmra.mxu0 %v6936
        %v8455 = vpop.f32.mrf.mxu0
        %v8456 = vadd.f32 %v8231, %v8455
        %v8457 = vpop.f32.mrf.mxu0
        %8458 = vmatprep.mubr.f32.mxu0 0.0
        %8459 = vmatmul.mubr.f32.gmra.mxu0 %v6939
        %v8460 = vpop.f32.mrf.mxu0
        %v8461 = vadd.f32 %v8236, %v8460
        %v8462 = vpop.f32.mrf.mxu0
        %8463 = vmatprep.mubr.f32.mxu0 0.0
        %8464 = vmatmul.mubr.f32.gmra.mxu0 %v6942
        %v8465 = vpop.f32.mrf.mxu0
        %v8466 = vadd.f32 %v8241, %v8465
        %v8467 = vpop.f32.mrf.mxu0
        %8468 = vmatprep.mubr.f32.mxu0 0.0
        %8469 = vmatmul.mubr.f32.gmra.mxu0 %v6945
        %v8470 = vpop.f32.mrf.mxu0
        %v8471 = vadd.f32 %v8246, %v8470
        %v8472 = vpop.f32.mrf.mxu0
        %8473 = vmatprep.mubr.f32.mxu0 0.0
        %8474 = vmatmul.mubr.f32.gmra.mxu0 %v6948
        %v8475 = vpop.f32.mrf.mxu0
        %v8476 = vadd.f32 %v8251, %v8475
        %v8477 = vpop.f32.mrf.mxu0
        %8478 = vmatprep.mubr.f32.mxu0 0.0
        %8479 = vmatmul.mubr.f32.gmra.mxu0 %v6951
        %v8480 = vpop.f32.mrf.mxu0
        %v8481 = vadd.f32 %v8256, %v8480
        %v8482 = vpop.f32.mrf.mxu0
        %8483 = vmatprep.mubr.f32.mxu0 0.0
        %8484 = vmatmul.mubr.f32.gmra.mxu0 %v6954
        %v8485 = vpop.f32.mrf.mxu0
        %v8486 = vadd.f32 %v8261, %v8485
        %v8487 = vpop.f32.mrf.mxu0
        %8488 = vmatprep.mubr.f32.mxu0 0.0
        %8489 = vmatmul.mubr.f32.gmra.mxu0 %v6957
        %v8490 = vpop.f32.mrf.mxu0
        %v8491 = vadd.f32 %v8266, %v8490
        %v8492 = vpop.f32.mrf.mxu0
        %8493 = vmatprep.mubr.f32.mxu0 0.0
        %8494 = vmatmul.mubr.f32.gmra.mxu0 %v6960
        %v8495 = vpop.f32.mrf.mxu0
        %v8496 = vadd.f32 %v8271, %v8495
        %v8497 = vpop.f32.mrf.mxu0
        %8498 = vmatprep.mubr.f32.mxu0 0.0
        %8499 = vmatmul.mubr.f32.gmra.mxu0 %v6963
        %v8500 = vpop.f32.mrf.mxu0
        %v8501 = vadd.f32 %v8276, %v8500
        %v8502 = vpop.f32.mrf.mxu0
        %8503 = vmatprep.mubr.f32.mxu0 0.0
        %8504 = vmatmul.mubr.f32.gmra.mxu0 %v6966
        %v8505 = vpop.f32.mrf.mxu0
        %v8506 = vadd.f32 %v8281, %v8505
        %v8507 = vpop.f32.mrf.mxu0
        %8508 = vmatprep.mubr.f32.mxu0 0.0
        %8509 = vmatmul.mubr.f32.gmra.mxu0 %v6969
        %v8510 = vpop.f32.mrf.mxu0
        %v8511 = vadd.f32 %v8286, %v8510
        %v8512 = vpop.f32.mrf.mxu0
        %8513 = vmatprep.mubr.f32.mxu0 0.0
        %8514 = vmatmul.mubr.f32.gmra.mxu0 %v6972
        %v8515 = vpop.f32.mrf.mxu0
        %v8516 = vadd.f32 %v8291, %v8515
        %v8517 = vpop.f32.mrf.mxu0
        %8518 = vmatprep.mubr.f32.mxu0 0.0
        %8519 = vmatmul.mubr.f32.gmra.mxu0 %v6975
        %v8520 = vpop.f32.mrf.mxu0
        %v8521 = vadd.f32 %v8296, %v8520
        %v8522 = vpop.f32.mrf.mxu0
        %8523 = vmatprep.mubr.f32.mxu0 0.0
        %8524 = vmatmul.mubr.f32.gmra.mxu0 %v6978
        %v8525 = vpop.f32.mrf.mxu0
        %v8526 = vadd.f32 %v8301, %v8525
        %v8527 = vpop.f32.mrf.mxu0
        %8528 = vmatprep.mubr.f32.mxu0 0.0
        %8529 = vmatmul.mubr.f32.gmra.mxu0 %v6981
        %v8530 = vpop.f32.mrf.mxu0
        %v8531 = vadd.f32 %v8306, %v8530
        %v8532 = vpop.f32.mrf.mxu0
        %8533 = vmatprep.mubr.f32.mxu0 0.0
        %8534 = vmatmul.mubr.f32.gmra.mxu0 %v6984
        %v8535 = vpop.f32.mrf.mxu0
        %v8536 = vadd.f32 %v8311, %v8535
        %v8537 = vpop.f32.mrf.mxu0
        %8538 = vmatprep.mubr.f32.mxu0 0.0
        %8539 = vmatmul.mubr.f32.gmra.mxu0 %v6987
        %v8540 = vpop.f32.mrf.mxu0
        %v8541 = vadd.f32 %v8316, %v8540
        %v8542 = vpop.f32.mrf.mxu0
        %8543 = vmatprep.mubr.f32.mxu0 0.0
        %8544 = vmatmul.mubr.f32.gmra.mxu0 %v6990
        %v8545 = vpop.f32.mrf.mxu0
        %v8546 = vadd.f32 %v8321, %v8545
        %v8547 = vpop.f32.mrf.mxu0
        %8548 = vmatprep.mubr.f32.mxu0 0.0
        %8549 = vmatmul.mubr.f32.gmra.mxu0 %v6993
        %v8550 = vpop.f32.mrf.mxu0
        %v8551 = vadd.f32 %v8326, %v8550
        %v8552 = vpop.f32.mrf.mxu0
        %8553 = vmatprep.mubr.f32.mxu0 0.0
        %8554 = vmatmul.mubr.f32.gmra.mxu0 %v6996
        %v8555 = vpop.f32.mrf.mxu0
        %v8556 = vadd.f32 %v8331, %v8555
        %v8557 = vpop.f32.mrf.mxu0
        %8558 = vmatprep.mubr.f32.mxu0 0.0
        %8559 = vmatmul.mubr.f32.gmra.mxu0 %v6999
        %v8560 = vpop.f32.mrf.mxu0
        %v8561 = vadd.f32 %v8336, %v8560
        %v8562 = vpop.f32.mrf.mxu0
        %8563 = vmatprep.mubr.f32.mxu0 0.0
        %8564 = vmatmul.mubr.f32.gmra.mxu0 %v7002
        %v8565 = vpop.f32.mrf.mxu0
        %v8566 = vadd.f32 %v8341, %v8565
        %v8567 = vpop.f32.mrf.mxu0
        %8568 = vmatprep.mubr.f32.mxu0 0.0
        %8569 = vmatmul.mubr.f32.gmra.mxu0 %v7005
        %v8570 = vpop.f32.mrf.mxu0
        %v8571 = vadd.f32 %v8346, %v8570
        %v8572 = vpop.f32.mrf.mxu0
        %8573 = vmatprep.mubr.f32.mxu0 0.0
        %8574 = vmatmul.mubr.f32.gmra.mxu0 %v7008
        %v8575 = vpop.f32.mrf.mxu0
        %v8576 = vadd.f32 %v8351, %v8575
        %v8577 = vpop.f32.mrf.mxu0
        %8578 = vmatprep.mubr.f32.mxu0 0.0
        %8579 = vmatmul.mubr.f32.gmra.mxu0 %v7011
        %v8580 = vpop.f32.mrf.mxu0
        %v8581 = vadd.f32 %v8356, %v8580
        %v8582 = vpop.f32.mrf.mxu0
        %8583 = vmatprep.mubr.f32.mxu0 0.0
        %8584 = vmatmul.mubr.f32.gmra.mxu0 %v7014
        %v8585 = vpop.f32.mrf.mxu0
        %v8586 = vadd.f32 %v8361, %v8585
        %v8587 = vpop.f32.mrf.mxu0
        %8588 = vmatprep.mubr.f32.mxu0 0.0
        %8589 = vmatmul.mubr.f32.gmra.mxu0 %v7017
        %v8590 = vpop.f32.mrf.mxu0
        %v8591 = vadd.f32 %v8366, %v8590
        %v8592 = vpop.f32.mrf.mxu0
        %8593 = vdwg.mxu0
        %8594 = vst.msk [vmem:[%s430 + $0x1] sm:$0xff] %vm421, %v464
        %8595 = vst.msk [vmem:[%s430 + $0x9] sm:$0xff] %vm421, %v465
        %8596 = vst.msk [vmem:[%s430 + $0x19] sm:$0xff] %vm421, %v466
        %8597 = vst.msk [vmem:[%s430 + $0x21] sm:$0xff] %vm421, %v467
        %8598 = vst.msk [vmem:[%s430 + $0x31] sm:$0xff] %vm421, %v468
        %8599 = vst.msk [vmem:[%s430 + $0x39] sm:$0xff] %vm421, %v469
        %8600 = vst.msk [vmem:[%s430 + $0x49] sm:$0xff] %vm421, %v470
        %8601 = vst.msk [vmem:[%s430 + $0x51] sm:$0xff] %vm421, %v471
        %8602 = vst.msk [vmem:[%s430 + $0x61] sm:$0xff] %vm421, %v472
        %8603 = vst.msk [vmem:[%s430 + $0x69] sm:$0xff] %vm421, %v473
        %8604 = vst.msk [vmem:[%s430 + $0x79] sm:$0xff] %vm421, %v474
        %8605 = vst.msk [vmem:[%s430 + $0x81] sm:$0xff] %vm421, %v475
        %8606 = vst.msk [vmem:[%s430 + $0x91] sm:$0xff] %vm421, %v476
        %8607 = vst.msk [vmem:[%s430 + $0x99] sm:$0xff] %vm421, %v477
        %8608 = vst.msk [vmem:[%s430 + $0xa9] sm:$0xff] %vm421, %v478
        %8609 = vst.msk [vmem:[%s430 + $0xb1] sm:$0xff] %vm421, %v479
        %8610 = vst.msk [vmem:[%s430 + $0xc1] sm:$0xff] %vm421, %v480
        %8611 = vst.msk [vmem:[%s430 + $0xc9] sm:$0xff] %vm421, %v481
        %8612 = vst.msk [vmem:[%s430 + $0xd9] sm:$0xff] %vm421, %v482
        %8613 = vst.msk [vmem:[%s430 + $0xe1] sm:$0xff] %vm421, %v483
        %8614 = vst.msk [vmem:[%s430 + $0xf1] sm:$0xff] %vm421, %v484
        %8615 = vst.msk [vmem:[%s430 + $0xf9] sm:$0xff] %vm421, %v485
        %8616 = vst.msk [vmem:[%s430 + $0x109] sm:$0xff] %vm421, %v486
        %8617 = vst.msk [vmem:[%s430 + $0x111] sm:$0xff] %vm421, %v487
        %8618 = vst.msk [vmem:[%s430 + $0x121] sm:$0xff] %vm421, %v488
        %8619 = vst.msk [vmem:[%s430 + $0x129] sm:$0xff] %vm421, %v489
        %8620 = vst.msk [vmem:[%s430 + $0x139] sm:$0xff] %vm421, %v490
        %8621 = vst.msk [vmem:[%s430 + $0x141] sm:$0xff] %vm421, %v491
        %8622 = vst.msk [vmem:[%s430 + $0x151] sm:$0xff] %vm421, %v492
        %8623 = vst.msk [vmem:[%s430 + $0x159] sm:$0xff] %vm421, %v493
        %8624 = vst.msk [vmem:[%s430 + $0x169] sm:$0xff] %vm421, %v494
        %8625 = vst.msk [vmem:[%s430 + $0x171] sm:$0xff] %vm421, %v495
        %v8626 = vld [vmem:[#allocation4] sm:$0xff]
        %v8627 = vld [vmem:[#allocation4 + $0x8] sm:$0xff]
        %v8628 = vld [vmem:[#allocation4 + $0x10] sm:$0x3]
        %v8629 = vld [vmem:[#allocation4 + $0x18] sm:$0xff]
        %v8630 = vld [vmem:[#allocation4 + $0x20] sm:$0xff]
        %v8631 = vld [vmem:[#allocation4 + $0x28] sm:$0x3]
        %v8632 = vld [vmem:[#allocation4 + $0x30] sm:$0xff]
        %v8633 = vld [vmem:[#allocation4 + $0x38] sm:$0xff]
        %v8634 = vld [vmem:[#allocation4 + $0x40] sm:$0x3]
        %v8635 = vld [vmem:[#allocation4 + $0x48] sm:$0xff]
        %v8636 = vld [vmem:[#allocation4 + $0x50] sm:$0xff]
        %v8637 = vld [vmem:[#allocation4 + $0x58] sm:$0x3]
        %v8638 = vld [vmem:[#allocation4 + $0x60] sm:$0xff]
        %v8639 = vld [vmem:[#allocation4 + $0x68] sm:$0xff]
        %v8640 = vld [vmem:[#allocation4 + $0x70] sm:$0x3]
        %v8641 = vld [vmem:[#allocation4 + $0x78] sm:$0xff]
        %v8642 = vld [vmem:[#allocation4 + $0x80] sm:$0xff]
        %v8643 = vld [vmem:[#allocation4 + $0x88] sm:$0x3]
        %v8644 = vld [vmem:[#allocation4 + $0x90] sm:$0xff]
        %v8645 = vld [vmem:[#allocation4 + $0x98] sm:$0xff]
        %v8646 = vld [vmem:[#allocation4 + $0xa0] sm:$0x3]
        %v8647 = vld [vmem:[#allocation4 + $0xa8] sm:$0xff]
        %v8648 = vld [vmem:[#allocation4 + $0xb0] sm:$0xff]
        %v8649 = vld [vmem:[#allocation4 + $0xb8] sm:$0x3]
        %v8650 = vld [vmem:[#allocation4 + $0xc0] sm:$0xff]
        %v8651 = vld [vmem:[#allocation4 + $0xc8] sm:$0xff]
        %v8652 = vld [vmem:[#allocation4 + $0xd0] sm:$0x3]
        %v8653 = vld [vmem:[#allocation4 + $0xd8] sm:$0xff]
        %v8654 = vld [vmem:[#allocation4 + $0xe0] sm:$0xff]
        %v8655 = vld [vmem:[#allocation4 + $0xe8] sm:$0x3]
        %v8656 = vld [vmem:[#allocation4 + $0xf0] sm:$0xff]
        %v8657 = vld [vmem:[#allocation4 + $0xf8] sm:$0xff]
        %v8658 = vld [vmem:[#allocation4 + $0x100] sm:$0x3]
        %v8659 = vld [vmem:[#allocation4 + $0x108] sm:$0xff]
        %v8660 = vld [vmem:[#allocation4 + $0x110] sm:$0xff]
        %v8661 = vld [vmem:[#allocation4 + $0x118] sm:$0x3]
        %v8662 = vld [vmem:[#allocation4 + $0x120] sm:$0xff]
        %v8663 = vld [vmem:[#allocation4 + $0x128] sm:$0xff]
        %v8664 = vld [vmem:[#allocation4 + $0x130] sm:$0x3]
        %v8665 = vld [vmem:[#allocation4 + $0x138] sm:$0xff]
        %v8666 = vld [vmem:[#allocation4 + $0x140] sm:$0xff]
        %v8667 = vld [vmem:[#allocation4 + $0x148] sm:$0x3]
        %v8668 = vld [vmem:[#allocation4 + $0x150] sm:$0xff]
        %v8669 = vld [vmem:[#allocation4 + $0x158] sm:$0xff]
        %v8670 = vld [vmem:[#allocation4 + $0x160] sm:$0x3]
        %v8671 = vld [vmem:[#allocation4 + $0x168] sm:$0xff]
        %v8672 = vld [vmem:[#allocation4 + $0x170] sm:$0xff]
        %v8673 = vld [vmem:[#allocation4 + $0x178] sm:$0x3]
        %v8674 = vld [vmem:[#allocation4 + $0x180] sm:$0xff]
        %v8675 = vld [vmem:[#allocation4 + $0x188] sm:$0xff]
        %v8676 = vld [vmem:[#allocation4 + $0x190] sm:$0x3]
        %v8677 = vld [vmem:[#allocation4 + $0x198] sm:$0xff]
        %v8678 = vld [vmem:[#allocation4 + $0x1a0] sm:$0xff]
        %v8679 = vld [vmem:[#allocation4 + $0x1a8] sm:$0x3]
        %v8680 = vmax.f32 %v8626, %v8629
        %v8681 = vmax.f32 %v8627, %v8630
        %v8682 = vmax.f32 %v8628, %v8631
        %v8683 = vmax.f32 %v8629, %v8632
        %v8684 = vmax.f32 %v8630, %v8633
        %v8685 = vmax.f32 %v8631, %v8634
        %v8686 = vmax.f32 %v8632, %v8635
        %v8687 = vmax.f32 %v8633, %v8636
        %v8688 = vmax.f32 %v8634, %v8637
        %v8689 = vmax.f32 %v8635, %v8638
        %v8690 = vmax.f32 %v8636, %v8639
        %v8691 = vmax.f32 %v8637, %v8640
        %v8692 = vmax.f32 %v8638, %v8641
        %v8693 = vmax.f32 %v8639, %v8642
        %v8694 = vmax.f32 %v8640, %v8643
        %v8695 = vmax.f32 %v8641, %v8644
        %v8696 = vmax.f32 %v8642, %v8645
        %v8697 = vmax.f32 %v8643, %v8646
        %v8698 = vmax.f32 %v8644, %v8647
        %v8699 = vmax.f32 %v8645, %v8648
        %v8700 = vmax.f32 %v8646, %v8649
        %v8701 = vmax.f32 %v8647, %v8650
        %v8702 = vmax.f32 %v8648, %v8651
        %v8703 = vmax.f32 %v8649, %v8652
        %v8704 = vmax.f32 %v8650, %v8653
        %v8705 = vmax.f32 %v8651, %v8654
        %v8706 = vmax.f32 %v8652, %v8655
        %v8707 = vmax.f32 %v8653, %v8656
        %v8708 = vmax.f32 %v8654, %v8657
        %v8709 = vmax.f32 %v8655, %v8658
        %v8710 = vmax.f32 %v8656, %v8659
        %v8711 = vmax.f32 %v8657, %v8660
        %v8712 = vmax.f32 %v8658, %v8661
        %v8713 = vmax.f32 %v8659, %v8662
        %v8714 = vmax.f32 %v8660, %v8663
        %v8715 = vmax.f32 %v8661, %v8664
        %v8716 = vmax.f32 %v8662, %v8665
        %v8717 = vmax.f32 %v8663, %v8666
        %v8718 = vmax.f32 %v8664, %v8667
        %v8719 = vmax.f32 %v8665, %v8668
        %v8720 = vmax.f32 %v8666, %v8669
        %v8721 = vmax.f32 %v8667, %v8670
        %v8722 = vmax.f32 %v8668, %v8671
        %v8723 = vmax.f32 %v8669, %v8672
        %v8724 = vmax.f32 %v8670, %v8673
        %v8725 = vmax.f32 %v8671, %v8674
        %v8726 = vmax.f32 %v8672, %v8675
        %v8727 = vmax.f32 %v8673, %v8676
        %v8728 = vmax.f32 %v8680, %v8632
        %v8729 = vmax.f32 %v8681, %v8633
        %v8730 = vmax.f32 %v8682, %v8634
        %v8731 = vmax.f32 %v8683, %v8635
        %v8732 = vmax.f32 %v8684, %v8636
        %v8733 = vmax.f32 %v8685, %v8637
        %v8734 = vmax.f32 %v8686, %v8638
        %v8735 = vmax.f32 %v8687, %v8639
        %v8736 = vmax.f32 %v8688, %v8640
        %v8737 = vmax.f32 %v8689, %v8641
        %v8738 = vmax.f32 %v8690, %v8642
        %v8739 = vmax.f32 %v8691, %v8643
        %v8740 = vmax.f32 %v8692, %v8644
        %v8741 = vmax.f32 %v8693, %v8645
        %v8742 = vmax.f32 %v8694, %v8646
        %v8743 = vmax.f32 %v8695, %v8647
        %v8744 = vmax.f32 %v8696, %v8648
        %v8745 = vmax.f32 %v8697, %v8649
        %v8746 = vmax.f32 %v8698, %v8650
        %v8747 = vmax.f32 %v8699, %v8651
        %v8748 = vmax.f32 %v8700, %v8652
        %v8749 = vmax.f32 %v8701, %v8653
        %v8750 = vmax.f32 %v8702, %v8654
        %v8751 = vmax.f32 %v8703, %v8655
        %v8752 = vmax.f32 %v8704, %v8656
        %v8753 = vmax.f32 %v8705, %v8657
        %v8754 = vmax.f32 %v8706, %v8658
        %v8755 = vmax.f32 %v8707, %v8659
        %v8756 = vmax.f32 %v8708, %v8660
        %v8757 = vmax.f32 %v8709, %v8661
        %v8758 = vmax.f32 %v8710, %v8662
        %v8759 = vmax.f32 %v8711, %v8663
        %v8760 = vmax.f32 %v8712, %v8664
        %v8761 = vmax.f32 %v8713, %v8665
        %v8762 = vmax.f32 %v8714, %v8666
        %v8763 = vmax.f32 %v8715, %v8667
        %v8764 = vmax.f32 %v8716, %v8668
        %v8765 = vmax.f32 %v8717, %v8669
        %v8766 = vmax.f32 %v8718, %v8670
        %v8767 = vmax.f32 %v8719, %v8671
        %v8768 = vmax.f32 %v8720, %v8672
        %v8769 = vmax.f32 %v8721, %v8673
        %v8770 = vmax.f32 %v8722, %v8674
        %v8771 = vmax.f32 %v8723, %v8675
        %v8772 = vmax.f32 %v8724, %v8676
        %v8773 = vmax.f32 %v8725, %v8677
        %v8774 = vmax.f32 %v8726, %v8678
        %v8775 = vmax.f32 %v8727, %v8679
        %vm8824 = vcmask 1046528
        %v8825 = vrot.slane %v8728, 1
        %v8826 = vrot.slane %v8729, 1
        %v8827 = vsel %vm8824, %v8825, %v8826
        %v8828 = vrot.slane %v8730, 1
        %v8829 = vsel %vm8824, %v8826, %v8828
        %v8830 = vrot.slane %v8731, 1
        %v8831 = vrot.slane %v8732, 1
        %v8832 = vsel %vm8824, %v8830, %v8831
        %v8833 = vrot.slane %v8733, 1
        %v8834 = vsel %vm8824, %v8831, %v8833
        %v8835 = vrot.slane %v8734, 1
        %v8836 = vrot.slane %v8735, 1
        %v8837 = vsel %vm8824, %v8835, %v8836
        %v8838 = vrot.slane %v8736, 1
        %v8839 = vsel %vm8824, %v8836, %v8838
        %v8840 = vrot.slane %v8737, 1
        %v8841 = vrot.slane %v8738, 1
        %v8842 = vsel %vm8824, %v8840, %v8841
        %v8843 = vrot.slane %v8739, 1
        %v8844 = vsel %vm8824, %v8841, %v8843
        %v8845 = vrot.slane %v8740, 1
        %v8846 = vrot.slane %v8741, 1
        %v8847 = vsel %vm8824, %v8845, %v8846
        %v8848 = vrot.slane %v8742, 1
        %v8849 = vsel %vm8824, %v8846, %v8848
        %v8850 = vrot.slane %v8743, 1
        %v8851 = vrot.slane %v8744, 1
        %v8852 = vsel %vm8824, %v8850, %v8851
        %v8853 = vrot.slane %v8745, 1
        %v8854 = vsel %vm8824, %v8851, %v8853
        %v8855 = vrot.slane %v8746, 1
        %v8856 = vrot.slane %v8747, 1
        %v8857 = vsel %vm8824, %v8855, %v8856
        %v8858 = vrot.slane %v8748, 1
        %v8859 = vsel %vm8824, %v8856, %v8858
        %v8860 = vrot.slane %v8749, 1
        %v8861 = vrot.slane %v8750, 1
        %v8862 = vsel %vm8824, %v8860, %v8861
        %v8863 = vrot.slane %v8751, 1
        %v8864 = vsel %vm8824, %v8861, %v8863
        %v8865 = vrot.slane %v8752, 1
        %v8866 = vrot.slane %v8753, 1
        %v8867 = vsel %vm8824, %v8865, %v8866
        %v8868 = vrot.slane %v8754, 1
        %v8869 = vsel %vm8824, %v8866, %v8868
        %v8870 = vrot.slane %v8755, 1
        %v8871 = vrot.slane %v8756, 1
        %v8872 = vsel %vm8824, %v8870, %v8871
        %v8873 = vrot.slane %v8757, 1
        %v8874 = vsel %vm8824, %v8871, %v8873
        %v8875 = vrot.slane %v8758, 1
        %v8876 = vrot.slane %v8759, 1
        %v8877 = vsel %vm8824, %v8875, %v8876
        %v8878 = vrot.slane %v8760, 1
        %v8879 = vsel %vm8824, %v8876, %v8878
        %v8880 = vrot.slane %v8761, 1
        %v8881 = vrot.slane %v8762, 1
        %v8882 = vsel %vm8824, %v8880, %v8881
        %v8883 = vrot.slane %v8763, 1
        %v8884 = vsel %vm8824, %v8881, %v8883
        %v8885 = vrot.slane %v8764, 1
        %v8886 = vrot.slane %v8765, 1
        %v8887 = vsel %vm8824, %v8885, %v8886
        %v8888 = vrot.slane %v8766, 1
        %v8889 = vsel %vm8824, %v8886, %v8888
        %v8890 = vrot.slane %v8767, 1
        %v8891 = vrot.slane %v8768, 1
        %v8892 = vsel %vm8824, %v8890, %v8891
        %v8893 = vrot.slane %v8769, 1
        %v8894 = vsel %vm8824, %v8891, %v8893
        %v8895 = vrot.slane %v8770, 1
        %v8896 = vrot.slane %v8771, 1
        %v8897 = vsel %vm8824, %v8895, %v8896
        %v8898 = vrot.slane %v8772, 1
        %v8899 = vsel %vm8824, %v8896, %v8898
        %v8900 = vrot.slane %v8773, 1
        %v8901 = vrot.slane %v8774, 1
        %v8902 = vsel %vm8824, %v8900, %v8901
        %v8903 = vrot.slane %v8775, 1
        %v8904 = vsel %vm8824, %v8901, %v8903
        %v8937 = vmax.f32 %v8728, %v8827
        %v8938 = vmax.f32 %v8729, %v8829
        %v8939 = vmax.f32 %v8731, %v8832
        %v8940 = vmax.f32 %v8732, %v8834
        %v8941 = vmax.f32 %v8734, %v8837
        %v8942 = vmax.f32 %v8735, %v8839
        %v8943 = vmax.f32 %v8737, %v8842
        %v8944 = vmax.f32 %v8738, %v8844
        %v8945 = vmax.f32 %v8740, %v8847
        %v8946 = vmax.f32 %v8741, %v8849
        %v8947 = vmax.f32 %v8743, %v8852
        %v8948 = vmax.f32 %v8744, %v8854
        %v8949 = vmax.f32 %v8746, %v8857
        %v8950 = vmax.f32 %v8747, %v8859
        %v8951 = vmax.f32 %v8749, %v8862
        %v8952 = vmax.f32 %v8750, %v8864
        %v8953 = vmax.f32 %v8752, %v8867
        %v8954 = vmax.f32 %v8753, %v8869
        %v8955 = vmax.f32 %v8755, %v8872
        %v8956 = vmax.f32 %v8756, %v8874
        %v8957 = vmax.f32 %v8758, %v8877
        %v8958 = vmax.f32 %v8759, %v8879
        %v8959 = vmax.f32 %v8761, %v8882
        %v8960 = vmax.f32 %v8762, %v8884
        %v8961 = vmax.f32 %v8764, %v8887
        %v8962 = vmax.f32 %v8765, %v8889
        %v8963 = vmax.f32 %v8767, %v8892
        %v8964 = vmax.f32 %v8768, %v8894
        %v8965 = vmax.f32 %v8770, %v8897
        %v8966 = vmax.f32 %v8771, %v8899
        %v8967 = vmax.f32 %v8773, %v8902
        %v8968 = vmax.f32 %v8774, %v8904
        %vm8969 = vcmask 1045504
        %v8970 = vrot.slane %v8728, 2
        %v8971 = vrot.slane %v8729, 2
        %v8972 = vsel %vm8969, %v8970, %v8971
        %v8973 = vrot.slane %v8730, 2
        %v8974 = vsel %vm8969, %v8971, %v8973
        %v8975 = vrot.slane %v8731, 2
        %v8976 = vrot.slane %v8732, 2
        %v8977 = vsel %vm8969, %v8975, %v8976
        %v8978 = vrot.slane %v8733, 2
        %v8979 = vsel %vm8969, %v8976, %v8978
        %v8980 = vrot.slane %v8734, 2
        %v8981 = vrot.slane %v8735, 2
        %v8982 = vsel %vm8969, %v8980, %v8981
        %v8983 = vrot.slane %v8736, 2
        %v8984 = vsel %vm8969, %v8981, %v8983
        %v8985 = vrot.slane %v8737, 2
        %v8986 = vrot.slane %v8738, 2
        %v8987 = vsel %vm8969, %v8985, %v8986
        %v8988 = vrot.slane %v8739, 2
        %v8989 = vsel %vm8969, %v8986, %v8988
        %v8990 = vrot.slane %v8740, 2
        %v8991 = vrot.slane %v8741, 2
        %v8992 = vsel %vm8969, %v8990, %v8991
        %v8993 = vrot.slane %v8742, 2
        %v8994 = vsel %vm8969, %v8991, %v8993
        %v8995 = vrot.slane %v8743, 2
        %v8996 = vrot.slane %v8744, 2
        %v8997 = vsel %vm8969, %v8995, %v8996
        %v8998 = vrot.slane %v8745, 2
        %v8999 = vsel %vm8969, %v8996, %v8998
        %v9000 = vrot.slane %v8746, 2
        %v9001 = vrot.slane %v8747, 2
        %v9002 = vsel %vm8969, %v9000, %v9001
        %v9003 = vrot.slane %v8748, 2
        %v9004 = vsel %vm8969, %v9001, %v9003
        %v9005 = vrot.slane %v8749, 2
        %v9006 = vrot.slane %v8750, 2
        %v9007 = vsel %vm8969, %v9005, %v9006
        %v9008 = vrot.slane %v8751, 2
        %v9009 = vsel %vm8969, %v9006, %v9008
        %v9010 = vrot.slane %v8752, 2
        %v9011 = vrot.slane %v8753, 2
        %v9012 = vsel %vm8969, %v9010, %v9011
        %v9013 = vrot.slane %v8754, 2
        %v9014 = vsel %vm8969, %v9011, %v9013
        %v9015 = vrot.slane %v8755, 2
        %v9016 = vrot.slane %v8756, 2
        %v9017 = vsel %vm8969, %v9015, %v9016
        %v9018 = vrot.slane %v8757, 2
        %v9019 = vsel %vm8969, %v9016, %v9018
        %v9020 = vrot.slane %v8758, 2
        %v9021 = vrot.slane %v8759, 2
        %v9022 = vsel %vm8969, %v9020, %v9021
        %v9023 = vrot.slane %v8760, 2
        %v9024 = vsel %vm8969, %v9021, %v9023
        %v9025 = vrot.slane %v8761, 2
        %v9026 = vrot.slane %v8762, 2
        %v9027 = vsel %vm8969, %v9025, %v9026
        %v9028 = vrot.slane %v8763, 2
        %v9029 = vsel %vm8969, %v9026, %v9028
        %v9030 = vrot.slane %v8764, 2
        %v9031 = vrot.slane %v8765, 2
        %v9032 = vsel %vm8969, %v9030, %v9031
        %v9033 = vrot.slane %v8766, 2
        %v9034 = vsel %vm8969, %v9031, %v9033
        %v9035 = vrot.slane %v8767, 2
        %v9036 = vrot.slane %v8768, 2
        %v9037 = vsel %vm8969, %v9035, %v9036
        %v9038 = vrot.slane %v8769, 2
        %v9039 = vsel %vm8969, %v9036, %v9038
        %v9040 = vrot.slane %v8770, 2
        %v9041 = vrot.slane %v8771, 2
        %v9042 = vsel %vm8969, %v9040, %v9041
        %v9043 = vrot.slane %v8772, 2
        %v9044 = vsel %vm8969, %v9041, %v9043
        %v9045 = vrot.slane %v8773, 2
        %v9046 = vrot.slane %v8774, 2
        %v9047 = vsel %vm8969, %v9045, %v9046
        %v9048 = vrot.slane %v8775, 2
        %v9049 = vsel %vm8969, %v9046, %v9048
        %v9082 = vmax.f32 %v8937, %v8972
        %v9083 = vmax.f32 %v8938, %v8974
        %v9084 = vmax.f32 %v8939, %v8977
        %v9085 = vmax.f32 %v8940, %v8979
        %v9086 = vmax.f32 %v8941, %v8982
        %v9087 = vmax.f32 %v8942, %v8984
        %v9088 = vmax.f32 %v8943, %v8987
        %v9089 = vmax.f32 %v8944, %v8989
        %v9090 = vmax.f32 %v8945, %v8992
        %v9091 = vmax.f32 %v8946, %v8994
        %v9092 = vmax.f32 %v8947, %v8997
        %v9093 = vmax.f32 %v8948, %v8999
        %v9094 = vmax.f32 %v8949, %v9002
        %v9095 = vmax.f32 %v8950, %v9004
        %v9096 = vmax.f32 %v8951, %v9007
        %v9097 = vmax.f32 %v8952, %v9009
        %v9098 = vmax.f32 %v8953, %v9012
        %v9099 = vmax.f32 %v8954, %v9014
        %v9100 = vmax.f32 %v8955, %v9017
        %v9101 = vmax.f32 %v8956, %v9019
        %v9102 = vmax.f32 %v8957, %v9022
        %v9103 = vmax.f32 %v8958, %v9024
        %v9104 = vmax.f32 %v8959, %v9027
        %v9105 = vmax.f32 %v8960, %v9029
        %v9106 = vmax.f32 %v8961, %v9032
        %v9107 = vmax.f32 %v8962, %v9034
        %v9108 = vmax.f32 %v8963, %v9037
        %v9109 = vmax.f32 %v8964, %v9039
        %v9110 = vmax.f32 %v8965, %v9042
        %v9111 = vmax.f32 %v8966, %v9044
        %v9112 = vmax.f32 %v8967, %v9047
        %v9113 = vmax.f32 %v8968, %v9049
        %v9114 = vld [vmem:[%s7] sm:$0xf]
        %v9115 = vld [vmem:[%s8] sm:$0x1]
        %v9117 = vlaneseq
        %v9118 = vshrl.u32 %v9117, 7
        %v9119 = vsub.s32 0, %v9118
        %v9120 = vrot.slane %v9115, %v9119
        %v9123 = vsel %vm421, %v9082, 0
        %v9126 = vsel %vm421, %v9083, 0
        %v9129 = vsel %vm421, %v9084, 0
        %v9132 = vsel %vm421, %v9085, 0
        %v9135 = vsel %vm421, %v9086, 0
        %v9138 = vsel %vm421, %v9087, 0
        %v9141 = vsel %vm421, %v9088, 0
        %v9144 = vsel %vm421, %v9089, 0
        %v9147 = vsel %vm421, %v9090, 0
        %v9150 = vsel %vm421, %v9091, 0
        %v9153 = vsel %vm421, %v9092, 0
        %v9156 = vsel %vm421, %v9093, 0
        %v9159 = vsel %vm421, %v9094, 0
        %v9162 = vsel %vm421, %v9095, 0
        %v9165 = vsel %vm421, %v9096, 0
        %v9168 = vsel %vm421, %v9097, 0
        %v9171 = vsel %vm421, %v9098, 0
        %v9174 = vsel %vm421, %v9099, 0
        %v9177 = vsel %vm421, %v9100, 0
        %v9180 = vsel %vm421, %v9101, 0
        %v9183 = vsel %vm421, %v9102, 0
        %v9186 = vsel %vm421, %v9103, 0
        %v9189 = vsel %vm421, %v9104, 0
        %v9192 = vsel %vm421, %v9105, 0
        %v9195 = vsel %vm421, %v9106, 0
        %v9198 = vsel %vm421, %v9107, 0
        %v9201 = vsel %vm421, %v9108, 0
        %v9204 = vsel %vm421, %v9109, 0
        %v9207 = vsel %vm421, %v9110, 0
        %v9210 = vsel %vm421, %v9111, 0
        %v9213 = vsel %vm421, %v9112, 0
        %v9216 = vsel %vm421, %v9113, 0
        %v9219 = vsel %vm607, %v9114, 0
        %9221 = vmatprep.subr.mxu0 0.0
        %9222 = vmatpush1.msra.mxu0 0.0
        %9223 = vmatprep.subr.mxu0 0.0
        %9224 = vmatpush1.msra.mxu0 0.0
        %9225 = vmatprep.subr.mxu0 0.0
        %9226 = vmatpush1.msra.mxu0 0.0
        %9227 = vmatprep.subr.mxu0 0.0
        %9228 = vmatpush1.msra.mxu0 0.0
        %9229 = vmatprep.subr.mxu0 0.0
        %9230 = vmatpush1.msra.mxu0 0.0
        %9231 = vmatprep.subr.mxu0 0.0
        %9232 = vmatpush1.msra.mxu0 0.0
        %9233 = vmatprep.subr.mxu0 0.0
        %9234 = vmatpush1.msra.mxu0 0.0
        %9235 = vmatprep.subr.mxu0 0.0
        %9236 = vmatpush1.msra.mxu0 0.0
        %9237 = vmatprep.subr.mxu0 0.0
        %9238 = vmatpush1.msra.mxu0 0.0
        %9239 = vmatprep.subr.mxu0 0.0
        %9240 = vmatpush1.msra.mxu0 0.0
        %9241 = vmatprep.subr.mxu0 0.0
        %9242 = vmatpush1.msra.mxu0 0.0
        %9243 = vmatprep.subr.mxu0 0.0
        %9244 = vmatpush1.msra.mxu0 0.0
        %9245 = vmatprep.subr.mxu0 0.0
        %9246 = vmatpush1.msra.mxu0 0.0
        %9247 = vmatprep.subr.mxu0 0.0
        %9248 = vmatpush1.msra.mxu0 0.0
        %9249 = vmatprep.subr.mxu0 0.0
        %9250 = vmatpush1.msra.mxu0 0.0
        %9251 = vmatprep.subr.mxu0 0.0
        %9252 = vmatpush1.msra.mxu0 %v9219
        %9253 = vmatprep.subr.mxu0 0.0
        %9254 = vmatpush2.msra.mxu0 0.0
        %9255 = vmatprep.subr.mxu0 0.0
        %9256 = vmatpush2.msra.mxu0 0.0
        %9257 = vmatprep.subr.mxu0 0.0
        %9258 = vmatpush2.msra.mxu0 0.0
        %9259 = vmatprep.subr.mxu0 0.0
        %9260 = vmatpush2.msra.mxu0 0.0
        %9261 = vmatprep.subr.mxu0 0.0
        %9262 = vmatpush2.msra.mxu0 0.0
        %9263 = vmatprep.subr.mxu0 0.0
        %9264 = vmatpush2.msra.mxu0 0.0
        %9265 = vmatprep.subr.mxu0 0.0
        %9266 = vmatpush2.msra.mxu0 0.0
        %9267 = vmatprep.subr.mxu0 0.0
        %9268 = vmatpush2.msra.mxu0 0.0
        %9269 = vmatprep.subr.mxu0 0.0
        %9270 = vmatpush2.msra.mxu0 0.0
        %9271 = vmatprep.subr.mxu0 0.0
        %9272 = vmatpush2.msra.mxu0 0.0
        %9273 = vmatprep.subr.mxu0 0.0
        %9274 = vmatpush2.msra.mxu0 0.0
        %9275 = vmatprep.subr.mxu0 0.0
        %9276 = vmatpush2.msra.mxu0 0.0
        %9277 = vmatprep.subr.mxu0 0.0
        %9278 = vmatpush2.msra.mxu0 0.0
        %9279 = vmatprep.subr.mxu0 0.0
        %9280 = vmatpush2.msra.mxu0 0.0
        %9281 = vmatprep.subr.mxu0 0.0
        %9282 = vmatpush2.msra.mxu0 0.0
        %9283 = vmatprep.subr.mxu0 0.0
        %9284 = vmatpush2.msra.mxu0 0.0
        %9285 = vmatprep.mubr.f32.mxu0 0.0
        %9286 = vmatmul.mubr.f32.gmra.mxu0 %v9123
        %v9287 = vpop.f32.mrf.mxu0
        %v9288 = vadd.f32 %v9120, %v9287
        %v9289 = vpop.f32.mrf.mxu0
        %9290 = vmatprep.mubr.f32.mxu0 0.0
        %9291 = vmatmul.mubr.f32.gmra.mxu0 %v9126
        %v9292 = vpop.f32.mrf.mxu0
        %v9293 = vadd.f32 %v9120, %v9292
        %v9294 = vpop.f32.mrf.mxu0
        %9295 = vmatprep.mubr.f32.mxu0 0.0
        %9296 = vmatmul.mubr.f32.gmra.mxu0 %v9129
        %v9297 = vpop.f32.mrf.mxu0
        %v9298 = vadd.f32 %v9120, %v9297
        %v9299 = vpop.f32.mrf.mxu0
        %9300 = vmatprep.mubr.f32.mxu0 0.0
        %9301 = vmatmul.mubr.f32.gmra.mxu0 %v9132
        %v9302 = vpop.f32.mrf.mxu0
        %v9303 = vadd.f32 %v9120, %v9302
        %v9304 = vpop.f32.mrf.mxu0
        %9305 = vmatprep.mubr.f32.mxu0 0.0
        %9306 = vmatmul.mubr.f32.gmra.mxu0 %v9135
        %v9307 = vpop.f32.mrf.mxu0
        %v9308 = vadd.f32 %v9120, %v9307
        %v9309 = vpop.f32.mrf.mxu0
        %9310 = vmatprep.mubr.f32.mxu0 0.0
        %9311 = vmatmul.mubr.f32.gmra.mxu0 %v9138
        %v9312 = vpop.f32.mrf.mxu0
        %v9313 = vadd.f32 %v9120, %v9312
        %v9314 = vpop.f32.mrf.mxu0
        %9315 = vmatprep.mubr.f32.mxu0 0.0
        %9316 = vmatmul.mubr.f32.gmra.mxu0 %v9141
        %v9317 = vpop.f32.mrf.mxu0
        %v9318 = vadd.f32 %v9120, %v9317
        %v9319 = vpop.f32.mrf.mxu0
        %9320 = vmatprep.mubr.f32.mxu0 0.0
        %9321 = vmatmul.mubr.f32.gmra.mxu0 %v9144
        %v9322 = vpop.f32.mrf.mxu0
        %v9323 = vadd.f32 %v9120, %v9322
        %v9324 = vpop.f32.mrf.mxu0
        %9325 = vmatprep.mubr.f32.mxu0 0.0
        %9326 = vmatmul.mubr.f32.gmra.mxu0 %v9147
        %v9327 = vpop.f32.mrf.mxu0
        %v9328 = vadd.f32 %v9120, %v9327
        %v9329 = vpop.f32.mrf.mxu0
        %9330 = vmatprep.mubr.f32.mxu0 0.0
        %9331 = vmatmul.mubr.f32.gmra.mxu0 %v9150
        %v9332 = vpop.f32.mrf.mxu0
        %v9333 = vadd.f32 %v9120, %v9332
        %v9334 = vpop.f32.mrf.mxu0
        %9335 = vmatprep.mubr.f32.mxu0 0.0
        %9336 = vmatmul.mubr.f32.gmra.mxu0 %v9153
        %v9337 = vpop.f32.mrf.mxu0
        %v9338 = vadd.f32 %v9120, %v9337
        %v9339 = vpop.f32.mrf.mxu0
        %9340 = vmatprep.mubr.f32.mxu0 0.0
        %9341 = vmatmul.mubr.f32.gmra.mxu0 %v9156
        %v9342 = vpop.f32.mrf.mxu0
        %v9343 = vadd.f32 %v9120, %v9342
        %v9344 = vpop.f32.mrf.mxu0
        %9345 = vmatprep.mubr.f32.mxu0 0.0
        %9346 = vmatmul.mubr.f32.gmra.mxu0 %v9159
        %v9347 = vpop.f32.mrf.mxu0
        %v9348 = vadd.f32 %v9120, %v9347
        %v9349 = vpop.f32.mrf.mxu0
        %9350 = vmatprep.mubr.f32.mxu0 0.0
        %9351 = vmatmul.mubr.f32.gmra.mxu0 %v9162
        %v9352 = vpop.f32.mrf.mxu0
        %v9353 = vadd.f32 %v9120, %v9352
        %v9354 = vpop.f32.mrf.mxu0
        %9355 = vmatprep.mubr.f32.mxu0 0.0
        %9356 = vmatmul.mubr.f32.gmra.mxu0 %v9165
        %v9357 = vpop.f32.mrf.mxu0
        %v9358 = vadd.f32 %v9120, %v9357
        %v9359 = vpop.f32.mrf.mxu0
        %9360 = vmatprep.mubr.f32.mxu0 0.0
        %9361 = vmatmul.mubr.f32.gmra.mxu0 %v9168
        %v9362 = vpop.f32.mrf.mxu0
        %v9363 = vadd.f32 %v9120, %v9362
        %v9364 = vpop.f32.mrf.mxu0
        %9365 = vmatprep.mubr.f32.mxu0 0.0
        %9366 = vmatmul.mubr.f32.gmra.mxu0 %v9171
        %v9367 = vpop.f32.mrf.mxu0
        %v9368 = vadd.f32 %v9120, %v9367
        %v9369 = vpop.f32.mrf.mxu0
        %9370 = vmatprep.mubr.f32.mxu0 0.0
        %9371 = vmatmul.mubr.f32.gmra.mxu0 %v9174
        %v9372 = vpop.f32.mrf.mxu0
        %v9373 = vadd.f32 %v9120, %v9372
        %v9374 = vpop.f32.mrf.mxu0
        %9375 = vmatprep.mubr.f32.mxu0 0.0
        %9376 = vmatmul.mubr.f32.gmra.mxu0 %v9177
        %v9377 = vpop.f32.mrf.mxu0
        %v9378 = vadd.f32 %v9120, %v9377
        %v9379 = vpop.f32.mrf.mxu0
        %9380 = vmatprep.mubr.f32.mxu0 0.0
        %9381 = vmatmul.mubr.f32.gmra.mxu0 %v9180
        %v9382 = vpop.f32.mrf.mxu0
        %v9383 = vadd.f32 %v9120, %v9382
        %v9384 = vpop.f32.mrf.mxu0
        %9385 = vmatprep.mubr.f32.mxu0 0.0
        %9386 = vmatmul.mubr.f32.gmra.mxu0 %v9183
        %v9387 = vpop.f32.mrf.mxu0
        %v9388 = vadd.f32 %v9120, %v9387
        %v9389 = vpop.f32.mrf.mxu0
        %9390 = vmatprep.mubr.f32.mxu0 0.0
        %9391 = vmatmul.mubr.f32.gmra.mxu0 %v9186
        %v9392 = vpop.f32.mrf.mxu0
        %v9393 = vadd.f32 %v9120, %v9392
        %v9394 = vpop.f32.mrf.mxu0
        %9395 = vmatprep.mubr.f32.mxu0 0.0
        %9396 = vmatmul.mubr.f32.gmra.mxu0 %v9189
        %v9397 = vpop.f32.mrf.mxu0
        %v9398 = vadd.f32 %v9120, %v9397
        %v9399 = vpop.f32.mrf.mxu0
        %9400 = vmatprep.mubr.f32.mxu0 0.0
        %9401 = vmatmul.mubr.f32.gmra.mxu0 %v9192
        %v9402 = vpop.f32.mrf.mxu0
        %v9403 = vadd.f32 %v9120, %v9402
        %v9404 = vpop.f32.mrf.mxu0
        %9405 = vmatprep.mubr.f32.mxu0 0.0
        %9406 = vmatmul.mubr.f32.gmra.mxu0 %v9195
        %v9407 = vpop.f32.mrf.mxu0
        %v9408 = vadd.f32 %v9120, %v9407
        %v9409 = vpop.f32.mrf.mxu0
        %9410 = vmatprep.mubr.f32.mxu0 0.0
        %9411 = vmatmul.mubr.f32.gmra.mxu0 %v9198
        %v9412 = vpop.f32.mrf.mxu0
        %v9413 = vadd.f32 %v9120, %v9412
        %v9414 = vpop.f32.mrf.mxu0
        %9415 = vmatprep.mubr.f32.mxu0 0.0
        %9416 = vmatmul.mubr.f32.gmra.mxu0 %v9201
        %v9417 = vpop.f32.mrf.mxu0
        %v9418 = vadd.f32 %v9120, %v9417
        %v9419 = vpop.f32.mrf.mxu0
        %9420 = vmatprep.mubr.f32.mxu0 0.0
        %9421 = vmatmul.mubr.f32.gmra.mxu0 %v9204
        %v9422 = vpop.f32.mrf.mxu0
        %v9423 = vadd.f32 %v9120, %v9422
        %v9424 = vpop.f32.mrf.mxu0
        %9425 = vmatprep.mubr.f32.mxu0 0.0
        %9426 = vmatmul.mubr.f32.gmra.mxu0 %v9207
        %v9427 = vpop.f32.mrf.mxu0
        %v9428 = vadd.f32 %v9120, %v9427
        %v9429 = vpop.f32.mrf.mxu0
        %9430 = vmatprep.mubr.f32.mxu0 0.0
        %9431 = vmatmul.mubr.f32.gmra.mxu0 %v9210
        %v9432 = vpop.f32.mrf.mxu0
        %v9433 = vadd.f32 %v9120, %v9432
        %v9434 = vpop.f32.mrf.mxu0
        %9435 = vmatprep.mubr.f32.mxu0 0.0
        %9436 = vmatmul.mubr.f32.gmra.mxu0 %v9213
        %v9437 = vpop.f32.mrf.mxu0
        %v9438 = vadd.f32 %v9120, %v9437
        %v9439 = vpop.f32.mrf.mxu0
        %9440 = vmatprep.mubr.f32.mxu0 0.0
        %9441 = vmatmul.mubr.f32.gmra.mxu0 %v9216
        %v9442 = vpop.f32.mrf.mxu0
        %v9443 = vadd.f32 %v9120, %v9442
        %v9444 = vpop.f32.mrf.mxu0
        %9445 = vdwg.mxu0
        %9478 = vrot.lane.b32.xlu0 %v6142, 64
        %v9479 = vpop.permute.xlu0 %9478
        %9480 = vrot.lane.b32.xlu0 %v6147, 64
        %v9481 = vpop.permute.xlu0 %9480
        %9482 = vrot.lane.b32.xlu0 %v6152, 64
        %v9483 = vpop.permute.xlu0 %9482
        %9484 = vrot.lane.b32.xlu0 %v6157, 64
        %v9485 = vpop.permute.xlu0 %9484
        %9486 = vrot.lane.b32.xlu0 %v6162, 64
        %v9487 = vpop.permute.xlu0 %9486
        %9488 = vrot.lane.b32.xlu0 %v6167, 64
        %v9489 = vpop.permute.xlu0 %9488
        %9490 = vrot.lane.b32.xlu0 %v6172, 64
        %v9491 = vpop.permute.xlu0 %9490
        %9492 = vrot.lane.b32.xlu0 %v6177, 64
        %v9493 = vpop.permute.xlu0 %9492
        %9494 = vrot.lane.b32.xlu0 %v6182, 64
        %v9495 = vpop.permute.xlu0 %9494
        %9496 = vrot.lane.b32.xlu0 %v6187, 64
        %v9497 = vpop.permute.xlu0 %9496
        %9498 = vrot.lane.b32.xlu0 %v6192, 64
        %v9499 = vpop.permute.xlu0 %9498
        %9500 = vrot.lane.b32.xlu0 %v6197, 64
        %v9501 = vpop.permute.xlu0 %9500
        %9502 = vrot.lane.b32.xlu0 %v6202, 64
        %v9503 = vpop.permute.xlu0 %9502
        %9504 = vrot.lane.b32.xlu0 %v6207, 64
        %v9505 = vpop.permute.xlu0 %9504
        %9506 = vrot.lane.b32.xlu0 %v6212, 64
        %v9507 = vpop.permute.xlu0 %9506
        %9508 = vrot.lane.b32.xlu0 %v6217, 64
        %v9509 = vpop.permute.xlu0 %9508
        %9510 = vrot.lane.b32.xlu0 %v6222, 64
        %v9511 = vpop.permute.xlu0 %9510
        %9512 = vrot.lane.b32.xlu0 %v6227, 64
        %v9513 = vpop.permute.xlu0 %9512
        %9514 = vrot.lane.b32.xlu0 %v6232, 64
        %v9515 = vpop.permute.xlu0 %9514
        %9516 = vrot.lane.b32.xlu0 %v6237, 64
        %v9517 = vpop.permute.xlu0 %9516
        %9518 = vrot.lane.b32.xlu0 %v6242, 64
        %v9519 = vpop.permute.xlu0 %9518
        %9520 = vrot.lane.b32.xlu0 %v6247, 64
        %v9521 = vpop.permute.xlu0 %9520
        %9522 = vrot.lane.b32.xlu0 %v6252, 64
        %v9523 = vpop.permute.xlu0 %9522
        %9524 = vrot.lane.b32.xlu0 %v6257, 64
        %v9525 = vpop.permute.xlu0 %9524
        %9526 = vrot.lane.b32.xlu0 %v6262, 64
        %v9527 = vpop.permute.xlu0 %9526
        %9528 = vrot.lane.b32.xlu0 %v6267, 64
        %v9529 = vpop.permute.xlu0 %9528
        %9530 = vrot.lane.b32.xlu0 %v6272, 64
        %v9531 = vpop.permute.xlu0 %9530
        %9532 = vrot.lane.b32.xlu0 %v6277, 64
        %v9533 = vpop.permute.xlu0 %9532
        %9534 = vrot.lane.b32.xlu0 %v6282, 64
        %v9535 = vpop.permute.xlu0 %9534
        %9536 = vrot.lane.b32.xlu0 %v6287, 64
        %v9537 = vpop.permute.xlu0 %9536
        %9538 = vrot.lane.b32.xlu0 %v6292, 64
        %v9539 = vpop.permute.xlu0 %9538
        %9540 = vrot.lane.b32.xlu0 %v6297, 64
        %v9541 = vpop.permute.xlu0 %9540
        %9606 = vrot.lane.b32.xlu0 %v9288, 64
        %v9607 = vpop.permute.xlu0 %9606
        %9608 = vrot.lane.b32.xlu0 %v9293, 64
        %v9609 = vpop.permute.xlu0 %9608
        %9610 = vrot.lane.b32.xlu0 %v9298, 64
        %v9611 = vpop.permute.xlu0 %9610
        %9612 = vrot.lane.b32.xlu0 %v9303, 64
        %v9613 = vpop.permute.xlu0 %9612
        %9614 = vrot.lane.b32.xlu0 %v9308, 64
        %v9615 = vpop.permute.xlu0 %9614
        %9616 = vrot.lane.b32.xlu0 %v9313, 64
        %v9617 = vpop.permute.xlu0 %9616
        %9618 = vrot.lane.b32.xlu0 %v9318, 64
        %v9619 = vpop.permute.xlu0 %9618
        %9620 = vrot.lane.b32.xlu0 %v9323, 64
        %v9621 = vpop.permute.xlu0 %9620
        %9622 = vrot.lane.b32.xlu0 %v9328, 64
        %v9623 = vpop.permute.xlu0 %9622
        %9624 = vrot.lane.b32.xlu0 %v9333, 64
        %v9625 = vpop.permute.xlu0 %9624
        %9626 = vrot.lane.b32.xlu0 %v9338, 64
        %v9627 = vpop.permute.xlu0 %9626
        %9628 = vrot.lane.b32.xlu0 %v9343, 64
        %v9629 = vpop.permute.xlu0 %9628
        %9630 = vrot.lane.b32.xlu0 %v9348, 64
        %v9631 = vpop.permute.xlu0 %9630
        %9632 = vrot.lane.b32.xlu0 %v9353, 64
        %v9633 = vpop.permute.xlu0 %9632
        %9634 = vrot.lane.b32.xlu0 %v9358, 64
        %v9635 = vpop.permute.xlu0 %9634
        %9636 = vrot.lane.b32.xlu0 %v9363, 64
        %v9637 = vpop.permute.xlu0 %9636
        %9638 = vrot.lane.b32.xlu0 %v9368, 64
        %v9639 = vpop.permute.xlu0 %9638
        %9640 = vrot.lane.b32.xlu0 %v9373, 64
        %v9641 = vpop.permute.xlu0 %9640
        %9642 = vrot.lane.b32.xlu0 %v9378, 64
        %v9643 = vpop.permute.xlu0 %9642
        %9644 = vrot.lane.b32.xlu0 %v9383, 64
        %v9645 = vpop.permute.xlu0 %9644
        %9646 = vrot.lane.b32.xlu0 %v9388, 64
        %v9647 = vpop.permute.xlu0 %9646
        %9648 = vrot.lane.b32.xlu0 %v9393, 64
        %v9649 = vpop.permute.xlu0 %9648
        %9650 = vrot.lane.b32.xlu0 %v9398, 64
        %v9651 = vpop.permute.xlu0 %9650
        %9652 = vrot.lane.b32.xlu0 %v9403, 64
        %v9653 = vpop.permute.xlu0 %9652
        %9654 = vrot.lane.b32.xlu0 %v9408, 64
        %v9655 = vpop.permute.xlu0 %9654
        %9656 = vrot.lane.b32.xlu0 %v9413, 64
        %v9657 = vpop.permute.xlu0 %9656
        %9658 = vrot.lane.b32.xlu0 %v9418, 64
        %v9659 = vpop.permute.xlu0 %9658
        %9660 = vrot.lane.b32.xlu0 %v9423, 64
        %v9661 = vpop.permute.xlu0 %9660
        %9662 = vrot.lane.b32.xlu0 %v9428, 64
        %v9663 = vpop.permute.xlu0 %9662
        %9664 = vrot.lane.b32.xlu0 %v9433, 64
        %v9665 = vpop.permute.xlu0 %9664
        %9666 = vrot.lane.b32.xlu0 %v9438, 64
        %v9667 = vpop.permute.xlu0 %9666
        %9668 = vrot.lane.b32.xlu0 %v9443, 64
        %v9669 = vpop.permute.xlu0 %9668
        %v9702 = vsel %vm331, %v679, %v9479
        %v9703 = vsel %vm331, %v685, %v9481
        %v9704 = vsel %vm331, %v691, %v9483
        %v9705 = vsel %vm331, %v697, %v9485
        %v9706 = vsel %vm331, %v703, %v9487
        %v9707 = vsel %vm331, %v709, %v9489
        %v9708 = vsel %vm331, %v715, %v9491
        %v9709 = vsel %vm331, %v721, %v9493
        %v9710 = vsel %vm331, %v727, %v9495
        %v9711 = vsel %vm331, %v733, %v9497
        %v9712 = vsel %vm331, %v739, %v9499
        %v9713 = vsel %vm331, %v745, %v9501
        %v9714 = vsel %vm331, %v751, %v9503
        %v9715 = vsel %vm331, %v757, %v9505
        %v9716 = vsel %vm331, %v763, %v9507
        %v9717 = vsel %vm331, %v769, %v9509
        %v9718 = vsel %vm331, %v775, %v9511
        %v9719 = vsel %vm331, %v781, %v9513
        %v9720 = vsel %vm331, %v787, %v9515
        %v9721 = vsel %vm331, %v793, %v9517
        %v9722 = vsel %vm331, %v799, %v9519
        %v9723 = vsel %vm331, %v805, %v9521
        %v9724 = vsel %vm331, %v811, %v9523
        %v9725 = vsel %vm331, %v817, %v9525
        %v9726 = vsel %vm331, %v823, %v9527
        %v9727 = vsel %vm331, %v829, %v9529
        %v9728 = vsel %vm331, %v835, %v9531
        %v9729 = vsel %vm331, %v841, %v9533
        %v9730 = vsel %vm331, %v847, %v9535
        %v9731 = vsel %vm331, %v853, %v9537
        %v9732 = vsel %vm331, %v859, %v9539
        %v9733 = vsel %vm331, %v865, %v9541
        %v9734 = vsel %vm331, %v8436, %v9607
        %v9735 = vsel %vm331, %v8441, %v9609
        %v9736 = vsel %vm331, %v8446, %v9611
        %v9737 = vsel %vm331, %v8451, %v9613
        %v9738 = vsel %vm331, %v8456, %v9615
        %v9739 = vsel %vm331, %v8461, %v9617
        %v9740 = vsel %vm331, %v8466, %v9619
        %v9741 = vsel %vm331, %v8471, %v9621
        %v9742 = vsel %vm331, %v8476, %v9623
        %v9743 = vsel %vm331, %v8481, %v9625
        %v9744 = vsel %vm331, %v8486, %v9627
        %v9745 = vsel %vm331, %v8491, %v9629
        %v9746 = vsel %vm331, %v8496, %v9631
        %v9747 = vsel %vm331, %v8501, %v9633
        %v9748 = vsel %vm331, %v8506, %v9635
        %v9749 = vsel %vm331, %v8511, %v9637
        %v9750 = vsel %vm331, %v8516, %v9639
        %v9751 = vsel %vm331, %v8521, %v9641
        %v9752 = vsel %vm331, %v8526, %v9643
        %v9753 = vsel %vm331, %v8531, %v9645
        %v9754 = vsel %vm331, %v8536, %v9647
        %v9755 = vsel %vm331, %v8541, %v9649
        %v9756 = vsel %vm331, %v8546, %v9651
        %v9757 = vsel %vm331, %v8551, %v9653
        %v9758 = vsel %vm331, %v8556, %v9655
        %v9759 = vsel %vm331, %v8561, %v9657
        %v9760 = vsel %vm331, %v8566, %v9659
        %v9761 = vsel %vm331, %v8571, %v9661
        %v9762 = vsel %vm331, %v8576, %v9663
        %v9763 = vsel %vm331, %v8581, %v9665
        %v9764 = vsel %vm331, %v8586, %v9667
        %v9765 = vsel %vm331, %v8591, %v9669
        %9766 = vst [vmem:[%s325] sm:$0xff] %v9702
        %9767 = vst [vmem:[%s325 + $0x8] sm:$0xff] %v9734
        %9768 = vst [vmem:[%s325 + $0x10] sm:$0xff] %v9703
        %9769 = vst [vmem:[%s325 + $0x18] sm:$0xff] %v9735
        %9770 = vst [vmem:[%s325 + $0x20] sm:$0xff] %v9704
        %9771 = vst [vmem:[%s325 + $0x28] sm:$0xff] %v9736
        %9772 = vst [vmem:[%s325 + $0x30] sm:$0xff] %v9705
        %9773 = vst [vmem:[%s325 + $0x38] sm:$0xff] %v9737
        %9774 = vst [vmem:[%s325 + $0x40] sm:$0xff] %v9706
        %9775 = vst [vmem:[%s325 + $0x48] sm:$0xff] %v9738
        %9776 = vst [vmem:[%s325 + $0x50] sm:$0xff] %v9707
        %9777 = vst [vmem:[%s325 + $0x58] sm:$0xff] %v9739
        %9778 = vst [vmem:[%s325 + $0x60] sm:$0xff] %v9708
        %9779 = vst [vmem:[%s325 + $0x68] sm:$0xff] %v9740
        %9780 = vst [vmem:[%s325 + $0x70] sm:$0xff] %v9709
        %9781 = vst [vmem:[%s325 + $0x78] sm:$0xff] %v9741
        %9782 = vst [vmem:[%s325 + $0x80] sm:$0xff] %v9710
        %9783 = vst [vmem:[%s325 + $0x88] sm:$0xff] %v9742
        %9784 = vst [vmem:[%s325 + $0x90] sm:$0xff] %v9711
        %9785 = vst [vmem:[%s325 + $0x98] sm:$0xff] %v9743
        %9786 = vst [vmem:[%s325 + $0xa0] sm:$0xff] %v9712
        %9787 = vst [vmem:[%s325 + $0xa8] sm:$0xff] %v9744
        %9788 = vst [vmem:[%s325 + $0xb0] sm:$0xff] %v9713
        %9789 = vst [vmem:[%s325 + $0xb8] sm:$0xff] %v9745
        %9790 = vst [vmem:[%s325 + $0xc0] sm:$0xff] %v9714
        %9791 = vst [vmem:[%s325 + $0xc8] sm:$0xff] %v9746
        %9792 = vst [vmem:[%s325 + $0xd0] sm:$0xff] %v9715
        %9793 = vst [vmem:[%s325 + $0xd8] sm:$0xff] %v9747
        %9794 = vst [vmem:[%s325 + $0xe0] sm:$0xff] %v9716
        %9795 = vst [vmem:[%s325 + $0xe8] sm:$0xff] %v9748
        %9796 = vst [vmem:[%s325 + $0xf0] sm:$0xff] %v9717
        %9797 = vst [vmem:[%s325 + $0xf8] sm:$0xff] %v9749
        %9798 = vst [vmem:[%s325 + $0x100] sm:$0xff] %v9718
        %9799 = vst [vmem:[%s325 + $0x108] sm:$0xff] %v9750
        %9800 = vst [vmem:[%s325 + $0x110] sm:$0xff] %v9719
        %9801 = vst [vmem:[%s325 + $0x118] sm:$0xff] %v9751
        %9802 = vst [vmem:[%s325 + $0x120] sm:$0xff] %v9720
        %9803 = vst [vmem:[%s325 + $0x128] sm:$0xff] %v9752
        %9804 = vst [vmem:[%s325 + $0x130] sm:$0xff] %v9721
        %9805 = vst [vmem:[%s325 + $0x138] sm:$0xff] %v9753
        %9806 = vst [vmem:[%s325 + $0x140] sm:$0xff] %v9722
        %9807 = vst [vmem:[%s325 + $0x148] sm:$0xff] %v9754
        %9808 = vst [vmem:[%s325 + $0x150] sm:$0xff] %v9723
        %9809 = vst [vmem:[%s325 + $0x158] sm:$0xff] %v9755
        %9810 = vst [vmem:[%s325 + $0x160] sm:$0xff] %v9724
        %9811 = vst [vmem:[%s325 + $0x168] sm:$0xff] %v9756
        %9812 = vst [vmem:[%s325 + $0x170] sm:$0xff] %v9725
        %9813 = vst [vmem:[%s325 + $0x178] sm:$0xff] %v9757
        %9814 = vst [vmem:[%s325 + $0x180] sm:$0xff] %v9726
        %9815 = vst [vmem:[%s325 + $0x188] sm:$0xff] %v9758
        %9816 = vst [vmem:[%s325 + $0x190] sm:$0xff] %v9727
        %9817 = vst [vmem:[%s325 + $0x198] sm:$0xff] %v9759
        %9818 = vst [vmem:[%s325 + $0x1a0] sm:$0xff] %v9728
        %9819 = vst [vmem:[%s325 + $0x1a8] sm:$0xff] %v9760
        %9820 = vst [vmem:[%s325 + $0x1b0] sm:$0xff] %v9729
        %9821 = vst [vmem:[%s325 + $0x1b8] sm:$0xff] %v9761
        %9822 = vst [vmem:[%s325 + $0x1c0] sm:$0xff] %v9730
        %9823 = vst [vmem:[%s325 + $0x1c8] sm:$0xff] %v9762
        %9824 = vst [vmem:[%s325 + $0x1d0] sm:$0xff] %v9731
        %9825 = vst [vmem:[%s325 + $0x1d8] sm:$0xff] %v9763
        %9826 = vst [vmem:[%s325 + $0x1e0] sm:$0xff] %v9732
        %9827 = vst [vmem:[%s325 + $0x1e8] sm:$0xff] %v9764
        %9828 = vst [vmem:[%s325 + $0x1f0] sm:$0xff] %v9733
        %9829 = vst [vmem:[%s325 + $0x1f8] sm:$0xff] %v9765
        %s9830 = sand.u32 %s225, 1
        %s9831 = scalar_lea.sflag [#allocation8], %s9830
        %s9832 = sand.u32 %s225, 1
        %s9833 = smul.addr %s9832, 512
        %s9834 = scalar_lea.vmem [#allocation7], %s9833
        // Predicated region
        $region57: #{tpu_custom_call.1} parent=55 // pred_check
          %p9835 = pneg %p235
        $region58: #{tpu_custom_call.1} parent=55 // pred_check_branch
          %9837 = sbr.rel (%p9835) target = $region60
        $region59: #{tpu_custom_call.1} parent=55 // pred_region
          %s9839 = ssub.s32 8192, 8192
          %9840 = vsyncadd %s9831, %s9839
          %s9841 = smul.addr %s23, 64
          %s9842 = smul.addr %s9841, 128
          %s9843 = scalar_lea.hbm %s9, %s9842
          %s9844 = sshll.u32 %s9834, 4
          %s9845 = int_to_ptr.vmem [resolvable:$true] %s9844
          %9850 = dma.vmem_to_hbm [thread:$0]  %s9845, 8192, %s9843, %s9831, 256, 256, 16
        $region60: #{tpu_custom_call.1} parent=55 // pred_fallthru
          _
      $region56: #{tpu_custom_call.1} parent=5 // pred_fallthru
        _
      %p9851 = scmp.le.s32.totalorder 2, %s18
      // Predicated region
      $region61: #{tpu_custom_call.1} parent=5 // pred_check
        %p9852 = pneg %p9851
      $region62: #{tpu_custom_call.1} parent=5 // pred_check_branch
        %9854 = sbr.rel (%p9852) target = $region64
      $region63: #{tpu_custom_call.1} parent=5 // pred_region
        %s9855 = ssub.s32 %s18, 2
        // Predicated region
        $region65: #{tpu_custom_call.1} parent=63 // pred_check
          %p9856 = pneg %p241
        $region66: #{tpu_custom_call.1} parent=63 // pred_check_branch
          %9858 = sbr.rel (%p9856) target = $region68
        $region67: #{tpu_custom_call.1} parent=63 // pred_region
          %s9859 = sand.u32 %s226, 1
          %s9860 = scalar_lea.sflag [#allocation8], %s9859
          %s9861 = sand.u32 %s226, 1
          %s9862 = smul.addr %s9861, 512
          %s9863 = scalar_lea.vmem [#allocation7], %s9862
          %9864 = dma.done %s9860, 8192
        $region68: #{tpu_custom_call.1} parent=63 // pred_fallthru
          _
      $region64: #{tpu_custom_call.1} parent=5 // pred_fallthru
        _
    $region6: #{tpu_custom_call.1} parent=1 // loop_footer
      %s22 = sadd.s32 1, %s18
    $region7: #{tpu_custom_call.1} parent=1 // loop_footer_branch
      %17 = sbr.rel target = $region3
    $region8: #{tpu_custom_call.1} parent=1 // loop_exit
      _
    %9865 = vsyncpa [#allocation8], 1
    %s9866 = scalar_lea.sflag [#allocation8], 1
    %9867 = vsyncpa %s9866, 1

</llo_original>
